<compile_context>
chip_gen: v6e
topology: v6e:2x2x1
jax: 0.10.0
libtpu: 0.0.40
codegen_flags: <defaults>
</compile_context>

<pallas_src>
import functools
import math

import jax
import jax.numpy as jnp
from jax import lax
from jax.experimental import pallas as pl
from jax.experimental.pallas import tpu as pltpu

EPS = 1e-5
LANE = 128
MATMUL_DTYPE = jnp.bfloat16   # MXU operand precision (accumulation stays f32)
ACT_DTYPE = jnp.bfloat16      # inter-kernel / inter-layer activation storage


def _round_up(x, m):
    return (x + m - 1) // m * m


@functools.lru_cache(maxsize=None)
def _vmem_limits():
    """(tile-sizing budget, scoped-VMEM limit) derived from the local chip."""
    cap = 64 * 1024 * 1024
    try:
        info = pltpu.get_tpu_info()
        cap = int(getattr(info, "vmem_capacity_bytes", cap) or cap)
    except Exception:
        pass
    cap = min(max(cap, 32 * 1024 * 1024), 128 * 1024 * 1024)
    return int(cap * 0.70), int(cap * 0.85)


# ---------------------------------------------------------------------------
# MaxPool2d(kernel=2, stride=2)  (bf16 in / bf16 out)
# ---------------------------------------------------------------------------
def _maxpool_kernel(x_ref, o_ref):
    x = x_ref[...]                                            # (th, w, c)
    th, w, c = x.shape
    x = jnp.max(x.reshape(th // 2, 2, w, c), axis=1)          # pool rows (outer dim)
    # NOTE: a strided jnp.maximum(x[:, 0::2], x[:, 1::2]) would avoid the sublane-split
    # relayout; kept as the proven reshape form since the pool is HBM-bound anyway.
    x = jnp.max(x.reshape(th // 2, w // 2, 2, c), axis=2)     # pool cols (sublane dim)
    o_ref[...] = x


def _pick_pool_tile(h, w, c, budget):
    per_row = w * c * 2 * 6
    cap = max(2, min(h, int(budget // max(per_row, 1))))
    th = max(2, cap - (cap % 2))
    while th > 2 and h % th:
        th -= 2
    if h % th:
        th = h
    return th


def maxpool2x2(x):
    """x: (N, H, W, C) bf16 (C lane-padded) -> (N, H//2, W//2, C) bf16."""
    n, h, w, c = x.shape
    budget, limit = _vmem_limits()
    th = _pick_pool_tile(h, w, c, budget)
    return pl.pallas_call(
        _maxpool_kernel,
        out_shape=jax.ShapeDtypeStruct((n, h // 2, w // 2, c), x.dtype),
        grid=(n, h // th),
        in_specs=[pl.BlockSpec((None, th, w, c), lambda i, j: (i, j, 0, 0))],
        out_specs=pl.BlockSpec((None, th // 2, w // 2, c),
                               lambda i, j: (i, j, 0, 0)),
        compiler_params=pltpu.CompilerParams(
            dimension_semantics=("parallel", "parallel"),
            vmem_limit_bytes=limit),
    )(x)


# ---------------------------------------------------------------------------
# Conv3x3 (pad=1, bias folded away) + previous-layer BN/ReLU fused on the input
# path + per-channel BN statistics accumulation.
# ---------------------------------------------------------------------------
def _make_conv_stats_kernel(*, th, w, cin_p, cout_p, h, r_in, n_row_tiles, pre_bn):
    def kernel(x_hbm, w_ref, scale_ref, shift_ref, conv_ref, stats_ref, xbuf, sems):
        # x_hbm:     (N, H, W, cin_p) bf16 in HBM (raw conv of prev layer / pooled in)
        # w_ref:     (3, 3*cin_p, cout_p) bf16 -- dy taps folded into K, indexed by dx
        # scale/shift: (1, cin_p) f32 -- previous layer's folded BatchNorm
        # conv_ref:  (th, w, cout_p) bf16 -- this layer's *raw* conv output tile
        # stats_ref: (2, cout_p) f32 -- [sum, sumsq], resident across the r axis
        # xbuf:      (2, th+2, w, cin_p) bf16 -- double-buffered halo'd row window
        # sems:      DMA semaphores (2 slots x 3 copies)
        i = pl.program_id(0)
        c = pl.program_id(1)
        r = pl.program_id(2)
        j = c * r_in + r                     # absolute row-tile index
        row_start = j * th
        slot = r % 2

        def copies(row_s, s):
            row_s = jnp.minimum(row_s, h - th)          # always in-bounds (prefetch guard)
            top = jnp.maximum(row_s - 1, 0)             # clamped; masked at image edge
            bot = jnp.minimum(row_s + th, h - 1)
            return (
                pltpu.make_async_copy(x_hbm.at[i, pl.ds(row_s, th)],
                                      xbuf.at[s, pl.ds(1, th)], sems.at[s, 0]),
                pltpu.make_async_copy(x_hbm.at[i, pl.ds(top, 1)],
                                      xbuf.at[s, pl.ds(0, 1)], sems.at[s, 1]),
                pltpu.make_async_copy(x_hbm.at[i, pl.ds(bot, 1)],
                                      xbuf.at[s, pl.ds(th + 1, 1)], sems.at[s, 2]),
            )

        # Prime the double buffer at the start of each row sweep (the only DMA per
        # sweep whose latency is not hidden).
        @pl.when(r == 0)
        def _():
            for cp in copies(row_start, slot):
                cp.start()

        # Prefetch the next row tile of this sweep into the other slot.  Only the
        # innermost, sequentially executed "arbitrary" axis is prefetched, so this
        # stays correct under megacore partitioning of the parallel axes.
        @pl.when(r + 1 < r_in)
        def _():
            for cp in copies(row_start + th, 1 - slot):
                cp.start()

        for cp in copies(row_start, slot):
            cp.wait()

        win = xbuf[slot]                                  # (th+2, w, cin_p) bf16
        act = win.astype(jnp.float32)
        if pre_bn:
            # Previous layer's BatchNorm + ReLU fused into this layer's input path
            # (the previous conv kernel stored its raw, un-normalized output).
            act = jnp.maximum(act * scale_ref[0] + shift_ref[0], 0.0)

        # Zero the conv's top/bottom zero-padding rows at the image borders; interior
        # tiles have valid neighbour rows DMA'd into the halo slots.
        row = lax.broadcasted_iota(jnp.int32, (th + 2, 1, 1), 0)
        pad = ((row == 0) & (j == 0)) | ((row == th + 1) & (j == n_row_tiles - 1))
        act = jnp.where(pad, 0.0, act)
        a16 = act.astype(MATMUL_DTYPE)

        # Column shifts (left/right zero padding built in).
        # TODO(synk): pltpu.roll + mask keeps these shifts on the XLU instead of a
        # relayout copy; only matters once the kernel is compute-bound (v7x).
        zcol = jnp.zeros((th + 2, 1, cin_p), dtype=a16.dtype)
        x_by_dx = [
            jnp.concatenate([zcol, a16[:, :w - 1, :]], axis=1),   # dx=0: in[x-1]
            a16,                                                  # dx=1: in[x]
            jnp.concatenate([a16[:, 1:, :], zcol], axis=1),       # dx=2: in[x+1]
        ]

        # 3x3 conv as 3 MXU matmuls with the dy taps folded into the contraction
        # (K = 3*cin_p): better MXU depth utilisation on 256-deep v6e/v7x MXUs and
        # 3x fewer accumulate passes everywhere.  f32 accumulation in values.
        acc = None
        for dx in range(3):
            xc = x_by_dx[dx]                                      # (th+2, w, cin_p)
            patch = jnp.concatenate([xc[0:th], xc[1:th + 1], xc[2:th + 2]],
                                    axis=-1).reshape(th * w, 3 * cin_p)
            contrib = jnp.dot(patch, w_ref[dx],
                              preferred_element_type=jnp.float32)
            acc = contrib if acc is None else acc + contrib

        conv_ref[...] = acc.reshape(th, w, cout_p).astype(conv_ref.dtype)

        # Two-stage BatchNorm: accumulate per-channel sum / sum-of-squares in f32
        # across the sequential row-tile axis; finalised in the wrapper.
        # NOTE: correctness relies on r being the innermost "arbitrary" axis.
        @pl.when(r == 0)
        def _():
            stats_ref[...] = jnp.zeros_like(stats_ref)

        psum = jnp.sum(acc, axis=0, keepdims=True)
        psq = jnp.sum(acc * acc, axis=0, keepdims=True)
        stats_ref[...] += jnp.concatenate([psum, psq], axis=0)

    return kernel


def _pick_row_tile(h, w, cin_p, cout_p, budget):
    # Weights are double-buffered by the BlockSpec pipeline even though their index
    # map is constant.  TODO(synk): pipeline_mode=pl.Buffered(1) would reclaim the
    # duplicate weight buffer at deep-layer channel counts.
    fixed = 2 * 3 * (3 * cin_p) * cout_p * 2 + 8 * cout_p * 4 + 2 * cin_p * 4
    per_row = (2 * w * cin_p * 2              # 2-slot bf16 halo window buffer
               + w * cin_p * (4 + 2 + 4)      # f32 / bf16 activation temporaries
               + 3 * w * 3 * cin_p * 2        # dy-folded bf16 patches (3 dx variants)
               + w * cout_p * 4               # f32 matmul accumulator value
               + 2 * w * cout_p * 2)          # bf16 conv-out block, double-buffered
    cap = max(1, int((budget - fixed) // max(per_row, 1)))
    cap = min(cap, h)
    th = cap
    # Largest divisor of h <= cap keeps every tile full (BN stats need no masking).
    # TODO(synk): masked ragged last tile so awkward H cannot force tiny divisors.
    while h % th:
        th -= 1
    return th


def conv_bn_stats(x, w_fold, pre_scale, pre_shift, *, pre_bn, row_tile_override=None):
    """x: (N, H, W, cin_p) bf16 raw input; returns (raw conv bf16, BN stats f32)."""
    n, h, w, cin_p = x.shape
    cout_p = w_fold.shape[-1]
    budget, limit = _vmem_limits()
    if row_tile_override is not None:
        assert h % row_tile_override == 0
        th = row_tile_override
    else:
        th = _pick_row_tile(h, w, cin_p, cout_p, budget)
    r_tiles = h // th
    # Extra parallel axis so both v7x TensorCores are busy when the batch is small.
    n_chunks = 2 if (r_tiles >= 2 and r_tiles % 2 == 0) else 1
    r_in = r_tiles // n_chunks

    kernel = _make_conv_stats_kernel(th=th, w=w, cin_p=cin_p, cout_p=cout_p,
                                     h=h, r_in=r_in, n_row_tiles=r_tiles,
                                     pre_bn=pre_bn)

    flops = 2 * n * h * w * 9 * cin_p * cout_p
    bytes_accessed = (x.size * 2 + w_fold.size * 2
                      + n * h * w * cout_p * 2 + n * n_chunks * 2 * cout_p * 4)

    conv, stats = pl.pallas_call(
        kernel,
        out_shape=(jax.ShapeDtypeStruct((n, h, w, cout_p), ACT_DTYPE),
                   jax.ShapeDtypeStruct((n, n_chunks, 2, cout_p), jnp.float32)),
        grid=(n, n_chunks, r_in),
        in_specs=[
            pl.BlockSpec(memory_space=pl.ANY),                      # activation in HBM
            pl.BlockSpec((3, 3 * cin_p, cout_p), lambda i, c, r: (0, 0, 0)),
            pl.BlockSpec((1, cin_p), lambda i, c, r: (0, 0)),
            pl.BlockSpec((1, cin_p), lambda i, c, r: (0, 0)),
        ],
        out_specs=(
            pl.BlockSpec((None, th, w, cout_p),
                         lambda i, c, r: (i, c * r_in + r, 0, 0)),
            pl.BlockSpec((None, None, 2, cout_p), lambda i, c, r: (i, c, 0, 0)),
        ),
        scratch_shapes=[pltpu.VMEM((2, th + 2, w, cin_p), ACT_DTYPE),
                        pltpu.SemaphoreType.DMA((2, 3))],
        compiler_params=pltpu.CompilerParams(
            dimension_semantics=("parallel", "parallel", "arbitrary"),
            vmem_limit_bytes=limit),
        cost_estimate=pl.CostEstimate(flops=flops, transcendentals=0,
                                      bytes_accessed=bytes_accessed),
    )(x, w_fold, pre_scale, pre_shift)
    return conv, stats


# ---------------------------------------------------------------------------
# Final-layer BatchNorm apply + ReLU (every other layer has this fused into the
# next conv's input path).
# ---------------------------------------------------------------------------
def _bn_relu_kernel(x_ref, scale_ref, shift_ref, o_ref):
    y = x_ref[...].astype(jnp.float32) * scale_ref[0] + shift_ref[0]
    o_ref[...] = jnp.maximum(y, 0.0)


def _pick_apply_tile(h, w, c, budget):
    per_row = w * c * (2 * 2 + 2 * 4 + 8)
    th = max(1, min(h, int(budget // max(per_row, 1))))
    while h % th:
        th -= 1
    return th


def bn_relu_apply(x, scale, shift):
    n, h, w, c = x.shape
    budget, limit = _vmem_limits()
    th = _pick_apply_tile(h, w, c, budget)
    return pl.pallas_call(
        _bn_relu_kernel,
        out_shape=jax.ShapeDtypeStruct((n, h, w, c), jnp.float32),
        grid=(n, h // th),
        in_specs=[pl.BlockSpec((None, th, w, c), lambda i, j: (i, j, 0, 0)),
                  pl.BlockSpec((1, c), lambda i, j: (0, 0)),
                  pl.BlockSpec((1, c), lambda i, j: (0, 0))],
        out_specs=pl.BlockSpec((None, th, w, c), lambda i, j: (i, j, 0, 0)),
        compiler_params=pltpu.CompilerParams(
            dimension_semantics=("parallel", "parallel"),
            vmem_limit_bytes=limit),
    )(x, scale, shift)


# ---------------------------------------------------------------------------
# DownBlock forward
# ---------------------------------------------------------------------------
def downblock_forward(x_nchw, layer_params, row_tile_override=None):
    """MaxPool2d(2) followed by the CBR stack.

    x_nchw: (N, Cin, H, W) f32.  layer_params: list of dicts with keys
    'w' (Cout, Cin, 3, 3), 'b' (Cout,), 'gamma' (Cout,), 'beta' (Cout,).
    Returns (N, Cout, H//2, W//2) f32.
    """
    n, cin, h, w = x_nchw.shape
    assert h % 2 == 0 and w % 2 == 0  # TODO(synk): odd sizes need floor-pooling
    cin_p = _round_up(cin, LANE)

    # One NCHW -> NHWC transpose + channel lane-padding + bf16 cast at the block
    # boundary (single fused XLA pass); everything downstream is NHWC bf16.
    x = jnp.transpose(x_nchw, (0, 2, 3, 1))
    x = jnp.pad(x, ((0, 0), (0, 0), (0, 0), (0, cin_p - cin))).astype(ACT_DTYPE)

    # TODO(synk): fold the 2x2 pool into the first conv's halo load to save one more
    # HBM round trip of the pooled activation.
    y = maxpool2x2(x)
    ph, pw = h // 2, w // 2

    pre_scale = jnp.ones((1, cin_p), jnp.float32)
    pre_shift = jnp.zeros((1, cin_p), jnp.float32)
    pre_bn = False

    c_prev, cp_prev = cin, cin_p
    for p in layer_params:
        wgt, gamma, beta = p["w"], p["gamma"], p["beta"]
        # NOTE: p["b"] (Conv2d bias) is deliberately unused: a per-channel constant
        # added before training-mode BatchNorm cancels exactly in (x - mean).
        cout = wgt.shape[0]
        cout_p = _round_up(cout, LANE)
        wp = jnp.pad(wgt, ((0, cout_p - cout), (0, cp_prev - c_prev),
                           (0, 0), (0, 0)))
        # (O, I, dy, dx) -> (dx, dy, I, O) -> (3, 3*cin_p, cout_p): dy taps folded
        # into the contraction dimension (dy-major, channel-minor).
        w_fold = jnp.transpose(wp, (3, 2, 1, 0)).reshape(3, 3 * cp_prev, cout_p)
        w_fold = w_fold.astype(MATMUL_DTYPE)

        conv, stats = conv_bn_stats(y, w_fold, pre_scale, pre_shift,
                                    pre_bn=pre_bn,
                                    row_tile_override=row_tile_override)

        # Finalise batch statistics (tiny per-channel math) and fold BN into one
        # scale/shift; biased variance + eps matches training-mode nn.BatchNorm2d.
        cnt = n * ph * pw
        s = jnp.sum(stats[:, :, 0, :], axis=(0, 1))
        s2 = jnp.sum(stats[:, :, 1, :], axis=(0, 1))
        mean = s / cnt
        # TODO(synk): E[x^2]-mean^2 in f32 can cancel for very large spatial extents
        # or large-mean conv outputs; switch to per-tile centred accumulation then.
        var = jnp.maximum(s2 / cnt - mean * mean, 0.0)
        inv = lax.rsqrt(var + EPS)
        gamma_p = jnp.pad(gamma.astype(jnp.float32), (0, cout_p - cout))
        beta_p = jnp.pad(beta.astype(jnp.float32), (0, cout_p - cout))
        pre_scale = (gamma_p * inv).reshape(1, cout_p)
        pre_shift = (beta_p - mean * gamma_p * inv).reshape(1, cout_p)
        pre_bn = True

        y = conv
        c_prev, cp_prev = cout, cout_p

    # The last layer's BatchNorm + ReLU is applied by a small standalone kernel.
    y = bn_relu_apply(y, pre_scale, pre_shift)

    # TODO(synk): BatchNorm running_mean/running_var buffer updates (training-time
    # side effect) are not produced; they do not affect the forward output.
    y = y[..., :c_prev]
    return jnp.transpose(y, (0, 3, 1, 2))


# ---------------------------------------------------------------------------
# Pure-JAX reference (PyTorch semantics, same MXU precision policy)
# ---------------------------------------------------------------------------
def _reference_downblock(x_nchw, layer_params):
    y = lax.reduce_window(x_nchw, -jnp.inf, lax.max,
                          (1, 1, 2, 2), (1, 1, 2, 2), "VALID")
    for p in layer_params:
        conv = lax.conv_general_dilated(
            y.astype(MATMUL_DTYPE), p["w"].astype(MATMUL_DTYPE),
            window_strides=(1, 1), padding=((1, 1), (1, 1)),
            dimension_numbers=("NCHW", "OIHW", "NCHW"),
            preferred_element_type=jnp.float32)
        conv = conv + p["b"].reshape(1, -1, 1, 1)   # cancels under training-mode BN
        mean = conv.mean(axis=(0, 2, 3), keepdims=True)
        var = ((conv - mean) ** 2).mean(axis=(0, 2, 3), keepdims=True)
        yhat = (conv - mean) * lax.rsqrt(var + EPS)
        yhat = yhat * p["gamma"].reshape(1, -1, 1, 1) + p["beta"].reshape(1, -1, 1, 1)
        y = jnp.maximum(yhat, 0.0)
    return y


if __name__ == "__main__":
    N, Cin, Cout, H, W, NB_CONV = 2, 4, 8, 16, 16, 2

    key = jax.random.PRNGKey(0)
    kx, *lkeys = jax.random.split(key, 1 + 4 * NB_CONV)

    x = jax.random.normal(kx, (N, Cin, H, W), jnp.float32)

    layer_params = []
    c_in = Cin
    for li in range(NB_CONV):
        kw, kb, kg, kbe = lkeys[4 * li: 4 * li + 4]
        fan_in = c_in * 9
        bound = 1.0 / math.sqrt(fan_in)
        layer_params.append({
            "w": jax.random.uniform(kw, (Cout, c_in, 3, 3), jnp.float32,
                                    -bound, bound),
            "b": jax.random.uniform(kb, (Cout,), jnp.float32, -bound, bound),
            "gamma": 1.0 + 0.1 * jax.random.normal(kg, (Cout,), jnp.float32),
            "beta": 0.1 * jax.random.normal(kbe, (Cout,), jnp.float32),
        })
        c_in = Cout

    fwd = jax.jit(downblock_forward, static_argnames=("row_tile_override",))

    out = jax.block_until_ready(fwd(x, layer_params))
    ref = _reference_downblock(x, layer_params)
    assert out.shape == (N, Cout, H // 2, W // 2), out.shape
    max_err = float(jnp.max(jnp.abs(out - ref)))
    # Tolerance accounts for bf16 MXU operands (same policy as the reference) plus
    # bf16 storage of inter-layer activations (per the performance review).
    assert jnp.allclose(out, ref, atol=2e-2, rtol=2e-2), max_err

    # Exercise the multi-row-tile / dual-chunk / halo-prefetch paths explicitly by
    # forcing a small row tile (grid becomes (N, 2, 2) per conv layer).
    out_tiled = jax.block_until_ready(fwd(x, layer_params, row_tile_override=2))
    tiled_err = float(jnp.max(jnp.abs(out_tiled - ref)))
    assert jnp.allclose(out_tiled, ref, atol=2e-2, rtol=2e-2), tiled_err

    print("KERNEL_OK")
</pallas_src>

<mosaic_0001>
module attributes {stable_mosaic.version = 11 : i64} {
  func.func @_maxpool_kernel(%arg0: i32, %arg1: i32, %arg2: memref<1x16x16x128xbf16, #tpu.memory_space<vmem>>, %arg3: memref<1x8x8x128xbf16, #tpu.memory_space<vmem>>) attributes {dimension_semantics = [#tpu.dimension_semantics<parallel>, #tpu.dimension_semantics<parallel>], iteration_bounds = array<i64: 2, 1>, scalar_prefetch = 0 : i64, scratch_operands = 0 : i64, tpu.core_type = #tpu.core_type<tc>, window_params = [{transform_indices = @transform_0, window_bounds = array<i64: 1, 16, 16, 128>}, {transform_indices = @transform_1, window_bounds = array<i64: 1, 8, 8, 128>}]} {
    %c0 = arith.constant 0 : index
    %c0_0 = arith.constant 0 : index
    %c0_1 = arith.constant 0 : index
    %c0_2 = arith.constant 0 : index
    %0 = vector.load %arg2[%c0, %c0_0, %c0_1, %c0_2] : memref<1x16x16x128xbf16, #tpu.memory_space<vmem>>, vector<1x16x16x128xbf16>
    %1 = vector.shape_cast %0 : vector<1x16x16x128xbf16> to vector<16x16x128xbf16>
    %2 = vector.shape_cast %1 : vector<16x16x128xbf16> to vector<8x2x16x128xbf16>
    %cst = arith.constant dense<0xFF80> : vector<8x16x128xbf16>
    %3 = vector.multi_reduction <maximumf>, %2, %cst [1] : vector<8x2x16x128xbf16> to vector<8x16x128xbf16>
    %4 = vector.shape_cast %3 : vector<8x16x128xbf16> to vector<8x8x2x128xbf16>
    %cst_3 = arith.constant dense<0xFF80> : vector<8x8x128xbf16>
    %5 = vector.multi_reduction <maximumf>, %4, %cst_3 [2] : vector<8x8x2x128xbf16> to vector<8x8x128xbf16>
    %c0_4 = arith.constant 0 : index
    %c0_5 = arith.constant 0 : index
    %c0_6 = arith.constant 0 : index
    %c0_7 = arith.constant 0 : index
    %6 = vector.load %arg3[%c0_4, %c0_5, %c0_6, %c0_7] : memref<1x8x8x128xbf16, #tpu.memory_space<vmem>>, vector<1x8x8x128xbf16>
    %7 = vector.shape_cast %6 : vector<1x8x8x128xbf16> to vector<8x8x128xbf16>
    %8 = vector.shape_cast %5 : vector<8x8x128xbf16> to vector<1x8x8x128xbf16>
    tpu.vector_store %arg3[%c0_4, %c0_5, %c0_6, %c0_7], %8 {strides = array<i32>} : memref<1x8x8x128xbf16, #tpu.memory_space<vmem>>, vector<1x8x8x128xbf16>,
    return
  }
  func.func @transform_0(%arg0: i32, %arg1: i32) -> (i32, i32, i32, i32) {
    %c0_i32 = arith.constant 0 : i32
    %c0_i32_0 = arith.constant 0 : i32
    %c0_i32_1 = arith.constant 0 : i32
    return %arg0, %arg1, %c0_i32, %c0_i32_0 : i32, i32, i32, i32
  }
  func.func @transform_1(%arg0: i32, %arg1: i32) -> (i32, i32, i32, i32) {
    %c0_i32 = arith.constant 0 : i32
    %c0_i32_0 = arith.constant 0 : i32
    %c0_i32_1 = arith.constant 0 : i32
    return %arg0, %arg1, %c0_i32, %c0_i32_0 : i32, i32, i32, i32
  }
}

module attributes {stable_mosaic.version = 11 : i64} {
  func.func @kernel(%arg0: i32, %arg1: i32, %arg2: i32, %arg3: memref<2x8x8x128xbf16, #tpu.memory_space<any>>, %arg4: memref<3x384x128xbf16, #tpu.memory_space<vmem>>, %arg5: memref<1x128xf32, #tpu.memory_space<vmem>>, %arg6: memref<1x128xf32, #tpu.memory_space<vmem>>, %arg7: memref<1x8x8x128xbf16, #tpu.memory_space<vmem>>, %arg8: memref<1x1x2x128xf32, #tpu.memory_space<vmem>>, %arg9: memref<2x10x8x128xbf16, #tpu.memory_space<vmem>>, %arg10: memref<2x3x!tpu.dma_semaphore, #tpu.memory_space<semaphore_mem>>) attributes {dimension_semantics = [#tpu.dimension_semantics<parallel>, #tpu.dimension_semantics<parallel>, #tpu.dimension_semantics<arbitrary>], iteration_bounds = array<i64: 2, 1, 1>, scalar_prefetch = 0 : i64, scratch_operands = 2 : i64, tpu.core_type = #tpu.core_type<tc>, window_params = [{}, {pipeline_mode = #tpu.pipeline_mode<synchronous>, transform_indices = @transform_1, window_bounds = array<i64: 3, 384, 128>}, {pipeline_mode = #tpu.pipeline_mode<synchronous>, transform_indices = @transform_2, window_bounds = array<i64: 1, 128>}, {pipeline_mode = #tpu.pipeline_mode<synchronous>, transform_indices = @transform_3, window_bounds = array<i64: 1, 128>}, {transform_indices = @transform_4, window_bounds = array<i64: 1, 8, 8, 128>}, {transform_indices = @transform_5, window_bounds = array<i64: 1, 1, 2, 128>}]} {
    %c1_i32 = arith.constant 1 : i32
    %0 = arith.muli %arg1, %c1_i32 : i32
    %1 = arith.addi %0, %arg2 : i32
    %c8_i32 = arith.constant 8 : i32
    %2 = arith.muli %1, %c8_i32 : i32
    %c2_i32 = arith.constant 2 : i32
    %c0_i32 = arith.constant 0 : i32
    %3 = arith.cmpi eq, %c2_i32, %c0_i32 : i32
    %c1_i32_0 = arith.constant 1 : i32
    %4 = arith.select %3, %c1_i32_0, %c2_i32 : i32
    %5 = arith.remsi %arg2, %4 : i32
    %c0_i32_1 = arith.constant 0 : i32
    %6 = arith.cmpi ne, %5, %c0_i32_1 : i32
    %c0_i32_2 = arith.constant 0 : i32
    %7 = arith.cmpi slt, %5, %c0_i32_2 : i32
    %c0_i32_3 = arith.constant 0 : i32
    %8 = arith.cmpi slt, %4, %c0_i32_3 : i32
    %9 = arith.xori %7, %8 : i1
    %10 = arith.andi %9, %6 : i1
    %11 = arith.addi %5, %4 : i32
    %12 = arith.select %10, %11, %5 : i32
    %c0_i32_4 = arith.constant 0 : i32
    %13 = arith.cmpi eq, %arg2, %c0_i32_4 : i32
    %14 = arith.extui %13 : i1 to i32
    %c0_i32_5 = arith.constant 0 : i32
    %15 = arith.cmpi ne, %14, %c0_i32_5 : i32
    scf.if %15 {
      %c0_i32_63 = arith.constant 0 : i32
      %115 = arith.minsi %2, %c0_i32_63 : i32
      %c1_i32_64 = arith.constant 1 : i32
      %116 = arith.subi %115, %c1_i32_64 : i32
      %c0_i32_65 = arith.constant 0 : i32
      %117 = arith.maxsi %116, %c0_i32_65 : i32
      %c8_i32_66 = arith.constant 8 : i32
      %118 = arith.addi %115, %c8_i32_66 : i32
      %c7_i32_67 = arith.constant 7 : i32
      %119 = arith.minsi %118, %c7_i32_67 : i32
      %c0_i32_68 = arith.constant 0 : i32
      %c0_i32_69 = arith.constant 0 : i32
      %c0_i32_70 = arith.constant 0 : i32
      %120 = tpu.memref_slice %arg3[%arg0, %115, %c0_i32_69, %c0_i32_70] : memref<2x8x8x128xbf16, #tpu.memory_space<any>> -> memref<1x8x8x128xbf16, #tpu.memory_space<any>>
      %121 = tpu.memref_squeeze %120 : memref<1x8x8x128xbf16, #tpu.memory_space<any>> -> memref<8x8x128xbf16, #tpu.memory_space<any>>
      %c1_i32_71 = arith.constant 1 : i32
      %c0_i32_72 = arith.constant 0 : i32
      %c0_i32_73 = arith.constant 0 : i32
      %122 = tpu.memref_slice %arg9[%12, %c1_i32_71, %c0_i32_72, %c0_i32_73] : memref<2x10x8x128xbf16, #tpu.memory_space<vmem>> -> memref<1x8x8x128xbf16, #tpu.memory_space<vmem>>
      %123 = tpu.memref_squeeze %122 : memref<1x8x8x128xbf16, #tpu.memory_space<vmem>> -> memref<8x8x128xbf16, #tpu.memory_space<vmem>>
      %124 = tpu.memref_slice %arg10[%12, %c0_i32_68] : memref<2x3x!tpu.dma_semaphore, #tpu.memory_space<semaphore_mem>> -> memref<1x1x!tpu.dma_semaphore, #tpu.memory_space<semaphore_mem>>
      %125 = tpu.memref_squeeze %124 : memref<1x1x!tpu.dma_semaphore, #tpu.memory_space<semaphore_mem>> -> memref<!tpu.dma_semaphore, #tpu.memory_space<semaphore_mem>>
      tpu.enqueue_dma source(%121 : memref<8x8x128xbf16, #tpu.memory_space<any>>) target(%123 : memref<8x8x128xbf16, #tpu.memory_space<vmem>>) target_semaphore(%125 : memref<!tpu.dma_semaphore, #tpu.memory_space<semaphore_mem>>)
      %c1_i32_74 = arith.constant 1 : i32
      %c0_i32_75 = arith.constant 0 : i32
      %c0_i32_76 = arith.constant 0 : i32
      %126 = tpu.memref_slice %arg3[%arg0, %117, %c0_i32_75, %c0_i32_76] : memref<2x8x8x128xbf16, #tpu.memory_space<any>> -> memref<1x1x8x128xbf16, #tpu.memory_space<any>>
      %127 = tpu.memref_squeeze %126 : memref<1x1x8x128xbf16, #tpu.memory_space<any>> -> memref<1x8x128xbf16, #tpu.memory_space<any>>
      %c0_i32_77 = arith.constant 0 : i32
      %c0_i32_78 = arith.constant 0 : i32
      %c0_i32_79 = arith.constant 0 : i32
      %128 = tpu.memref_slice %arg9[%12, %c0_i32_77, %c0_i32_78, %c0_i32_79] : memref<2x10x8x128xbf16, #tpu.memory_space<vmem>> -> memref<1x1x8x128xbf16, #tpu.memory_space<vmem>>
      %129 = tpu.memref_squeeze %128 : memref<1x1x8x128xbf16, #tpu.memory_space<vmem>> -> memref<1x8x128xbf16, #tpu.memory_space<vmem>>
      %130 = tpu.memref_slice %arg10[%12, %c1_i32_74] : memref<2x3x!tpu.dma_semaphore, #tpu.memory_space<semaphore_mem>> -> memref<1x1x!tpu.dma_semaphore, #tpu.memory_space<semaphore_mem>>
      %131 = tpu.memref_squeeze %130 : memref<1x1x!tpu.dma_semaphore, #tpu.memory_space<semaphore_mem>> -> memref<!tpu.dma_semaphore, #tpu.memory_space<semaphore_mem>>
      tpu.enqueue_dma source(%127 : memref<1x8x128xbf16, #tpu.memory_space<any>>) target(%129 : memref<1x8x128xbf16, #tpu.memory_space<vmem>>) target_semaphore(%131 : memref<!tpu.dma_semaphore, #tpu.memory_space<semaphore_mem>>)
      %c2_i32_80 = arith.constant 2 : i32
      %c0_i32_81 = arith.constant 0 : i32
      %c0_i32_82 = arith.constant 0 : i32
      %132 = tpu.memref_slice %arg3[%arg0, %119, %c0_i32_81, %c0_i32_82] : memref<2x8x8x128xbf16, #tpu.memory_space<any>> -> memref<1x1x8x128xbf16, #tpu.memory_space<any>>
      %133 = tpu.memref_squeeze %132 : memref<1x1x8x128xbf16, #tpu.memory_space<any>> -> memref<1x8x128xbf16, #tpu.memory_space<any>>
      %c9_i32_83 = arith.constant 9 : i32
      %c0_i32_84 = arith.constant 0 : i32
      %c0_i32_85 = arith.constant 0 : i32
      %134 = tpu.memref_slice %arg9[%12, %c9_i32_83, %c0_i32_84, %c0_i32_85] : memref<2x10x8x128xbf16, #tpu.memory_space<vmem>> -> memref<1x1x8x128xbf16, #tpu.memory_space<vmem>>
      %135 = tpu.memref_squeeze %134 : memref<1x1x8x128xbf16, #tpu.memory_space<vmem>> -> memref<1x8x128xbf16, #tpu.memory_space<vmem>>
      %136 = tpu.memref_slice %arg10[%12, %c2_i32_80] : memref<2x3x!tpu.dma_semaphore, #tpu.memory_space<semaphore_mem>> -> memref<1x1x!tpu.dma_semaphore, #tpu.memory_space<semaphore_mem>>
      %137 = tpu.memref_squeeze %136 : memref<1x1x!tpu.dma_semaphore, #tpu.memory_space<semaphore_mem>> -> memref<!tpu.dma_semaphore, #tpu.memory_space<semaphore_mem>>
      tpu.enqueue_dma source(%133 : memref<1x8x128xbf16, #tpu.memory_space<any>>) target(%135 : memref<1x8x128xbf16, #tpu.memory_space<vmem>>) target_semaphore(%137 : memref<!tpu.dma_semaphore, #tpu.memory_space<semaphore_mem>>)
    } else {
    }
    %c1_i32_6 = arith.constant 1 : i32
    %16 = arith.addi %arg2, %c1_i32_6 : i32
    %c1_i32_7 = arith.constant 1 : i32
    %17 = arith.cmpi slt, %16, %c1_i32_7 : i32
    %18 = arith.extui %17 : i1 to i32
    %c0_i32_8 = arith.constant 0 : i32
    %19 = arith.cmpi ne, %18, %c0_i32_8 : i32
    scf.if %19 {
      %c8_i32_63 = arith.constant 8 : i32
      %115 = arith.addi %2, %c8_i32_63 : i32
      %c1_i32_64 = arith.constant 1 : i32
      %116 = arith.subi %c1_i32_64, %12 : i32
      %c0_i32_65 = arith.constant 0 : i32
      %117 = arith.minsi %115, %c0_i32_65 : i32
      %c1_i32_66 = arith.constant 1 : i32
      %118 = arith.subi %117, %c1_i32_66 : i32
      %c0_i32_67 = arith.constant 0 : i32
      %119 = arith.maxsi %118, %c0_i32_67 : i32
      %c8_i32_68 = arith.constant 8 : i32
      %120 = arith.addi %117, %c8_i32_68 : i32
      %c7_i32_69 = arith.constant 7 : i32
      %121 = arith.minsi %120, %c7_i32_69 : i32
      %c0_i32_70 = arith.constant 0 : i32
      %c0_i32_71 = arith.constant 0 : i32
      %c0_i32_72 = arith.constant 0 : i32
      %122 = tpu.memref_slice %arg3[%arg0, %117, %c0_i32_71, %c0_i32_72] : memref<2x8x8x128xbf16, #tpu.memory_space<any>> -> memref<1x8x8x128xbf16, #tpu.memory_space<any>>
      %123 = tpu.memref_squeeze %122 : memref<1x8x8x128xbf16, #tpu.memory_space<any>> -> memref<8x8x128xbf16, #tpu.memory_space<any>>
      %c1_i32_73 = arith.constant 1 : i32
      %c0_i32_74 = arith.constant 0 : i32
      %c0_i32_75 = arith.constant 0 : i32
      %124 = tpu.memref_slice %arg9[%116, %c1_i32_73, %c0_i32_74, %c0_i32_75] : memref<2x10x8x128xbf16, #tpu.memory_space<vmem>> -> memref<1x8x8x128xbf16, #tpu.memory_space<vmem>>
      %125 = tpu.memref_squeeze %124 : memref<1x8x8x128xbf16, #tpu.memory_space<vmem>> -> memref<8x8x128xbf16, #tpu.memory_space<vmem>>
      %126 = tpu.memref_slice %arg10[%116, %c0_i32_70] : memref<2x3x!tpu.dma_semaphore, #tpu.memory_space<semaphore_mem>> -> memref<1x1x!tpu.dma_semaphore, #tpu.memory_space<semaphore_mem>>
      %127 = tpu.memref_squeeze %126 : memref<1x1x!tpu.dma_semaphore, #tpu.memory_space<semaphore_mem>> -> memref<!tpu.dma_semaphore, #tpu.memory_space<semaphore_mem>>
      tpu.enqueue_dma source(%123 : memref<8x8x128xbf16, #tpu.memory_space<any>>) target(%125 : memref<8x8x128xbf16, #tpu.memory_space<vmem>>) target_semaphore(%127 : memref<!tpu.dma_semaphore, #tpu.memory_space<semaphore_mem>>)
      %c1_i32_76 = arith.constant 1 : i32
      %c0_i32_77 = arith.constant 0 : i32
      %c0_i32_78 = arith.constant 0 : i32
      %128 = tpu.memref_slice %arg3[%arg0, %119, %c0_i32_77, %c0_i32_78] : memref<2x8x8x128xbf16, #tpu.memory_space<any>> -> memref<1x1x8x128xbf16, #tpu.memory_space<any>>
      %129 = tpu.memref_squeeze %128 : memref<1x1x8x128xbf16, #tpu.memory_space<any>> -> memref<1x8x128xbf16, #tpu.memory_space<any>>
      %c0_i32_79 = arith.constant 0 : i32
      %c0_i32_80 = arith.constant 0 : i32
      %c0_i32_81 = arith.constant 0 : i32
      %130 = tpu.memref_slice %arg9[%116, %c0_i32_79, %c0_i32_80, %c0_i32_81] : memref<2x10x8x128xbf16, #tpu.memory_space<vmem>> -> memref<1x1x8x128xbf16, #tpu.memory_space<vmem>>
      %131 = tpu.memref_squeeze %130 : memref<1x1x8x128xbf16, #tpu.memory_space<vmem>> -> memref<1x8x128xbf16, #tpu.memory_space<vmem>>
      %132 = tpu.memref_slice %arg10[%116, %c1_i32_76] : memref<2x3x!tpu.dma_semaphore, #tpu.memory_space<semaphore_mem>> -> memref<1x1x!tpu.dma_semaphore, #tpu.memory_space<semaphore_mem>>
      %133 = tpu.memref_squeeze %132 : memref<1x1x!tpu.dma_semaphore, #tpu.memory_space<semaphore_mem>> -> memref<!tpu.dma_semaphore, #tpu.memory_space<semaphore_mem>>
      tpu.enqueue_dma source(%129 : memref<1x8x128xbf16, #tpu.memory_space<any>>) target(%131 : memref<1x8x128xbf16, #tpu.memory_space<vmem>>) target_semaphore(%133 : memref<!tpu.dma_semaphore, #tpu.memory_space<semaphore_mem>>)
      %c2_i32_82 = arith.constant 2 : i32
      %c0_i32_83 = arith.constant 0 : i32
      %c0_i32_84 = arith.constant 0 : i32
      %134 = tpu.memref_slice %arg3[%arg0, %121, %c0_i32_83, %c0_i32_84] : memref<2x8x8x128xbf16, #tpu.memory_space<any>> -> memref<1x1x8x128xbf16, #tpu.memory_space<any>>
      %135 = tpu.memref_squeeze %134 : memref<1x1x8x128xbf16, #tpu.memory_space<any>> -> memref<1x8x128xbf16, #tpu.memory_space<any>>
      %c9_i32_85 = arith.constant 9 : i32
      %c0_i32_86 = arith.constant 0 : i32
      %c0_i32_87 = arith.constant 0 : i32
      %136 = tpu.memref_slice %arg9[%116, %c9_i32_85, %c0_i32_86, %c0_i32_87] : memref<2x10x8x128xbf16, #tpu.memory_space<vmem>> -> memref<1x1x8x128xbf16, #tpu.memory_space<vmem>>
      %137 = tpu.memref_squeeze %136 : memref<1x1x8x128xbf16, #tpu.memory_space<vmem>> -> memref<1x8x128xbf16, #tpu.memory_space<vmem>>
      %138 = tpu.memref_slice %arg10[%116, %c2_i32_82] : memref<2x3x!tpu.dma_semaphore, #tpu.memory_space<semaphore_mem>> -> memref<1x1x!tpu.dma_semaphore, #tpu.memory_space<semaphore_mem>>
      %139 = tpu.memref_squeeze %138 : memref<1x1x!tpu.dma_semaphore, #tpu.memory_space<semaphore_mem>> -> memref<!tpu.dma_semaphore, #tpu.memory_space<semaphore_mem>>
      tpu.enqueue_dma source(%135 : memref<1x8x128xbf16, #tpu.memory_space<any>>) target(%137 : memref<1x8x128xbf16, #tpu.memory_space<vmem>>) target_semaphore(%139 : memref<!tpu.dma_semaphore, #tpu.memory_space<semaphore_mem>>)
    } else {
    }
    %c0_i32_9 = arith.constant 0 : i32
    %20 = arith.minsi %2, %c0_i32_9 : i32
    %c1_i32_10 = arith.constant 1 : i32
    %21 = arith.subi %20, %c1_i32_10 : i32
    %c0_i32_11 = arith.constant 0 : i32
    %22 = arith.maxsi %21, %c0_i32_11 : i32
    %c8_i32_12 = arith.constant 8 : i32
    %23 = arith.addi %20, %c8_i32_12 : i32
    %c7_i32 = arith.constant 7 : i32
    %24 = arith.minsi %23, %c7_i32 : i32
    %c0_i32_13 = arith.constant 0 : i32
    %c0_i32_14 = arith.constant 0 : i32
    %c0_i32_15 = arith.constant 0 : i32
    %25 = tpu.memref_slice %arg3[%arg0, %20, %c0_i32_14, %c0_i32_15] : memref<2x8x8x128xbf16, #tpu.memory_space<any>> -> memref<1x8x8x128xbf16, #tpu.memory_space<any>>
    %26 = tpu.memref_squeeze %25 : memref<1x8x8x128xbf16, #tpu.memory_space<any>> -> memref<8x8x128xbf16, #tpu.memory_space<any>>
    %c1_i32_16 = arith.constant 1 : i32
    %c0_i32_17 = arith.constant 0 : i32
    %c0_i32_18 = arith.constant 0 : i32
    %27 = tpu.memref_slice %arg9[%12, %c1_i32_16, %c0_i32_17, %c0_i32_18] : memref<2x10x8x128xbf16, #tpu.memory_space<vmem>> -> memref<1x8x8x128xbf16, #tpu.memory_space<vmem>>
    %28 = tpu.memref_squeeze %27 : memref<1x8x8x128xbf16, #tpu.memory_space<vmem>> -> memref<8x8x128xbf16, #tpu.memory_space<vmem>>
    %29 = tpu.memref_slice %arg10[%12, %c0_i32_13] : memref<2x3x!tpu.dma_semaphore, #tpu.memory_space<semaphore_mem>> -> memref<1x1x!tpu.dma_semaphore, #tpu.memory_space<semaphore_mem>>
    %30 = tpu.memref_squeeze %29 : memref<1x1x!tpu.dma_semaphore, #tpu.memory_space<semaphore_mem>> -> memref<!tpu.dma_semaphore, #tpu.memory_space<semaphore_mem>>
    tpu.wait_dma2 semaphore(%30 : memref<!tpu.dma_semaphore, #tpu.memory_space<semaphore_mem>>) src(%26 : memref<8x8x128xbf16, #tpu.memory_space<any>>) dst(%28 : memref<8x8x128xbf16, #tpu.memory_space<vmem>>)
    %c1_i32_19 = arith.constant 1 : i32
    %c0_i32_20 = arith.constant 0 : i32
    %c0_i32_21 = arith.constant 0 : i32
    %31 = tpu.memref_slice %arg3[%arg0, %22, %c0_i32_20, %c0_i32_21] : memref<2x8x8x128xbf16, #tpu.memory_space<any>> -> memref<1x1x8x128xbf16, #tpu.memory_space<any>>
    %32 = tpu.memref_squeeze %31 : memref<1x1x8x128xbf16, #tpu.memory_space<any>> -> memref<1x8x128xbf16, #tpu.memory_space<any>>
    %c0_i32_22 = arith.constant 0 : i32
    %c0_i32_23 = arith.constant 0 : i32
    %c0_i32_24 = arith.constant 0 : i32
    %33 = tpu.memref_slice %arg9[%12, %c0_i32_22, %c0_i32_23, %c0_i32_24] : memref<2x10x8x128xbf16, #tpu.memory_space<vmem>> -> memref<1x1x8x128xbf16, #tpu.memory_space<vmem>>
    %34 = tpu.memref_squeeze %33 : memref<1x1x8x128xbf16, #tpu.memory_space<vmem>> -> memref<1x8x128xbf16, #tpu.memory_space<vmem>>
    %35 = tpu.memref_slice %arg10[%12, %c1_i32_19] : memref<2x3x!tpu.dma_semaphore, #tpu.memory_space<semaphore_mem>> -> memref<1x1x!tpu.dma_semaphore, #tpu.memory_space<semaphore_mem>>
    %36 = tpu.memref_squeeze %35 : memref<1x1x!tpu.dma_semaphore, #tpu.memory_space<semaphore_mem>> -> memref<!tpu.dma_semaphore, #tpu.memory_space<semaphore_mem>>
    tpu.wait_dma2 semaphore(%36 : memref<!tpu.dma_semaphore, #tpu.memory_space<semaphore_mem>>) src(%32 : memref<1x8x128xbf16, #tpu.memory_space<any>>) dst(%34 : memref<1x8x128xbf16, #tpu.memory_space<vmem>>)
    %c2_i32_25 = arith.constant 2 : i32
    %c0_i32_26 = arith.constant 0 : i32
    %c0_i32_27 = arith.constant 0 : i32
    %37 = tpu.memref_slice %arg3[%arg0, %24, %c0_i32_26, %c0_i32_27] : memref<2x8x8x128xbf16, #tpu.memory_space<any>> -> memref<1x1x8x128xbf16, #tpu.memory_space<any>>
    %38 = tpu.memref_squeeze %37 : memref<1x1x8x128xbf16, #tpu.memory_space<any>> -> memref<1x8x128xbf16, #tpu.memory_space<any>>
    %c9_i32 = arith.constant 9 : i32
    %c0_i32_28 = arith.constant 0 : i32
    %c0_i32_29 = arith.constant 0 : i32
    %39 = tpu.memref_slice %arg9[%12, %c9_i32, %c0_i32_28, %c0_i32_29] : memref<2x10x8x128xbf16, #tpu.memory_space<vmem>> -> memref<1x1x8x128xbf16, #tpu.memory_space<vmem>>
    %40 = tpu.memref_squeeze %39 : memref<1x1x8x128xbf16, #tpu.memory_space<vmem>> -> memref<1x8x128xbf16, #tpu.memory_space<vmem>>
    %41 = tpu.memref_slice %arg10[%12, %c2_i32_25] : memref<2x3x!tpu.dma_semaphore, #tpu.memory_space<semaphore_mem>> -> memref<1x1x!tpu.dma_semaphore, #tpu.memory_space<semaphore_mem>>
    %42 = tpu.memref_squeeze %41 : memref<1x1x!tpu.dma_semaphore, #tpu.memory_space<semaphore_mem>> -> memref<!tpu.dma_semaphore, #tpu.memory_space<semaphore_mem>>
    tpu.wait_dma2 semaphore(%42 : memref<!tpu.dma_semaphore, #tpu.memory_space<semaphore_mem>>) src(%38 : memref<1x8x128xbf16, #tpu.memory_space<any>>) dst(%40 : memref<1x8x128xbf16, #tpu.memory_space<vmem>>)
    %43 = arith.index_cast %12 : i32 to index
    %c0 = arith.constant 0 : index
    %c0_30 = arith.constant 0 : index
    %c0_31 = arith.constant 0 : index
    %44 = vector.load %arg9[%43, %c0, %c0_30, %c0_31] : memref<2x10x8x128xbf16, #tpu.memory_space<vmem>>, vector<1x10x8x128xbf16>
    %45 = vector.shape_cast %44 : vector<1x10x8x128xbf16> to vector<10x8x128xbf16>
    %46 = arith.extf %45 : vector<10x8x128xbf16> to vector<10x8x128xf32>
    %47 = tpu.iota {dimensions = array<i32: 0>} : vector<10x1x1xi32>
    %c0_i32_32 = arith.constant 0 : i32
    %48 = vector.broadcast %c0_i32_32 : i32 to vector<10x1x1xi32>
    %49 = arith.cmpi eq, %47, %48 : vector<10x1x1xi32>
    %c0_i32_33 = arith.constant 0 : i32
    %50 = arith.cmpi eq, %1, %c0_i32_33 : i32
    %51 = vector.broadcast %50 : i1 to vector<10x1x1xi1>
    %52 = arith.andi %49, %51 : vector<10x1x1xi1>
    %c9_i32_34 = arith.constant 9 : i32
    %53 = vector.broadcast %c9_i32_34 : i32 to vector<10x1x1xi32>
    %54 = arith.cmpi eq, %47, %53 : vector<10x1x1xi32>
    %c0_i32_35 = arith.constant 0 : i32
    %55 = arith.cmpi eq, %1, %c0_i32_35 : i32
    %56 = vector.broadcast %55 : i1 to vector<10x1x1xi1>
    %57 = arith.andi %54, %56 : vector<10x1x1xi1>
    %58 = arith.ori %52, %57 : vector<10x1x1xi1>
    %cst = arith.constant 0.000000e+00 : f32
    %59 = vector.shape_cast %58 : vector<10x1x1xi1> to vector<10x1x1xi1>
    %60 = vector.broadcast %59 : vector<10x1x1xi1> to vector<10x8x128xi1>
    %61 = vector.broadcast %cst : f32 to vector<10x8x128xf32>
    %62 = arith.select %60, %61, %46 : vector<10x8x128xi1>, vector<10x8x128xf32>
    %63 = arith.truncf %62 : vector<10x8x128xf32> to vector<10x8x128xbf16>
    %cst_36 = arith.constant 0.000000e+00 : bf16
    %64 = vector.broadcast %cst_36 : bf16 to vector<10x1x128xbf16>
    %65 = vector.extract_strided_slice %63 {offsets = [0, 0, 0], sizes = [10, 7, 128], strides = [1, 1, 1]} : vector<10x8x128xbf16> to vector<10x7x128xbf16>
    %66 = tpu.concatenate %64, %65 in 1 : vector<10x1x128xbf16>, vector<10x7x128xbf16> -> vector<10x8x128xbf16>
    %67 = vector.extract_strided_slice %63 {offsets = [0, 1, 0], sizes = [10, 7, 128], strides = [1, 1, 1]} : vector<10x8x128xbf16> to vector<10x7x128xbf16>
    %68 = tpu.concatenate %67, %64 in 1 : vector<10x7x128xbf16>, vector<10x1x128xbf16> -> vector<10x8x128xbf16>
    %69 = vector.extract_strided_slice %66 {offsets = [0, 0, 0], sizes = [8, 8, 128], strides = [1, 1, 1]} : vector<10x8x128xbf16> to vector<8x8x128xbf16>
    %70 = vector.extract_strided_slice %66 {offsets = [1, 0, 0], sizes = [8, 8, 128], strides = [1, 1, 1]} : vector<10x8x128xbf16> to vector<8x8x128xbf16>
    %71 = vector.extract_strided_slice %66 {offsets = [2, 0, 0], sizes = [8, 8, 128], strides = [1, 1, 1]} : vector<10x8x128xbf16> to vector<8x8x128xbf16>
    %72 = tpu.concatenate %69, %70, %71 in 2 : vector<8x8x128xbf16>, vector<8x8x128xbf16>, vector<8x8x128xbf16> -> vector<8x8x384xbf16>
    %73 = vector.shape_cast %72 : vector<8x8x384xbf16> to vector<64x384xbf16>
    %c0_37 = arith.constant 0 : index
    %c0_38 = arith.constant 0 : index
    %c0_39 = arith.constant 0 : index
    %74 = vector.load %arg4[%c0_37, %c0_38, %c0_39] : memref<3x384x128xbf16, #tpu.memory_space<vmem>>, vector<1x384x128xbf16>
    %75 = vector.shape_cast %74 : vector<1x384x128xbf16> to vector<384x128xbf16>
    %cst_40 = arith.constant dense<0.000000e+00> : vector<64x128xf32>
    %76 = tpu.matmul %73, %75, %cst_40 {dimension_numbers = #tpu.dot_dimension_numbers<[1], [0], [0], [1], [0, 0, 1, 1], [], []>} : vector<64x384xbf16>, vector<384x128xbf16>, vector<64x128xf32> -> vector<64x128xf32>
    %77 = vector.extract_strided_slice %63 {offsets = [0, 0, 0], sizes = [8, 8, 128], strides = [1, 1, 1]} : vector<10x8x128xbf16> to vector<8x8x128xbf16>
    %78 = vector.extract_strided_slice %63 {offsets = [1, 0, 0], sizes = [8, 8, 128], strides = [1, 1, 1]} : vector<10x8x128xbf16> to vector<8x8x128xbf16>
    %79 = vector.extract_strided_slice %63 {offsets = [2, 0, 0], sizes = [8, 8, 128], strides = [1, 1, 1]} : vector<10x8x128xbf16> to vector<8x8x128xbf16>
    %80 = tpu.concatenate %77, %78, %79 in 2 : vector<8x8x128xbf16>, vector<8x8x128xbf16>, vector<8x8x128xbf16> -> vector<8x8x384xbf16>
    %81 = vector.shape_cast %80 : vector<8x8x384xbf16> to vector<64x384xbf16>
    %c1 = arith.constant 1 : index
    %c0_41 = arith.constant 0 : index
    %c0_42 = arith.constant 0 : index
    %82 = vector.load %arg4[%c1, %c0_41, %c0_42] : memref<3x384x128xbf16, #tpu.memory_space<vmem>>, vector<1x384x128xbf16>
    %83 = vector.shape_cast %82 : vector<1x384x128xbf16> to vector<384x128xbf16>
    %cst_43 = arith.constant dense<0.000000e+00> : vector<64x128xf32>
    %84 = tpu.matmul %81, %83, %cst_43 {dimension_numbers = #tpu.dot_dimension_numbers<[1], [0], [0], [1], [0, 0, 1, 1], [], []>} : vector<64x384xbf16>, vector<384x128xbf16>, vector<64x128xf32> -> vector<64x128xf32>
    %85 = arith.addf %76, %84 : vector<64x128xf32>
    %86 = vector.extract_strided_slice %68 {offsets = [0, 0, 0], sizes = [8, 8, 128], strides = [1, 1, 1]} : vector<10x8x128xbf16> to vector<8x8x128xbf16>
    %87 = vector.extract_strided_slice %68 {offsets = [1, 0, 0], sizes = [8, 8, 128], strides = [1, 1, 1]} : vector<10x8x128xbf16> to vector<8x8x128xbf16>
    %88 = vector.extract_strided_slice %68 {offsets = [2, 0, 0], sizes = [8, 8, 128], strides = [1, 1, 1]} : vector<10x8x128xbf16> to vector<8x8x128xbf16>
    %89 = tpu.concatenate %86, %87, %88 in 2 : vector<8x8x128xbf16>, vector<8x8x128xbf16>, vector<8x8x128xbf16> -> vector<8x8x384xbf16>
    %90 = vector.shape_cast %89 : vector<8x8x384xbf16> to vector<64x384xbf16>
    %c2 = arith.constant 2 : index
    %c0_44 = arith.constant 0 : index
    %c0_45 = arith.constant 0 : index
    %91 = vector.load %arg4[%c2, %c0_44, %c0_45] : memref<3x384x128xbf16, #tpu.memory_space<vmem>>, vector<1x384x128xbf16>
    %92 = vector.shape_cast %91 : vector<1x384x128xbf16> to vector<384x128xbf16>
    %cst_46 = arith.constant dense<0.000000e+00> : vector<64x128xf32>
    %93 = tpu.matmul %90, %92, %cst_46 {dimension_numbers = #tpu.dot_dimension_numbers<[1], [0], [0], [1], [0, 0, 1, 1], [], []>} : vector<64x384xbf16>, vector<384x128xbf16>, vector<64x128xf32> -> vector<64x128xf32>
    %94 = arith.addf %85, %93 : vector<64x128xf32>
    %95 = vector.shape_cast %94 : vector<64x128xf32> to vector<8x8x128xf32>
    %96 = arith.truncf %95 : vector<8x8x128xf32> to vector<8x8x128xbf16>
    %c0_47 = arith.constant 0 : index
    %c0_48 = arith.constant 0 : index
    %c0_49 = arith.constant 0 : index
    %c0_50 = arith.constant 0 : index
    %97 = vector.load %arg7[%c0_47, %c0_48, %c0_49, %c0_50] : memref<1x8x8x128xbf16, #tpu.memory_space<vmem>>, vector<1x8x8x128xbf16>
    %98 = vector.shape_cast %97 : vector<1x8x8x128xbf16> to vector<8x8x128xbf16>
    %99 = vector.shape_cast %96 : vector<8x8x128xbf16> to vector<1x8x8x128xbf16>
    tpu.vector_store %arg7[%c0_47, %c0_48, %c0_49, %c0_50], %99 {strides = array<i32>} : memref<1x8x8x128xbf16, #tpu.memory_space<vmem>>, vector<1x8x8x128xbf16>,
    %c0_i32_51 = arith.constant 0 : i32
    %100 = arith.cmpi eq, %arg2, %c0_i32_51 : i32
    %101 = arith.extui %100 : i1 to i32
    %c0_i32_52 = arith.constant 0 : i32
    %102 = arith.cmpi ne, %101, %c0_i32_52 : i32
    scf.if %102 {
      %cst_63 = arith.constant 0.000000e+00 : f32
      %115 = vector.broadcast %cst_63 : f32 to vector<2x128xf32>
      %c0_64 = arith.constant 0 : index
      %c0_65 = arith.constant 0 : index
      %c0_66 = arith.constant 0 : index
      %c0_67 = arith.constant 0 : index
      %116 = vector.load %arg8[%c0_64, %c0_65, %c0_66, %c0_67] : memref<1x1x2x128xf32, #tpu.memory_space<vmem>>, vector<1x1x2x128xf32>
      %117 = vector.shape_cast %116 : vector<1x1x2x128xf32> to vector<2x128xf32>
      %118 = vector.shape_cast %115 : vector<2x128xf32> to vector<1x1x2x128xf32>
      tpu.vector_store %arg8[%c0_64, %c0_65, %c0_66, %c0_67], %118 {strides = array<i32>} : memref<1x1x2x128xf32, #tpu.memory_space<vmem>>, vector<1x1x2x128xf32>,
    } else {
    }
    %cst_53 = arith.constant dense<0.000000e+00> : vector<128xf32>
    %103 = vector.multi_reduction <add>, %94, %cst_53 [0] : vector<64x128xf32> to vector<128xf32>
    %104 = vector.shape_cast %103 : vector<128xf32> to vector<1x128xf32>
    %105 = arith.mulf %94, %94 : vector<64x128xf32>
    %cst_54 = arith.constant dense<0.000000e+00> : vector<128xf32>
    %106 = vector.multi_reduction <add>, %105, %cst_54 [0] : vector<64x128xf32> to vector<128xf32>
    %107 = vector.shape_cast %106 : vector<128xf32> to vector<1x128xf32>
    %c0_55 = arith.constant 0 : index
    %c0_56 = arith.constant 0 : index
    %c0_57 = arith.constant 0 : index
    %c0_58 = arith.constant 0 : index
    %108 = vector.load %arg8[%c0_55, %c0_56, %c0_57, %c0_58] : memref<1x1x2x128xf32, #tpu.memory_space<vmem>>, vector<1x1x2x128xf32>
    %109 = vector.shape_cast %108 : vector<1x1x2x128xf32> to vector<2x128xf32>
    %110 = tpu.concatenate %104, %107 in 0 : vector<1x128xf32>, vector<1x128xf32> -> vector<2x128xf32>
    %111 = arith.addf %109, %110 : vector<2x128xf32>
    %c0_59 = arith.constant 0 : index
    %c0_60 = arith.constant 0 : index
    %c0_61 = arith.constant 0 : index
    %c0_62 = arith.constant 0 : index
    %112 = vector.load %arg8[%c0_59, %c0_60, %c0_61, %c0_62] : memref<1x1x2x128xf32, #tpu.memory_space<vmem>>, vector<1x1x2x128xf32>
    %113 = vector.shape_cast %112 : vector<1x1x2x128xf32> to vector<2x128xf32>
    %114 = vector.shape_cast %111 : vector<2x128xf32> to vector<1x1x2x128xf32>
    tpu.vector_store %arg8[%c0_59, %c0_60, %c0_61, %c0_62], %114 {strides = array<i32>} : memref<1x1x2x128xf32, #tpu.memory_space<vmem>>, vector<1x1x2x128xf32>,
    return
  }
  func.func @transform_1(%arg0: i32, %arg1: i32, %arg2: i32) -> (i32, i32, i32) {
    %c0_i32 = arith.constant 0 : i32
    %c0_i32_0 = arith.constant 0 : i32
    %c0_i32_1 = arith.constant 0 : i32
    %c0_i32_2 = arith.constant 0 : i32
    return %c0_i32, %c0_i32_0, %c0_i32_1 : i32, i32, i32
  }
  func.func @transform_2(%arg0: i32, %arg1: i32, %arg2: i32) -> (i32, i32) {
    %c0_i32 = arith.constant 0 : i32
    %c0_i32_0 = arith.constant 0 : i32
    %c0_i32_1 = arith.constant 0 : i32
    return %c0_i32, %c0_i32_0 : i32, i32
  }
  func.func @transform_3(%arg0: i32, %arg1: i32, %arg2: i32) -> (i32, i32) {
    %c0_i32 = arith.constant 0 : i32
    %c0_i32_0 = arith.constant 0 : i32
    %c0_i32_1 = arith.constant 0 : i32
    return %c0_i32, %c0_i32_0 : i32, i32
  }
  func.func @transform_4(%arg0: i32, %arg1: i32, %arg2: i32) -> (i32, i32, i32, i32) {
    %c1_i32 = arith.constant 1 : i32
    %0 = arith.muli %arg1, %c1_i32 : i32
    %1 = arith.addi %0, %arg2 : i32
    %c0_i32 = arith.constant 0 : i32
    %c0_i32_0 = arith.constant 0 : i32
    %c0_i32_1 = arith.constant 0 : i32
    return %arg0, %1, %c0_i32, %c0_i32_0 : i32, i32, i32, i32
  }
  func.func @transform_5(%arg0: i32, %arg1: i32, %arg2: i32) -> (i32, i32, i32, i32) {
    %c0_i32 = arith.constant 0 : i32
    %c0_i32_0 = arith.constant 0 : i32
    %c0_i32_1 = arith.constant 0 : i32
    return %arg0, %arg1, %c0_i32, %c0_i32_0 : i32, i32, i32, i32
  }
}

module attributes {stable_mosaic.version = 11 : i64} {
  func.func @kernel(%arg0: i32, %arg1: i32, %arg2: i32, %arg3: memref<2x8x8x128xbf16, #tpu.memory_space<any>>, %arg4: memref<3x384x128xbf16, #tpu.memory_space<vmem>>, %arg5: memref<1x128xf32, #tpu.memory_space<vmem>>, %arg6: memref<1x128xf32, #tpu.memory_space<vmem>>, %arg7: memref<1x8x8x128xbf16, #tpu.memory_space<vmem>>, %arg8: memref<1x1x2x128xf32, #tpu.memory_space<vmem>>, %arg9: memref<2x10x8x128xbf16, #tpu.memory_space<vmem>>, %arg10: memref<2x3x!tpu.dma_semaphore, #tpu.memory_space<semaphore_mem>>) attributes {dimension_semantics = [#tpu.dimension_semantics<parallel>, #tpu.dimension_semantics<parallel>, #tpu.dimension_semantics<arbitrary>], iteration_bounds = array<i64: 2, 1, 1>, scalar_prefetch = 0 : i64, scratch_operands = 2 : i64, tpu.core_type = #tpu.core_type<tc>, window_params = [{}, {pipeline_mode = #tpu.pipeline_mode<synchronous>, transform_indices = @transform_1, window_bounds = array<i64: 3, 384, 128>}, {pipeline_mode = #tpu.pipeline_mode<synchronous>, transform_indices = @transform_2, window_bounds = array<i64: 1, 128>}, {pipeline_mode = #tpu.pipeline_mode<synchronous>, transform_indices = @transform_3, window_bounds = array<i64: 1, 128>}, {transform_indices = @transform_4, window_bounds = array<i64: 1, 8, 8, 128>}, {transform_indices = @transform_5, window_bounds = array<i64: 1, 1, 2, 128>}]} {
    %c1_i32 = arith.constant 1 : i32
    %0 = arith.muli %arg1, %c1_i32 : i32
    %1 = arith.addi %0, %arg2 : i32
    %c8_i32 = arith.constant 8 : i32
    %2 = arith.muli %1, %c8_i32 : i32
    %c2_i32 = arith.constant 2 : i32
    %c0_i32 = arith.constant 0 : i32
    %3 = arith.cmpi eq, %c2_i32, %c0_i32 : i32
    %c1_i32_0 = arith.constant 1 : i32
    %4 = arith.select %3, %c1_i32_0, %c2_i32 : i32
    %5 = arith.remsi %arg2, %4 : i32
    %c0_i32_1 = arith.constant 0 : i32
    %6 = arith.cmpi ne, %5, %c0_i32_1 : i32
    %c0_i32_2 = arith.constant 0 : i32
    %7 = arith.cmpi slt, %5, %c0_i32_2 : i32
    %c0_i32_3 = arith.constant 0 : i32
    %8 = arith.cmpi slt, %4, %c0_i32_3 : i32
    %9 = arith.xori %7, %8 : i1
    %10 = arith.andi %9, %6 : i1
    %11 = arith.addi %5, %4 : i32
    %12 = arith.select %10, %11, %5 : i32
    %c0_i32_4 = arith.constant 0 : i32
    %13 = arith.cmpi eq, %arg2, %c0_i32_4 : i32
    %14 = arith.extui %13 : i1 to i32
    %c0_i32_5 = arith.constant 0 : i32
    %15 = arith.cmpi ne, %14, %c0_i32_5 : i32
    scf.if %15 {
      %c0_i32_68 = arith.constant 0 : i32
      %127 = arith.minsi %2, %c0_i32_68 : i32
      %c1_i32_69 = arith.constant 1 : i32
      %128 = arith.subi %127, %c1_i32_69 : i32
      %c0_i32_70 = arith.constant 0 : i32
      %129 = arith.maxsi %128, %c0_i32_70 : i32
      %c8_i32_71 = arith.constant 8 : i32
      %130 = arith.addi %127, %c8_i32_71 : i32
      %c7_i32_72 = arith.constant 7 : i32
      %131 = arith.minsi %130, %c7_i32_72 : i32
      %c0_i32_73 = arith.constant 0 : i32
      %c0_i32_74 = arith.constant 0 : i32
      %c0_i32_75 = arith.constant 0 : i32
      %132 = tpu.memref_slice %arg3[%arg0, %127, %c0_i32_74, %c0_i32_75] : memref<2x8x8x128xbf16, #tpu.memory_space<any>> -> memref<1x8x8x128xbf16, #tpu.memory_space<any>>
      %133 = tpu.memref_squeeze %132 : memref<1x8x8x128xbf16, #tpu.memory_space<any>> -> memref<8x8x128xbf16, #tpu.memory_space<any>>
      %c1_i32_76 = arith.constant 1 : i32
      %c0_i32_77 = arith.constant 0 : i32
      %c0_i32_78 = arith.constant 0 : i32
      %134 = tpu.memref_slice %arg9[%12, %c1_i32_76, %c0_i32_77, %c0_i32_78] : memref<2x10x8x128xbf16, #tpu.memory_space<vmem>> -> memref<1x8x8x128xbf16, #tpu.memory_space<vmem>>
      %135 = tpu.memref_squeeze %134 : memref<1x8x8x128xbf16, #tpu.memory_space<vmem>> -> memref<8x8x128xbf16, #tpu.memory_space<vmem>>
      %136 = tpu.memref_slice %arg10[%12, %c0_i32_73] : memref<2x3x!tpu.dma_semaphore, #tpu.memory_space<semaphore_mem>> -> memref<1x1x!tpu.dma_semaphore, #tpu.memory_space<semaphore_mem>>
      %137 = tpu.memref_squeeze %136 : memref<1x1x!tpu.dma_semaphore, #tpu.memory_space<semaphore_mem>> -> memref<!tpu.dma_semaphore, #tpu.memory_space<semaphore_mem>>
      tpu.enqueue_dma source(%133 : memref<8x8x128xbf16, #tpu.memory_space<any>>) target(%135 : memref<8x8x128xbf16, #tpu.memory_space<vmem>>) target_semaphore(%137 : memref<!tpu.dma_semaphore, #tpu.memory_space<semaphore_mem>>)
      %c1_i32_79 = arith.constant 1 : i32
      %c0_i32_80 = arith.constant 0 : i32
      %c0_i32_81 = arith.constant 0 : i32
      %138 = tpu.memref_slice %arg3[%arg0, %129, %c0_i32_80, %c0_i32_81] : memref<2x8x8x128xbf16, #tpu.memory_space<any>> -> memref<1x1x8x128xbf16, #tpu.memory_space<any>>
      %139 = tpu.memref_squeeze %138 : memref<1x1x8x128xbf16, #tpu.memory_space<any>> -> memref<1x8x128xbf16, #tpu.memory_space<any>>
      %c0_i32_82 = arith.constant 0 : i32
      %c0_i32_83 = arith.constant 0 : i32
      %c0_i32_84 = arith.constant 0 : i32
      %140 = tpu.memref_slice %arg9[%12, %c0_i32_82, %c0_i32_83, %c0_i32_84] : memref<2x10x8x128xbf16, #tpu.memory_space<vmem>> -> memref<1x1x8x128xbf16, #tpu.memory_space<vmem>>
      %141 = tpu.memref_squeeze %140 : memref<1x1x8x128xbf16, #tpu.memory_space<vmem>> -> memref<1x8x128xbf16, #tpu.memory_space<vmem>>
      %142 = tpu.memref_slice %arg10[%12, %c1_i32_79] : memref<2x3x!tpu.dma_semaphore, #tpu.memory_space<semaphore_mem>> -> memref<1x1x!tpu.dma_semaphore, #tpu.memory_space<semaphore_mem>>
      %143 = tpu.memref_squeeze %142 : memref<1x1x!tpu.dma_semaphore, #tpu.memory_space<semaphore_mem>> -> memref<!tpu.dma_semaphore, #tpu.memory_space<semaphore_mem>>
      tpu.enqueue_dma source(%139 : memref<1x8x128xbf16, #tpu.memory_space<any>>) target(%141 : memref<1x8x128xbf16, #tpu.memory_space<vmem>>) target_semaphore(%143 : memref<!tpu.dma_semaphore, #tpu.memory_space<semaphore_mem>>)
      %c2_i32_85 = arith.constant 2 : i32
      %c0_i32_86 = arith.constant 0 : i32
      %c0_i32_87 = arith.constant 0 : i32
      %144 = tpu.memref_slice %arg3[%arg0, %131, %c0_i32_86, %c0_i32_87] : memref<2x8x8x128xbf16, #tpu.memory_space<any>> -> memref<1x1x8x128xbf16, #tpu.memory_space<any>>
      %145 = tpu.memref_squeeze %144 : memref<1x1x8x128xbf16, #tpu.memory_space<any>> -> memref<1x8x128xbf16, #tpu.memory_space<any>>
      %c9_i32_88 = arith.constant 9 : i32
      %c0_i32_89 = arith.constant 0 : i32
      %c0_i32_90 = arith.constant 0 : i32
      %146 = tpu.memref_slice %arg9[%12, %c9_i32_88, %c0_i32_89, %c0_i32_90] : memref<2x10x8x128xbf16, #tpu.memory_space<vmem>> -> memref<1x1x8x128xbf16, #tpu.memory_space<vmem>>
      %147 = tpu.memref_squeeze %146 : memref<1x1x8x128xbf16, #tpu.memory_space<vmem>> -> memref<1x8x128xbf16, #tpu.memory_space<vmem>>
      %148 = tpu.memref_slice %arg10[%12, %c2_i32_85] : memref<2x3x!tpu.dma_semaphore, #tpu.memory_space<semaphore_mem>> -> memref<1x1x!tpu.dma_semaphore, #tpu.memory_space<semaphore_mem>>
      %149 = tpu.memref_squeeze %148 : memref<1x1x!tpu.dma_semaphore, #tpu.memory_space<semaphore_mem>> -> memref<!tpu.dma_semaphore, #tpu.memory_space<semaphore_mem>>
      tpu.enqueue_dma source(%145 : memref<1x8x128xbf16, #tpu.memory_space<any>>) target(%147 : memref<1x8x128xbf16, #tpu.memory_space<vmem>>) target_semaphore(%149 : memref<!tpu.dma_semaphore, #tpu.memory_space<semaphore_mem>>)
    } else {
    }
    %c1_i32_6 = arith.constant 1 : i32
    %16 = arith.addi %arg2, %c1_i32_6 : i32
    %c1_i32_7 = arith.constant 1 : i32
    %17 = arith.cmpi slt, %16, %c1_i32_7 : i32
    %18 = arith.extui %17 : i1 to i32
    %c0_i32_8 = arith.constant 0 : i32
    %19 = arith.cmpi ne, %18, %c0_i32_8 : i32
    scf.if %19 {
      %c8_i32_68 = arith.constant 8 : i32
      %127 = arith.addi %2, %c8_i32_68 : i32
      %c1_i32_69 = arith.constant 1 : i32
      %128 = arith.subi %c1_i32_69, %12 : i32
      %c0_i32_70 = arith.constant 0 : i32
      %129 = arith.minsi %127, %c0_i32_70 : i32
      %c1_i32_71 = arith.constant 1 : i32
      %130 = arith.subi %129, %c1_i32_71 : i32
      %c0_i32_72 = arith.constant 0 : i32
      %131 = arith.maxsi %130, %c0_i32_72 : i32
      %c8_i32_73 = arith.constant 8 : i32
      %132 = arith.addi %129, %c8_i32_73 : i32
      %c7_i32_74 = arith.constant 7 : i32
      %133 = arith.minsi %132, %c7_i32_74 : i32
      %c0_i32_75 = arith.constant 0 : i32
      %c0_i32_76 = arith.constant 0 : i32
      %c0_i32_77 = arith.constant 0 : i32
      %134 = tpu.memref_slice %arg3[%arg0, %129, %c0_i32_76, %c0_i32_77] : memref<2x8x8x128xbf16, #tpu.memory_space<any>> -> memref<1x8x8x128xbf16, #tpu.memory_space<any>>
      %135 = tpu.memref_squeeze %134 : memref<1x8x8x128xbf16, #tpu.memory_space<any>> -> memref<8x8x128xbf16, #tpu.memory_space<any>>
      %c1_i32_78 = arith.constant 1 : i32
      %c0_i32_79 = arith.constant 0 : i32
      %c0_i32_80 = arith.constant 0 : i32
      %136 = tpu.memref_slice %arg9[%128, %c1_i32_78, %c0_i32_79, %c0_i32_80] : memref<2x10x8x128xbf16, #tpu.memory_space<vmem>> -> memref<1x8x8x128xbf16, #tpu.memory_space<vmem>>
      %137 = tpu.memref_squeeze %136 : memref<1x8x8x128xbf16, #tpu.memory_space<vmem>> -> memref<8x8x128xbf16, #tpu.memory_space<vmem>>
      %138 = tpu.memref_slice %arg10[%128, %c0_i32_75] : memref<2x3x!tpu.dma_semaphore, #tpu.memory_space<semaphore_mem>> -> memref<1x1x!tpu.dma_semaphore, #tpu.memory_space<semaphore_mem>>
      %139 = tpu.memref_squeeze %138 : memref<1x1x!tpu.dma_semaphore, #tpu.memory_space<semaphore_mem>> -> memref<!tpu.dma_semaphore, #tpu.memory_space<semaphore_mem>>
      tpu.enqueue_dma source(%135 : memref<8x8x128xbf16, #tpu.memory_space<any>>) target(%137 : memref<8x8x128xbf16, #tpu.memory_space<vmem>>) target_semaphore(%139 : memref<!tpu.dma_semaphore, #tpu.memory_space<semaphore_mem>>)
      %c1_i32_81 = arith.constant 1 : i32
      %c0_i32_82 = arith.constant 0 : i32
      %c0_i32_83 = arith.constant 0 : i32
      %140 = tpu.memref_slice %arg3[%arg0, %131, %c0_i32_82, %c0_i32_83] : memref<2x8x8x128xbf16, #tpu.memory_space<any>> -> memref<1x1x8x128xbf16, #tpu.memory_space<any>>
      %141 = tpu.memref_squeeze %140 : memref<1x1x8x128xbf16, #tpu.memory_space<any>> -> memref<1x8x128xbf16, #tpu.memory_space<any>>
      %c0_i32_84 = arith.constant 0 : i32
      %c0_i32_85 = arith.constant 0 : i32
      %c0_i32_86 = arith.constant 0 : i32
      %142 = tpu.memref_slice %arg9[%128, %c0_i32_84, %c0_i32_85, %c0_i32_86] : memref<2x10x8x128xbf16, #tpu.memory_space<vmem>> -> memref<1x1x8x128xbf16, #tpu.memory_space<vmem>>
      %143 = tpu.memref_squeeze %142 : memref<1x1x8x128xbf16, #tpu.memory_space<vmem>> -> memref<1x8x128xbf16, #tpu.memory_space<vmem>>
      %144 = tpu.memref_slice %arg10[%128, %c1_i32_81] : memref<2x3x!tpu.dma_semaphore, #tpu.memory_space<semaphore_mem>> -> memref<1x1x!tpu.dma_semaphore, #tpu.memory_space<semaphore_mem>>
      %145 = tpu.memref_squeeze %144 : memref<1x1x!tpu.dma_semaphore, #tpu.memory_space<semaphore_mem>> -> memref<!tpu.dma_semaphore, #tpu.memory_space<semaphore_mem>>
      tpu.enqueue_dma source(%141 : memref<1x8x128xbf16, #tpu.memory_space<any>>) target(%143 : memref<1x8x128xbf16, #tpu.memory_space<vmem>>) target_semaphore(%145 : memref<!tpu.dma_semaphore, #tpu.memory_space<semaphore_mem>>)
      %c2_i32_87 = arith.constant 2 : i32
      %c0_i32_88 = arith.constant 0 : i32
      %c0_i32_89 = arith.constant 0 : i32
      %146 = tpu.memref_slice %arg3[%arg0, %133, %c0_i32_88, %c0_i32_89] : memref<2x8x8x128xbf16, #tpu.memory_space<any>> -> memref<1x1x8x128xbf16, #tpu.memory_space<any>>
      %147 = tpu.memref_squeeze %146 : memref<1x1x8x128xbf16, #tpu.memory_space<any>> -> memref<1x8x128xbf16, #tpu.memory_space<any>>
      %c9_i32_90 = arith.constant 9 : i32
      %c0_i32_91 = arith.constant 0 : i32
      %c0_i32_92 = arith.constant 0 : i32
      %148 = tpu.memref_slice %arg9[%128, %c9_i32_90, %c0_i32_91, %c0_i32_92] : memref<2x10x8x128xbf16, #tpu.memory_space<vmem>> -> memref<1x1x8x128xbf16, #tpu.memory_space<vmem>>
      %149 = tpu.memref_squeeze %148 : memref<1x1x8x128xbf16, #tpu.memory_space<vmem>> -> memref<1x8x128xbf16, #tpu.memory_space<vmem>>
      %150 = tpu.memref_slice %arg10[%128, %c2_i32_87] : memref<2x3x!tpu.dma_semaphore, #tpu.memory_space<semaphore_mem>> -> memref<1x1x!tpu.dma_semaphore, #tpu.memory_space<semaphore_mem>>
      %151 = tpu.memref_squeeze %150 : memref<1x1x!tpu.dma_semaphore, #tpu.memory_space<semaphore_mem>> -> memref<!tpu.dma_semaphore, #tpu.memory_space<semaphore_mem>>
      tpu.enqueue_dma source(%147 : memref<1x8x128xbf16, #tpu.memory_space<any>>) target(%149 : memref<1x8x128xbf16, #tpu.memory_space<vmem>>) target_semaphore(%151 : memref<!tpu.dma_semaphore, #tpu.memory_space<semaphore_mem>>)
    } else {
    }
    %c0_i32_9 = arith.constant 0 : i32
    %20 = arith.minsi %2, %c0_i32_9 : i32
    %c1_i32_10 = arith.constant 1 : i32
    %21 = arith.subi %20, %c1_i32_10 : i32
    %c0_i32_11 = arith.constant 0 : i32
    %22 = arith.maxsi %21, %c0_i32_11 : i32
    %c8_i32_12 = arith.constant 8 : i32
    %23 = arith.addi %20, %c8_i32_12 : i32
    %c7_i32 = arith.constant 7 : i32
    %24 = arith.minsi %23, %c7_i32 : i32
    %c0_i32_13 = arith.constant 0 : i32
    %c0_i32_14 = arith.constant 0 : i32
    %c0_i32_15 = arith.constant 0 : i32
    %25 = tpu.memref_slice %arg3[%arg0, %20, %c0_i32_14, %c0_i32_15] : memref<2x8x8x128xbf16, #tpu.memory_space<any>> -> memref<1x8x8x128xbf16, #tpu.memory_space<any>>
    %26 = tpu.memref_squeeze %25 : memref<1x8x8x128xbf16, #tpu.memory_space<any>> -> memref<8x8x128xbf16, #tpu.memory_space<any>>
    %c1_i32_16 = arith.constant 1 : i32
    %c0_i32_17 = arith.constant 0 : i32
    %c0_i32_18 = arith.constant 0 : i32
    %27 = tpu.memref_slice %arg9[%12, %c1_i32_16, %c0_i32_17, %c0_i32_18] : memref<2x10x8x128xbf16, #tpu.memory_space<vmem>> -> memref<1x8x8x128xbf16, #tpu.memory_space<vmem>>
    %28 = tpu.memref_squeeze %27 : memref<1x8x8x128xbf16, #tpu.memory_space<vmem>> -> memref<8x8x128xbf16, #tpu.memory_space<vmem>>
    %29 = tpu.memref_slice %arg10[%12, %c0_i32_13] : memref<2x3x!tpu.dma_semaphore, #tpu.memory_space<semaphore_mem>> -> memref<1x1x!tpu.dma_semaphore, #tpu.memory_space<semaphore_mem>>
    %30 = tpu.memref_squeeze %29 : memref<1x1x!tpu.dma_semaphore, #tpu.memory_space<semaphore_mem>> -> memref<!tpu.dma_semaphore, #tpu.memory_space<semaphore_mem>>
    tpu.wait_dma2 semaphore(%30 : memref<!tpu.dma_semaphore, #tpu.memory_space<semaphore_mem>>) src(%26 : memref<8x8x128xbf16, #tpu.memory_space<any>>) dst(%28 : memref<8x8x128xbf16, #tpu.memory_space<vmem>>)
    %c1_i32_19 = arith.constant 1 : i32
    %c0_i32_20 = arith.constant 0 : i32
    %c0_i32_21 = arith.constant 0 : i32
    %31 = tpu.memref_slice %arg3[%arg0, %22, %c0_i32_20, %c0_i32_21] : memref<2x8x8x128xbf16, #tpu.memory_space<any>> -> memref<1x1x8x128xbf16, #tpu.memory_space<any>>
    %32 = tpu.memref_squeeze %31 : memref<1x1x8x128xbf16, #tpu.memory_space<any>> -> memref<1x8x128xbf16, #tpu.memory_space<any>>
    %c0_i32_22 = arith.constant 0 : i32
    %c0_i32_23 = arith.constant 0 : i32
    %c0_i32_24 = arith.constant 0 : i32
    %33 = tpu.memref_slice %arg9[%12, %c0_i32_22, %c0_i32_23, %c0_i32_24] : memref<2x10x8x128xbf16, #tpu.memory_space<vmem>> -> memref<1x1x8x128xbf16, #tpu.memory_space<vmem>>
    %34 = tpu.memref_squeeze %33 : memref<1x1x8x128xbf16, #tpu.memory_space<vmem>> -> memref<1x8x128xbf16, #tpu.memory_space<vmem>>
    %35 = tpu.memref_slice %arg10[%12, %c1_i32_19] : memref<2x3x!tpu.dma_semaphore, #tpu.memory_space<semaphore_mem>> -> memref<1x1x!tpu.dma_semaphore, #tpu.memory_space<semaphore_mem>>
    %36 = tpu.memref_squeeze %35 : memref<1x1x!tpu.dma_semaphore, #tpu.memory_space<semaphore_mem>> -> memref<!tpu.dma_semaphore, #tpu.memory_space<semaphore_mem>>
    tpu.wait_dma2 semaphore(%36 : memref<!tpu.dma_semaphore, #tpu.memory_space<semaphore_mem>>) src(%32 : memref<1x8x128xbf16, #tpu.memory_space<any>>) dst(%34 : memref<1x8x128xbf16, #tpu.memory_space<vmem>>)
    %c2_i32_25 = arith.constant 2 : i32
    %c0_i32_26 = arith.constant 0 : i32
    %c0_i32_27 = arith.constant 0 : i32
    %37 = tpu.memref_slice %arg3[%arg0, %24, %c0_i32_26, %c0_i32_27] : memref<2x8x8x128xbf16, #tpu.memory_space<any>> -> memref<1x1x8x128xbf16, #tpu.memory_space<any>>
    %38 = tpu.memref_squeeze %37 : memref<1x1x8x128xbf16, #tpu.memory_space<any>> -> memref<1x8x128xbf16, #tpu.memory_space<any>>
    %c9_i32 = arith.constant 9 : i32
    %c0_i32_28 = arith.constant 0 : i32
    %c0_i32_29 = arith.constant 0 : i32
    %39 = tpu.memref_slice %arg9[%12, %c9_i32, %c0_i32_28, %c0_i32_29] : memref<2x10x8x128xbf16, #tpu.memory_space<vmem>> -> memref<1x1x8x128xbf16, #tpu.memory_space<vmem>>
    %40 = tpu.memref_squeeze %39 : memref<1x1x8x128xbf16, #tpu.memory_space<vmem>> -> memref<1x8x128xbf16, #tpu.memory_space<vmem>>
    %41 = tpu.memref_slice %arg10[%12, %c2_i32_25] : memref<2x3x!tpu.dma_semaphore, #tpu.memory_space<semaphore_mem>> -> memref<1x1x!tpu.dma_semaphore, #tpu.memory_space<semaphore_mem>>
    %42 = tpu.memref_squeeze %41 : memref<1x1x!tpu.dma_semaphore, #tpu.memory_space<semaphore_mem>> -> memref<!tpu.dma_semaphore, #tpu.memory_space<semaphore_mem>>
    tpu.wait_dma2 semaphore(%42 : memref<!tpu.dma_semaphore, #tpu.memory_space<semaphore_mem>>) src(%38 : memref<1x8x128xbf16, #tpu.memory_space<any>>) dst(%40 : memref<1x8x128xbf16, #tpu.memory_space<vmem>>)
    %43 = arith.index_cast %12 : i32 to index
    %c0 = arith.constant 0 : index
    %c0_30 = arith.constant 0 : index
    %c0_31 = arith.constant 0 : index
    %44 = vector.load %arg9[%43, %c0, %c0_30, %c0_31] : memref<2x10x8x128xbf16, #tpu.memory_space<vmem>>, vector<1x10x8x128xbf16>
    %45 = vector.shape_cast %44 : vector<1x10x8x128xbf16> to vector<10x8x128xbf16>
    %46 = arith.extf %45 : vector<10x8x128xbf16> to vector<10x8x128xf32>
    %c0_32 = arith.constant 0 : index
    %c0_33 = arith.constant 0 : index
    %47 = vector.load %arg5[%c0_32, %c0_33] : memref<1x128xf32, #tpu.memory_space<vmem>>, vector<1x128xf32>
    %48 = vector.shape_cast %47 : vector<1x128xf32> to vector<128xf32>
    %49 = vector.shape_cast %48 : vector<128xf32> to vector<1x1x128xf32>
    %50 = vector.broadcast %49 : vector<1x1x128xf32> to vector<10x8x128xf32>
    %51 = arith.mulf %46, %50 : vector<10x8x128xf32>
    %c0_34 = arith.constant 0 : index
    %c0_35 = arith.constant 0 : index
    %52 = vector.load %arg6[%c0_34, %c0_35] : memref<1x128xf32, #tpu.memory_space<vmem>>, vector<1x128xf32>
    %53 = vector.shape_cast %52 : vector<1x128xf32> to vector<128xf32>
    %54 = vector.shape_cast %53 : vector<128xf32> to vector<1x1x128xf32>
    %55 = vector.broadcast %54 : vector<1x1x128xf32> to vector<10x8x128xf32>
    %56 = arith.addf %51, %55 : vector<10x8x128xf32>
    %cst = arith.constant 0.000000e+00 : f32
    %57 = vector.broadcast %cst : f32 to vector<10x8x128xf32>
    %58 = arith.maximumf %56, %57 : vector<10x8x128xf32>
    %59 = tpu.iota {dimensions = array<i32: 0>} : vector<10x1x1xi32>
    %c0_i32_36 = arith.constant 0 : i32
    %60 = vector.broadcast %c0_i32_36 : i32 to vector<10x1x1xi32>
    %61 = arith.cmpi eq, %59, %60 : vector<10x1x1xi32>
    %c0_i32_37 = arith.constant 0 : i32
    %62 = arith.cmpi eq, %1, %c0_i32_37 : i32
    %63 = vector.broadcast %62 : i1 to vector<10x1x1xi1>
    %64 = arith.andi %61, %63 : vector<10x1x1xi1>
    %c9_i32_38 = arith.constant 9 : i32
    %65 = vector.broadcast %c9_i32_38 : i32 to vector<10x1x1xi32>
    %66 = arith.cmpi eq, %59, %65 : vector<10x1x1xi32>
    %c0_i32_39 = arith.constant 0 : i32
    %67 = arith.cmpi eq, %1, %c0_i32_39 : i32
    %68 = vector.broadcast %67 : i1 to vector<10x1x1xi1>
    %69 = arith.andi %66, %68 : vector<10x1x1xi1>
    %70 = arith.ori %64, %69 : vector<10x1x1xi1>
    %cst_40 = arith.constant 0.000000e+00 : f32
    %71 = vector.shape_cast %70 : vector<10x1x1xi1> to vector<10x1x1xi1>
    %72 = vector.broadcast %71 : vector<10x1x1xi1> to vector<10x8x128xi1>
    %73 = vector.broadcast %cst_40 : f32 to vector<10x8x128xf32>
    %74 = arith.select %72, %73, %58 : vector<10x8x128xi1>, vector<10x8x128xf32>
    %75 = arith.truncf %74 : vector<10x8x128xf32> to vector<10x8x128xbf16>
    %cst_41 = arith.constant 0.000000e+00 : bf16
    %76 = vector.broadcast %cst_41 : bf16 to vector<10x1x128xbf16>
    %77 = vector.extract_strided_slice %75 {offsets = [0, 0, 0], sizes = [10, 7, 128], strides = [1, 1, 1]} : vector<10x8x128xbf16> to vector<10x7x128xbf16>
    %78 = tpu.concatenate %76, %77 in 1 : vector<10x1x128xbf16>, vector<10x7x128xbf16> -> vector<10x8x128xbf16>
    %79 = vector.extract_strided_slice %75 {offsets = [0, 1, 0], sizes = [10, 7, 128], strides = [1, 1, 1]} : vector<10x8x128xbf16> to vector<10x7x128xbf16>
    %80 = tpu.concatenate %79, %76 in 1 : vector<10x7x128xbf16>, vector<10x1x128xbf16> -> vector<10x8x128xbf16>
    %81 = vector.extract_strided_slice %78 {offsets = [0, 0, 0], sizes = [8, 8, 128], strides = [1, 1, 1]} : vector<10x8x128xbf16> to vector<8x8x128xbf16>
    %82 = vector.extract_strided_slice %78 {offsets = [1, 0, 0], sizes = [8, 8, 128], strides = [1, 1, 1]} : vector<10x8x128xbf16> to vector<8x8x128xbf16>
    %83 = vector.extract_strided_slice %78 {offsets = [2, 0, 0], sizes = [8, 8, 128], strides = [1, 1, 1]} : vector<10x8x128xbf16> to vector<8x8x128xbf16>
    %84 = tpu.concatenate %81, %82, %83 in 2 : vector<8x8x128xbf16>, vector<8x8x128xbf16>, vector<8x8x128xbf16> -> vector<8x8x384xbf16>
    %85 = vector.shape_cast %84 : vector<8x8x384xbf16> to vector<64x384xbf16>
    %c0_42 = arith.constant 0 : index
    %c0_43 = arith.constant 0 : index
    %c0_44 = arith.constant 0 : index
    %86 = vector.load %arg4[%c0_42, %c0_43, %c0_44] : memref<3x384x128xbf16, #tpu.memory_space<vmem>>, vector<1x384x128xbf16>
    %87 = vector.shape_cast %86 : vector<1x384x128xbf16> to vector<384x128xbf16>
    %cst_45 = arith.constant dense<0.000000e+00> : vector<64x128xf32>
    %88 = tpu.matmul %85, %87, %cst_45 {dimension_numbers = #tpu.dot_dimension_numbers<[1], [0], [0], [1], [0, 0, 1, 1], [], []>} : vector<64x384xbf16>, vector<384x128xbf16>, vector<64x128xf32> -> vector<64x128xf32>
    %89 = vector.extract_strided_slice %75 {offsets = [0, 0, 0], sizes = [8, 8, 128], strides = [1, 1, 1]} : vector<10x8x128xbf16> to vector<8x8x128xbf16>
    %90 = vector.extract_strided_slice %75 {offsets = [1, 0, 0], sizes = [8, 8, 128], strides = [1, 1, 1]} : vector<10x8x128xbf16> to vector<8x8x128xbf16>
    %91 = vector.extract_strided_slice %75 {offsets = [2, 0, 0], sizes = [8, 8, 128], strides = [1, 1, 1]} : vector<10x8x128xbf16> to vector<8x8x128xbf16>
    %92 = tpu.concatenate %89, %90, %91 in 2 : vector<8x8x128xbf16>, vector<8x8x128xbf16>, vector<8x8x128xbf16> -> vector<8x8x384xbf16>
    %93 = vector.shape_cast %92 : vector<8x8x384xbf16> to vector<64x384xbf16>
    %c1 = arith.constant 1 : index
    %c0_46 = arith.constant 0 : index
    %c0_47 = arith.constant 0 : index
    %94 = vector.load %arg4[%c1, %c0_46, %c0_47] : memref<3x384x128xbf16, #tpu.memory_space<vmem>>, vector<1x384x128xbf16>
    %95 = vector.shape_cast %94 : vector<1x384x128xbf16> to vector<384x128xbf16>
    %cst_48 = arith.constant dense<0.000000e+00> : vector<64x128xf32>
    %96 = tpu.matmul %93, %95, %cst_48 {dimension_numbers = #tpu.dot_dimension_numbers<[1], [0], [0], [1], [0, 0, 1, 1], [], []>} : vector<64x384xbf16>, vector<384x128xbf16>, vector<64x128xf32> -> vector<64x128xf32>
    %97 = arith.addf %88, %96 : vector<64x128xf32>
    %98 = vector.extract_strided_slice %80 {offsets = [0, 0, 0], sizes = [8, 8, 128], strides = [1, 1, 1]} : vector<10x8x128xbf16> to vector<8x8x128xbf16>
    %99 = vector.extract_strided_slice %80 {offsets = [1, 0, 0], sizes = [8, 8, 128], strides = [1, 1, 1]} : vector<10x8x128xbf16> to vector<8x8x128xbf16>
    %100 = vector.extract_strided_slice %80 {offsets = [2, 0, 0], sizes = [8, 8, 128], strides = [1, 1, 1]} : vector<10x8x128xbf16> to vector<8x8x128xbf16>
    %101 = tpu.concatenate %98, %99, %100 in 2 : vector<8x8x128xbf16>, vector<8x8x128xbf16>, vector<8x8x128xbf16> -> vector<8x8x384xbf16>
    %102 = vector.shape_cast %101 : vector<8x8x384xbf16> to vector<64x384xbf16>
    %c2 = arith.constant 2 : index
    %c0_49 = arith.constant 0 : index
    %c0_50 = arith.constant 0 : index
    %103 = vector.load %arg4[%c2, %c0_49, %c0_50] : memref<3x384x128xbf16, #tpu.memory_space<vmem>>, vector<1x384x128xbf16>
    %104 = vector.shape_cast %103 : vector<1x384x128xbf16> to vector<384x128xbf16>
    %cst_51 = arith.constant dense<0.000000e+00> : vector<64x128xf32>
    %105 = tpu.matmul %102, %104, %cst_51 {dimension_numbers = #tpu.dot_dimension_numbers<[1], [0], [0], [1], [0, 0, 1, 1], [], []>} : vector<64x384xbf16>, vector<384x128xbf16>, vector<64x128xf32> -> vector<64x128xf32>
    %106 = arith.addf %97, %105 : vector<64x128xf32>
    %107 = vector.shape_cast %106 : vector<64x128xf32> to vector<8x8x128xf32>
    %108 = arith.truncf %107 : vector<8x8x128xf32> to vector<8x8x128xbf16>
    %c0_52 = arith.constant 0 : index
    %c0_53 = arith.constant 0 : index
    %c0_54 = arith.constant 0 : index
    %c0_55 = arith.constant 0 : index
    %109 = vector.load %arg7[%c0_52, %c0_53, %c0_54, %c0_55] : memref<1x8x8x128xbf16, #tpu.memory_space<vmem>>, vector<1x8x8x128xbf16>
    %110 = vector.shape_cast %109 : vector<1x8x8x128xbf16> to vector<8x8x128xbf16>
    %111 = vector.shape_cast %108 : vector<8x8x128xbf16> to vector<1x8x8x128xbf16>
    tpu.vector_store %arg7[%c0_52, %c0_53, %c0_54, %c0_55], %111 {strides = array<i32>} : memref<1x8x8x128xbf16, #tpu.memory_space<vmem>>, vector<1x8x8x128xbf16>,
    %c0_i32_56 = arith.constant 0 : i32
    %112 = arith.cmpi eq, %arg2, %c0_i32_56 : i32
    %113 = arith.extui %112 : i1 to i32
    %c0_i32_57 = arith.constant 0 : i32
    %114 = arith.cmpi ne, %113, %c0_i32_57 : i32
    scf.if %114 {
      %cst_68 = arith.constant 0.000000e+00 : f32
      %127 = vector.broadcast %cst_68 : f32 to vector<2x128xf32>
      %c0_69 = arith.constant 0 : index
      %c0_70 = arith.constant 0 : index
      %c0_71 = arith.constant 0 : index
      %c0_72 = arith.constant 0 : index
      %128 = vector.load %arg8[%c0_69, %c0_70, %c0_71, %c0_72] : memref<1x1x2x128xf32, #tpu.memory_space<vmem>>, vector<1x1x2x128xf32>
      %129 = vector.shape_cast %128 : vector<1x1x2x128xf32> to vector<2x128xf32>
      %130 = vector.shape_cast %127 : vector<2x128xf32> to vector<1x1x2x128xf32>
      tpu.vector_store %arg8[%c0_69, %c0_70, %c0_71, %c0_72], %130 {strides = array<i32>} : memref<1x1x2x128xf32, #tpu.memory_space<vmem>>, vector<1x1x2x128xf32>,
    } else {
    }
    %cst_58 = arith.constant dense<0.000000e+00> : vector<128xf32>
    %115 = vector.multi_reduction <add>, %106, %cst_58 [0] : vector<64x128xf32> to vector<128xf32>
    %116 = vector.shape_cast %115 : vector<128xf32> to vector<1x128xf32>
    %117 = arith.mulf %106, %106 : vector<64x128xf32>
    %cst_59 = arith.constant dense<0.000000e+00> : vector<128xf32>
    %118 = vector.multi_reduction <add>, %117, %cst_59 [0] : vector<64x128xf32> to vector<128xf32>
    %119 = vector.shape_cast %118 : vector<128xf32> to vector<1x128xf32>
    %c0_60 = arith.constant 0 : index
    %c0_61 = arith.constant 0 : index
    %c0_62 = arith.constant 0 : index
    %c0_63 = arith.constant 0 : index
    %120 = vector.load %arg8[%c0_60, %c0_61, %c0_62, %c0_63] : memref<1x1x2x128xf32, #tpu.memory_space<vmem>>, vector<1x1x2x128xf32>
    %121 = vector.shape_cast %120 : vector<1x1x2x128xf32> to vector<2x128xf32>
    %122 = tpu.concatenate %116, %119 in 0 : vector<1x128xf32>, vector<1x128xf32> -> vector<2x128xf32>
    %123 = arith.addf %121, %122 : vector<2x128xf32>
    %c0_64 = arith.constant 0 : index
    %c0_65 = arith.constant 0 : index
    %c0_66 = arith.constant 0 : index
    %c0_67 = arith.constant 0 : index
    %124 = vector.load %arg8[%c0_64, %c0_65, %c0_66, %c0_67] : memref<1x1x2x128xf32, #tpu.memory_space<vmem>>, vector<1x1x2x128xf32>
    %125 = vector.shape_cast %124 : vector<1x1x2x128xf32> to vector<2x128xf32>
    %126 = vector.shape_cast %123 : vector<2x128xf32> to vector<1x1x2x128xf32>
    tpu.vector_store %arg8[%c0_64, %c0_65, %c0_66, %c0_67], %126 {strides = array<i32>} : memref<1x1x2x128xf32, #tpu.memory_space<vmem>>, vector<1x1x2x128xf32>,
    return
  }
  func.func @transform_1(%arg0: i32, %arg1: i32, %arg2: i32) -> (i32, i32, i32) {
    %c0_i32 = arith.constant 0 : i32
    %c0_i32_0 = arith.constant 0 : i32
    %c0_i32_1 = arith.constant 0 : i32
    %c0_i32_2 = arith.constant 0 : i32
    return %c0_i32, %c0_i32_0, %c0_i32_1 : i32, i32, i32
  }
  func.func @transform_2(%arg0: i32, %arg1: i32, %arg2: i32) -> (i32, i32) {
    %c0_i32 = arith.constant 0 : i32
    %c0_i32_0 = arith.constant 0 : i32
    %c0_i32_1 = arith.constant 0 : i32
    return %c0_i32, %c0_i32_0 : i32, i32
  }
  func.func @transform_3(%arg0: i32, %arg1: i32, %arg2: i32) -> (i32, i32) {
    %c0_i32 = arith.constant 0 : i32
    %c0_i32_0 = arith.constant 0 : i32
    %c0_i32_1 = arith.constant 0 : i32
    return %c0_i32, %c0_i32_0 : i32, i32
  }
  func.func @transform_4(%arg0: i32, %arg1: i32, %arg2: i32) -> (i32, i32, i32, i32) {
    %c1_i32 = arith.constant 1 : i32
    %0 = arith.muli %arg1, %c1_i32 : i32
    %1 = arith.addi %0, %arg2 : i32
    %c0_i32 = arith.constant 0 : i32
    %c0_i32_0 = arith.constant 0 : i32
    %c0_i32_1 = arith.constant 0 : i32
    return %arg0, %1, %c0_i32, %c0_i32_0 : i32, i32, i32, i32
  }
  func.func @transform_5(%arg0: i32, %arg1: i32, %arg2: i32) -> (i32, i32, i32, i32) {
    %c0_i32 = arith.constant 0 : i32
    %c0_i32_0 = arith.constant 0 : i32
    %c0_i32_1 = arith.constant 0 : i32
    return %arg0, %arg1, %c0_i32, %c0_i32_0 : i32, i32, i32, i32
  }
}

module attributes {stable_mosaic.version = 11 : i64} {
  func.func @_bn_relu_kernel(%arg0: i32, %arg1: i32, %arg2: memref<1x8x8x128xbf16, #tpu.memory_space<vmem>>, %arg3: memref<1x128xf32, #tpu.memory_space<vmem>>, %arg4: memref<1x128xf32, #tpu.memory_space<vmem>>, %arg5: memref<1x8x8x128xf32, #tpu.memory_space<vmem>>) attributes {dimension_semantics = [#tpu.dimension_semantics<parallel>, #tpu.dimension_semantics<parallel>], iteration_bounds = array<i64: 2, 1>, scalar_prefetch = 0 : i64, scratch_operands = 0 : i64, tpu.core_type = #tpu.core_type<tc>, window_params = [{transform_indices = @transform_0, window_bounds = array<i64: 1, 8, 8, 128>}, {pipeline_mode = #tpu.pipeline_mode<synchronous>, transform_indices = @transform_1, window_bounds = array<i64: 1, 128>}, {pipeline_mode = #tpu.pipeline_mode<synchronous>, transform_indices = @transform_2, window_bounds = array<i64: 1, 128>}, {transform_indices = @transform_3, window_bounds = array<i64: 1, 8, 8, 128>}]} {
    %c0 = arith.constant 0 : index
    %c0_0 = arith.constant 0 : index
    %c0_1 = arith.constant 0 : index
    %c0_2 = arith.constant 0 : index
    %0 = vector.load %arg2[%c0, %c0_0, %c0_1, %c0_2] : memref<1x8x8x128xbf16, #tpu.memory_space<vmem>>, vector<1x8x8x128xbf16>
    %1 = vector.shape_cast %0 : vector<1x8x8x128xbf16> to vector<8x8x128xbf16>
    %2 = arith.extf %1 : vector<8x8x128xbf16> to vector<8x8x128xf32>
    %c0_3 = arith.constant 0 : index
    %c0_4 = arith.constant 0 : index
    %3 = vector.load %arg3[%c0_3, %c0_4] : memref<1x128xf32, #tpu.memory_space<vmem>>, vector<1x128xf32>
    %4 = vector.shape_cast %3 : vector<1x128xf32> to vector<128xf32>
    %5 = vector.shape_cast %4 : vector<128xf32> to vector<1x1x128xf32>
    %6 = vector.broadcast %5 : vector<1x1x128xf32> to vector<8x8x128xf32>
    %7 = arith.mulf %2, %6 : vector<8x8x128xf32>
    %c0_5 = arith.constant 0 : index
    %c0_6 = arith.constant 0 : index
    %8 = vector.load %arg4[%c0_5, %c0_6] : memref<1x128xf32, #tpu.memory_space<vmem>>, vector<1x128xf32>
    %9 = vector.shape_cast %8 : vector<1x128xf32> to vector<128xf32>
    %10 = vector.shape_cast %9 : vector<128xf32> to vector<1x1x128xf32>
    %11 = vector.broadcast %10 : vector<1x1x128xf32> to vector<8x8x128xf32>
    %12 = arith.addf %7, %11 : vector<8x8x128xf32>
    %cst = arith.constant 0.000000e+00 : f32
    %13 = vector.broadcast %cst : f32 to vector<8x8x128xf32>
    %14 = arith.maximumf %12, %13 : vector<8x8x128xf32>
    %c0_7 = arith.constant 0 : index
    %c0_8 = arith.constant 0 : index
    %c0_9 = arith.constant 0 : index
    %c0_10 = arith.constant 0 : index
    %15 = vector.load %arg5[%c0_7, %c0_8, %c0_9, %c0_10] : memref<1x8x8x128xf32, #tpu.memory_space<vmem>>, vector<1x8x8x128xf32>
    %16 = vector.shape_cast %15 : vector<1x8x8x128xf32> to vector<8x8x128xf32>
    %17 = vector.shape_cast %14 : vector<8x8x128xf32> to vector<1x8x8x128xf32>
    tpu.vector_store %arg5[%c0_7, %c0_8, %c0_9, %c0_10], %17 {strides = array<i32>} : memref<1x8x8x128xf32, #tpu.memory_space<vmem>>, vector<1x8x8x128xf32>,
    return
  }
  func.func @transform_0(%arg0: i32, %arg1: i32) -> (i32, i32, i32, i32) {
    %c0_i32 = arith.constant 0 : i32
    %c0_i32_0 = arith.constant 0 : i32
    %c0_i32_1 = arith.constant 0 : i32
    return %arg0, %arg1, %c0_i32, %c0_i32_0 : i32, i32, i32, i32
  }
  func.func @transform_1(%arg0: i32, %arg1: i32) -> (i32, i32) {
    %c0_i32 = arith.constant 0 : i32
    %c0_i32_0 = arith.constant 0 : i32
    %c0_i32_1 = arith.constant 0 : i32
    return %c0_i32, %c0_i32_0 : i32, i32
  }
  func.func @transform_2(%arg0: i32, %arg1: i32) -> (i32, i32) {
    %c0_i32 = arith.constant 0 : i32
    %c0_i32_0 = arith.constant 0 : i32
    %c0_i32_1 = arith.constant 0 : i32
    return %c0_i32, %c0_i32_0 : i32, i32
  }
  func.func @transform_3(%arg0: i32, %arg1: i32) -> (i32, i32, i32, i32) {
    %c0_i32 = arith.constant 0 : i32
    %c0_i32_0 = arith.constant 0 : i32
    %c0_i32_1 = arith.constant 0 : i32
    return %arg0, %arg1, %c0_i32, %c0_i32_0 : i32, i32, i32, i32
  }
}

</mosaic_0001>

<llo_original>
// kernel: downblock_forward.4
$region0: #{downblock_forward.4}
  #allocation0 [shape = 'u32[]', space=smem, size = 0x4, offset = 0x4, fixed_abs, tag = 'smem constant byte address 0x4 - core index']
  #allocation1 [shape = 'u32[144,128]{1,0:T(1,128)}', space=vmem, size = 0x12000, scoped, tag = 'internal scratch']
  %s0 = inlined_call_operand.vmem [shape: bf16[2,16,16,128], index: 0, kind: input, shape index: {}]
  %s1 = inlined_call_operand.vmem [shape: bf16[2,8,8,128], index: 1, kind: output, shape index: {}]
  %s2 = sld [smem:[#allocation0]]
  $region37: #{downblock_forward.4} parent=0
    _
  %s4 = ssub.s32 1, %s2
  %s5 = scalar_select 0, %s4, %s2
  loop: start=0, step=1, limit=4
  $region2: #{downblock_forward.4} parent=0 // loop_pre_header
    _
  $region3: #{downblock_forward.4} parent=0 // loop_header
    %s7 = sphi 0, %s11
    %p8 = scmp.ge.s32.totalorder %s7, 4
    %s14 = sphi 0, %s26
    %s15 = sphi 0, %s22
    %s16 = sphi 0, %s14
    %s17 = sphi 0, %s15
    %s18 = sphi 0, %s16
    %s19 = sphi 0, %s17
    %s31 = sphi 0, %s33
    %s34 = sphi 0, %s31
    %s35 = sphi 0, %s34
    %s51 = sphi 0, %s35
    %s59 = sphi 0, %s61
    %s62 = sphi 0, %s59
    %s63 = sphi 0, %s62
    %s79 = sphi 0, %s63
  $region4: #{downblock_forward.4} parent=0 // loop_header_branch
    %10 = sbr.rel (%p8) target = $region8
  $region5: #{downblock_forward.4} parent=0 // loop_body
    %s12 = ssub.s32 %s7, 1
    %s13 = ssub.s32 %s7, 2
    %s20 = sadd.s32 1, %s15
    %p21 = scmp.ge.s32.totalorder %s20, 1
    %s22 = scalar_select %p21, 0, %s20
    %s23 = sadd.s32 1, %s14
    %s24 = scalar_select %p21, %s23, %s14
    %p25 = scmp.ge.s32.totalorder %s24, 2
    %s26 = scalar_select %p25, 0, %s24
    %s27 = ssub.s32 %s14, %s26
    %s28 = ssub.s32 %s15, %s22
    %s29 = sor.u32 %s27, %s28
    %p30 = scmp.eq.s32.totalorder %s29, 0
    %s32 = sadd.s32 %s31, 1
    %s33 = scalar_select %p30, %s31, %s32
    %p36 = pneg %p30
    %p37 = scmp.eq.s32.totalorder %s7, 1
    %p38 = por %p36, %p37
    %p39 = scmp.ne.s32.totalorder %s31, %s34
    %p40 = scmp.eq.s32.totalorder %s7, 0
    %p41 = por %p39, %p40
    %p42 = scmp.ne.s32.totalorder %s31, %s34
    %p43 = scmp.eq.s32.totalorder %s12, 1
    %p44 = por %p42, %p43
    %p45 = scmp.ne.s32.totalorder %s34, %s35
    %p46 = scmp.eq.s32.totalorder %s12, 0
    %p47 = por %p45, %p46
    %p48 = scmp.ne.s32.totalorder %s34, %s35
    %p49 = scmp.eq.s32.totalorder %s13, 1
    %p50 = por %p48, %p49
    %p52 = scmp.ne.s32.totalorder %s35, %s51
    %p53 = scmp.eq.s32.totalorder %s13, 0
    %p54 = por %p52, %p53
    %s55 = ssub.s32 %s14, %s26
    %s56 = ssub.s32 %s15, %s22
    %s57 = sor.u32 %s55, %s56
    %p58 = scmp.eq.s32.totalorder %s57, 0
    %s60 = sadd.s32 %s59, 1
    %s61 = scalar_select %p58, %s59, %s60
    %p64 = pneg %p58
    %p65 = scmp.eq.s32.totalorder %s7, 1
    %p66 = por %p64, %p65
    %p67 = scmp.ne.s32.totalorder %s59, %s62
    %p68 = scmp.eq.s32.totalorder %s7, 0
    %p69 = por %p67, %p68
    %p70 = scmp.ne.s32.totalorder %s59, %s62
    %p71 = scmp.eq.s32.totalorder %s12, 1
    %p72 = por %p70, %p71
    %p73 = scmp.ne.s32.totalorder %s62, %s63
    %p74 = scmp.eq.s32.totalorder %s12, 0
    %p75 = por %p73, %p74
    %p76 = scmp.ne.s32.totalorder %s62, %s63
    %p77 = scmp.eq.s32.totalorder %s13, 1
    %p78 = por %p76, %p77
    %p80 = scmp.ne.s32.totalorder %s63, %s79
    %p81 = scmp.eq.s32.totalorder %s13, 0
    %p82 = por %p80, %p81
    %p83 = scmp.le.s32.totalorder 1, %s7
    %p84 = scmp.lt.s32.totalorder %s7, 3
    %p85 = pnand %p83, %p84
    %p86 = pneg %p85
    // Predicated region
    $region9: #{downblock_forward.4} parent=5 // pred_check
      _
    $region10: #{downblock_forward.4} parent=5 // pred_check_branch
      %88 = sbr.rel (%p85) target = $region12
    $region11: #{downblock_forward.4} parent=5 // pred_region
      %s89 = ssub.s32 %s7, 1
    $region12: #{downblock_forward.4} parent=5 // pred_fallthru
      _
    %p90 = scmp.lt.s32.totalorder %s7, 2
    // Predicated region
    $region13: #{downblock_forward.4} parent=5 // pred_check
      %p91 = pneg %p90
    $region14: #{downblock_forward.4} parent=5 // pred_check_branch
      %93 = sbr.rel (%p91) target = $region16
    $region15: #{downblock_forward.4} parent=5 // pred_region
      // Predicated region
      $region17: #{downblock_forward.4} parent=15 // pred_check
        %p94 = pneg %p41
      $region18: #{downblock_forward.4} parent=15 // pred_check_branch
        %96 = sbr.rel (%p94) target = $region20
      $region19: #{downblock_forward.4} parent=15 // pred_region
        %s97 = smul.u32 16, %s15
        %p98 = scmp.lt.s32.totalorder %s14, 1
        %s99 = scalar_select %p98, %s14, 1
        %p100 = scmp.lt.s32.totalorder %s97, 15
        %s101 = scalar_select %p100, %s97, 15
        %s102 = smul.addr %s101, 2
        %s103 = smul.addr %s99, 32
        %s104 = sadd.s32 %s102, %s103
        %s105 = smul.addr %s104, 4
        %s106 = scalar_lea.vmem %s0, %s105
        %s107 = smul.u32 16, %s15
      $region20: #{downblock_forward.4} parent=15 // pred_fallthru
        _
    $region16: #{downblock_forward.4} parent=5 // pred_fallthru
      _
    %p108 = scmp.le.s32.totalorder 1, %s7
    %p109 = scmp.lt.s32.totalorder %s7, 3
    %p110 = pnand %p108, %p109
    %p111 = pneg %p110
    // Predicated region
    $region21: #{downblock_forward.4} parent=5 // pred_check
      _
    $region22: #{downblock_forward.4} parent=5 // pred_check_branch
      %113 = sbr.rel (%p110) target = $region24
    $region23: #{downblock_forward.4} parent=5 // pred_region
      %s114 = ssub.s32 %s7, 1
      %s115 = smul.u32 16, %s17
      %p116 = scmp.lt.s32.totalorder %s16, 1
      %s117 = scalar_select %p116, %s16, 1
      %p118 = scmp.lt.s32.totalorder %s115, 15
      %s119 = scalar_select %p118, %s115, 15
      %s120 = smul.addr %s119, 2
      %s121 = smul.addr %s117, 32
      %s122 = sadd.s32 %s120, %s121
      %s123 = smul.addr %s122, 4
      %s124 = scalar_lea.vmem %s0, %s123
      %p125 = pneg %p47
      %p126 = pneg %p44
      %p127 = pneg %p75
      %p128 = pneg %p72
      %s129 = smul.u32 8, %s17
      %p130 = scmp.lt.s32.totalorder %s16, 1
      %s131 = scalar_select %p130, %s16, 1
      %p132 = scmp.lt.s32.totalorder %s129, 7
      %s133 = scalar_select %p132, %s129, 7
      %s134 = smul.addr %s131, 8
      %s135 = sadd.s32 %s133, %s134
      %s136 = smul.addr %s135, 4
      %s137 = scalar_lea.vmem %s1, %s136
      %s138 = smul.u32 16, %s17
      %p139 = scmp.lt.s32.totalorder %s16, 1
      %s140 = scalar_select %p139, %s16, 1
      %p141 = scmp.lt.s32.totalorder %s138, 15
      %s142 = scalar_select %p141, %s138, 15
      %s143 = smul.addr %s142, 2
      %s144 = smul.addr %s140, 32
      %s145 = sadd.s32 %s143, %s144
      %s146 = smul.addr %s145, 4
      %s147 = scalar_lea.vmem %s0, %s146
      %s148 = smul.u32 16, %s17
      %s149 = smul.u32 8, %s17
      %p150 = scmp.lt.s32.totalorder %s16, 1
      %s151 = scalar_select %p150, %s16, 1
      %p152 = scmp.lt.s32.totalorder %s149, 7
      %s153 = scalar_select %p152, %s149, 7
      %s154 = smul.addr %s151, 8
      %s155 = sadd.s32 %s153, %s154
      %s156 = smul.addr %s155, 4
      %s157 = scalar_lea.vmem %s1, %s156
      %s158 = smul.u32 8, %s17
      %v160 = vld [vmem:[%s147] sm:$0xf]
      %v161 = vld [vmem:[%s147 + $0x4] sm:$0xf]
      %v162 = vld [vmem:[%s147 + $0x8] sm:$0xf]
      %v163 = vld [vmem:[%s147 + $0xc] sm:$0xf]
      %v164 = vld [vmem:[%s147 + $0x10] sm:$0xf]
      %v165 = vld [vmem:[%s147 + $0x14] sm:$0xf]
      %v166 = vld [vmem:[%s147 + $0x18] sm:$0xf]
      %v167 = vld [vmem:[%s147 + $0x1c] sm:$0xf]
      %v168 = vld [vmem:[%s147 + $0x20] sm:$0xf]
      %v169 = vld [vmem:[%s147 + $0x24] sm:$0xf]
      %v170 = vld [vmem:[%s147 + $0x28] sm:$0xf]
      %v171 = vld [vmem:[%s147 + $0x2c] sm:$0xf]
      %v172 = vld [vmem:[%s147 + $0x30] sm:$0xf]
      %v173 = vld [vmem:[%s147 + $0x34] sm:$0xf]
      %v174 = vld [vmem:[%s147 + $0x38] sm:$0xf]
      %v175 = vld [vmem:[%s147 + $0x3c] sm:$0xf]
      %v176 = vld [vmem:[%s147 + $0x40] sm:$0xf]
      %v177 = vld [vmem:[%s147 + $0x44] sm:$0xf]
      %v178 = vld [vmem:[%s147 + $0x48] sm:$0xf]
      %v179 = vld [vmem:[%s147 + $0x4c] sm:$0xf]
      %v180 = vld [vmem:[%s147 + $0x50] sm:$0xf]
      %v181 = vld [vmem:[%s147 + $0x54] sm:$0xf]
      %v182 = vld [vmem:[%s147 + $0x58] sm:$0xf]
      %v183 = vld [vmem:[%s147 + $0x5c] sm:$0xf]
      %v184 = vld [vmem:[%s147 + $0x60] sm:$0xf]
      %v185 = vld [vmem:[%s147 + $0x64] sm:$0xf]
      %v186 = vld [vmem:[%s147 + $0x68] sm:$0xf]
      %v187 = vld [vmem:[%s147 + $0x6c] sm:$0xf]
      %v188 = vld [vmem:[%s147 + $0x70] sm:$0xf]
      %v189 = vld [vmem:[%s147 + $0x74] sm:$0xf]
      %v190 = vld [vmem:[%s147 + $0x78] sm:$0xf]
      %v191 = vld [vmem:[%s147 + $0x7c] sm:$0xf]
      %vm192 = vcmask 1043456
      %v195 = vsel %vm192, %v160, 4286644096
      %v198 = vsel %vm192, %v162, 4286644096
      %v200 = vmax.bf16 %v195, %v198
      %v202 = vsel %vm192, %v161, 4286644096
      %v205 = vsel %vm192, %v163, 4286644096
      %v207 = vmax.bf16 %v202, %v205
      %v209 = vsel %vm192, %v164, 4286644096
      %v212 = vsel %vm192, %v166, 4286644096
      %v214 = vmax.bf16 %v209, %v212
      %v216 = vsel %vm192, %v165, 4286644096
      %v219 = vsel %vm192, %v167, 4286644096
      %v221 = vmax.bf16 %v216, %v219
      %v223 = vsel %vm192, %v168, 4286644096
      %v226 = vsel %vm192, %v170, 4286644096
      %v228 = vmax.bf16 %v223, %v226
      %v230 = vsel %vm192, %v169, 4286644096
      %v233 = vsel %vm192, %v171, 4286644096
      %v235 = vmax.bf16 %v230, %v233
      %v237 = vsel %vm192, %v172, 4286644096
      %v240 = vsel %vm192, %v174, 4286644096
      %v242 = vmax.bf16 %v237, %v240
      %v244 = vsel %vm192, %v173, 4286644096
      %v247 = vsel %vm192, %v175, 4286644096
      %v249 = vmax.bf16 %v244, %v247
      %v251 = vsel %vm192, %v176, 4286644096
      %v254 = vsel %vm192, %v178, 4286644096
      %v256 = vmax.bf16 %v251, %v254
      %v258 = vsel %vm192, %v177, 4286644096
      %v261 = vsel %vm192, %v179, 4286644096
      %v263 = vmax.bf16 %v258, %v261
      %v265 = vsel %vm192, %v180, 4286644096
      %v268 = vsel %vm192, %v182, 4286644096
      %v270 = vmax.bf16 %v265, %v268
      %v272 = vsel %vm192, %v181, 4286644096
      %v275 = vsel %vm192, %v183, 4286644096
      %v277 = vmax.bf16 %v272, %v275
      %v279 = vsel %vm192, %v184, 4286644096
      %v282 = vsel %vm192, %v186, 4286644096
      %v284 = vmax.bf16 %v279, %v282
      %v286 = vsel %vm192, %v185, 4286644096
      %v289 = vsel %vm192, %v187, 4286644096
      %v291 = vmax.bf16 %v286, %v289
      %v293 = vsel %vm192, %v188, 4286644096
      %v296 = vsel %vm192, %v190, 4286644096
      %v298 = vmax.bf16 %v293, %v296
      %v300 = vsel %vm192, %v189, 4286644096
      %v303 = vsel %vm192, %v191, 4286644096
      %v305 = vmax.bf16 %v300, %v303
      %v323 = vunpack.c.l.s4 1966171168
      %v324 = vunpack.c.0.s8 %v323
      %v325 = vlaneseq
      %v326 = vshrl.u32 %v325, 7
      %v327 = vsub.s32 %v324, %v326
      %v328 = vrot.slane %v200, %v327
      %v329 = vcombine.high %v328, %v328
      %v331 = vunpack.c.l.s4 1966171168
      %v332 = vunpack.c.0.s8 %v331
      %v333 = vlaneseq
      %v334 = vshrl.u32 %v333, 7
      %v335 = vsub.s32 %v332, %v334
      %v336 = vrot.slane %v328, %v335
      %v338 = vunpack.c.l.s4 1966171168
      %v339 = vunpack.c.0.s8 %v338
      %v340 = vlaneseq
      %v341 = vshrl.u32 %v340, 7
      %v342 = vsub.s32 %v339, %v341
      %v343 = vrot.slane %v329, %v342
      %v344 = vcombine.high %v336, %v336
      %v345 = vcombine.high %v343, %v343
      %v347 = vunpack.c.l.s4 1966171168
      %v348 = vunpack.c.0.s8 %v347
      %v349 = vlaneseq
      %v350 = vshrl.u32 %v349, 7
      %v351 = vsub.s32 %v348, %v350
      %v352 = vrot.slane %v207, %v351
      %v353 = vcombine.high %v352, %v352
      %v355 = vunpack.c.l.s4 1966171168
      %v356 = vunpack.c.0.s8 %v355
      %v357 = vlaneseq
      %v358 = vshrl.u32 %v357, 7
      %v359 = vsub.s32 %v356, %v358
      %v360 = vrot.slane %v352, %v359
      %v362 = vunpack.c.l.s4 1966171168
      %v363 = vunpack.c.0.s8 %v362
      %v364 = vlaneseq
      %v365 = vshrl.u32 %v364, 7
      %v366 = vsub.s32 %v363, %v365
      %v367 = vrot.slane %v353, %v366
      %v368 = vcombine.high %v360, %v360
      %v369 = vcombine.high %v367, %v367
      %v371 = vunpack.c.l.s4 1966171168
      %v372 = vunpack.c.0.s8 %v371
      %v373 = vlaneseq
      %v374 = vshrl.u32 %v373, 7
      %v375 = vsub.s32 %v372, %v374
      %v376 = vrot.slane %v214, %v375
      %v377 = vcombine.high %v376, %v376
      %v379 = vunpack.c.l.s4 1966171168
      %v380 = vunpack.c.0.s8 %v379
      %v381 = vlaneseq
      %v382 = vshrl.u32 %v381, 7
      %v383 = vsub.s32 %v380, %v382
      %v384 = vrot.slane %v376, %v383
      %v386 = vunpack.c.l.s4 1966171168
      %v387 = vunpack.c.0.s8 %v386
      %v388 = vlaneseq
      %v389 = vshrl.u32 %v388, 7
      %v390 = vsub.s32 %v387, %v389
      %v391 = vrot.slane %v377, %v390
      %v392 = vcombine.high %v384, %v384
      %v393 = vcombine.high %v391, %v391
      %v395 = vunpack.c.l.s4 1966171168
      %v396 = vunpack.c.0.s8 %v395
      %v397 = vlaneseq
      %v398 = vshrl.u32 %v397, 7
      %v399 = vsub.s32 %v396, %v398
      %v400 = vrot.slane %v221, %v399
      %v401 = vcombine.high %v400, %v400
      %v403 = vunpack.c.l.s4 1966171168
      %v404 = vunpack.c.0.s8 %v403
      %v405 = vlaneseq
      %v406 = vshrl.u32 %v405, 7
      %v407 = vsub.s32 %v404, %v406
      %v408 = vrot.slane %v400, %v407
      %v410 = vunpack.c.l.s4 1966171168
      %v411 = vunpack.c.0.s8 %v410
      %v412 = vlaneseq
      %v413 = vshrl.u32 %v412, 7
      %v414 = vsub.s32 %v411, %v413
      %v415 = vrot.slane %v401, %v414
      %v416 = vcombine.high %v408, %v408
      %v417 = vcombine.high %v415, %v415
      %v419 = vunpack.c.l.s4 1966171168
      %v420 = vunpack.c.0.s8 %v419
      %v421 = vlaneseq
      %v422 = vshrl.u32 %v421, 7
      %v423 = vsub.s32 %v420, %v422
      %v424 = vrot.slane %v228, %v423
      %v425 = vcombine.high %v424, %v424
      %v427 = vunpack.c.l.s4 1966171168
      %v428 = vunpack.c.0.s8 %v427
      %v429 = vlaneseq
      %v430 = vshrl.u32 %v429, 7
      %v431 = vsub.s32 %v428, %v430
      %v432 = vrot.slane %v424, %v431
      %v434 = vunpack.c.l.s4 1966171168
      %v435 = vunpack.c.0.s8 %v434
      %v436 = vlaneseq
      %v437 = vshrl.u32 %v436, 7
      %v438 = vsub.s32 %v435, %v437
      %v439 = vrot.slane %v425, %v438
      %v440 = vcombine.high %v432, %v432
      %v441 = vcombine.high %v439, %v439
      %v443 = vunpack.c.l.s4 1966171168
      %v444 = vunpack.c.0.s8 %v443
      %v445 = vlaneseq
      %v446 = vshrl.u32 %v445, 7
      %v447 = vsub.s32 %v444, %v446
      %v448 = vrot.slane %v235, %v447
      %v449 = vcombine.high %v448, %v448
      %v451 = vunpack.c.l.s4 1966171168
      %v452 = vunpack.c.0.s8 %v451
      %v453 = vlaneseq
      %v454 = vshrl.u32 %v453, 7
      %v455 = vsub.s32 %v452, %v454
      %v456 = vrot.slane %v448, %v455
      %v458 = vunpack.c.l.s4 1966171168
      %v459 = vunpack.c.0.s8 %v458
      %v460 = vlaneseq
      %v461 = vshrl.u32 %v460, 7
      %v462 = vsub.s32 %v459, %v461
      %v463 = vrot.slane %v449, %v462
      %v464 = vcombine.high %v456, %v456
      %v465 = vcombine.high %v463, %v463
      %v467 = vunpack.c.l.s4 1966171168
      %v468 = vunpack.c.0.s8 %v467
      %v469 = vlaneseq
      %v470 = vshrl.u32 %v469, 7
      %v471 = vsub.s32 %v468, %v470
      %v472 = vrot.slane %v242, %v471
      %v473 = vcombine.high %v472, %v472
      %v475 = vunpack.c.l.s4 1966171168
      %v476 = vunpack.c.0.s8 %v475
      %v477 = vlaneseq
      %v478 = vshrl.u32 %v477, 7
      %v479 = vsub.s32 %v476, %v478
      %v480 = vrot.slane %v472, %v479
      %v482 = vunpack.c.l.s4 1966171168
      %v483 = vunpack.c.0.s8 %v482
      %v484 = vlaneseq
      %v485 = vshrl.u32 %v484, 7
      %v486 = vsub.s32 %v483, %v485
      %v487 = vrot.slane %v473, %v486
      %v488 = vcombine.high %v480, %v480
      %v489 = vcombine.high %v487, %v487
      %v491 = vunpack.c.l.s4 1966171168
      %v492 = vunpack.c.0.s8 %v491
      %v493 = vlaneseq
      %v494 = vshrl.u32 %v493, 7
      %v495 = vsub.s32 %v492, %v494
      %v496 = vrot.slane %v249, %v495
      %v497 = vcombine.high %v496, %v496
      %v499 = vunpack.c.l.s4 1966171168
      %v500 = vunpack.c.0.s8 %v499
      %v501 = vlaneseq
      %v502 = vshrl.u32 %v501, 7
      %v503 = vsub.s32 %v500, %v502
      %v504 = vrot.slane %v496, %v503
      %v506 = vunpack.c.l.s4 1966171168
      %v507 = vunpack.c.0.s8 %v506
      %v508 = vlaneseq
      %v509 = vshrl.u32 %v508, 7
      %v510 = vsub.s32 %v507, %v509
      %v511 = vrot.slane %v497, %v510
      %v512 = vcombine.high %v504, %v504
      %v513 = vcombine.high %v511, %v511
      %v515 = vunpack.c.l.s4 1966171168
      %v516 = vunpack.c.0.s8 %v515
      %v517 = vlaneseq
      %v518 = vshrl.u32 %v517, 7
      %v519 = vsub.s32 %v516, %v518
      %v520 = vrot.slane %v256, %v519
      %v521 = vcombine.high %v520, %v520
      %v523 = vunpack.c.l.s4 1966171168
      %v524 = vunpack.c.0.s8 %v523
      %v525 = vlaneseq
      %v526 = vshrl.u32 %v525, 7
      %v527 = vsub.s32 %v524, %v526
      %v528 = vrot.slane %v520, %v527
      %v530 = vunpack.c.l.s4 1966171168
      %v531 = vunpack.c.0.s8 %v530
      %v532 = vlaneseq
      %v533 = vshrl.u32 %v532, 7
      %v534 = vsub.s32 %v531, %v533
      %v535 = vrot.slane %v521, %v534
      %v536 = vcombine.high %v528, %v528
      %v537 = vcombine.high %v535, %v535
      %v539 = vunpack.c.l.s4 1966171168
      %v540 = vunpack.c.0.s8 %v539
      %v541 = vlaneseq
      %v542 = vshrl.u32 %v541, 7
      %v543 = vsub.s32 %v540, %v542
      %v544 = vrot.slane %v263, %v543
      %v545 = vcombine.high %v544, %v544
      %v547 = vunpack.c.l.s4 1966171168
      %v548 = vunpack.c.0.s8 %v547
      %v549 = vlaneseq
      %v550 = vshrl.u32 %v549, 7
      %v551 = vsub.s32 %v548, %v550
      %v552 = vrot.slane %v544, %v551
      %v554 = vunpack.c.l.s4 1966171168
      %v555 = vunpack.c.0.s8 %v554
      %v556 = vlaneseq
      %v557 = vshrl.u32 %v556, 7
      %v558 = vsub.s32 %v555, %v557
      %v559 = vrot.slane %v545, %v558
      %v560 = vcombine.high %v552, %v552
      %v561 = vcombine.high %v559, %v559
      %v563 = vunpack.c.l.s4 1966171168
      %v564 = vunpack.c.0.s8 %v563
      %v565 = vlaneseq
      %v566 = vshrl.u32 %v565, 7
      %v567 = vsub.s32 %v564, %v566
      %v568 = vrot.slane %v270, %v567
      %v569 = vcombine.high %v568, %v568
      %v571 = vunpack.c.l.s4 1966171168
      %v572 = vunpack.c.0.s8 %v571
      %v573 = vlaneseq
      %v574 = vshrl.u32 %v573, 7
      %v575 = vsub.s32 %v572, %v574
      %v576 = vrot.slane %v568, %v575
      %v578 = vunpack.c.l.s4 1966171168
      %v579 = vunpack.c.0.s8 %v578
      %v580 = vlaneseq
      %v581 = vshrl.u32 %v580, 7
      %v582 = vsub.s32 %v579, %v581
      %v583 = vrot.slane %v569, %v582
      %v584 = vcombine.high %v576, %v576
      %v585 = vcombine.high %v583, %v583
      %v587 = vunpack.c.l.s4 1966171168
      %v588 = vunpack.c.0.s8 %v587
      %v589 = vlaneseq
      %v590 = vshrl.u32 %v589, 7
      %v591 = vsub.s32 %v588, %v590
      %v592 = vrot.slane %v277, %v591
      %v593 = vcombine.high %v592, %v592
      %v595 = vunpack.c.l.s4 1966171168
      %v596 = vunpack.c.0.s8 %v595
      %v597 = vlaneseq
      %v598 = vshrl.u32 %v597, 7
      %v599 = vsub.s32 %v596, %v598
      %v600 = vrot.slane %v592, %v599
      %v602 = vunpack.c.l.s4 1966171168
      %v603 = vunpack.c.0.s8 %v602
      %v604 = vlaneseq
      %v605 = vshrl.u32 %v604, 7
      %v606 = vsub.s32 %v603, %v605
      %v607 = vrot.slane %v593, %v606
      %v608 = vcombine.high %v600, %v600
      %v609 = vcombine.high %v607, %v607
      %v611 = vunpack.c.l.s4 1966171168
      %v612 = vunpack.c.0.s8 %v611
      %v613 = vlaneseq
      %v614 = vshrl.u32 %v613, 7
      %v615 = vsub.s32 %v612, %v614
      %v616 = vrot.slane %v284, %v615
      %v617 = vcombine.high %v616, %v616
      %v619 = vunpack.c.l.s4 1966171168
      %v620 = vunpack.c.0.s8 %v619
      %v621 = vlaneseq
      %v622 = vshrl.u32 %v621, 7
      %v623 = vsub.s32 %v620, %v622
      %v624 = vrot.slane %v616, %v623
      %v626 = vunpack.c.l.s4 1966171168
      %v627 = vunpack.c.0.s8 %v626
      %v628 = vlaneseq
      %v629 = vshrl.u32 %v628, 7
      %v630 = vsub.s32 %v627, %v629
      %v631 = vrot.slane %v617, %v630
      %v632 = vcombine.high %v624, %v624
      %v633 = vcombine.high %v631, %v631
      %v635 = vunpack.c.l.s4 1966171168
      %v636 = vunpack.c.0.s8 %v635
      %v637 = vlaneseq
      %v638 = vshrl.u32 %v637, 7
      %v639 = vsub.s32 %v636, %v638
      %v640 = vrot.slane %v291, %v639
      %v641 = vcombine.high %v640, %v640
      %v643 = vunpack.c.l.s4 1966171168
      %v644 = vunpack.c.0.s8 %v643
      %v645 = vlaneseq
      %v646 = vshrl.u32 %v645, 7
      %v647 = vsub.s32 %v644, %v646
      %v648 = vrot.slane %v640, %v647
      %v650 = vunpack.c.l.s4 1966171168
      %v651 = vunpack.c.0.s8 %v650
      %v652 = vlaneseq
      %v653 = vshrl.u32 %v652, 7
      %v654 = vsub.s32 %v651, %v653
      %v655 = vrot.slane %v641, %v654
      %v656 = vcombine.high %v648, %v648
      %v657 = vcombine.high %v655, %v655
      %v659 = vunpack.c.l.s4 1966171168
      %v660 = vunpack.c.0.s8 %v659
      %v661 = vlaneseq
      %v662 = vshrl.u32 %v661, 7
      %v663 = vsub.s32 %v660, %v662
      %v664 = vrot.slane %v298, %v663
      %v665 = vcombine.high %v664, %v664
      %v667 = vunpack.c.l.s4 1966171168
      %v668 = vunpack.c.0.s8 %v667
      %v669 = vlaneseq
      %v670 = vshrl.u32 %v669, 7
      %v671 = vsub.s32 %v668, %v670
      %v672 = vrot.slane %v664, %v671
      %v674 = vunpack.c.l.s4 1966171168
      %v675 = vunpack.c.0.s8 %v674
      %v676 = vlaneseq
      %v677 = vshrl.u32 %v676, 7
      %v678 = vsub.s32 %v675, %v677
      %v679 = vrot.slane %v665, %v678
      %v680 = vcombine.high %v672, %v672
      %v681 = vcombine.high %v679, %v679
      %v683 = vunpack.c.l.s4 1966171168
      %v684 = vunpack.c.0.s8 %v683
      %v685 = vlaneseq
      %v686 = vshrl.u32 %v685, 7
      %v687 = vsub.s32 %v684, %v686
      %v688 = vrot.slane %v305, %v687
      %v689 = vcombine.high %v688, %v688
      %v691 = vunpack.c.l.s4 1966171168
      %v692 = vunpack.c.0.s8 %v691
      %v693 = vlaneseq
      %v694 = vshrl.u32 %v693, 7
      %v695 = vsub.s32 %v692, %v694
      %v696 = vrot.slane %v688, %v695
      %v698 = vunpack.c.l.s4 1966171168
      %v699 = vunpack.c.0.s8 %v698
      %v700 = vlaneseq
      %v701 = vshrl.u32 %v700, 7
      %v702 = vsub.s32 %v699, %v701
      %v703 = vrot.slane %v689, %v702
      %v704 = vcombine.high %v696, %v696
      %v705 = vcombine.high %v703, %v703
      %vm706 = vcmask 1040384
      %v708 = vsel %vm706, %v336, 4286644096
      %v710 = vunpack.i.l.bf16 %v708
      %v711 = vunpack.i.h.bf16 %v708
      %v712 = vmax.f32 %v710, %v711
      %v713 = vrot.slane %v712, 4
      %v714 = vmax.f32 %v712, %v713
      %v715 = vrot.slane %v714, 2
      %v716 = vmax.f32 %v714, %v715
      %v717 = vrot.slane %v716, 1
      %v718 = vmax.f32 %v716, %v717
      %v719 = vpack.i.bf16 %v718, %v718
      %v721 = vsel %vm706, %v343, 4286644096
      %v723 = vunpack.i.l.bf16 %v721
      %v724 = vunpack.i.h.bf16 %v721
      %v725 = vmax.f32 %v723, %v724
      %v726 = vrot.slane %v725, 4
      %v727 = vmax.f32 %v725, %v726
      %v728 = vrot.slane %v727, 2
      %v729 = vmax.f32 %v727, %v728
      %v730 = vrot.slane %v729, 1
      %v731 = vmax.f32 %v729, %v730
      %v732 = vpack.i.bf16 %v731, %v731
      %v734 = vsel %vm706, %v344, 4286644096
      %v736 = vunpack.i.l.bf16 %v734
      %v737 = vunpack.i.h.bf16 %v734
      %v738 = vmax.f32 %v736, %v737
      %v739 = vrot.slane %v738, 4
      %v740 = vmax.f32 %v738, %v739
      %v741 = vrot.slane %v740, 2
      %v742 = vmax.f32 %v740, %v741
      %v743 = vrot.slane %v742, 1
      %v744 = vmax.f32 %v742, %v743
      %v745 = vpack.i.bf16 %v744, %v744
      %v747 = vsel %vm706, %v345, 4286644096
      %v749 = vunpack.i.l.bf16 %v747
      %v750 = vunpack.i.h.bf16 %v747
      %v751 = vmax.f32 %v749, %v750
      %v752 = vrot.slane %v751, 4
      %v753 = vmax.f32 %v751, %v752
      %v754 = vrot.slane %v753, 2
      %v755 = vmax.f32 %v753, %v754
      %v756 = vrot.slane %v755, 1
      %v757 = vmax.f32 %v755, %v756
      %v758 = vpack.i.bf16 %v757, %v757
      %v760 = vsel %vm706, %v360, 4286644096
      %v762 = vunpack.i.l.bf16 %v760
      %v763 = vunpack.i.h.bf16 %v760
      %v764 = vmax.f32 %v762, %v763
      %v765 = vrot.slane %v764, 4
      %v766 = vmax.f32 %v764, %v765
      %v767 = vrot.slane %v766, 2
      %v768 = vmax.f32 %v766, %v767
      %v769 = vrot.slane %v768, 1
      %v770 = vmax.f32 %v768, %v769
      %v771 = vpack.i.bf16 %v770, %v770
      %v773 = vsel %vm706, %v367, 4286644096
      %v775 = vunpack.i.l.bf16 %v773
      %v776 = vunpack.i.h.bf16 %v773
      %v777 = vmax.f32 %v775, %v776
      %v778 = vrot.slane %v777, 4
      %v779 = vmax.f32 %v777, %v778
      %v780 = vrot.slane %v779, 2
      %v781 = vmax.f32 %v779, %v780
      %v782 = vrot.slane %v781, 1
      %v783 = vmax.f32 %v781, %v782
      %v784 = vpack.i.bf16 %v783, %v783
      %v786 = vsel %vm706, %v368, 4286644096
      %v788 = vunpack.i.l.bf16 %v786
      %v789 = vunpack.i.h.bf16 %v786
      %v790 = vmax.f32 %v788, %v789
      %v791 = vrot.slane %v790, 4
      %v792 = vmax.f32 %v790, %v791
      %v793 = vrot.slane %v792, 2
      %v794 = vmax.f32 %v792, %v793
      %v795 = vrot.slane %v794, 1
      %v796 = vmax.f32 %v794, %v795
      %v797 = vpack.i.bf16 %v796, %v796
      %v799 = vsel %vm706, %v369, 4286644096
      %v801 = vunpack.i.l.bf16 %v799
      %v802 = vunpack.i.h.bf16 %v799
      %v803 = vmax.f32 %v801, %v802
      %v804 = vrot.slane %v803, 4
      %v805 = vmax.f32 %v803, %v804
      %v806 = vrot.slane %v805, 2
      %v807 = vmax.f32 %v805, %v806
      %v808 = vrot.slane %v807, 1
      %v809 = vmax.f32 %v807, %v808
      %v810 = vpack.i.bf16 %v809, %v809
      %v812 = vsel %vm706, %v384, 4286644096
      %v814 = vunpack.i.l.bf16 %v812
      %v815 = vunpack.i.h.bf16 %v812
      %v816 = vmax.f32 %v814, %v815
      %v817 = vrot.slane %v816, 4
      %v818 = vmax.f32 %v816, %v817
      %v819 = vrot.slane %v818, 2
      %v820 = vmax.f32 %v818, %v819
      %v821 = vrot.slane %v820, 1
      %v822 = vmax.f32 %v820, %v821
      %v823 = vpack.i.bf16 %v822, %v822
      %v825 = vsel %vm706, %v391, 4286644096
      %v827 = vunpack.i.l.bf16 %v825
      %v828 = vunpack.i.h.bf16 %v825
      %v829 = vmax.f32 %v827, %v828
      %v830 = vrot.slane %v829, 4
      %v831 = vmax.f32 %v829, %v830
      %v832 = vrot.slane %v831, 2
      %v833 = vmax.f32 %v831, %v832
      %v834 = vrot.slane %v833, 1
      %v835 = vmax.f32 %v833, %v834
      %v836 = vpack.i.bf16 %v835, %v835
      %v838 = vsel %vm706, %v392, 4286644096
      %v840 = vunpack.i.l.bf16 %v838
      %v841 = vunpack.i.h.bf16 %v838
      %v842 = vmax.f32 %v840, %v841
      %v843 = vrot.slane %v842, 4
      %v844 = vmax.f32 %v842, %v843
      %v845 = vrot.slane %v844, 2
      %v846 = vmax.f32 %v844, %v845
      %v847 = vrot.slane %v846, 1
      %v848 = vmax.f32 %v846, %v847
      %v849 = vpack.i.bf16 %v848, %v848
      %v851 = vsel %vm706, %v393, 4286644096
      %v853 = vunpack.i.l.bf16 %v851
      %v854 = vunpack.i.h.bf16 %v851
      %v855 = vmax.f32 %v853, %v854
      %v856 = vrot.slane %v855, 4
      %v857 = vmax.f32 %v855, %v856
      %v858 = vrot.slane %v857, 2
      %v859 = vmax.f32 %v857, %v858
      %v860 = vrot.slane %v859, 1
      %v861 = vmax.f32 %v859, %v860
      %v862 = vpack.i.bf16 %v861, %v861
      %v864 = vsel %vm706, %v408, 4286644096
      %v866 = vunpack.i.l.bf16 %v864
      %v867 = vunpack.i.h.bf16 %v864
      %v868 = vmax.f32 %v866, %v867
      %v869 = vrot.slane %v868, 4
      %v870 = vmax.f32 %v868, %v869
      %v871 = vrot.slane %v870, 2
      %v872 = vmax.f32 %v870, %v871
      %v873 = vrot.slane %v872, 1
      %v874 = vmax.f32 %v872, %v873
      %v875 = vpack.i.bf16 %v874, %v874
      %v877 = vsel %vm706, %v415, 4286644096
      %v879 = vunpack.i.l.bf16 %v877
      %v880 = vunpack.i.h.bf16 %v877
      %v881 = vmax.f32 %v879, %v880
      %v882 = vrot.slane %v881, 4
      %v883 = vmax.f32 %v881, %v882
      %v884 = vrot.slane %v883, 2
      %v885 = vmax.f32 %v883, %v884
      %v886 = vrot.slane %v885, 1
      %v887 = vmax.f32 %v885, %v886
      %v888 = vpack.i.bf16 %v887, %v887
      %v890 = vsel %vm706, %v416, 4286644096
      %v892 = vunpack.i.l.bf16 %v890
      %v893 = vunpack.i.h.bf16 %v890
      %v894 = vmax.f32 %v892, %v893
      %v895 = vrot.slane %v894, 4
      %v896 = vmax.f32 %v894, %v895
      %v897 = vrot.slane %v896, 2
      %v898 = vmax.f32 %v896, %v897
      %v899 = vrot.slane %v898, 1
      %v900 = vmax.f32 %v898, %v899
      %v901 = vpack.i.bf16 %v900, %v900
      %v903 = vsel %vm706, %v417, 4286644096
      %v905 = vunpack.i.l.bf16 %v903
      %v906 = vunpack.i.h.bf16 %v903
      %v907 = vmax.f32 %v905, %v906
      %v908 = vrot.slane %v907, 4
      %v909 = vmax.f32 %v907, %v908
      %v910 = vrot.slane %v909, 2
      %v911 = vmax.f32 %v909, %v910
      %v912 = vrot.slane %v911, 1
      %v913 = vmax.f32 %v911, %v912
      %v914 = vpack.i.bf16 %v913, %v913
      %v916 = vsel %vm706, %v432, 4286644096
      %v918 = vunpack.i.l.bf16 %v916
      %v919 = vunpack.i.h.bf16 %v916
      %v920 = vmax.f32 %v918, %v919
      %v921 = vrot.slane %v920, 4
      %v922 = vmax.f32 %v920, %v921
      %v923 = vrot.slane %v922, 2
      %v924 = vmax.f32 %v922, %v923
      %v925 = vrot.slane %v924, 1
      %v926 = vmax.f32 %v924, %v925
      %v927 = vpack.i.bf16 %v926, %v926
      %v929 = vsel %vm706, %v439, 4286644096
      %v931 = vunpack.i.l.bf16 %v929
      %v932 = vunpack.i.h.bf16 %v929
      %v933 = vmax.f32 %v931, %v932
      %v934 = vrot.slane %v933, 4
      %v935 = vmax.f32 %v933, %v934
      %v936 = vrot.slane %v935, 2
      %v937 = vmax.f32 %v935, %v936
      %v938 = vrot.slane %v937, 1
      %v939 = vmax.f32 %v937, %v938
      %v940 = vpack.i.bf16 %v939, %v939
      %v942 = vsel %vm706, %v440, 4286644096
      %v944 = vunpack.i.l.bf16 %v942
      %v945 = vunpack.i.h.bf16 %v942
      %v946 = vmax.f32 %v944, %v945
      %v947 = vrot.slane %v946, 4
      %v948 = vmax.f32 %v946, %v947
      %v949 = vrot.slane %v948, 2
      %v950 = vmax.f32 %v948, %v949
      %v951 = vrot.slane %v950, 1
      %v952 = vmax.f32 %v950, %v951
      %v953 = vpack.i.bf16 %v952, %v952
      %v955 = vsel %vm706, %v441, 4286644096
      %v957 = vunpack.i.l.bf16 %v955
      %v958 = vunpack.i.h.bf16 %v955
      %v959 = vmax.f32 %v957, %v958
      %v960 = vrot.slane %v959, 4
      %v961 = vmax.f32 %v959, %v960
      %v962 = vrot.slane %v961, 2
      %v963 = vmax.f32 %v961, %v962
      %v964 = vrot.slane %v963, 1
      %v965 = vmax.f32 %v963, %v964
      %v966 = vpack.i.bf16 %v965, %v965
      %v968 = vsel %vm706, %v456, 4286644096
      %v970 = vunpack.i.l.bf16 %v968
      %v971 = vunpack.i.h.bf16 %v968
      %v972 = vmax.f32 %v970, %v971
      %v973 = vrot.slane %v972, 4
      %v974 = vmax.f32 %v972, %v973
      %v975 = vrot.slane %v974, 2
      %v976 = vmax.f32 %v974, %v975
      %v977 = vrot.slane %v976, 1
      %v978 = vmax.f32 %v976, %v977
      %v979 = vpack.i.bf16 %v978, %v978
      %v981 = vsel %vm706, %v463, 4286644096
      %v983 = vunpack.i.l.bf16 %v981
      %v984 = vunpack.i.h.bf16 %v981
      %v985 = vmax.f32 %v983, %v984
      %v986 = vrot.slane %v985, 4
      %v987 = vmax.f32 %v985, %v986
      %v988 = vrot.slane %v987, 2
      %v989 = vmax.f32 %v987, %v988
      %v990 = vrot.slane %v989, 1
      %v991 = vmax.f32 %v989, %v990
      %v992 = vpack.i.bf16 %v991, %v991
      %v994 = vsel %vm706, %v464, 4286644096
      %v996 = vunpack.i.l.bf16 %v994
      %v997 = vunpack.i.h.bf16 %v994
      %v998 = vmax.f32 %v996, %v997
      %v999 = vrot.slane %v998, 4
      %v1000 = vmax.f32 %v998, %v999
      %v1001 = vrot.slane %v1000, 2
      %v1002 = vmax.f32 %v1000, %v1001
      %v1003 = vrot.slane %v1002, 1
      %v1004 = vmax.f32 %v1002, %v1003
      %v1005 = vpack.i.bf16 %v1004, %v1004
      %v1007 = vsel %vm706, %v465, 4286644096
      %v1009 = vunpack.i.l.bf16 %v1007
      %v1010 = vunpack.i.h.bf16 %v1007
      %v1011 = vmax.f32 %v1009, %v1010
      %v1012 = vrot.slane %v1011, 4
      %v1013 = vmax.f32 %v1011, %v1012
      %v1014 = vrot.slane %v1013, 2
      %v1015 = vmax.f32 %v1013, %v1014
      %v1016 = vrot.slane %v1015, 1
      %v1017 = vmax.f32 %v1015, %v1016
      %v1018 = vpack.i.bf16 %v1017, %v1017
      %v1020 = vsel %vm706, %v480, 4286644096
      %v1022 = vunpack.i.l.bf16 %v1020
      %v1023 = vunpack.i.h.bf16 %v1020
      %v1024 = vmax.f32 %v1022, %v1023
      %v1025 = vrot.slane %v1024, 4
      %v1026 = vmax.f32 %v1024, %v1025
      %v1027 = vrot.slane %v1026, 2
      %v1028 = vmax.f32 %v1026, %v1027
      %v1029 = vrot.slane %v1028, 1
      %v1030 = vmax.f32 %v1028, %v1029
      %v1031 = vpack.i.bf16 %v1030, %v1030
      %v1033 = vsel %vm706, %v487, 4286644096
      %v1035 = vunpack.i.l.bf16 %v1033
      %v1036 = vunpack.i.h.bf16 %v1033
      %v1037 = vmax.f32 %v1035, %v1036
      %v1038 = vrot.slane %v1037, 4
      %v1039 = vmax.f32 %v1037, %v1038
      %v1040 = vrot.slane %v1039, 2
      %v1041 = vmax.f32 %v1039, %v1040
      %v1042 = vrot.slane %v1041, 1
      %v1043 = vmax.f32 %v1041, %v1042
      %v1044 = vpack.i.bf16 %v1043, %v1043
      %v1046 = vsel %vm706, %v488, 4286644096
      %v1048 = vunpack.i.l.bf16 %v1046
      %v1049 = vunpack.i.h.bf16 %v1046
      %v1050 = vmax.f32 %v1048, %v1049
      %v1051 = vrot.slane %v1050, 4
      %v1052 = vmax.f32 %v1050, %v1051
      %v1053 = vrot.slane %v1052, 2
      %v1054 = vmax.f32 %v1052, %v1053
      %v1055 = vrot.slane %v1054, 1
      %v1056 = vmax.f32 %v1054, %v1055
      %v1057 = vpack.i.bf16 %v1056, %v1056
      %v1059 = vsel %vm706, %v489, 4286644096
      %v1061 = vunpack.i.l.bf16 %v1059
      %v1062 = vunpack.i.h.bf16 %v1059
      %v1063 = vmax.f32 %v1061, %v1062
      %v1064 = vrot.slane %v1063, 4
      %v1065 = vmax.f32 %v1063, %v1064
      %v1066 = vrot.slane %v1065, 2
      %v1067 = vmax.f32 %v1065, %v1066
      %v1068 = vrot.slane %v1067, 1
      %v1069 = vmax.f32 %v1067, %v1068
      %v1070 = vpack.i.bf16 %v1069, %v1069
      %v1072 = vsel %vm706, %v504, 4286644096
      %v1074 = vunpack.i.l.bf16 %v1072
      %v1075 = vunpack.i.h.bf16 %v1072
      %v1076 = vmax.f32 %v1074, %v1075
      %v1077 = vrot.slane %v1076, 4
      %v1078 = vmax.f32 %v1076, %v1077
      %v1079 = vrot.slane %v1078, 2
      %v1080 = vmax.f32 %v1078, %v1079
      %v1081 = vrot.slane %v1080, 1
      %v1082 = vmax.f32 %v1080, %v1081
      %v1083 = vpack.i.bf16 %v1082, %v1082
      %v1085 = vsel %vm706, %v511, 4286644096
      %v1087 = vunpack.i.l.bf16 %v1085
      %v1088 = vunpack.i.h.bf16 %v1085
      %v1089 = vmax.f32 %v1087, %v1088
      %v1090 = vrot.slane %v1089, 4
      %v1091 = vmax.f32 %v1089, %v1090
      %v1092 = vrot.slane %v1091, 2
      %v1093 = vmax.f32 %v1091, %v1092
      %v1094 = vrot.slane %v1093, 1
      %v1095 = vmax.f32 %v1093, %v1094
      %v1096 = vpack.i.bf16 %v1095, %v1095
      %v1098 = vsel %vm706, %v512, 4286644096
      %v1100 = vunpack.i.l.bf16 %v1098
      %v1101 = vunpack.i.h.bf16 %v1098
      %v1102 = vmax.f32 %v1100, %v1101
      %v1103 = vrot.slane %v1102, 4
      %v1104 = vmax.f32 %v1102, %v1103
      %v1105 = vrot.slane %v1104, 2
      %v1106 = vmax.f32 %v1104, %v1105
      %v1107 = vrot.slane %v1106, 1
      %v1108 = vmax.f32 %v1106, %v1107
      %v1109 = vpack.i.bf16 %v1108, %v1108
      %v1111 = vsel %vm706, %v513, 4286644096
      %v1113 = vunpack.i.l.bf16 %v1111
      %v1114 = vunpack.i.h.bf16 %v1111
      %v1115 = vmax.f32 %v1113, %v1114
      %v1116 = vrot.slane %v1115, 4
      %v1117 = vmax.f32 %v1115, %v1116
      %v1118 = vrot.slane %v1117, 2
      %v1119 = vmax.f32 %v1117, %v1118
      %v1120 = vrot.slane %v1119, 1
      %v1121 = vmax.f32 %v1119, %v1120
      %v1122 = vpack.i.bf16 %v1121, %v1121
      %v1124 = vsel %vm706, %v528, 4286644096
      %v1126 = vunpack.i.l.bf16 %v1124
      %v1127 = vunpack.i.h.bf16 %v1124
      %v1128 = vmax.f32 %v1126, %v1127
      %v1129 = vrot.slane %v1128, 4
      %v1130 = vmax.f32 %v1128, %v1129
      %v1131 = vrot.slane %v1130, 2
      %v1132 = vmax.f32 %v1130, %v1131
      %v1133 = vrot.slane %v1132, 1
      %v1134 = vmax.f32 %v1132, %v1133
      %v1135 = vpack.i.bf16 %v1134, %v1134
      %v1137 = vsel %vm706, %v535, 4286644096
      %v1139 = vunpack.i.l.bf16 %v1137
      %v1140 = vunpack.i.h.bf16 %v1137
      %v1141 = vmax.f32 %v1139, %v1140
      %v1142 = vrot.slane %v1141, 4
      %v1143 = vmax.f32 %v1141, %v1142
      %v1144 = vrot.slane %v1143, 2
      %v1145 = vmax.f32 %v1143, %v1144
      %v1146 = vrot.slane %v1145, 1
      %v1147 = vmax.f32 %v1145, %v1146
      %v1148 = vpack.i.bf16 %v1147, %v1147
      %v1150 = vsel %vm706, %v536, 4286644096
      %v1152 = vunpack.i.l.bf16 %v1150
      %v1153 = vunpack.i.h.bf16 %v1150
      %v1154 = vmax.f32 %v1152, %v1153
      %v1155 = vrot.slane %v1154, 4
      %v1156 = vmax.f32 %v1154, %v1155
      %v1157 = vrot.slane %v1156, 2
      %v1158 = vmax.f32 %v1156, %v1157
      %v1159 = vrot.slane %v1158, 1
      %v1160 = vmax.f32 %v1158, %v1159
      %v1161 = vpack.i.bf16 %v1160, %v1160
      %v1163 = vsel %vm706, %v537, 4286644096
      %v1165 = vunpack.i.l.bf16 %v1163
      %v1166 = vunpack.i.h.bf16 %v1163
      %v1167 = vmax.f32 %v1165, %v1166
      %v1168 = vrot.slane %v1167, 4
      %v1169 = vmax.f32 %v1167, %v1168
      %v1170 = vrot.slane %v1169, 2
      %v1171 = vmax.f32 %v1169, %v1170
      %v1172 = vrot.slane %v1171, 1
      %v1173 = vmax.f32 %v1171, %v1172
      %v1174 = vpack.i.bf16 %v1173, %v1173
      %v1176 = vsel %vm706, %v552, 4286644096
      %v1178 = vunpack.i.l.bf16 %v1176
      %v1179 = vunpack.i.h.bf16 %v1176
      %v1180 = vmax.f32 %v1178, %v1179
      %v1181 = vrot.slane %v1180, 4
      %v1182 = vmax.f32 %v1180, %v1181
      %v1183 = vrot.slane %v1182, 2
      %v1184 = vmax.f32 %v1182, %v1183
      %v1185 = vrot.slane %v1184, 1
      %v1186 = vmax.f32 %v1184, %v1185
      %v1187 = vpack.i.bf16 %v1186, %v1186
      %v1189 = vsel %vm706, %v559, 4286644096
      %v1191 = vunpack.i.l.bf16 %v1189
      %v1192 = vunpack.i.h.bf16 %v1189
      %v1193 = vmax.f32 %v1191, %v1192
      %v1194 = vrot.slane %v1193, 4
      %v1195 = vmax.f32 %v1193, %v1194
      %v1196 = vrot.slane %v1195, 2
      %v1197 = vmax.f32 %v1195, %v1196
      %v1198 = vrot.slane %v1197, 1
      %v1199 = vmax.f32 %v1197, %v1198
      %v1200 = vpack.i.bf16 %v1199, %v1199
      %v1202 = vsel %vm706, %v560, 4286644096
      %v1204 = vunpack.i.l.bf16 %v1202
      %v1205 = vunpack.i.h.bf16 %v1202
      %v1206 = vmax.f32 %v1204, %v1205
      %v1207 = vrot.slane %v1206, 4
      %v1208 = vmax.f32 %v1206, %v1207
      %v1209 = vrot.slane %v1208, 2
      %v1210 = vmax.f32 %v1208, %v1209
      %v1211 = vrot.slane %v1210, 1
      %v1212 = vmax.f32 %v1210, %v1211
      %v1213 = vpack.i.bf16 %v1212, %v1212
      %v1215 = vsel %vm706, %v561, 4286644096
      %v1217 = vunpack.i.l.bf16 %v1215
      %v1218 = vunpack.i.h.bf16 %v1215
      %v1219 = vmax.f32 %v1217, %v1218
      %v1220 = vrot.slane %v1219, 4
      %v1221 = vmax.f32 %v1219, %v1220
      %v1222 = vrot.slane %v1221, 2
      %v1223 = vmax.f32 %v1221, %v1222
      %v1224 = vrot.slane %v1223, 1
      %v1225 = vmax.f32 %v1223, %v1224
      %v1226 = vpack.i.bf16 %v1225, %v1225
      %v1228 = vsel %vm706, %v576, 4286644096
      %v1230 = vunpack.i.l.bf16 %v1228
      %v1231 = vunpack.i.h.bf16 %v1228
      %v1232 = vmax.f32 %v1230, %v1231
      %v1233 = vrot.slane %v1232, 4
      %v1234 = vmax.f32 %v1232, %v1233
      %v1235 = vrot.slane %v1234, 2
      %v1236 = vmax.f32 %v1234, %v1235
      %v1237 = vrot.slane %v1236, 1
      %v1238 = vmax.f32 %v1236, %v1237
      %v1239 = vpack.i.bf16 %v1238, %v1238
      %v1241 = vsel %vm706, %v583, 4286644096
      %v1243 = vunpack.i.l.bf16 %v1241
      %v1244 = vunpack.i.h.bf16 %v1241
      %v1245 = vmax.f32 %v1243, %v1244
      %v1246 = vrot.slane %v1245, 4
      %v1247 = vmax.f32 %v1245, %v1246
      %v1248 = vrot.slane %v1247, 2
      %v1249 = vmax.f32 %v1247, %v1248
      %v1250 = vrot.slane %v1249, 1
      %v1251 = vmax.f32 %v1249, %v1250
      %v1252 = vpack.i.bf16 %v1251, %v1251
      %v1254 = vsel %vm706, %v584, 4286644096
      %v1256 = vunpack.i.l.bf16 %v1254
      %v1257 = vunpack.i.h.bf16 %v1254
      %v1258 = vmax.f32 %v1256, %v1257
      %v1259 = vrot.slane %v1258, 4
      %v1260 = vmax.f32 %v1258, %v1259
      %v1261 = vrot.slane %v1260, 2
      %v1262 = vmax.f32 %v1260, %v1261
      %v1263 = vrot.slane %v1262, 1
      %v1264 = vmax.f32 %v1262, %v1263
      %v1265 = vpack.i.bf16 %v1264, %v1264
      %v1267 = vsel %vm706, %v585, 4286644096
      %v1269 = vunpack.i.l.bf16 %v1267
      %v1270 = vunpack.i.h.bf16 %v1267
      %v1271 = vmax.f32 %v1269, %v1270
      %v1272 = vrot.slane %v1271, 4
      %v1273 = vmax.f32 %v1271, %v1272
      %v1274 = vrot.slane %v1273, 2
      %v1275 = vmax.f32 %v1273, %v1274
      %v1276 = vrot.slane %v1275, 1
      %v1277 = vmax.f32 %v1275, %v1276
      %v1278 = vpack.i.bf16 %v1277, %v1277
      %v1280 = vsel %vm706, %v600, 4286644096
      %v1282 = vunpack.i.l.bf16 %v1280
      %v1283 = vunpack.i.h.bf16 %v1280
      %v1284 = vmax.f32 %v1282, %v1283
      %v1285 = vrot.slane %v1284, 4
      %v1286 = vmax.f32 %v1284, %v1285
      %v1287 = vrot.slane %v1286, 2
      %v1288 = vmax.f32 %v1286, %v1287
      %v1289 = vrot.slane %v1288, 1
      %v1290 = vmax.f32 %v1288, %v1289
      %v1291 = vpack.i.bf16 %v1290, %v1290
      %v1293 = vsel %vm706, %v607, 4286644096
      %v1295 = vunpack.i.l.bf16 %v1293
      %v1296 = vunpack.i.h.bf16 %v1293
      %v1297 = vmax.f32 %v1295, %v1296
      %v1298 = vrot.slane %v1297, 4
      %v1299 = vmax.f32 %v1297, %v1298
      %v1300 = vrot.slane %v1299, 2
      %v1301 = vmax.f32 %v1299, %v1300
      %v1302 = vrot.slane %v1301, 1
      %v1303 = vmax.f32 %v1301, %v1302
      %v1304 = vpack.i.bf16 %v1303, %v1303
      %v1306 = vsel %vm706, %v608, 4286644096
      %v1308 = vunpack.i.l.bf16 %v1306
      %v1309 = vunpack.i.h.bf16 %v1306
      %v1310 = vmax.f32 %v1308, %v1309
      %v1311 = vrot.slane %v1310, 4
      %v1312 = vmax.f32 %v1310, %v1311
      %v1313 = vrot.slane %v1312, 2
      %v1314 = vmax.f32 %v1312, %v1313
      %v1315 = vrot.slane %v1314, 1
      %v1316 = vmax.f32 %v1314, %v1315
      %v1317 = vpack.i.bf16 %v1316, %v1316
      %v1319 = vsel %vm706, %v609, 4286644096
      %v1321 = vunpack.i.l.bf16 %v1319
      %v1322 = vunpack.i.h.bf16 %v1319
      %v1323 = vmax.f32 %v1321, %v1322
      %v1324 = vrot.slane %v1323, 4
      %v1325 = vmax.f32 %v1323, %v1324
      %v1326 = vrot.slane %v1325, 2
      %v1327 = vmax.f32 %v1325, %v1326
      %v1328 = vrot.slane %v1327, 1
      %v1329 = vmax.f32 %v1327, %v1328
      %v1330 = vpack.i.bf16 %v1329, %v1329
      %v1332 = vsel %vm706, %v624, 4286644096
      %v1334 = vunpack.i.l.bf16 %v1332
      %v1335 = vunpack.i.h.bf16 %v1332
      %v1336 = vmax.f32 %v1334, %v1335
      %v1337 = vrot.slane %v1336, 4
      %v1338 = vmax.f32 %v1336, %v1337
      %v1339 = vrot.slane %v1338, 2
      %v1340 = vmax.f32 %v1338, %v1339
      %v1341 = vrot.slane %v1340, 1
      %v1342 = vmax.f32 %v1340, %v1341
      %v1343 = vpack.i.bf16 %v1342, %v1342
      %v1345 = vsel %vm706, %v631, 4286644096
      %v1347 = vunpack.i.l.bf16 %v1345
      %v1348 = vunpack.i.h.bf16 %v1345
      %v1349 = vmax.f32 %v1347, %v1348
      %v1350 = vrot.slane %v1349, 4
      %v1351 = vmax.f32 %v1349, %v1350
      %v1352 = vrot.slane %v1351, 2
      %v1353 = vmax.f32 %v1351, %v1352
      %v1354 = vrot.slane %v1353, 1
      %v1355 = vmax.f32 %v1353, %v1354
      %v1356 = vpack.i.bf16 %v1355, %v1355
      %v1358 = vsel %vm706, %v632, 4286644096
      %v1360 = vunpack.i.l.bf16 %v1358
      %v1361 = vunpack.i.h.bf16 %v1358
      %v1362 = vmax.f32 %v1360, %v1361
      %v1363 = vrot.slane %v1362, 4
      %v1364 = vmax.f32 %v1362, %v1363
      %v1365 = vrot.slane %v1364, 2
      %v1366 = vmax.f32 %v1364, %v1365
      %v1367 = vrot.slane %v1366, 1
      %v1368 = vmax.f32 %v1366, %v1367
      %v1369 = vpack.i.bf16 %v1368, %v1368
      %v1371 = vsel %vm706, %v633, 4286644096
      %v1373 = vunpack.i.l.bf16 %v1371
      %v1374 = vunpack.i.h.bf16 %v1371
      %v1375 = vmax.f32 %v1373, %v1374
      %v1376 = vrot.slane %v1375, 4
      %v1377 = vmax.f32 %v1375, %v1376
      %v1378 = vrot.slane %v1377, 2
      %v1379 = vmax.f32 %v1377, %v1378
      %v1380 = vrot.slane %v1379, 1
      %v1381 = vmax.f32 %v1379, %v1380
      %v1382 = vpack.i.bf16 %v1381, %v1381
      %v1384 = vsel %vm706, %v648, 4286644096
      %v1386 = vunpack.i.l.bf16 %v1384
      %v1387 = vunpack.i.h.bf16 %v1384
      %v1388 = vmax.f32 %v1386, %v1387
      %v1389 = vrot.slane %v1388, 4
      %v1390 = vmax.f32 %v1388, %v1389
      %v1391 = vrot.slane %v1390, 2
      %v1392 = vmax.f32 %v1390, %v1391
      %v1393 = vrot.slane %v1392, 1
      %v1394 = vmax.f32 %v1392, %v1393
      %v1395 = vpack.i.bf16 %v1394, %v1394
      %v1397 = vsel %vm706, %v655, 4286644096
      %v1399 = vunpack.i.l.bf16 %v1397
      %v1400 = vunpack.i.h.bf16 %v1397
      %v1401 = vmax.f32 %v1399, %v1400
      %v1402 = vrot.slane %v1401, 4
      %v1403 = vmax.f32 %v1401, %v1402
      %v1404 = vrot.slane %v1403, 2
      %v1405 = vmax.f32 %v1403, %v1404
      %v1406 = vrot.slane %v1405, 1
      %v1407 = vmax.f32 %v1405, %v1406
      %v1408 = vpack.i.bf16 %v1407, %v1407
      %v1410 = vsel %vm706, %v656, 4286644096
      %v1412 = vunpack.i.l.bf16 %v1410
      %v1413 = vunpack.i.h.bf16 %v1410
      %v1414 = vmax.f32 %v1412, %v1413
      %v1415 = vrot.slane %v1414, 4
      %v1416 = vmax.f32 %v1414, %v1415
      %v1417 = vrot.slane %v1416, 2
      %v1418 = vmax.f32 %v1416, %v1417
      %v1419 = vrot.slane %v1418, 1
      %v1420 = vmax.f32 %v1418, %v1419
      %v1421 = vpack.i.bf16 %v1420, %v1420
      %v1423 = vsel %vm706, %v657, 4286644096
      %v1425 = vunpack.i.l.bf16 %v1423
      %v1426 = vunpack.i.h.bf16 %v1423
      %v1427 = vmax.f32 %v1425, %v1426
      %v1428 = vrot.slane %v1427, 4
      %v1429 = vmax.f32 %v1427, %v1428
      %v1430 = vrot.slane %v1429, 2
      %v1431 = vmax.f32 %v1429, %v1430
      %v1432 = vrot.slane %v1431, 1
      %v1433 = vmax.f32 %v1431, %v1432
      %v1434 = vpack.i.bf16 %v1433, %v1433
      %v1436 = vsel %vm706, %v672, 4286644096
      %v1438 = vunpack.i.l.bf16 %v1436
      %v1439 = vunpack.i.h.bf16 %v1436
      %v1440 = vmax.f32 %v1438, %v1439
      %v1441 = vrot.slane %v1440, 4
      %v1442 = vmax.f32 %v1440, %v1441
      %v1443 = vrot.slane %v1442, 2
      %v1444 = vmax.f32 %v1442, %v1443
      %v1445 = vrot.slane %v1444, 1
      %v1446 = vmax.f32 %v1444, %v1445
      %v1447 = vpack.i.bf16 %v1446, %v1446
      %v1449 = vsel %vm706, %v679, 4286644096
      %v1451 = vunpack.i.l.bf16 %v1449
      %v1452 = vunpack.i.h.bf16 %v1449
      %v1453 = vmax.f32 %v1451, %v1452
      %v1454 = vrot.slane %v1453, 4
      %v1455 = vmax.f32 %v1453, %v1454
      %v1456 = vrot.slane %v1455, 2
      %v1457 = vmax.f32 %v1455, %v1456
      %v1458 = vrot.slane %v1457, 1
      %v1459 = vmax.f32 %v1457, %v1458
      %v1460 = vpack.i.bf16 %v1459, %v1459
      %v1462 = vsel %vm706, %v680, 4286644096
      %v1464 = vunpack.i.l.bf16 %v1462
      %v1465 = vunpack.i.h.bf16 %v1462
      %v1466 = vmax.f32 %v1464, %v1465
      %v1467 = vrot.slane %v1466, 4
      %v1468 = vmax.f32 %v1466, %v1467
      %v1469 = vrot.slane %v1468, 2
      %v1470 = vmax.f32 %v1468, %v1469
      %v1471 = vrot.slane %v1470, 1
      %v1472 = vmax.f32 %v1470, %v1471
      %v1473 = vpack.i.bf16 %v1472, %v1472
      %v1475 = vsel %vm706, %v681, 4286644096
      %v1477 = vunpack.i.l.bf16 %v1475
      %v1478 = vunpack.i.h.bf16 %v1475
      %v1479 = vmax.f32 %v1477, %v1478
      %v1480 = vrot.slane %v1479, 4
      %v1481 = vmax.f32 %v1479, %v1480
      %v1482 = vrot.slane %v1481, 2
      %v1483 = vmax.f32 %v1481, %v1482
      %v1484 = vrot.slane %v1483, 1
      %v1485 = vmax.f32 %v1483, %v1484
      %v1486 = vpack.i.bf16 %v1485, %v1485
      %v1488 = vsel %vm706, %v696, 4286644096
      %v1490 = vunpack.i.l.bf16 %v1488
      %v1491 = vunpack.i.h.bf16 %v1488
      %v1492 = vmax.f32 %v1490, %v1491
      %v1493 = vrot.slane %v1492, 4
      %v1494 = vmax.f32 %v1492, %v1493
      %v1495 = vrot.slane %v1494, 2
      %v1496 = vmax.f32 %v1494, %v1495
      %v1497 = vrot.slane %v1496, 1
      %v1498 = vmax.f32 %v1496, %v1497
      %v1499 = vpack.i.bf16 %v1498, %v1498
      %v1501 = vsel %vm706, %v703, 4286644096
      %v1503 = vunpack.i.l.bf16 %v1501
      %v1504 = vunpack.i.h.bf16 %v1501
      %v1505 = vmax.f32 %v1503, %v1504
      %v1506 = vrot.slane %v1505, 4
      %v1507 = vmax.f32 %v1505, %v1506
      %v1508 = vrot.slane %v1507, 2
      %v1509 = vmax.f32 %v1507, %v1508
      %v1510 = vrot.slane %v1509, 1
      %v1511 = vmax.f32 %v1509, %v1510
      %v1512 = vpack.i.bf16 %v1511, %v1511
      %v1514 = vsel %vm706, %v704, 4286644096
      %v1516 = vunpack.i.l.bf16 %v1514
      %v1517 = vunpack.i.h.bf16 %v1514
      %v1518 = vmax.f32 %v1516, %v1517
      %v1519 = vrot.slane %v1518, 4
      %v1520 = vmax.f32 %v1518, %v1519
      %v1521 = vrot.slane %v1520, 2
      %v1522 = vmax.f32 %v1520, %v1521
      %v1523 = vrot.slane %v1522, 1
      %v1524 = vmax.f32 %v1522, %v1523
      %v1525 = vpack.i.bf16 %v1524, %v1524
      %v1527 = vsel %vm706, %v705, 4286644096
      %v1529 = vunpack.i.l.bf16 %v1527
      %v1530 = vunpack.i.h.bf16 %v1527
      %v1531 = vmax.f32 %v1529, %v1530
      %v1532 = vrot.slane %v1531, 4
      %v1533 = vmax.f32 %v1531, %v1532
      %v1534 = vrot.slane %v1533, 2
      %v1535 = vmax.f32 %v1533, %v1534
      %v1536 = vrot.slane %v1535, 1
      %v1537 = vmax.f32 %v1535, %v1536
      %v1538 = vpack.i.bf16 %v1537, %v1537
      %v1603 = vunpack.c.l.b16 %v719
      %v1604 = vunpack.c.l.b16 %v732
      %v1605 = vunpack.c.l.b16 %v745
      %v1606 = vunpack.c.l.b16 %v758
      %v1607 = vunpack.c.l.b16 %v771
      %v1608 = vunpack.c.l.b16 %v784
      %v1609 = vunpack.c.l.b16 %v797
      %v1610 = vunpack.c.l.b16 %v810
      %v1611 = vunpack.c.l.b16 %v823
      %v1612 = vunpack.c.l.b16 %v836
      %v1613 = vunpack.c.l.b16 %v849
      %v1614 = vunpack.c.l.b16 %v862
      %v1615 = vunpack.c.l.b16 %v875
      %v1616 = vunpack.c.l.b16 %v888
      %v1617 = vunpack.c.l.b16 %v901
      %v1618 = vunpack.c.l.b16 %v914
      %v1619 = vunpack.c.l.b16 %v927
      %v1620 = vunpack.c.l.b16 %v940
      %v1621 = vunpack.c.l.b16 %v953
      %v1622 = vunpack.c.l.b16 %v966
      %v1623 = vunpack.c.l.b16 %v979
      %v1624 = vunpack.c.l.b16 %v992
      %v1625 = vunpack.c.l.b16 %v1005
      %v1626 = vunpack.c.l.b16 %v1018
      %v1627 = vunpack.c.l.b16 %v1031
      %v1628 = vunpack.c.l.b16 %v1044
      %v1629 = vunpack.c.l.b16 %v1057
      %v1630 = vunpack.c.l.b16 %v1070
      %v1631 = vunpack.c.l.b16 %v1083
      %v1632 = vunpack.c.l.b16 %v1096
      %v1633 = vunpack.c.l.b16 %v1109
      %v1634 = vunpack.c.l.b16 %v1122
      %v1635 = vunpack.c.l.b16 %v1135
      %v1636 = vunpack.c.l.b16 %v1148
      %v1637 = vunpack.c.l.b16 %v1161
      %v1638 = vunpack.c.l.b16 %v1174
      %v1639 = vunpack.c.l.b16 %v1187
      %v1640 = vunpack.c.l.b16 %v1200
      %v1641 = vunpack.c.l.b16 %v1213
      %v1642 = vunpack.c.l.b16 %v1226
      %v1643 = vunpack.c.l.b16 %v1239
      %v1644 = vunpack.c.l.b16 %v1252
      %v1645 = vunpack.c.l.b16 %v1265
      %v1646 = vunpack.c.l.b16 %v1278
      %v1647 = vunpack.c.l.b16 %v1291
      %v1648 = vunpack.c.l.b16 %v1304
      %v1649 = vunpack.c.l.b16 %v1317
      %v1650 = vunpack.c.l.b16 %v1330
      %v1651 = vunpack.c.l.b16 %v1343
      %v1652 = vunpack.c.l.b16 %v1356
      %v1653 = vunpack.c.l.b16 %v1369
      %v1654 = vunpack.c.l.b16 %v1382
      %v1655 = vunpack.c.l.b16 %v1395
      %v1656 = vunpack.c.l.b16 %v1408
      %v1657 = vunpack.c.l.b16 %v1421
      %v1658 = vunpack.c.l.b16 %v1434
      %v1659 = vunpack.c.l.b16 %v1447
      %v1660 = vunpack.c.l.b16 %v1460
      %v1661 = vunpack.c.l.b16 %v1473
      %v1662 = vunpack.c.l.b16 %v1486
      %v1663 = vunpack.c.l.b16 %v1499
      %v1664 = vunpack.c.l.b16 %v1512
      %v1665 = vunpack.c.l.b16 %v1525
      %v1666 = vunpack.c.l.b16 %v1538
      %v1667 = vpack.c.b16 %v1603, %v1603
      %v1668 = vpack.c.b16 %v1604, %v1604
      %v1669 = vpack.c.b16 %v1605, %v1605
      %v1670 = vpack.c.b16 %v1606, %v1606
      %v1671 = vpack.c.b16 %v1607, %v1607
      %v1672 = vpack.c.b16 %v1608, %v1608
      %v1673 = vpack.c.b16 %v1609, %v1609
      %v1674 = vpack.c.b16 %v1610, %v1610
      %v1675 = vpack.c.b16 %v1611, %v1611
      %v1676 = vpack.c.b16 %v1612, %v1612
      %v1677 = vpack.c.b16 %v1613, %v1613
      %v1678 = vpack.c.b16 %v1614, %v1614
      %v1679 = vpack.c.b16 %v1615, %v1615
      %v1680 = vpack.c.b16 %v1616, %v1616
      %v1681 = vpack.c.b16 %v1617, %v1617
      %v1682 = vpack.c.b16 %v1618, %v1618
      %v1683 = vpack.c.b16 %v1619, %v1619
      %v1684 = vpack.c.b16 %v1620, %v1620
      %v1685 = vpack.c.b16 %v1621, %v1621
      %v1686 = vpack.c.b16 %v1622, %v1622
      %v1687 = vpack.c.b16 %v1623, %v1623
      %v1688 = vpack.c.b16 %v1624, %v1624
      %v1689 = vpack.c.b16 %v1625, %v1625
      %v1690 = vpack.c.b16 %v1626, %v1626
      %v1691 = vpack.c.b16 %v1627, %v1627
      %v1692 = vpack.c.b16 %v1628, %v1628
      %v1693 = vpack.c.b16 %v1629, %v1629
      %v1694 = vpack.c.b16 %v1630, %v1630
      %v1695 = vpack.c.b16 %v1631, %v1631
      %v1696 = vpack.c.b16 %v1632, %v1632
      %v1697 = vpack.c.b16 %v1633, %v1633
      %v1698 = vpack.c.b16 %v1634, %v1634
      %v1699 = vpack.c.b16 %v1635, %v1635
      %v1700 = vpack.c.b16 %v1636, %v1636
      %v1701 = vpack.c.b16 %v1637, %v1637
      %v1702 = vpack.c.b16 %v1638, %v1638
      %v1703 = vpack.c.b16 %v1639, %v1639
      %v1704 = vpack.c.b16 %v1640, %v1640
      %v1705 = vpack.c.b16 %v1641, %v1641
      %v1706 = vpack.c.b16 %v1642, %v1642
      %v1707 = vpack.c.b16 %v1643, %v1643
      %v1708 = vpack.c.b16 %v1644, %v1644
      %v1709 = vpack.c.b16 %v1645, %v1645
      %v1710 = vpack.c.b16 %v1646, %v1646
      %v1711 = vpack.c.b16 %v1647, %v1647
      %v1712 = vpack.c.b16 %v1648, %v1648
      %v1713 = vpack.c.b16 %v1649, %v1649
      %v1714 = vpack.c.b16 %v1650, %v1650
      %v1715 = vpack.c.b16 %v1651, %v1651
      %v1716 = vpack.c.b16 %v1652, %v1652
      %v1717 = vpack.c.b16 %v1653, %v1653
      %v1718 = vpack.c.b16 %v1654, %v1654
      %v1719 = vpack.c.b16 %v1655, %v1655
      %v1720 = vpack.c.b16 %v1656, %v1656
      %v1721 = vpack.c.b16 %v1657, %v1657
      %v1722 = vpack.c.b16 %v1658, %v1658
      %v1723 = vpack.c.b16 %v1659, %v1659
      %v1724 = vpack.c.b16 %v1660, %v1660
      %v1725 = vpack.c.b16 %v1661, %v1661
      %v1726 = vpack.c.b16 %v1662, %v1662
      %v1727 = vpack.c.b16 %v1663, %v1663
      %v1728 = vpack.c.b16 %v1664, %v1664
      %v1729 = vpack.c.b16 %v1665, %v1665
      %v1730 = vpack.c.b16 %v1666, %v1666
      %v1731 = vunpack.c.l.b16 %v1667
      %v1732 = vunpack.c.l.b16 %v1668
      %v1733 = vunpack.c.l.b16 %v1669
      %v1734 = vunpack.c.l.b16 %v1670
      %v1735 = vunpack.c.l.b16 %v1671
      %v1736 = vunpack.c.l.b16 %v1672
      %v1737 = vunpack.c.l.b16 %v1673
      %v1738 = vunpack.c.l.b16 %v1674
      %v1739 = vunpack.c.l.b16 %v1675
      %v1740 = vunpack.c.l.b16 %v1676
      %v1741 = vunpack.c.l.b16 %v1677
      %v1742 = vunpack.c.l.b16 %v1678
      %v1743 = vunpack.c.l.b16 %v1679
      %v1744 = vunpack.c.l.b16 %v1680
      %v1745 = vunpack.c.l.b16 %v1681
      %v1746 = vunpack.c.l.b16 %v1682
      %v1747 = vunpack.c.l.b16 %v1683
      %v1748 = vunpack.c.l.b16 %v1684
      %v1749 = vunpack.c.l.b16 %v1685
      %v1750 = vunpack.c.l.b16 %v1686
      %v1751 = vunpack.c.l.b16 %v1687
      %v1752 = vunpack.c.l.b16 %v1688
      %v1753 = vunpack.c.l.b16 %v1689
      %v1754 = vunpack.c.l.b16 %v1690
      %v1755 = vunpack.c.l.b16 %v1691
      %v1756 = vunpack.c.l.b16 %v1692
      %v1757 = vunpack.c.l.b16 %v1693
      %v1758 = vunpack.c.l.b16 %v1694
      %v1759 = vunpack.c.l.b16 %v1695
      %v1760 = vunpack.c.l.b16 %v1696
      %v1761 = vunpack.c.l.b16 %v1697
      %v1762 = vunpack.c.l.b16 %v1698
      %v1763 = vunpack.c.l.b16 %v1699
      %v1764 = vunpack.c.l.b16 %v1700
      %v1765 = vunpack.c.l.b16 %v1701
      %v1766 = vunpack.c.l.b16 %v1702
      %v1767 = vunpack.c.l.b16 %v1703
      %v1768 = vunpack.c.l.b16 %v1704
      %v1769 = vunpack.c.l.b16 %v1705
      %v1770 = vunpack.c.l.b16 %v1706
      %v1771 = vunpack.c.l.b16 %v1707
      %v1772 = vunpack.c.l.b16 %v1708
      %v1773 = vunpack.c.l.b16 %v1709
      %v1774 = vunpack.c.l.b16 %v1710
      %v1775 = vunpack.c.l.b16 %v1711
      %v1776 = vunpack.c.l.b16 %v1712
      %v1777 = vunpack.c.l.b16 %v1713
      %v1778 = vunpack.c.l.b16 %v1714
      %v1779 = vunpack.c.l.b16 %v1715
      %v1780 = vunpack.c.l.b16 %v1716
      %v1781 = vunpack.c.l.b16 %v1717
      %v1782 = vunpack.c.l.b16 %v1718
      %v1783 = vunpack.c.l.b16 %v1719
      %v1784 = vunpack.c.l.b16 %v1720
      %v1785 = vunpack.c.l.b16 %v1721
      %v1786 = vunpack.c.l.b16 %v1722
      %v1787 = vunpack.c.l.b16 %v1723
      %v1788 = vunpack.c.l.b16 %v1724
      %v1789 = vunpack.c.l.b16 %v1725
      %v1790 = vunpack.c.l.b16 %v1726
      %v1791 = vunpack.c.l.b16 %v1727
      %v1792 = vunpack.c.l.b16 %v1728
      %v1793 = vunpack.c.l.b16 %v1729
      %v1794 = vunpack.c.l.b16 %v1730
      %vm1795 = vcmask 1041409
      %v1796 = vsel %vm1795, %v1732, %v1731
      %vm1797 = vcmask 1042434
      %v1798 = vsel %vm1797, %v1733, %v1796
      %vm1799 = vcmask 1043459
      %v1800 = vsel %vm1799, %v1734, %v1798
      %vm1801 = vcmask 1044484
      %v1802 = vsel %vm1801, %v1735, %v1800
      %vm1803 = vcmask 1045509
      %v1804 = vsel %vm1803, %v1736, %v1802
      %vm1805 = vcmask 1046534
      %v1806 = vsel %vm1805, %v1737, %v1804
      %vm1807 = vcmask 1047559
      %v1808 = vsel %vm1807, %v1738, %v1806
      %v1809 = vsel %vm1795, %v1740, %v1739
      %v1810 = vsel %vm1797, %v1741, %v1809
      %v1811 = vsel %vm1799, %v1742, %v1810
      %v1812 = vsel %vm1801, %v1743, %v1811
      %v1813 = vsel %vm1803, %v1744, %v1812
      %v1814 = vsel %vm1805, %v1745, %v1813
      %v1815 = vsel %vm1807, %v1746, %v1814
      %v1816 = vsel %vm1795, %v1748, %v1747
      %v1817 = vsel %vm1797, %v1749, %v1816
      %v1818 = vsel %vm1799, %v1750, %v1817
      %v1819 = vsel %vm1801, %v1751, %v1818
      %v1820 = vsel %vm1803, %v1752, %v1819
      %v1821 = vsel %vm1805, %v1753, %v1820
      %v1822 = vsel %vm1807, %v1754, %v1821
      %v1823 = vsel %vm1795, %v1756, %v1755
      %v1824 = vsel %vm1797, %v1757, %v1823
      %v1825 = vsel %vm1799, %v1758, %v1824
      %v1826 = vsel %vm1801, %v1759, %v1825
      %v1827 = vsel %vm1803, %v1760, %v1826
      %v1828 = vsel %vm1805, %v1761, %v1827
      %v1829 = vsel %vm1807, %v1762, %v1828
      %v1830 = vsel %vm1795, %v1764, %v1763
      %v1831 = vsel %vm1797, %v1765, %v1830
      %v1832 = vsel %vm1799, %v1766, %v1831
      %v1833 = vsel %vm1801, %v1767, %v1832
      %v1834 = vsel %vm1803, %v1768, %v1833
      %v1835 = vsel %vm1805, %v1769, %v1834
      %v1836 = vsel %vm1807, %v1770, %v1835
      %v1837 = vsel %vm1795, %v1772, %v1771
      %v1838 = vsel %vm1797, %v1773, %v1837
      %v1839 = vsel %vm1799, %v1774, %v1838
      %v1840 = vsel %vm1801, %v1775, %v1839
      %v1841 = vsel %vm1803, %v1776, %v1840
      %v1842 = vsel %vm1805, %v1777, %v1841
      %v1843 = vsel %vm1807, %v1778, %v1842
      %v1844 = vsel %vm1795, %v1780, %v1779
      %v1845 = vsel %vm1797, %v1781, %v1844
      %v1846 = vsel %vm1799, %v1782, %v1845
      %v1847 = vsel %vm1801, %v1783, %v1846
      %v1848 = vsel %vm1803, %v1784, %v1847
      %v1849 = vsel %vm1805, %v1785, %v1848
      %v1850 = vsel %vm1807, %v1786, %v1849
      %v1851 = vsel %vm1795, %v1788, %v1787
      %v1852 = vsel %vm1797, %v1789, %v1851
      %v1853 = vsel %vm1799, %v1790, %v1852
      %v1854 = vsel %vm1801, %v1791, %v1853
      %v1855 = vsel %vm1803, %v1792, %v1854
      %v1856 = vsel %vm1805, %v1793, %v1855
      %v1857 = vsel %vm1807, %v1794, %v1856
      %v1858 = vpack.c.b16 %v1808, %v1808
      %v1859 = vpack.c.b16 %v1815, %v1815
      %v1860 = vpack.c.b16 %v1822, %v1822
      %v1861 = vpack.c.b16 %v1829, %v1829
      %v1862 = vpack.c.b16 %v1836, %v1836
      %v1863 = vpack.c.b16 %v1843, %v1843
      %v1864 = vpack.c.b16 %v1850, %v1850
      %v1865 = vpack.c.b16 %v1857, %v1857
      %1874 = vst [vmem:[%s157] sm:$0xf] %v1858
      %1875 = vst [vmem:[%s157 + $0x4] sm:$0xf] %v1859
      %1876 = vst [vmem:[%s157 + $0x8] sm:$0xf] %v1860
      %1877 = vst [vmem:[%s157 + $0xc] sm:$0xf] %v1861
      %1878 = vst [vmem:[%s157 + $0x10] sm:$0xf] %v1862
      %1879 = vst [vmem:[%s157 + $0x14] sm:$0xf] %v1863
      %1880 = vst [vmem:[%s157 + $0x18] sm:$0xf] %v1864
      %1881 = vst [vmem:[%s157 + $0x1c] sm:$0xf] %v1865
      %s1882 = smul.u32 8, %s17
      %p1883 = scmp.lt.s32.totalorder %s16, 1
      %s1884 = scalar_select %p1883, %s16, 1
      %p1885 = scmp.lt.s32.totalorder %s1882, 7
      %s1886 = scalar_select %p1885, %s1882, 7
      %s1887 = smul.addr %s1884, 8
      %s1888 = sadd.s32 %s1886, %s1887
      %s1889 = smul.addr %s1888, 4
      %s1890 = scalar_lea.vmem %s1, %s1889
      // Predicated region
      $region25: #{downblock_forward.4} parent=23 // pred_check
        %p1891 = pneg %p72
      $region26: #{downblock_forward.4} parent=23 // pred_check_branch
        %1893 = sbr.rel (%p1891) target = $region28
      $region27: #{downblock_forward.4} parent=23 // pred_region
        %s1894 = smul.u32 8, %s17
      $region28: #{downblock_forward.4} parent=23 // pred_fallthru
        _
    $region24: #{downblock_forward.4} parent=5 // pred_fallthru
      _
    %p1895 = scmp.le.s32.totalorder 2, %s7
    // Predicated region
    $region29: #{downblock_forward.4} parent=5 // pred_check
      %p1896 = pneg %p1895
    $region30: #{downblock_forward.4} parent=5 // pred_check_branch
      %1898 = sbr.rel (%p1896) target = $region32
    $region31: #{downblock_forward.4} parent=5 // pred_region
      %s1899 = ssub.s32 %s7, 2
      // Predicated region
      $region33: #{downblock_forward.4} parent=31 // pred_check
        %p1900 = pneg %p78
      $region34: #{downblock_forward.4} parent=31 // pred_check_branch
        %1902 = sbr.rel (%p1900) target = $region36
      $region35: #{downblock_forward.4} parent=31 // pred_region
        %s1903 = smul.u32 8, %s19
        %p1904 = scmp.lt.s32.totalorder %s18, 1
        %s1905 = scalar_select %p1904, %s18, 1
        %p1906 = scmp.lt.s32.totalorder %s1903, 7
        %s1907 = scalar_select %p1906, %s1903, 7
        %s1908 = smul.addr %s1905, 8
        %s1909 = sadd.s32 %s1907, %s1908
        %s1910 = smul.addr %s1909, 4
        %s1911 = scalar_lea.vmem %s1, %s1910
      $region36: #{downblock_forward.4} parent=31 // pred_fallthru
        _
    $region32: #{downblock_forward.4} parent=5 // pred_fallthru
      _
  $region6: #{downblock_forward.4} parent=0 // loop_footer
    %s11 = sadd.s32 1, %s7
  $region7: #{downblock_forward.4} parent=0 // loop_footer_branch
    %6 = sbr.rel target = $region3
  $region8: #{downblock_forward.4} parent=0 // loop_exit
    _

// kernel: downblock_forward.5
$region0: #{downblock_forward.5}
  #allocation0 [shape = 'u32[]', space=smem, size = 0x4, offset = 0x4, fixed_abs, tag = 'smem constant byte address 0x4 - core index']
  #allocation1 [shape = 'u32[144,128]{1,0:T(1,128)}', space=vmem, size = 0x12000, scoped, tag = 'internal scratch']
  #allocation2 [shape = 'bf16[2,10,8,128]{3,2,1,0:T(8,128)(2,1)}', space=vmem, size = 0xa000, scoped, tag = 'scratch operand']
  #allocation3 [shape = 's32[6]{0}', space=sflag, size = 0x18, scoped, tag = 'scratch operand']
  #allocation4 [shape = 's32[]', space=sflag, size = 0x4, offset = 0, fixed_abs, tag = 'sflag constant byte address 0x0 - dummy sync flag']
  #allocation5 [shape = 's32[]', space=sflag, size = 0x4, offset = 0, fixed_abs, tag = 'sflag constant byte address 0x0 - dummy sync flag']
  #allocation6 [shape = 's32[]', space=sflag, size = 0x4, offset = 0, fixed_abs, tag = 'sflag constant byte address 0x0 - dummy sync flag']
  #allocation7 [shape = 's32[]', space=sflag, size = 0x4, offset = 0, fixed_abs, tag = 'sflag constant byte address 0x0 - dummy sync flag']
  #allocation8 [shape = 's32[]', space=sflag, size = 0x4, offset = 0, fixed_abs, tag = 'sflag constant byte address 0x0 - dummy sync flag']
  #allocation9 [shape = 's32[]', space=sflag, size = 0x4, offset = 0, fixed_abs, tag = 'sflag constant byte address 0x0 - dummy sync flag']
  %s0 = inlined_call_operand.vmem [shape: bf16[2,8,8,128], index: 0, kind: input, shape index: {}]
  %s1 = inlined_call_operand.vmem [shape: bf16[3,384,128], index: 1, kind: input, shape index: {}]
  %s2 = inlined_call_operand.vmem [shape: f32[1,128], index: 2, kind: input, shape index: {}]
  %s3 = inlined_call_operand.vmem [shape: f32[1,128], index: 3, kind: input, shape index: {}]
  %s4 = inlined_call_operand.vmem [shape: bf16[2,8,8,128], index: 4, kind: output, shape index: {0}]
  %s5 = inlined_call_operand.vmem [shape: f32[2,1,2,128], index: 5, kind: output, shape index: {1}]
  %6 = xla_tuple %s4, %s5
  %s7 = sld [smem:[#allocation0]]
  $region253: #{downblock_forward.5} parent=0
    _
  %s9 = ssub.s32 1, %s7
  %s10 = scalar_select 0, %s9, %s7
  loop: start=0, step=1, limit=4
  $region2: #{downblock_forward.5} parent=0 // loop_pre_header
    _
  $region3: #{downblock_forward.5} parent=0 // loop_header
    %s12 = sphi 0, %s16
    %p13 = scmp.ge.s32.totalorder %s12, 4
    %s19 = sphi 0, %s38
    %s20 = sphi 0, %s34
    %s21 = sphi 0, %s30
    %s22 = sphi 0, %s19
    %s23 = sphi 0, %s20
    %s24 = sphi 0, %s21
    %s25 = sphi 0, %s22
    %s26 = sphi 0, %s23
    %s27 = sphi 0, %s24
    %s39 = sphi 0, %s39
    %s41 = sphi 0, %s39
    %s42 = sphi 0, %s41
    %s56 = sphi 0, %s42
    %s60 = sphi 0, %s60
    %s62 = sphi 0, %s60
    %s63 = sphi 0, %s62
    %s77 = sphi 0, %s63
    %s81 = sphi 0, %s81
    %s83 = sphi 0, %s81
    %s84 = sphi 0, %s83
    %s98 = sphi 0, %s84
    %s108 = sphi 0, %s110
    %s111 = sphi 0, %s108
    %s112 = sphi 0, %s111
    %s128 = sphi 0, %s112
    %s136 = sphi 0, %s138
    %s139 = sphi 0, %s136
    %s140 = sphi 0, %s139
    %s156 = sphi 0, %s140
  $region4: #{downblock_forward.5} parent=0 // loop_header_branch
    %15 = sbr.rel (%p13) target = $region8
  $region5: #{downblock_forward.5} parent=0 // loop_body
    %s17 = ssub.s32 %s12, 1
    %s18 = ssub.s32 %s12, 2
    %s28 = sadd.s32 1, %s21
    %p29 = scmp.ge.s32.totalorder %s28, 1
    %s30 = scalar_select %p29, 0, %s28
    %s31 = sadd.s32 1, %s20
    %s32 = scalar_select %p29, %s31, %s20
    %p33 = scmp.ge.s32.totalorder %s32, 1
    %s34 = scalar_select %p33, 0, %s32
    %s35 = sadd.s32 1, %s19
    %s36 = scalar_select %p33, %s35, %s19
    %p37 = scmp.ge.s32.totalorder %s36, 2
    %s38 = scalar_select %p37, 0, %s36
    %s40 = sadd.s32 %s39, 1
    %p43 = scmp.eq.s32.totalorder %s12, 1
    %p44 = scmp.ne.s32.totalorder %s39, %s41
    %p45 = scmp.eq.s32.totalorder %s12, 0
    %p46 = por %p44, %p45
    %p47 = scmp.ne.s32.totalorder %s39, %s41
    %p48 = scmp.eq.s32.totalorder %s17, 1
    %p49 = por %p47, %p48
    %p50 = scmp.ne.s32.totalorder %s41, %s42
    %p51 = scmp.eq.s32.totalorder %s17, 0
    %p52 = por %p50, %p51
    %p53 = scmp.ne.s32.totalorder %s41, %s42
    %p54 = scmp.eq.s32.totalorder %s18, 1
    %p55 = por %p53, %p54
    %p57 = scmp.ne.s32.totalorder %s42, %s56
    %p58 = scmp.eq.s32.totalorder %s18, 0
    %p59 = por %p57, %p58
    %s61 = sadd.s32 %s60, 1
    %p64 = scmp.eq.s32.totalorder %s12, 1
    %p65 = scmp.ne.s32.totalorder %s60, %s62
    %p66 = scmp.eq.s32.totalorder %s12, 0
    %p67 = por %p65, %p66
    %p68 = scmp.ne.s32.totalorder %s60, %s62
    %p69 = scmp.eq.s32.totalorder %s17, 1
    %p70 = por %p68, %p69
    %p71 = scmp.ne.s32.totalorder %s62, %s63
    %p72 = scmp.eq.s32.totalorder %s17, 0
    %p73 = por %p71, %p72
    %p74 = scmp.ne.s32.totalorder %s62, %s63
    %p75 = scmp.eq.s32.totalorder %s18, 1
    %p76 = por %p74, %p75
    %p78 = scmp.ne.s32.totalorder %s63, %s77
    %p79 = scmp.eq.s32.totalorder %s18, 0
    %p80 = por %p78, %p79
    %s82 = sadd.s32 %s81, 1
    %p85 = scmp.eq.s32.totalorder %s12, 1
    %p86 = scmp.ne.s32.totalorder %s81, %s83
    %p87 = scmp.eq.s32.totalorder %s12, 0
    %p88 = por %p86, %p87
    %p89 = scmp.ne.s32.totalorder %s81, %s83
    %p90 = scmp.eq.s32.totalorder %s17, 1
    %p91 = por %p89, %p90
    %p92 = scmp.ne.s32.totalorder %s83, %s84
    %p93 = scmp.eq.s32.totalorder %s17, 0
    %p94 = por %p92, %p93
    %p95 = scmp.ne.s32.totalorder %s83, %s84
    %p96 = scmp.eq.s32.totalorder %s18, 1
    %p97 = por %p95, %p96
    %p99 = scmp.ne.s32.totalorder %s84, %s98
    %p100 = scmp.eq.s32.totalorder %s18, 0
    %p101 = por %p99, %p100
    %s102 = sadd.s32 %s20, %s21
    %s103 = sadd.s32 %s34, %s30
    %s104 = ssub.s32 %s19, %s38
    %s105 = ssub.s32 %s102, %s103
    %s106 = sor.u32 %s104, %s105
    %p107 = scmp.eq.s32.totalorder %s106, 0
    %s109 = sadd.s32 %s108, 1
    %s110 = scalar_select %p107, %s108, %s109
    %p113 = pneg %p107
    %p114 = scmp.eq.s32.totalorder %s12, 1
    %p115 = por %p113, %p114
    %p116 = scmp.ne.s32.totalorder %s108, %s111
    %p117 = scmp.eq.s32.totalorder %s12, 0
    %p118 = por %p116, %p117
    %p119 = scmp.ne.s32.totalorder %s108, %s111
    %p120 = scmp.eq.s32.totalorder %s17, 1
    %p121 = por %p119, %p120
    %p122 = scmp.ne.s32.totalorder %s111, %s112
    %p123 = scmp.eq.s32.totalorder %s17, 0
    %p124 = por %p122, %p123
    %p125 = scmp.ne.s32.totalorder %s111, %s112
    %p126 = scmp.eq.s32.totalorder %s18, 1
    %p127 = por %p125, %p126
    %p129 = scmp.ne.s32.totalorder %s112, %s128
    %p130 = scmp.eq.s32.totalorder %s18, 0
    %p131 = por %p129, %p130
    %s132 = ssub.s32 %s19, %s38
    %s133 = ssub.s32 %s20, %s34
    %s134 = sor.u32 %s132, %s133
    %p135 = scmp.eq.s32.totalorder %s134, 0
    %s137 = sadd.s32 %s136, 1
    %s138 = scalar_select %p135, %s136, %s137
    %p141 = pneg %p135
    %p142 = scmp.eq.s32.totalorder %s12, 1
    %p143 = por %p141, %p142
    %p144 = scmp.ne.s32.totalorder %s136, %s139
    %p145 = scmp.eq.s32.totalorder %s12, 0
    %p146 = por %p144, %p145
    %p147 = scmp.ne.s32.totalorder %s136, %s139
    %p148 = scmp.eq.s32.totalorder %s17, 1
    %p149 = por %p147, %p148
    %p150 = scmp.ne.s32.totalorder %s139, %s140
    %p151 = scmp.eq.s32.totalorder %s17, 0
    %p152 = por %p150, %p151
    %p153 = scmp.ne.s32.totalorder %s139, %s140
    %p154 = scmp.eq.s32.totalorder %s18, 1
    %p155 = por %p153, %p154
    %p157 = scmp.ne.s32.totalorder %s140, %s156
    %p158 = scmp.eq.s32.totalorder %s18, 0
    %p159 = por %p157, %p158
    %p160 = scmp.le.s32.totalorder 1, %s12
    %p161 = scmp.lt.s32.totalorder %s12, 3
    %p162 = pnand %p160, %p161
    %p163 = pneg %p162
    // Predicated region
    $region9: #{downblock_forward.5} parent=5 // pred_check
      _
    $region10: #{downblock_forward.5} parent=5 // pred_check_branch
      %165 = sbr.rel (%p162) target = $region12
    $region11: #{downblock_forward.5} parent=5 // pred_region
      %s166 = ssub.s32 %s12, 1
      // Predicated region
      $region13: #{downblock_forward.5} parent=11 // pred_check
        %p167 = pneg %p52
      $region14: #{downblock_forward.5} parent=11 // pred_check_branch
        %169 = sbr.rel (%p167) target = $region16
      $region15: #{downblock_forward.5} parent=11 // pred_region
        _
      $region16: #{downblock_forward.5} parent=11 // pred_fallthru
        _
      // Predicated region
      $region17: #{downblock_forward.5} parent=11 // pred_check
        %p170 = pneg %p73
      $region18: #{downblock_forward.5} parent=11 // pred_check_branch
        %172 = sbr.rel (%p170) target = $region20
      $region19: #{downblock_forward.5} parent=11 // pred_region
        _
      $region20: #{downblock_forward.5} parent=11 // pred_fallthru
        _
      // Predicated region
      $region21: #{downblock_forward.5} parent=11 // pred_check
        %p173 = pneg %p94
      $region22: #{downblock_forward.5} parent=11 // pred_check_branch
        %175 = sbr.rel (%p173) target = $region24
      $region23: #{downblock_forward.5} parent=11 // pred_region
        _
      $region24: #{downblock_forward.5} parent=11 // pred_fallthru
        _
    $region12: #{downblock_forward.5} parent=5 // pred_fallthru
      _
    %p176 = scmp.lt.s32.totalorder %s12, 2
    // Predicated region
    $region25: #{downblock_forward.5} parent=5 // pred_check
      %p177 = pneg %p176
    $region26: #{downblock_forward.5} parent=5 // pred_check_branch
      %179 = sbr.rel (%p177) target = $region28
    $region27: #{downblock_forward.5} parent=5 // pred_region
      _
    $region28: #{downblock_forward.5} parent=5 // pred_fallthru
      _
    %p180 = scmp.le.s32.totalorder 1, %s12
    %p181 = scmp.lt.s32.totalorder %s12, 3
    %p182 = pnand %p180, %p181
    %p183 = pneg %p182
    // Predicated region
    $region29: #{downblock_forward.5} parent=5 // pred_check
      _
    $region30: #{downblock_forward.5} parent=5 // pred_check_branch
      %185 = sbr.rel (%p182) target = $region32
    $region31: #{downblock_forward.5} parent=5 // pred_region
      %s186 = ssub.s32 %s12, 1
      %p187 = pneg %p52
      %p188 = pneg %p49
      %p189 = pneg %p73
      %p190 = pneg %p70
      %p191 = pneg %p94
      %p192 = pneg %p91
      %p193 = pneg %p124
      %p194 = pneg %p121
      %s195 = sadd.s32 %s23, %s24
      %s196 = smul.u32 8, %s195
      %p197 = scmp.lt.s32.totalorder %s22, 1
      %s198 = scalar_select %p197, %s22, 1
      %p199 = scmp.lt.s32.totalorder %s196, 7
      %s200 = scalar_select %p199, %s196, 7
      %s201 = smul.addr %s198, 8
      %s202 = sadd.s32 %s200, %s201
      %s203 = smul.addr %s202, 4
      %s204 = scalar_lea.vmem %s4, %s203
      %p205 = pneg %p152
      %p206 = pneg %p149
      %p207 = scmp.lt.s32.totalorder %s22, 1
      %s208 = scalar_select %p207, %s22, 1
      %p209 = scmp.lt.s32.totalorder %s23, 0
      %s210 = scalar_select %p209, %s23, 0
      %s211 = sadd.s32 %s210, %s208
      %s212 = smul.addr %s211, 2
      %s213 = scalar_lea.vmem %s5, %s212
      %s214 = sadd.s32 %s23, %s24
      %s215 = smul.u32 8, %s214
      %p216 = scmp.lt.s32.totalorder %s22, 1
      %s217 = scalar_select %p216, %s22, 1
      %p218 = scmp.lt.s32.totalorder %s215, 7
      %s219 = scalar_select %p218, %s215, 7
      %s220 = smul.addr %s217, 8
      %s221 = sadd.s32 %s219, %s220
      %s222 = smul.addr %s221, 4
      %s223 = scalar_lea.vmem %s4, %s222
      %s224 = sadd.s32 %s23, %s24
      %s225 = smul.u32 8, %s224
      %p226 = scmp.lt.s32.totalorder %s22, 1
      %s227 = scalar_select %p226, %s22, 1
      %p228 = scmp.lt.s32.totalorder %s23, 0
      %s229 = scalar_select %p228, %s23, 0
      %s230 = sadd.s32 %s229, %s227
      %s231 = smul.addr %s230, 2
      %s232 = scalar_lea.vmem %s5, %s231
      %s234 = sadd.s32 %s23, %s24
      %s235 = smul.u32 %s234, 8
      %p236 = scmp.lt.s32.totalorder %s24, 0
      %s237 = ssub.s32 0, %s24
      %s238 = scalar_select %p236, %s237, %s24
      %s239 = sand.u32 %s238, 1
      %s240 = ssub.s32 0, %s239
      %s241 = scalar_select %p236, %s240, %s239
      %p242 = scmp.ne.s32.totalorder %s241, 0
      %p243 = scmp.lt.s32.totalorder %s241, 0
      %p244 = pnand %p243, %p242
      %p245 = pneg %p244
      %s246 = sadd.s32 %s241, 2
      %s247 = scalar_select %p245, %s246, %s241
      %p248 = scmp.eq.s32.totalorder %s24, 0
      // Predicated region
      $region33: #{downblock_forward.5} parent=31 // pred_check
        %p249 = pneg %p248
      $region34: #{downblock_forward.5} parent=31 // pred_check_branch
        %251 = sbr.rel (%p249) target = $region36
      $region35: #{downblock_forward.5} parent=31 // pred_region
        %p252 = scmp.lt.s32.totalorder %s235, 0
        %s253 = scalar_select %p252, %s235, 0
        %s254 = ssub.s32 %s253, 1
        %p255 = scmp.gt.s32.totalorder %s254, 0
        %s256 = scalar_select %p255, %s254, 0
        %s257 = sadd.s32 %s253, 8
        %p258 = scmp.lt.s32.totalorder %s257, 7
        %s259 = scalar_select %p258, %s257, 7
        %s260 = smul.u32 %s22, 8
        %s261 = sadd.s32 %s253, %s260
        %s262 = smul.addr %s261, 4
        %s263 = scalar_lea.vmem %s0, %s262
        %s264 = smul.u32 %s247, 10
        %s265 = sadd.s32 1, %s264
        %s266 = smul.addr %s265, 4
        %s267 = scalar_lea.vmem [#allocation2], %s266
        %s268 = smul.u32 %s247, 3
        %s269 = scalar_lea.sflag [#allocation3], %s268
        %p271 = scmp.lt.u32.totalorder 32, 8
        %p272 = pneg %p271
        // Predicated region
        $region37: #{downblock_forward.5} parent=35 // pred_check
          _
        $region38: #{downblock_forward.5} parent=35 // pred_check_branch
          %274 = sbr.rel (%p271) target = $region40
        $region39: #{downblock_forward.5} parent=35 // pred_region
          %s290 = sand.u32 32, 7
          %p291 = scmp.eq.s32.totalorder %s290, 0
          // Predicated region
          $region52: #{downblock_forward.5} parent=39 // pred_check
            %p292 = pneg %p291
          $region53: #{downblock_forward.5} parent=39 // pred_check_branch
            %294 = sbr.rel (%p292) target = $region55
          $region54: #{downblock_forward.5} parent=39 // pred_region
            loop: start=0, step=1, limit=1
            $region56: #{downblock_forward.5} parent=54 // loop_pre_header
              _
            $region57: #{downblock_forward.5} parent=54 // loop_header
              %s296 = sphi 0, %s300
              %p297 = scmp.ge.s32.totalorder %s296, 1
              %s301 = sphi %s263, %s263
              %s302 = sphi %s267, %s267
            $region58: #{downblock_forward.5} parent=54 // loop_header_branch
              %299 = sbr.rel (%p297) target = $region62
            $region59: #{downblock_forward.5} parent=54 // loop_body
              %v303 = vld [vmem:[%s301] sm:$0xff]
              %304 = vst [vmem:[%s302] sm:$0xff] %v303
              %v305 = vld [vmem:[%s301 + $0x8] sm:$0xff]
              %306 = vst [vmem:[%s302 + $0x8] sm:$0xff] %v305
              %v307 = vld [vmem:[%s301 + $0x10] sm:$0xff]
              %308 = vst [vmem:[%s302 + $0x10] sm:$0xff] %v307
              %v309 = vld [vmem:[%s301 + $0x18] sm:$0xff]
              %310 = vst [vmem:[%s302 + $0x18] sm:$0xff] %v309
            $region60: #{downblock_forward.5} parent=54 // loop_footer
              %s300 = sadd.s32 1, %s296
            $region61: #{downblock_forward.5} parent=54 // loop_footer_branch
              %295 = sbr.rel target = $region57
            $region62: #{downblock_forward.5} parent=54 // loop_exit
              _
          $region55: #{downblock_forward.5} parent=39 // pred_fallthru
            _
          %p311 = pneg %p291
          // Predicated region
          $region63: #{downblock_forward.5} parent=39 // pred_check
            _
          $region64: #{downblock_forward.5} parent=39 // pred_check_branch
            %313 = sbr.rel (%p291) target = $region66
          $region65: #{downblock_forward.5} parent=39 // pred_region
            %s314 = sand.u32 32, 7
          $region66: #{downblock_forward.5} parent=39 // pred_fallthru
            _
        $region40: #{downblock_forward.5} parent=35 // pred_fallthru
          _
        // Predicated region
        $region41: #{downblock_forward.5} parent=35 // pred_check
          %p275 = pneg %p271
        $region42: #{downblock_forward.5} parent=35 // pred_check_branch
          %277 = sbr.rel (%p275) target = $region44
        $region43: #{downblock_forward.5} parent=35 // pred_region
          %s278 = sshll.u32 1, 32
          %s279 = ssub.s32 %s278, 1
          loop: start=0, step=1, limit=1
          $region45: #{downblock_forward.5} parent=43 // loop_pre_header
            _
          $region46: #{downblock_forward.5} parent=43 // loop_header
            %s281 = sphi 0, %s285
            %p282 = scmp.ge.s32.totalorder %s281, 1
            %s286 = sphi %s263, %s263
            %s287 = sphi %s267, %s267
          $region47: #{downblock_forward.5} parent=43 // loop_header_branch
            %284 = sbr.rel (%p282) target = $region51
          $region48: #{downblock_forward.5} parent=43 // loop_body
            %v288 = vld [vmem:[%s286] sm:%s279]
            %289 = vst [vmem:[%s287] sm:%s279] %v288
          $region49: #{downblock_forward.5} parent=43 // loop_footer
            %s285 = sadd.s32 1, %s281
          $region50: #{downblock_forward.5} parent=43 // loop_footer_branch
            %280 = sbr.rel target = $region46
          $region51: #{downblock_forward.5} parent=43 // loop_exit
            _
        $region44: #{downblock_forward.5} parent=35 // pred_fallthru
          _
        // Predicated region
        $region67: #{downblock_forward.5} parent=35 // pred_check
          _
        $region68: #{downblock_forward.5} parent=35 // pred_check_branch
          %317 = sbr.rel (0) target = $region70
        $region69: #{downblock_forward.5} parent=35 // pred_region
          %318 = vsyncadd %s269, 512
        $region70: #{downblock_forward.5} parent=35 // pred_fallthru
          _
        %s319 = sadd.s32 %s256, %s260
        %s320 = smul.addr %s319, 4
        %s321 = scalar_lea.vmem %s0, %s320
        %s322 = smul.addr %s264, 4
        %s323 = scalar_lea.vmem [#allocation2], %s322
        %s324 = sadd.s32 1, %s268
        %s325 = scalar_lea.sflag [#allocation3], %s324
        %p327 = scmp.lt.u32.totalorder 4, 8
        %p328 = pneg %p327
        // Predicated region
        $region71: #{downblock_forward.5} parent=35 // pred_check
          _
        $region72: #{downblock_forward.5} parent=35 // pred_check_branch
          %330 = sbr.rel (%p327) target = $region74
        $region73: #{downblock_forward.5} parent=35 // pred_region
          %s346 = sand.u32 4, 7
          %p347 = scmp.eq.s32.totalorder %s346, 0
          %p348 = pneg %p347
          // Predicated region
          $region86: #{downblock_forward.5} parent=73 // pred_check
            _
          $region87: #{downblock_forward.5} parent=73 // pred_check_branch
            %350 = sbr.rel (%p347) target = $region89
          $region88: #{downblock_forward.5} parent=73 // pred_region
            %s351 = sand.u32 4, 7
            %s352 = ssub.s32 4, %s351
            %s353 = scalar_lea.vmem %s321, %s352
            %s354 = ssub.s32 4, %s351
            %s355 = scalar_lea.vmem %s323, %s354 [#allocation2]
            %s356 = sshll.u32 1, %s351
            %s357 = ssub.s32 %s356, 1
            loop: start=0, step=1, limit=1
            $region90: #{downblock_forward.5} parent=88 // loop_pre_header
              _
            $region91: #{downblock_forward.5} parent=88 // loop_header
              %s359 = sphi 0, %s363
              %p360 = scmp.ge.s32.totalorder %s359, 1
              %s364 = sphi %s353, %s353
              %s365 = sphi %s355, %s355
            $region92: #{downblock_forward.5} parent=88 // loop_header_branch
              %362 = sbr.rel (%p360) target = $region96
            $region93: #{downblock_forward.5} parent=88 // loop_body
              %v366 = vld [vmem:[%s364] sm:%s357]
              %367 = vst [vmem:[%s365] sm:%s357] %v366
            $region94: #{downblock_forward.5} parent=88 // loop_footer
              %s363 = sadd.s32 1, %s359
            $region95: #{downblock_forward.5} parent=88 // loop_footer_branch
              %358 = sbr.rel target = $region91
            $region96: #{downblock_forward.5} parent=88 // loop_exit
              _
          $region89: #{downblock_forward.5} parent=73 // pred_fallthru
            _
        $region74: #{downblock_forward.5} parent=35 // pred_fallthru
          _
        // Predicated region
        $region75: #{downblock_forward.5} parent=35 // pred_check
          %p331 = pneg %p327
        $region76: #{downblock_forward.5} parent=35 // pred_check_branch
          %333 = sbr.rel (%p331) target = $region78
        $region77: #{downblock_forward.5} parent=35 // pred_region
          %s334 = sshll.u32 1, 4
          %s335 = ssub.s32 %s334, 1
          loop: start=0, step=1, limit=1
          $region79: #{downblock_forward.5} parent=77 // loop_pre_header
            _
          $region80: #{downblock_forward.5} parent=77 // loop_header
            %s337 = sphi 0, %s341
            %p338 = scmp.ge.s32.totalorder %s337, 1
            %s342 = sphi %s321, %s321
            %s343 = sphi %s323, %s323
          $region81: #{downblock_forward.5} parent=77 // loop_header_branch
            %340 = sbr.rel (%p338) target = $region85
          $region82: #{downblock_forward.5} parent=77 // loop_body
            %v344 = vld [vmem:[%s342] sm:%s335]
            %345 = vst [vmem:[%s343] sm:%s335] %v344
          $region83: #{downblock_forward.5} parent=77 // loop_footer
            %s341 = sadd.s32 1, %s337
          $region84: #{downblock_forward.5} parent=77 // loop_footer_branch
            %336 = sbr.rel target = $region80
          $region85: #{downblock_forward.5} parent=77 // loop_exit
            _
        $region78: #{downblock_forward.5} parent=35 // pred_fallthru
          _
        // Predicated region
        $region97: #{downblock_forward.5} parent=35 // pred_check
          _
        $region98: #{downblock_forward.5} parent=35 // pred_check_branch
          %370 = sbr.rel (0) target = $region100
        $region99: #{downblock_forward.5} parent=35 // pred_region
          %371 = vsyncadd %s325, 64
        $region100: #{downblock_forward.5} parent=35 // pred_fallthru
          _
        %s372 = sadd.s32 %s259, %s260
        %s373 = smul.addr %s372, 4
        %s374 = scalar_lea.vmem %s0, %s373
        %s375 = sadd.s32 9, %s264
        %s376 = smul.addr %s375, 4
        %s377 = scalar_lea.vmem [#allocation2], %s376
        %s378 = sadd.s32 2, %s268
        %s379 = scalar_lea.sflag [#allocation3], %s378
        %p381 = scmp.lt.u32.totalorder 4, 8
        %p382 = pneg %p381
        // Predicated region
        $region101: #{downblock_forward.5} parent=35 // pred_check
          _
        $region102: #{downblock_forward.5} parent=35 // pred_check_branch
          %384 = sbr.rel (%p381) target = $region104
        $region103: #{downblock_forward.5} parent=35 // pred_region
          %s400 = sand.u32 4, 7
          %p401 = scmp.eq.s32.totalorder %s400, 0
          %p402 = pneg %p401
          // Predicated region
          $region116: #{downblock_forward.5} parent=103 // pred_check
            _
          $region117: #{downblock_forward.5} parent=103 // pred_check_branch
            %404 = sbr.rel (%p401) target = $region119
          $region118: #{downblock_forward.5} parent=103 // pred_region
            %s405 = sand.u32 4, 7
            %s406 = ssub.s32 4, %s405
            %s407 = scalar_lea.vmem %s374, %s406
            %s408 = ssub.s32 4, %s405
            %s409 = scalar_lea.vmem %s377, %s408 [#allocation2]
            %s410 = sshll.u32 1, %s405
            %s411 = ssub.s32 %s410, 1
            loop: start=0, step=1, limit=1
            $region120: #{downblock_forward.5} parent=118 // loop_pre_header
              _
            $region121: #{downblock_forward.5} parent=118 // loop_header
              %s413 = sphi 0, %s417
              %p414 = scmp.ge.s32.totalorder %s413, 1
              %s418 = sphi %s407, %s407
              %s419 = sphi %s409, %s409
            $region122: #{downblock_forward.5} parent=118 // loop_header_branch
              %416 = sbr.rel (%p414) target = $region126
            $region123: #{downblock_forward.5} parent=118 // loop_body
              %v420 = vld [vmem:[%s418] sm:%s411]
              %421 = vst [vmem:[%s419] sm:%s411] %v420
            $region124: #{downblock_forward.5} parent=118 // loop_footer
              %s417 = sadd.s32 1, %s413
            $region125: #{downblock_forward.5} parent=118 // loop_footer_branch
              %412 = sbr.rel target = $region121
            $region126: #{downblock_forward.5} parent=118 // loop_exit
              _
          $region119: #{downblock_forward.5} parent=103 // pred_fallthru
            _
        $region104: #{downblock_forward.5} parent=35 // pred_fallthru
          _
        // Predicated region
        $region105: #{downblock_forward.5} parent=35 // pred_check
          %p385 = pneg %p381
        $region106: #{downblock_forward.5} parent=35 // pred_check_branch
          %387 = sbr.rel (%p385) target = $region108
        $region107: #{downblock_forward.5} parent=35 // pred_region
          %s388 = sshll.u32 1, 4
          %s389 = ssub.s32 %s388, 1
          loop: start=0, step=1, limit=1
          $region109: #{downblock_forward.5} parent=107 // loop_pre_header
            _
          $region110: #{downblock_forward.5} parent=107 // loop_header
            %s391 = sphi 0, %s395
            %p392 = scmp.ge.s32.totalorder %s391, 1
            %s396 = sphi %s374, %s374
            %s397 = sphi %s377, %s377
          $region111: #{downblock_forward.5} parent=107 // loop_header_branch
            %394 = sbr.rel (%p392) target = $region115
          $region112: #{downblock_forward.5} parent=107 // loop_body
            %v398 = vld [vmem:[%s396] sm:%s389]
            %399 = vst [vmem:[%s397] sm:%s389] %v398
          $region113: #{downblock_forward.5} parent=107 // loop_footer
            %s395 = sadd.s32 1, %s391
          $region114: #{downblock_forward.5} parent=107 // loop_footer_branch
            %390 = sbr.rel target = $region110
          $region115: #{downblock_forward.5} parent=107 // loop_exit
            _
        $region108: #{downblock_forward.5} parent=35 // pred_fallthru
          _
        // Predicated region
        $region127: #{downblock_forward.5} parent=35 // pred_check
          _
        $region128: #{downblock_forward.5} parent=35 // pred_check_branch
          %424 = sbr.rel (0) target = $region130
        $region129: #{downblock_forward.5} parent=35 // pred_region
          %425 = vsyncadd %s379, 64
        $region130: #{downblock_forward.5} parent=35 // pred_fallthru
          _
      $region36: #{downblock_forward.5} parent=31 // pred_fallthru
        _
      %s426 = sadd.s32 %s24, 1
      %p427 = scmp.lt.s32.totalorder %s426, 1
      // Predicated region
      $region131: #{downblock_forward.5} parent=31 // pred_check
        %p428 = pneg %p427
      $region132: #{downblock_forward.5} parent=31 // pred_check_branch
        %430 = sbr.rel (%p428) target = $region134
      $region133: #{downblock_forward.5} parent=31 // pred_region
        %s431 = sadd.s32 %s235, 8
        %s432 = ssub.s32 1, %s247
        %p433 = scmp.lt.s32.totalorder %s431, 0
        %s434 = scalar_select %p433, %s431, 0
        %s435 = ssub.s32 %s434, 1
        %p436 = scmp.gt.s32.totalorder %s435, 0
        %s437 = scalar_select %p436, %s435, 0
        %s438 = sadd.s32 %s434, 8
        %p439 = scmp.lt.s32.totalorder %s438, 7
        %s440 = scalar_select %p439, %s438, 7
        %s441 = smul.u32 %s22, 8
        %s442 = sadd.s32 %s434, %s441
        %s443 = smul.addr %s442, 4
        %s444 = scalar_lea.vmem %s0, %s443
        %s445 = smul.u32 %s432, 10
        %s446 = sadd.s32 1, %s445
        %s447 = smul.addr %s446, 4
        %s448 = scalar_lea.vmem [#allocation2], %s447
        %s449 = smul.u32 %s432, 3
        %s450 = scalar_lea.sflag [#allocation3], %s449
        %p452 = scmp.lt.u32.totalorder 32, 8
        %p453 = pneg %p452
        // Predicated region
        $region135: #{downblock_forward.5} parent=133 // pred_check
          _
        $region136: #{downblock_forward.5} parent=133 // pred_check_branch
          %455 = sbr.rel (%p452) target = $region138
        $region137: #{downblock_forward.5} parent=133 // pred_region
          %s471 = sand.u32 32, 7
          %p472 = scmp.eq.s32.totalorder %s471, 0
          // Predicated region
          $region150: #{downblock_forward.5} parent=137 // pred_check
            %p473 = pneg %p472
          $region151: #{downblock_forward.5} parent=137 // pred_check_branch
            %475 = sbr.rel (%p473) target = $region153
          $region152: #{downblock_forward.5} parent=137 // pred_region
            loop: start=0, step=1, limit=1
            $region154: #{downblock_forward.5} parent=152 // loop_pre_header
              _
            $region155: #{downblock_forward.5} parent=152 // loop_header
              %s477 = sphi 0, %s481
              %p478 = scmp.ge.s32.totalorder %s477, 1
              %s482 = sphi %s444, %s444
              %s483 = sphi %s448, %s448
            $region156: #{downblock_forward.5} parent=152 // loop_header_branch
              %480 = sbr.rel (%p478) target = $region160
            $region157: #{downblock_forward.5} parent=152 // loop_body
              %v484 = vld [vmem:[%s482] sm:$0xff]
              %485 = vst [vmem:[%s483] sm:$0xff] %v484
              %v486 = vld [vmem:[%s482 + $0x8] sm:$0xff]
              %487 = vst [vmem:[%s483 + $0x8] sm:$0xff] %v486
              %v488 = vld [vmem:[%s482 + $0x10] sm:$0xff]
              %489 = vst [vmem:[%s483 + $0x10] sm:$0xff] %v488
              %v490 = vld [vmem:[%s482 + $0x18] sm:$0xff]
              %491 = vst [vmem:[%s483 + $0x18] sm:$0xff] %v490
            $region158: #{downblock_forward.5} parent=152 // loop_footer
              %s481 = sadd.s32 1, %s477
            $region159: #{downblock_forward.5} parent=152 // loop_footer_branch
              %476 = sbr.rel target = $region155
            $region160: #{downblock_forward.5} parent=152 // loop_exit
              _
          $region153: #{downblock_forward.5} parent=137 // pred_fallthru
            _
          %p492 = pneg %p472
          // Predicated region
          $region161: #{downblock_forward.5} parent=137 // pred_check
            _
          $region162: #{downblock_forward.5} parent=137 // pred_check_branch
            %494 = sbr.rel (%p472) target = $region164
          $region163: #{downblock_forward.5} parent=137 // pred_region
            %s495 = sand.u32 32, 7
          $region164: #{downblock_forward.5} parent=137 // pred_fallthru
            _
        $region138: #{downblock_forward.5} parent=133 // pred_fallthru
          _
        // Predicated region
        $region139: #{downblock_forward.5} parent=133 // pred_check
          %p456 = pneg %p452
        $region140: #{downblock_forward.5} parent=133 // pred_check_branch
          %458 = sbr.rel (%p456) target = $region142
        $region141: #{downblock_forward.5} parent=133 // pred_region
          %s459 = sshll.u32 1, 32
          %s460 = ssub.s32 %s459, 1
          loop: start=0, step=1, limit=1
          $region143: #{downblock_forward.5} parent=141 // loop_pre_header
            _
          $region144: #{downblock_forward.5} parent=141 // loop_header
            %s462 = sphi 0, %s466
            %p463 = scmp.ge.s32.totalorder %s462, 1
            %s467 = sphi %s444, %s444
            %s468 = sphi %s448, %s448
          $region145: #{downblock_forward.5} parent=141 // loop_header_branch
            %465 = sbr.rel (%p463) target = $region149
          $region146: #{downblock_forward.5} parent=141 // loop_body
            %v469 = vld [vmem:[%s467] sm:%s460]
            %470 = vst [vmem:[%s468] sm:%s460] %v469
          $region147: #{downblock_forward.5} parent=141 // loop_footer
            %s466 = sadd.s32 1, %s462
          $region148: #{downblock_forward.5} parent=141 // loop_footer_branch
            %461 = sbr.rel target = $region144
          $region149: #{downblock_forward.5} parent=141 // loop_exit
            _
        $region142: #{downblock_forward.5} parent=133 // pred_fallthru
          _
        // Predicated region
        $region165: #{downblock_forward.5} parent=133 // pred_check
          _
        $region166: #{downblock_forward.5} parent=133 // pred_check_branch
          %498 = sbr.rel (0) target = $region168
        $region167: #{downblock_forward.5} parent=133 // pred_region
          %499 = vsyncadd %s450, 512
        $region168: #{downblock_forward.5} parent=133 // pred_fallthru
          _
        %s500 = sadd.s32 %s437, %s441
        %s501 = smul.addr %s500, 4
        %s502 = scalar_lea.vmem %s0, %s501
        %s503 = smul.addr %s445, 4
        %s504 = scalar_lea.vmem [#allocation2], %s503
        %s505 = sadd.s32 1, %s449
        %s506 = scalar_lea.sflag [#allocation3], %s505
        %p508 = scmp.lt.u32.totalorder 4, 8
        %p509 = pneg %p508
        // Predicated region
        $region169: #{downblock_forward.5} parent=133 // pred_check
          _
        $region170: #{downblock_forward.5} parent=133 // pred_check_branch
          %511 = sbr.rel (%p508) target = $region172
        $region171: #{downblock_forward.5} parent=133 // pred_region
          %s527 = sand.u32 4, 7
          %p528 = scmp.eq.s32.totalorder %s527, 0
          %p529 = pneg %p528
          // Predicated region
          $region184: #{downblock_forward.5} parent=171 // pred_check
            _
          $region185: #{downblock_forward.5} parent=171 // pred_check_branch
            %531 = sbr.rel (%p528) target = $region187
          $region186: #{downblock_forward.5} parent=171 // pred_region
            %s532 = sand.u32 4, 7
            %s533 = ssub.s32 4, %s532
            %s534 = scalar_lea.vmem %s502, %s533
            %s535 = ssub.s32 4, %s532
            %s536 = scalar_lea.vmem %s504, %s535 [#allocation2]
            %s537 = sshll.u32 1, %s532
            %s538 = ssub.s32 %s537, 1
            loop: start=0, step=1, limit=1
            $region188: #{downblock_forward.5} parent=186 // loop_pre_header
              _
            $region189: #{downblock_forward.5} parent=186 // loop_header
              %s540 = sphi 0, %s544
              %p541 = scmp.ge.s32.totalorder %s540, 1
              %s545 = sphi %s534, %s534
              %s546 = sphi %s536, %s536
            $region190: #{downblock_forward.5} parent=186 // loop_header_branch
              %543 = sbr.rel (%p541) target = $region194
            $region191: #{downblock_forward.5} parent=186 // loop_body
              %v547 = vld [vmem:[%s545] sm:%s538]
              %548 = vst [vmem:[%s546] sm:%s538] %v547
            $region192: #{downblock_forward.5} parent=186 // loop_footer
              %s544 = sadd.s32 1, %s540
            $region193: #{downblock_forward.5} parent=186 // loop_footer_branch
              %539 = sbr.rel target = $region189
            $region194: #{downblock_forward.5} parent=186 // loop_exit
              _
          $region187: #{downblock_forward.5} parent=171 // pred_fallthru
            _
        $region172: #{downblock_forward.5} parent=133 // pred_fallthru
          _
        // Predicated region
        $region173: #{downblock_forward.5} parent=133 // pred_check
          %p512 = pneg %p508
        $region174: #{downblock_forward.5} parent=133 // pred_check_branch
          %514 = sbr.rel (%p512) target = $region176
        $region175: #{downblock_forward.5} parent=133 // pred_region
          %s515 = sshll.u32 1, 4
          %s516 = ssub.s32 %s515, 1
          loop: start=0, step=1, limit=1
          $region177: #{downblock_forward.5} parent=175 // loop_pre_header
            _
          $region178: #{downblock_forward.5} parent=175 // loop_header
            %s518 = sphi 0, %s522
            %p519 = scmp.ge.s32.totalorder %s518, 1
            %s523 = sphi %s502, %s502
            %s524 = sphi %s504, %s504
          $region179: #{downblock_forward.5} parent=175 // loop_header_branch
            %521 = sbr.rel (%p519) target = $region183
          $region180: #{downblock_forward.5} parent=175 // loop_body
            %v525 = vld [vmem:[%s523] sm:%s516]
            %526 = vst [vmem:[%s524] sm:%s516] %v525
          $region181: #{downblock_forward.5} parent=175 // loop_footer
            %s522 = sadd.s32 1, %s518
          $region182: #{downblock_forward.5} parent=175 // loop_footer_branch
            %517 = sbr.rel target = $region178
          $region183: #{downblock_forward.5} parent=175 // loop_exit
            _
        $region176: #{downblock_forward.5} parent=133 // pred_fallthru
          _
        // Predicated region
        $region195: #{downblock_forward.5} parent=133 // pred_check
          _
        $region196: #{downblock_forward.5} parent=133 // pred_check_branch
          %551 = sbr.rel (0) target = $region198
        $region197: #{downblock_forward.5} parent=133 // pred_region
          %552 = vsyncadd %s506, 64
        $region198: #{downblock_forward.5} parent=133 // pred_fallthru
          _
        %s553 = sadd.s32 %s440, %s441
        %s554 = smul.addr %s553, 4
        %s555 = scalar_lea.vmem %s0, %s554
        %s556 = sadd.s32 9, %s445
        %s557 = smul.addr %s556, 4
        %s558 = scalar_lea.vmem [#allocation2], %s557
        %s559 = sadd.s32 2, %s449
        %s560 = scalar_lea.sflag [#allocation3], %s559
        %p562 = scmp.lt.u32.totalorder 4, 8
        %p563 = pneg %p562
        // Predicated region
        $region199: #{downblock_forward.5} parent=133 // pred_check
          _
        $region200: #{downblock_forward.5} parent=133 // pred_check_branch
          %565 = sbr.rel (%p562) target = $region202
        $region201: #{downblock_forward.5} parent=133 // pred_region
          %s581 = sand.u32 4, 7
          %p582 = scmp.eq.s32.totalorder %s581, 0
          %p583 = pneg %p582
          // Predicated region
          $region214: #{downblock_forward.5} parent=201 // pred_check
            _
          $region215: #{downblock_forward.5} parent=201 // pred_check_branch
            %585 = sbr.rel (%p582) target = $region217
          $region216: #{downblock_forward.5} parent=201 // pred_region
            %s586 = sand.u32 4, 7
            %s587 = ssub.s32 4, %s586
            %s588 = scalar_lea.vmem %s555, %s587
            %s589 = ssub.s32 4, %s586
            %s590 = scalar_lea.vmem %s558, %s589 [#allocation2]
            %s591 = sshll.u32 1, %s586
            %s592 = ssub.s32 %s591, 1
            loop: start=0, step=1, limit=1
            $region218: #{downblock_forward.5} parent=216 // loop_pre_header
              _
            $region219: #{downblock_forward.5} parent=216 // loop_header
              %s594 = sphi 0, %s598
              %p595 = scmp.ge.s32.totalorder %s594, 1
              %s599 = sphi %s588, %s588
              %s600 = sphi %s590, %s590
            $region220: #{downblock_forward.5} parent=216 // loop_header_branch
              %597 = sbr.rel (%p595) target = $region224
            $region221: #{downblock_forward.5} parent=216 // loop_body
              %v601 = vld [vmem:[%s599] sm:%s592]
              %602 = vst [vmem:[%s600] sm:%s592] %v601
            $region222: #{downblock_forward.5} parent=216 // loop_footer
              %s598 = sadd.s32 1, %s594
            $region223: #{downblock_forward.5} parent=216 // loop_footer_branch
              %593 = sbr.rel target = $region219
            $region224: #{downblock_forward.5} parent=216 // loop_exit
              _
          $region217: #{downblock_forward.5} parent=201 // pred_fallthru
            _
        $region202: #{downblock_forward.5} parent=133 // pred_fallthru
          _
        // Predicated region
        $region203: #{downblock_forward.5} parent=133 // pred_check
          %p566 = pneg %p562
        $region204: #{downblock_forward.5} parent=133 // pred_check_branch
          %568 = sbr.rel (%p566) target = $region206
        $region205: #{downblock_forward.5} parent=133 // pred_region
          %s569 = sshll.u32 1, 4
          %s570 = ssub.s32 %s569, 1
          loop: start=0, step=1, limit=1
          $region207: #{downblock_forward.5} parent=205 // loop_pre_header
            _
          $region208: #{downblock_forward.5} parent=205 // loop_header
            %s572 = sphi 0, %s576
            %p573 = scmp.ge.s32.totalorder %s572, 1
            %s577 = sphi %s555, %s555
            %s578 = sphi %s558, %s558
          $region209: #{downblock_forward.5} parent=205 // loop_header_branch
            %575 = sbr.rel (%p573) target = $region213
          $region210: #{downblock_forward.5} parent=205 // loop_body
            %v579 = vld [vmem:[%s577] sm:%s570]
            %580 = vst [vmem:[%s578] sm:%s570] %v579
          $region211: #{downblock_forward.5} parent=205 // loop_footer
            %s576 = sadd.s32 1, %s572
          $region212: #{downblock_forward.5} parent=205 // loop_footer_branch
            %571 = sbr.rel target = $region208
          $region213: #{downblock_forward.5} parent=205 // loop_exit
            _
        $region206: #{downblock_forward.5} parent=133 // pred_fallthru
          _
        // Predicated region
        $region225: #{downblock_forward.5} parent=133 // pred_check
          _
        $region226: #{downblock_forward.5} parent=133 // pred_check_branch
          %605 = sbr.rel (0) target = $region228
        $region227: #{downblock_forward.5} parent=133 // pred_region
          %606 = vsyncadd %s560, 64
        $region228: #{downblock_forward.5} parent=133 // pred_fallthru
          _
      $region134: #{downblock_forward.5} parent=31 // pred_fallthru
        _
      %s607 = smul.u32 %s247, 3
      %s608 = scalar_lea.sflag [#allocation3], %s607
      %s609 = smul.u32 4, 8
      %s610 = smul.u32 %s609, 1
      %s611 = smul.u32 %s610, 1
      %s612 = sshll.u32 %s611, 4
      %613 = dma.done %s608, %s612
      %s614 = sadd.s32 1, %s607
      %s615 = scalar_lea.sflag [#allocation3], %s614
      %s616 = smul.u32 4, 1
      %s617 = smul.u32 %s616, 1
      %s618 = smul.u32 %s617, 1
      %s619 = sshll.u32 %s618, 4
      %620 = dma.done %s615, %s619
      %s621 = sadd.s32 2, %s607
      %s622 = scalar_lea.sflag [#allocation3], %s621
      %s623 = sshll.u32 %s618, 4
      %624 = dma.done %s622, %s623
      %s625 = smul.u32 %s247, 10
      %s626 = smul.addr %s625, 4
      %s627 = scalar_lea.vmem [#allocation2], %s626
      %v628 = vld [vmem:[%s627] sm:$0xf]
      %v629 = vld [vmem:[%s627 + $0x4] sm:$0xf]
      %v630 = vld [vmem:[%s627 + $0x8] sm:$0xf]
      %v631 = vld [vmem:[%s627 + $0xc] sm:$0xf]
      %v632 = vld [vmem:[%s627 + $0x10] sm:$0xf]
      %v633 = vld [vmem:[%s627 + $0x14] sm:$0xf]
      %v634 = vld [vmem:[%s627 + $0x18] sm:$0xf]
      %v635 = vld [vmem:[%s627 + $0x1c] sm:$0xf]
      %v636 = vld [vmem:[%s627 + $0x20] sm:$0xf]
      %v637 = vld [vmem:[%s627 + $0x24] sm:$0xf]
      %v638 = vunpack.c.l.bf16 %v628
      %v639 = vunpack.c.l.bf16 %v629
      %v640 = vunpack.c.l.bf16 %v630
      %v641 = vunpack.c.l.bf16 %v631
      %v642 = vunpack.c.l.bf16 %v632
      %v643 = vunpack.c.l.bf16 %v633
      %v644 = vunpack.c.l.bf16 %v634
      %v645 = vunpack.c.l.bf16 %v635
      %v646 = vunpack.c.l.bf16 %v636
      %v647 = vunpack.c.l.bf16 %v637
      %p648 = scmp.eq.s32.totalorder %s234, 0
      %s649 = scalar_select %p648, 1, 0
      %v650 = vstv %s649
      %vm651 = vcmp.eq.s32.totalorder %v650, 1
      %v652 = vsel %vm651, 1, 0
      %vm653 = vcmp.eq.s32.totalorder %v652, 1
      %v654 = vsel %vm653, 0.0, %v638
      %v655 = vsel 0, 0.0, %v639
      %v656 = vsel 0, 0.0, %v640
      %v657 = vsel 0, 0.0, %v641
      %v658 = vsel 0, 0.0, %v642
      %v659 = vsel 0, 0.0, %v643
      %v660 = vsel 0, 0.0, %v644
      %v661 = vsel 0, 0.0, %v645
      %v662 = vsel 0, 0.0, %v646
      %v663 = vsel %vm653, 0.0, %v647
      %v664 = vpack.c.bf16 %v654, %v654
      %v665 = vpack.c.bf16 %v655, %v655
      %v666 = vpack.c.bf16 %v656, %v656
      %v667 = vpack.c.bf16 %v657, %v657
      %v668 = vpack.c.bf16 %v658, %v658
      %v669 = vpack.c.bf16 %v659, %v659
      %v670 = vpack.c.bf16 %v660, %v660
      %v671 = vpack.c.bf16 %v661, %v661
      %v672 = vpack.c.bf16 %v662, %v662
      %v673 = vpack.c.bf16 %v663, %v663
      %v675 = vshrl.u32 %v664, 16
      %v677 = vrot.slane %v675, 7
      %v678 = vshll.u32 %v664, 16
      %v680 = vor.u32 %v677, %v678
      %v682 = vshrl.u32 %v665, 16
      %v684 = vrot.slane %v682, 7
      %v685 = vshll.u32 %v665, 16
      %v687 = vor.u32 %v684, %v685
      %v689 = vshrl.u32 %v666, 16
      %v691 = vrot.slane %v689, 7
      %v692 = vshll.u32 %v666, 16
      %v694 = vor.u32 %v691, %v692
      %v696 = vshrl.u32 %v667, 16
      %v698 = vrot.slane %v696, 7
      %v699 = vshll.u32 %v667, 16
      %v701 = vor.u32 %v698, %v699
      %v703 = vshrl.u32 %v668, 16
      %v705 = vrot.slane %v703, 7
      %v706 = vshll.u32 %v668, 16
      %v708 = vor.u32 %v705, %v706
      %v710 = vshrl.u32 %v669, 16
      %v712 = vrot.slane %v710, 7
      %v713 = vshll.u32 %v669, 16
      %v715 = vor.u32 %v712, %v713
      %v717 = vshrl.u32 %v670, 16
      %v719 = vrot.slane %v717, 7
      %v720 = vshll.u32 %v670, 16
      %v722 = vor.u32 %v719, %v720
      %v724 = vshrl.u32 %v671, 16
      %v726 = vrot.slane %v724, 7
      %v727 = vshll.u32 %v671, 16
      %v729 = vor.u32 %v726, %v727
      %v731 = vshrl.u32 %v672, 16
      %v733 = vrot.slane %v731, 7
      %v734 = vshll.u32 %v672, 16
      %v736 = vor.u32 %v733, %v734
      %v738 = vshrl.u32 %v673, 16
      %v740 = vrot.slane %v738, 7
      %v741 = vshll.u32 %v673, 16
      %v743 = vor.u32 %v740, %v741
      %vm754 = vcmask 1040384
      %vm755 = vsmask.f32 256
      %vm756 = vmand %vm754, %vm755
      %v757 = vsel %vm756, 0, %v680
      %v758 = vsel %vm756, 0, %v687
      %v759 = vsel %vm756, 0, %v694
      %v760 = vsel %vm756, 0, %v701
      %v761 = vsel %vm756, 0, %v708
      %v762 = vsel %vm756, 0, %v715
      %v763 = vsel %vm756, 0, %v722
      %v764 = vsel %vm756, 0, %v729
      %v765 = vsel %vm756, 0, %v736
      %v766 = vsel %vm756, 0, %v743
      %v767 = vrot.slane %v678, 1
      %v768 = vor.u32 %v675, %v767
      %v769 = vrot.slane %v685, 1
      %v770 = vor.u32 %v682, %v769
      %v771 = vrot.slane %v692, 1
      %v772 = vor.u32 %v689, %v771
      %v773 = vrot.slane %v699, 1
      %v774 = vor.u32 %v696, %v773
      %v775 = vrot.slane %v706, 1
      %v776 = vor.u32 %v703, %v775
      %v777 = vrot.slane %v713, 1
      %v778 = vor.u32 %v710, %v777
      %v779 = vrot.slane %v720, 1
      %v780 = vor.u32 %v717, %v779
      %v781 = vrot.slane %v727, 1
      %v782 = vor.u32 %v724, %v781
      %v783 = vrot.slane %v734, 1
      %v784 = vor.u32 %v731, %v783
      %v785 = vrot.slane %v741, 1
      %v786 = vor.u32 %v738, %v785
      %vm797 = vcmask 1043456
      %vm798 = vsmask.f32 3328
      %vm799 = vmand %vm797, %vm798
      %v800 = vsel %vm799, %v768, 0
      %v801 = vsel %vm799, %v770, 0
      %v802 = vsel %vm799, %v772, 0
      %v803 = vsel %vm799, %v774, 0
      %v804 = vsel %vm799, %v776, 0
      %v805 = vsel %vm799, %v778, 0
      %v806 = vsel %vm799, %v780, 0
      %v807 = vsel %vm799, %v782, 0
      %v808 = vsel %vm799, %v784, 0
      %v809 = vsel %vm799, %v786, 0
      %v820 = vunpack.c.l.b16 %v757
      %v821 = vunpack.c.l.b16 %v758
      %v822 = vunpack.c.l.b16 %v759
      %v823 = vunpack.c.l.b16 %v760
      %v824 = vunpack.c.l.b16 %v761
      %v825 = vunpack.c.l.b16 %v762
      %v826 = vunpack.c.l.b16 %v763
      %v827 = vunpack.c.l.b16 %v764
      %v828 = vunpack.c.l.b16 %v765
      %v829 = vunpack.c.l.b16 %v766
      %v830 = vld [vmem:[%s1] sm:$0xf]
      %v831 = vld [vmem:[%s1 + $0x4] sm:$0xf]
      %v832 = vld [vmem:[%s1 + $0x8] sm:$0xf]
      %v833 = vld [vmem:[%s1 + $0xc] sm:$0xf]
      %v834 = vld [vmem:[%s1 + $0x10] sm:$0xf]
      %v835 = vld [vmem:[%s1 + $0x14] sm:$0xf]
      %v836 = vld [vmem:[%s1 + $0x18] sm:$0xf]
      %v837 = vld [vmem:[%s1 + $0x1c] sm:$0xf]
      %v838 = vld [vmem:[%s1 + $0x20] sm:$0xf]
      %v839 = vld [vmem:[%s1 + $0x24] sm:$0xf]
      %v840 = vld [vmem:[%s1 + $0x28] sm:$0xf]
      %v841 = vld [vmem:[%s1 + $0x2c] sm:$0xf]
      %v842 = vld [vmem:[%s1 + $0x30] sm:$0xf]
      %v843 = vld [vmem:[%s1 + $0x34] sm:$0xf]
      %v844 = vld [vmem:[%s1 + $0x38] sm:$0xf]
      %v845 = vld [vmem:[%s1 + $0x3c] sm:$0xf]
      %v846 = vld [vmem:[%s1 + $0x40] sm:$0xf]
      %v847 = vld [vmem:[%s1 + $0x44] sm:$0xf]
      %v848 = vld [vmem:[%s1 + $0x48] sm:$0xf]
      %v849 = vld [vmem:[%s1 + $0x4c] sm:$0xf]
      %v850 = vld [vmem:[%s1 + $0x50] sm:$0xf]
      %v851 = vld [vmem:[%s1 + $0x54] sm:$0xf]
      %v852 = vld [vmem:[%s1 + $0x58] sm:$0xf]
      %v853 = vld [vmem:[%s1 + $0x5c] sm:$0xf]
      %v854 = vld [vmem:[%s1 + $0x60] sm:$0xf]
      %v855 = vld [vmem:[%s1 + $0x64] sm:$0xf]
      %v856 = vld [vmem:[%s1 + $0x68] sm:$0xf]
      %v857 = vld [vmem:[%s1 + $0x6c] sm:$0xf]
      %v858 = vld [vmem:[%s1 + $0x70] sm:$0xf]
      %v859 = vld [vmem:[%s1 + $0x74] sm:$0xf]
      %v860 = vld [vmem:[%s1 + $0x78] sm:$0xf]
      %v861 = vld [vmem:[%s1 + $0x7c] sm:$0xf]
      %v862 = vld [vmem:[%s1 + $0x80] sm:$0xf]
      %v863 = vld [vmem:[%s1 + $0x84] sm:$0xf]
      %v864 = vld [vmem:[%s1 + $0x88] sm:$0xf]
      %v865 = vld [vmem:[%s1 + $0x8c] sm:$0xf]
      %v866 = vld [vmem:[%s1 + $0x90] sm:$0xf]
      %v867 = vld [vmem:[%s1 + $0x94] sm:$0xf]
      %v868 = vld [vmem:[%s1 + $0x98] sm:$0xf]
      %v869 = vld [vmem:[%s1 + $0x9c] sm:$0xf]
      %v870 = vld [vmem:[%s1 + $0xa0] sm:$0xf]
      %v871 = vld [vmem:[%s1 + $0xa4] sm:$0xf]
      %v872 = vld [vmem:[%s1 + $0xa8] sm:$0xf]
      %v873 = vld [vmem:[%s1 + $0xac] sm:$0xf]
      %v874 = vld [vmem:[%s1 + $0xb0] sm:$0xf]
      %v875 = vld [vmem:[%s1 + $0xb4] sm:$0xf]
      %v876 = vld [vmem:[%s1 + $0xb8] sm:$0xf]
      %v877 = vld [vmem:[%s1 + $0xbc] sm:$0xf]
      %v888 = vunpack.c.l.b16 %v664
      %v889 = vunpack.c.l.b16 %v665
      %v890 = vunpack.c.l.b16 %v666
      %v891 = vunpack.c.l.b16 %v667
      %v892 = vunpack.c.l.b16 %v668
      %v893 = vunpack.c.l.b16 %v669
      %v894 = vunpack.c.l.b16 %v670
      %v895 = vunpack.c.l.b16 %v671
      %v896 = vunpack.c.l.b16 %v672
      %v897 = vunpack.c.l.b16 %v673
      %s898 = scalar_lea.vmem %s1, 192
      %v899 = vld [vmem:[%s898] sm:$0xf]
      %v900 = vld [vmem:[%s898 + $0x4] sm:$0xf]
      %v901 = vld [vmem:[%s898 + $0x8] sm:$0xf]
      %v902 = vld [vmem:[%s898 + $0xc] sm:$0xf]
      %v903 = vld [vmem:[%s898 + $0x10] sm:$0xf]
      %v904 = vld [vmem:[%s898 + $0x14] sm:$0xf]
      %v905 = vld [vmem:[%s898 + $0x18] sm:$0xf]
      %v906 = vld [vmem:[%s898 + $0x1c] sm:$0xf]
      %v907 = vld [vmem:[%s898 + $0x20] sm:$0xf]
      %v908 = vld [vmem:[%s898 + $0x24] sm:$0xf]
      %v909 = vld [vmem:[%s898 + $0x28] sm:$0xf]
      %v910 = vld [vmem:[%s898 + $0x2c] sm:$0xf]
      %v911 = vld [vmem:[%s898 + $0x30] sm:$0xf]
      %v912 = vld [vmem:[%s898 + $0x34] sm:$0xf]
      %v913 = vld [vmem:[%s898 + $0x38] sm:$0xf]
      %v914 = vld [vmem:[%s898 + $0x3c] sm:$0xf]
      %v915 = vld [vmem:[%s898 + $0x40] sm:$0xf]
      %v916 = vld [vmem:[%s898 + $0x44] sm:$0xf]
      %v917 = vld [vmem:[%s898 + $0x48] sm:$0xf]
      %v918 = vld [vmem:[%s898 + $0x4c] sm:$0xf]
      %v919 = vld [vmem:[%s898 + $0x50] sm:$0xf]
      %v920 = vld [vmem:[%s898 + $0x54] sm:$0xf]
      %v921 = vld [vmem:[%s898 + $0x58] sm:$0xf]
      %v922 = vld [vmem:[%s898 + $0x5c] sm:$0xf]
      %v923 = vld [vmem:[%s898 + $0x60] sm:$0xf]
      %v924 = vld [vmem:[%s898 + $0x64] sm:$0xf]
      %v925 = vld [vmem:[%s898 + $0x68] sm:$0xf]
      %v926 = vld [vmem:[%s898 + $0x6c] sm:$0xf]
      %v927 = vld [vmem:[%s898 + $0x70] sm:$0xf]
      %v928 = vld [vmem:[%s898 + $0x74] sm:$0xf]
      %v929 = vld [vmem:[%s898 + $0x78] sm:$0xf]
      %v930 = vld [vmem:[%s898 + $0x7c] sm:$0xf]
      %v931 = vld [vmem:[%s898 + $0x80] sm:$0xf]
      %v932 = vld [vmem:[%s898 + $0x84] sm:$0xf]
      %v933 = vld [vmem:[%s898 + $0x88] sm:$0xf]
      %v934 = vld [vmem:[%s898 + $0x8c] sm:$0xf]
      %v935 = vld [vmem:[%s898 + $0x90] sm:$0xf]
      %v936 = vld [vmem:[%s898 + $0x94] sm:$0xf]
      %v937 = vld [vmem:[%s898 + $0x98] sm:$0xf]
      %v938 = vld [vmem:[%s898 + $0x9c] sm:$0xf]
      %v939 = vld [vmem:[%s898 + $0xa0] sm:$0xf]
      %v940 = vld [vmem:[%s898 + $0xa4] sm:$0xf]
      %v941 = vld [vmem:[%s898 + $0xa8] sm:$0xf]
      %v942 = vld [vmem:[%s898 + $0xac] sm:$0xf]
      %v943 = vld [vmem:[%s898 + $0xb0] sm:$0xf]
      %v944 = vld [vmem:[%s898 + $0xb4] sm:$0xf]
      %v945 = vld [vmem:[%s898 + $0xb8] sm:$0xf]
      %v946 = vld [vmem:[%s898 + $0xbc] sm:$0xf]
      %v947 = vpack.c.b16 %v889, %v888
      %v948 = vpack.c.b16 %v890, %v889
      %v949 = vpack.c.b16 %v891, %v890
      %v950 = vpack.c.b16 %v892, %v891
      %v951 = vpack.c.b16 %v893, %v892
      %v952 = vpack.c.b16 %v894, %v893
      %v953 = vpack.c.b16 %v895, %v894
      %v954 = vpack.c.b16 %v896, %v895
      %v955 = vpack.c.b16 %v897, %v896
      %v1013 = vunpack.c.l.b16 %v899
      %v1014 = vunpack.c.l.b16 %v900
      %v1015 = vunpack.c.l.b16 %v901
      %v1016 = vunpack.c.l.b16 %v902
      %v1017 = vunpack.c.l.b16 %v903
      %v1018 = vunpack.c.l.b16 %v904
      %v1019 = vunpack.c.l.b16 %v905
      %v1020 = vunpack.c.l.b16 %v906
      %v1021 = vunpack.c.l.b16 %v907
      %v1022 = vunpack.c.l.b16 %v908
      %v1023 = vunpack.c.l.b16 %v909
      %v1024 = vunpack.c.l.b16 %v910
      %v1025 = vunpack.c.l.b16 %v911
      %v1026 = vunpack.c.l.b16 %v912
      %v1027 = vunpack.c.l.b16 %v913
      %v1028 = vunpack.c.l.b16 %v914
      %v1029 = vunpack.c.l.b16 %v915
      %v1030 = vunpack.c.l.b16 %v916
      %v1031 = vunpack.c.l.b16 %v917
      %v1032 = vunpack.c.l.b16 %v918
      %v1033 = vunpack.c.l.b16 %v919
      %v1034 = vunpack.c.l.b16 %v920
      %v1035 = vunpack.c.l.b16 %v921
      %v1036 = vunpack.c.l.b16 %v922
      %v1037 = vunpack.c.l.b16 %v923
      %v1038 = vunpack.c.l.b16 %v924
      %v1039 = vunpack.c.l.b16 %v925
      %v1040 = vunpack.c.l.b16 %v926
      %v1041 = vunpack.c.l.b16 %v927
      %v1042 = vunpack.c.l.b16 %v928
      %v1043 = vunpack.c.l.b16 %v929
      %v1044 = vunpack.c.l.b16 %v930
      %v1045 = vunpack.c.l.b16 %v931
      %v1046 = vunpack.c.l.b16 %v932
      %v1047 = vunpack.c.l.b16 %v933
      %v1048 = vunpack.c.l.b16 %v934
      %v1049 = vunpack.c.l.b16 %v935
      %v1050 = vunpack.c.l.b16 %v936
      %v1051 = vunpack.c.l.b16 %v937
      %v1052 = vunpack.c.l.b16 %v938
      %v1053 = vunpack.c.l.b16 %v939
      %v1054 = vunpack.c.l.b16 %v940
      %v1055 = vunpack.c.l.b16 %v941
      %v1056 = vunpack.c.l.b16 %v942
      %v1057 = vunpack.c.l.b16 %v943
      %v1058 = vunpack.c.l.b16 %v944
      %v1059 = vunpack.c.l.b16 %v945
      %v1060 = vunpack.c.l.b16 %v946
      %v1061 = vpack.c.b16 %v1014, %v1013
      %v1062 = vpack.c.b16 %v1016, %v1015
      %v1063 = vpack.c.b16 %v1018, %v1017
      %v1064 = vpack.c.b16 %v1020, %v1019
      %v1065 = vpack.c.b16 %v1022, %v1021
      %v1066 = vpack.c.b16 %v1024, %v1023
      %v1067 = vpack.c.b16 %v1026, %v1025
      %v1068 = vpack.c.b16 %v1028, %v1027
      %v1069 = vpack.c.b16 %v1030, %v1029
      %v1070 = vpack.c.b16 %v1032, %v1031
      %v1071 = vpack.c.b16 %v1034, %v1033
      %v1072 = vpack.c.b16 %v1036, %v1035
      %v1073 = vpack.c.b16 %v1038, %v1037
      %v1074 = vpack.c.b16 %v1040, %v1039
      %v1075 = vpack.c.b16 %v1042, %v1041
      %v1076 = vpack.c.b16 %v1044, %v1043
      %v1077 = vpack.c.b16 %v1046, %v1045
      %v1078 = vpack.c.b16 %v1048, %v1047
      %v1079 = vpack.c.b16 %v1050, %v1049
      %v1080 = vpack.c.b16 %v1052, %v1051
      %v1081 = vpack.c.b16 %v1054, %v1053
      %v1082 = vpack.c.b16 %v1056, %v1055
      %v1083 = vpack.c.b16 %v1058, %v1057
      %v1084 = vpack.c.b16 %v1060, %v1059
      %1109 = vmatprep.subr.bf16.mxu0 0
      %1110 = vmatpush1.bf16.msra.mxu0 %v1068
      %1111 = vmatprep.subr.bf16.mxu0 0
      %1112 = vmatpush1.bf16.msra.mxu0 %v1067
      %1113 = vmatprep.subr.bf16.mxu0 0
      %1114 = vmatpush1.bf16.msra.mxu0 %v1066
      %1115 = vmatprep.subr.bf16.mxu0 0
      %1116 = vmatpush1.bf16.msra.mxu0 %v1065
      %1117 = vmatprep.subr.bf16.mxu0 0
      %1118 = vmatpush1.bf16.msra.mxu0 %v1064
      %1119 = vmatprep.subr.bf16.mxu0 0
      %1120 = vmatpush1.bf16.msra.mxu0 %v1063
      %1121 = vmatprep.subr.bf16.mxu0 0
      %1122 = vmatpush1.bf16.msra.mxu0 %v1062
      %1123 = vmatprep.subr.bf16.mxu0 0
      %1124 = vmatpush1.bf16.msra.mxu0 %v1061
      %1125 = vmatprep.subr.bf16.mxu0 0
      %1126 = vmatpush2.bf16.msra.mxu0 %v1076
      %1127 = vmatprep.subr.bf16.mxu0 0
      %1128 = vmatpush2.bf16.msra.mxu0 %v1075
      %1129 = vmatprep.subr.bf16.mxu0 0
      %1130 = vmatpush2.bf16.msra.mxu0 %v1074
      %1131 = vmatprep.subr.bf16.mxu0 0
      %1132 = vmatpush2.bf16.msra.mxu0 %v1073
      %1133 = vmatprep.subr.bf16.mxu0 0
      %1134 = vmatpush2.bf16.msra.mxu0 %v1072
      %1135 = vmatprep.subr.bf16.mxu0 0
      %1136 = vmatpush2.bf16.msra.mxu0 %v1071
      %1137 = vmatprep.subr.bf16.mxu0 0
      %1138 = vmatpush2.bf16.msra.mxu0 %v1070
      %1139 = vmatprep.subr.bf16.mxu0 0
      %1140 = vmatpush2.bf16.msra.mxu0 %v1069
      %1141 = vmatprep.mubr.bf16.mxu0 %v948
      %1142 = vmatmul.mubr.bf16.gmra.mxu0 %v947
      %v1143 = vpop.f32.mrf.mxu0
      %v1144 = vadd.f32 0.0, %v1143
      %v1145 = vpop.f32.mrf.mxu0
      %v1146 = vpop.f32.mrf.mxu0
      %v1147 = vadd.f32 0.0, %v1146
      %v1148 = vpop.f32.mrf.mxu0
      %1149 = vmatprep.mubr.bf16.mxu0 %v950
      %1150 = vmatmul.mubr.bf16.gmra.mxu0 %v949
      %v1151 = vpop.f32.mrf.mxu0
      %v1152 = vadd.f32 0.0, %v1151
      %v1153 = vpop.f32.mrf.mxu0
      %v1154 = vpop.f32.mrf.mxu0
      %v1155 = vadd.f32 0.0, %v1154
      %v1156 = vpop.f32.mrf.mxu0
      %1157 = vmatprep.mubr.bf16.mxu0 %v952
      %1158 = vmatmul.mubr.bf16.gmra.mxu0 %v951
      %v1159 = vpop.f32.mrf.mxu0
      %v1160 = vadd.f32 0.0, %v1159
      %v1161 = vpop.f32.mrf.mxu0
      %v1162 = vpop.f32.mrf.mxu0
      %v1163 = vadd.f32 0.0, %v1162
      %v1164 = vpop.f32.mrf.mxu0
      %1165 = vmatprep.mubr.bf16.mxu0 %v954
      %1166 = vmatmul.mubr.bf16.gmra.mxu0 %v953
      %v1167 = vpop.f32.mrf.mxu0
      %v1168 = vadd.f32 0.0, %v1167
      %v1169 = vpop.f32.mrf.mxu0
      %v1170 = vpop.f32.mrf.mxu0
      %v1171 = vadd.f32 0.0, %v1170
      %v1172 = vpop.f32.mrf.mxu0
      %1173 = vdwg.mxu0
      %1174 = vmatprep.subr.bf16.mxu0 0
      %1175 = vmatpush1.bf16.msra.mxu0 %v1084
      %1176 = vmatprep.subr.bf16.mxu0 0
      %1177 = vmatpush1.bf16.msra.mxu0 %v1083
      %1178 = vmatprep.subr.bf16.mxu0 0
      %1179 = vmatpush1.bf16.msra.mxu0 %v1082
      %1180 = vmatprep.subr.bf16.mxu0 0
      %1181 = vmatpush1.bf16.msra.mxu0 %v1081
      %1182 = vmatprep.subr.bf16.mxu0 0
      %1183 = vmatpush1.bf16.msra.mxu0 %v1080
      %1184 = vmatprep.subr.bf16.mxu0 0
      %1185 = vmatpush1.bf16.msra.mxu0 %v1079
      %1186 = vmatprep.subr.bf16.mxu0 0
      %1187 = vmatpush1.bf16.msra.mxu0 %v1078
      %1188 = vmatprep.subr.bf16.mxu0 0
      %1189 = vmatpush1.bf16.msra.mxu0 %v1077
      %1190 = vmatprep.subr.bf16.mxu0 0
      %1191 = vmatpush2.bf16.msra.mxu0 0
      %1192 = vmatprep.subr.bf16.mxu0 0
      %1193 = vmatpush2.bf16.msra.mxu0 0
      %1194 = vmatprep.subr.bf16.mxu0 0
      %1195 = vmatpush2.bf16.msra.mxu0 0
      %1196 = vmatprep.subr.bf16.mxu0 0
      %1197 = vmatpush2.bf16.msra.mxu0 0
      %1198 = vmatprep.subr.bf16.mxu0 0
      %1199 = vmatpush2.bf16.msra.mxu0 0
      %1200 = vmatprep.subr.bf16.mxu0 0
      %1201 = vmatpush2.bf16.msra.mxu0 0
      %1202 = vmatprep.subr.bf16.mxu0 0
      %1203 = vmatpush2.bf16.msra.mxu0 0
      %1204 = vmatprep.subr.bf16.mxu0 0
      %1205 = vmatpush2.bf16.msra.mxu0 0
      %1206 = vmatprep.mubr.bf16.mxu0 0
      %1207 = vmatmul.mubr.bf16.gmra.mxu0 %v949
      %v1208 = vpop.f32.mrf.mxu0
      %v1209 = vadd.f32 %v1144, %v1208
      %v1210 = vpop.f32.mrf.mxu0
      %v1211 = vpop.f32.mrf.mxu0
      %v1212 = vadd.f32 %v1147, %v1211
      %v1213 = vpop.f32.mrf.mxu0
      %1214 = vmatprep.mubr.bf16.mxu0 0
      %1215 = vmatmul.mubr.bf16.gmra.mxu0 %v951
      %v1216 = vpop.f32.mrf.mxu0
      %v1217 = vadd.f32 %v1152, %v1216
      %v1218 = vpop.f32.mrf.mxu0
      %v1219 = vpop.f32.mrf.mxu0
      %v1220 = vadd.f32 %v1155, %v1219
      %v1221 = vpop.f32.mrf.mxu0
      %1222 = vmatprep.mubr.bf16.mxu0 0
      %1223 = vmatmul.mubr.bf16.gmra.mxu0 %v953
      %v1224 = vpop.f32.mrf.mxu0
      %v1225 = vadd.f32 %v1160, %v1224
      %v1226 = vpop.f32.mrf.mxu0
      %v1227 = vpop.f32.mrf.mxu0
      %v1228 = vadd.f32 %v1163, %v1227
      %v1229 = vpop.f32.mrf.mxu0
      %1230 = vmatprep.mubr.bf16.mxu0 0
      %1231 = vmatmul.mubr.bf16.gmra.mxu0 %v955
      %v1232 = vpop.f32.mrf.mxu0
      %v1233 = vadd.f32 %v1168, %v1232
      %v1234 = vpop.f32.mrf.mxu0
      %v1235 = vpop.f32.mrf.mxu0
      %v1236 = vadd.f32 %v1171, %v1235
      %v1237 = vpop.f32.mrf.mxu0
      %1238 = vdwg.mxu0
      %v1239 = vpack.c.b16 %v821, %v820
      %v1240 = vpack.c.b16 %v822, %v821
      %v1241 = vpack.c.b16 %v823, %v822
      %v1242 = vpack.c.b16 %v824, %v823
      %v1243 = vpack.c.b16 %v825, %v824
      %v1244 = vpack.c.b16 %v826, %v825
      %v1245 = vpack.c.b16 %v827, %v826
      %v1246 = vpack.c.b16 %v828, %v827
      %v1247 = vpack.c.b16 %v829, %v828
      %v1305 = vunpack.c.l.b16 %v830
      %v1306 = vunpack.c.l.b16 %v831
      %v1307 = vunpack.c.l.b16 %v832
      %v1308 = vunpack.c.l.b16 %v833
      %v1309 = vunpack.c.l.b16 %v834
      %v1310 = vunpack.c.l.b16 %v835
      %v1311 = vunpack.c.l.b16 %v836
      %v1312 = vunpack.c.l.b16 %v837
      %v1313 = vunpack.c.l.b16 %v838
      %v1314 = vunpack.c.l.b16 %v839
      %v1315 = vunpack.c.l.b16 %v840
      %v1316 = vunpack.c.l.b16 %v841
      %v1317 = vunpack.c.l.b16 %v842
      %v1318 = vunpack.c.l.b16 %v843
      %v1319 = vunpack.c.l.b16 %v844
      %v1320 = vunpack.c.l.b16 %v845
      %v1321 = vunpack.c.l.b16 %v846
      %v1322 = vunpack.c.l.b16 %v847
      %v1323 = vunpack.c.l.b16 %v848
      %v1324 = vunpack.c.l.b16 %v849
      %v1325 = vunpack.c.l.b16 %v850
      %v1326 = vunpack.c.l.b16 %v851
      %v1327 = vunpack.c.l.b16 %v852
      %v1328 = vunpack.c.l.b16 %v853
      %v1329 = vunpack.c.l.b16 %v854
      %v1330 = vunpack.c.l.b16 %v855
      %v1331 = vunpack.c.l.b16 %v856
      %v1332 = vunpack.c.l.b16 %v857
      %v1333 = vunpack.c.l.b16 %v858
      %v1334 = vunpack.c.l.b16 %v859
      %v1335 = vunpack.c.l.b16 %v860
      %v1336 = vunpack.c.l.b16 %v861
      %v1337 = vunpack.c.l.b16 %v862
      %v1338 = vunpack.c.l.b16 %v863
      %v1339 = vunpack.c.l.b16 %v864
      %v1340 = vunpack.c.l.b16 %v865
      %v1341 = vunpack.c.l.b16 %v866
      %v1342 = vunpack.c.l.b16 %v867
      %v1343 = vunpack.c.l.b16 %v868
      %v1344 = vunpack.c.l.b16 %v869
      %v1345 = vunpack.c.l.b16 %v870
      %v1346 = vunpack.c.l.b16 %v871
      %v1347 = vunpack.c.l.b16 %v872
      %v1348 = vunpack.c.l.b16 %v873
      %v1349 = vunpack.c.l.b16 %v874
      %v1350 = vunpack.c.l.b16 %v875
      %v1351 = vunpack.c.l.b16 %v876
      %v1352 = vunpack.c.l.b16 %v877
      %v1353 = vpack.c.b16 %v1306, %v1305
      %v1354 = vpack.c.b16 %v1308, %v1307
      %v1355 = vpack.c.b16 %v1310, %v1309
      %v1356 = vpack.c.b16 %v1312, %v1311
      %v1357 = vpack.c.b16 %v1314, %v1313
      %v1358 = vpack.c.b16 %v1316, %v1315
      %v1359 = vpack.c.b16 %v1318, %v1317
      %v1360 = vpack.c.b16 %v1320, %v1319
      %v1361 = vpack.c.b16 %v1322, %v1321
      %v1362 = vpack.c.b16 %v1324, %v1323
      %v1363 = vpack.c.b16 %v1326, %v1325
      %v1364 = vpack.c.b16 %v1328, %v1327
      %v1365 = vpack.c.b16 %v1330, %v1329
      %v1366 = vpack.c.b16 %v1332, %v1331
      %v1367 = vpack.c.b16 %v1334, %v1333
      %v1368 = vpack.c.b16 %v1336, %v1335
      %v1369 = vpack.c.b16 %v1338, %v1337
      %v1370 = vpack.c.b16 %v1340, %v1339
      %v1371 = vpack.c.b16 %v1342, %v1341
      %v1372 = vpack.c.b16 %v1344, %v1343
      %v1373 = vpack.c.b16 %v1346, %v1345
      %v1374 = vpack.c.b16 %v1348, %v1347
      %v1375 = vpack.c.b16 %v1350, %v1349
      %v1376 = vpack.c.b16 %v1352, %v1351
      %1401 = vmatprep.subr.bf16.mxu0 0
      %1402 = vmatpush1.bf16.msra.mxu0 %v1360
      %1403 = vmatprep.subr.bf16.mxu0 0
      %1404 = vmatpush1.bf16.msra.mxu0 %v1359
      %1405 = vmatprep.subr.bf16.mxu0 0
      %1406 = vmatpush1.bf16.msra.mxu0 %v1358
      %1407 = vmatprep.subr.bf16.mxu0 0
      %1408 = vmatpush1.bf16.msra.mxu0 %v1357
      %1409 = vmatprep.subr.bf16.mxu0 0
      %1410 = vmatpush1.bf16.msra.mxu0 %v1356
      %1411 = vmatprep.subr.bf16.mxu0 0
      %1412 = vmatpush1.bf16.msra.mxu0 %v1355
      %1413 = vmatprep.subr.bf16.mxu0 0
      %1414 = vmatpush1.bf16.msra.mxu0 %v1354
      %1415 = vmatprep.subr.bf16.mxu0 0
      %1416 = vmatpush1.bf16.msra.mxu0 %v1353
      %1417 = vmatprep.subr.bf16.mxu0 0
      %1418 = vmatpush2.bf16.msra.mxu0 %v1368
      %1419 = vmatprep.subr.bf16.mxu0 0
      %1420 = vmatpush2.bf16.msra.mxu0 %v1367
      %1421 = vmatprep.subr.bf16.mxu0 0
      %1422 = vmatpush2.bf16.msra.mxu0 %v1366
      %1423 = vmatprep.subr.bf16.mxu0 0
      %1424 = vmatpush2.bf16.msra.mxu0 %v1365
      %1425 = vmatprep.subr.bf16.mxu0 0
      %1426 = vmatpush2.bf16.msra.mxu0 %v1364
      %1427 = vmatprep.subr.bf16.mxu0 0
      %1428 = vmatpush2.bf16.msra.mxu0 %v1363
      %1429 = vmatprep.subr.bf16.mxu0 0
      %1430 = vmatpush2.bf16.msra.mxu0 %v1362
      %1431 = vmatprep.subr.bf16.mxu0 0
      %1432 = vmatpush2.bf16.msra.mxu0 %v1361
      %1433 = vmatprep.mubr.bf16.mxu0 %v1240
      %1434 = vmatmul.mubr.bf16.gmra.mxu0 %v1239
      %v1435 = vpop.f32.mrf.mxu0
      %v1436 = vadd.f32 %v1209, %v1435
      %v1437 = vpop.f32.mrf.mxu0
      %v1438 = vpop.f32.mrf.mxu0
      %v1439 = vadd.f32 %v1212, %v1438
      %v1440 = vpop.f32.mrf.mxu0
      %1441 = vmatprep.mubr.bf16.mxu0 %v1242
      %1442 = vmatmul.mubr.bf16.gmra.mxu0 %v1241
      %v1443 = vpop.f32.mrf.mxu0
      %v1444 = vadd.f32 %v1217, %v1443
      %v1445 = vpop.f32.mrf.mxu0
      %v1446 = vpop.f32.mrf.mxu0
      %v1447 = vadd.f32 %v1220, %v1446
      %v1448 = vpop.f32.mrf.mxu0
      %1449 = vmatprep.mubr.bf16.mxu0 %v1244
      %1450 = vmatmul.mubr.bf16.gmra.mxu0 %v1243
      %v1451 = vpop.f32.mrf.mxu0
      %v1452 = vadd.f32 %v1225, %v1451
      %v1453 = vpop.f32.mrf.mxu0
      %v1454 = vpop.f32.mrf.mxu0
      %v1455 = vadd.f32 %v1228, %v1454
      %v1456 = vpop.f32.mrf.mxu0
      %1457 = vmatprep.mubr.bf16.mxu0 %v1246
      %1458 = vmatmul.mubr.bf16.gmra.mxu0 %v1245
      %v1459 = vpop.f32.mrf.mxu0
      %v1460 = vadd.f32 %v1233, %v1459
      %v1461 = vpop.f32.mrf.mxu0
      %v1462 = vpop.f32.mrf.mxu0
      %v1463 = vadd.f32 %v1236, %v1462
      %v1464 = vpop.f32.mrf.mxu0
      %1465 = vdwg.mxu0
      %1466 = vmatprep.subr.bf16.mxu0 0
      %1467 = vmatpush1.bf16.msra.mxu0 %v1376
      %1468 = vmatprep.subr.bf16.mxu0 0
      %1469 = vmatpush1.bf16.msra.mxu0 %v1375
      %1470 = vmatprep.subr.bf16.mxu0 0
      %1471 = vmatpush1.bf16.msra.mxu0 %v1374
      %1472 = vmatprep.subr.bf16.mxu0 0
      %1473 = vmatpush1.bf16.msra.mxu0 %v1373
      %1474 = vmatprep.subr.bf16.mxu0 0
      %1475 = vmatpush1.bf16.msra.mxu0 %v1372
      %1476 = vmatprep.subr.bf16.mxu0 0
      %1477 = vmatpush1.bf16.msra.mxu0 %v1371
      %1478 = vmatprep.subr.bf16.mxu0 0
      %1479 = vmatpush1.bf16.msra.mxu0 %v1370
      %1480 = vmatprep.subr.bf16.mxu0 0
      %1481 = vmatpush1.bf16.msra.mxu0 %v1369
      %1482 = vmatprep.subr.bf16.mxu0 0
      %1483 = vmatpush2.bf16.msra.mxu0 0
      %1484 = vmatprep.subr.bf16.mxu0 0
      %1485 = vmatpush2.bf16.msra.mxu0 0
      %1486 = vmatprep.subr.bf16.mxu0 0
      %1487 = vmatpush2.bf16.msra.mxu0 0
      %1488 = vmatprep.subr.bf16.mxu0 0
      %1489 = vmatpush2.bf16.msra.mxu0 0
      %1490 = vmatprep.subr.bf16.mxu0 0
      %1491 = vmatpush2.bf16.msra.mxu0 0
      %1492 = vmatprep.subr.bf16.mxu0 0
      %1493 = vmatpush2.bf16.msra.mxu0 0
      %1494 = vmatprep.subr.bf16.mxu0 0
      %1495 = vmatpush2.bf16.msra.mxu0 0
      %1496 = vmatprep.subr.bf16.mxu0 0
      %1497 = vmatpush2.bf16.msra.mxu0 0
      %1498 = vmatprep.mubr.bf16.mxu0 0
      %1499 = vmatmul.mubr.bf16.gmra.mxu0 %v1241
      %v1500 = vpop.f32.mrf.mxu0
      %v1501 = vadd.f32 %v1436, %v1500
      %v1502 = vpop.f32.mrf.mxu0
      %v1503 = vpop.f32.mrf.mxu0
      %v1504 = vadd.f32 %v1439, %v1503
      %v1505 = vpop.f32.mrf.mxu0
      %1506 = vmatprep.mubr.bf16.mxu0 0
      %1507 = vmatmul.mubr.bf16.gmra.mxu0 %v1243
      %v1508 = vpop.f32.mrf.mxu0
      %v1509 = vadd.f32 %v1444, %v1508
      %v1510 = vpop.f32.mrf.mxu0
      %v1511 = vpop.f32.mrf.mxu0
      %v1512 = vadd.f32 %v1447, %v1511
      %v1513 = vpop.f32.mrf.mxu0
      %1514 = vmatprep.mubr.bf16.mxu0 0
      %1515 = vmatmul.mubr.bf16.gmra.mxu0 %v1245
      %v1516 = vpop.f32.mrf.mxu0
      %v1517 = vadd.f32 %v1452, %v1516
      %v1518 = vpop.f32.mrf.mxu0
      %v1519 = vpop.f32.mrf.mxu0
      %v1520 = vadd.f32 %v1455, %v1519
      %v1521 = vpop.f32.mrf.mxu0
      %1522 = vmatprep.mubr.bf16.mxu0 0
      %1523 = vmatmul.mubr.bf16.gmra.mxu0 %v1247
      %v1524 = vpop.f32.mrf.mxu0
      %v1525 = vadd.f32 %v1460, %v1524
      %v1526 = vpop.f32.mrf.mxu0
      %v1527 = vpop.f32.mrf.mxu0
      %v1528 = vadd.f32 %v1463, %v1527
      %v1529 = vpop.f32.mrf.mxu0
      %1530 = vdwg.mxu0
      %v1541 = vunpack.c.l.b16 %v800
      %v1542 = vunpack.c.l.b16 %v801
      %v1543 = vunpack.c.l.b16 %v802
      %v1544 = vunpack.c.l.b16 %v803
      %v1545 = vunpack.c.l.b16 %v804
      %v1546 = vunpack.c.l.b16 %v805
      %v1547 = vunpack.c.l.b16 %v806
      %v1548 = vunpack.c.l.b16 %v807
      %v1549 = vunpack.c.l.b16 %v808
      %v1550 = vunpack.c.l.b16 %v809
      %s1551 = scalar_lea.vmem %s1, 384
      %v1552 = vld [vmem:[%s1551] sm:$0xf]
      %v1553 = vld [vmem:[%s1551 + $0x4] sm:$0xf]
      %v1554 = vld [vmem:[%s1551 + $0x8] sm:$0xf]
      %v1555 = vld [vmem:[%s1551 + $0xc] sm:$0xf]
      %v1556 = vld [vmem:[%s1551 + $0x10] sm:$0xf]
      %v1557 = vld [vmem:[%s1551 + $0x14] sm:$0xf]
      %v1558 = vld [vmem:[%s1551 + $0x18] sm:$0xf]
      %v1559 = vld [vmem:[%s1551 + $0x1c] sm:$0xf]
      %v1560 = vld [vmem:[%s1551 + $0x20] sm:$0xf]
      %v1561 = vld [vmem:[%s1551 + $0x24] sm:$0xf]
      %v1562 = vld [vmem:[%s1551 + $0x28] sm:$0xf]
      %v1563 = vld [vmem:[%s1551 + $0x2c] sm:$0xf]
      %v1564 = vld [vmem:[%s1551 + $0x30] sm:$0xf]
      %v1565 = vld [vmem:[%s1551 + $0x34] sm:$0xf]
      %v1566 = vld [vmem:[%s1551 + $0x38] sm:$0xf]
      %v1567 = vld [vmem:[%s1551 + $0x3c] sm:$0xf]
      %v1568 = vld [vmem:[%s1551 + $0x40] sm:$0xf]
      %v1569 = vld [vmem:[%s1551 + $0x44] sm:$0xf]
      %v1570 = vld [vmem:[%s1551 + $0x48] sm:$0xf]
      %v1571 = vld [vmem:[%s1551 + $0x4c] sm:$0xf]
      %v1572 = vld [vmem:[%s1551 + $0x50] sm:$0xf]
      %v1573 = vld [vmem:[%s1551 + $0x54] sm:$0xf]
      %v1574 = vld [vmem:[%s1551 + $0x58] sm:$0xf]
      %v1575 = vld [vmem:[%s1551 + $0x5c] sm:$0xf]
      %v1576 = vld [vmem:[%s1551 + $0x60] sm:$0xf]
      %v1577 = vld [vmem:[%s1551 + $0x64] sm:$0xf]
      %v1578 = vld [vmem:[%s1551 + $0x68] sm:$0xf]
      %v1579 = vld [vmem:[%s1551 + $0x6c] sm:$0xf]
      %v1580 = vld [vmem:[%s1551 + $0x70] sm:$0xf]
      %v1581 = vld [vmem:[%s1551 + $0x74] sm:$0xf]
      %v1582 = vld [vmem:[%s1551 + $0x78] sm:$0xf]
      %v1583 = vld [vmem:[%s1551 + $0x7c] sm:$0xf]
      %v1584 = vld [vmem:[%s1551 + $0x80] sm:$0xf]
      %v1585 = vld [vmem:[%s1551 + $0x84] sm:$0xf]
      %v1586 = vld [vmem:[%s1551 + $0x88] sm:$0xf]
      %v1587 = vld [vmem:[%s1551 + $0x8c] sm:$0xf]
      %v1588 = vld [vmem:[%s1551 + $0x90] sm:$0xf]
      %v1589 = vld [vmem:[%s1551 + $0x94] sm:$0xf]
      %v1590 = vld [vmem:[%s1551 + $0x98] sm:$0xf]
      %v1591 = vld [vmem:[%s1551 + $0x9c] sm:$0xf]
      %v1592 = vld [vmem:[%s1551 + $0xa0] sm:$0xf]
      %v1593 = vld [vmem:[%s1551 + $0xa4] sm:$0xf]
      %v1594 = vld [vmem:[%s1551 + $0xa8] sm:$0xf]
      %v1595 = vld [vmem:[%s1551 + $0xac] sm:$0xf]
      %v1596 = vld [vmem:[%s1551 + $0xb0] sm:$0xf]
      %v1597 = vld [vmem:[%s1551 + $0xb4] sm:$0xf]
      %v1598 = vld [vmem:[%s1551 + $0xb8] sm:$0xf]
      %v1599 = vld [vmem:[%s1551 + $0xbc] sm:$0xf]
      %v1600 = vpack.c.b16 %v1542, %v1541
      %v1601 = vpack.c.b16 %v1543, %v1542
      %v1602 = vpack.c.b16 %v1544, %v1543
      %v1603 = vpack.c.b16 %v1545, %v1544
      %v1604 = vpack.c.b16 %v1546, %v1545
      %v1605 = vpack.c.b16 %v1547, %v1546
      %v1606 = vpack.c.b16 %v1548, %v1547
      %v1607 = vpack.c.b16 %v1549, %v1548
      %v1608 = vpack.c.b16 %v1550, %v1549
      %v1666 = vunpack.c.l.b16 %v1552
      %v1667 = vunpack.c.l.b16 %v1553
      %v1668 = vunpack.c.l.b16 %v1554
      %v1669 = vunpack.c.l.b16 %v1555
      %v1670 = vunpack.c.l.b16 %v1556
      %v1671 = vunpack.c.l.b16 %v1557
      %v1672 = vunpack.c.l.b16 %v1558
      %v1673 = vunpack.c.l.b16 %v1559
      %v1674 = vunpack.c.l.b16 %v1560
      %v1675 = vunpack.c.l.b16 %v1561
      %v1676 = vunpack.c.l.b16 %v1562
      %v1677 = vunpack.c.l.b16 %v1563
      %v1678 = vunpack.c.l.b16 %v1564
      %v1679 = vunpack.c.l.b16 %v1565
      %v1680 = vunpack.c.l.b16 %v1566
      %v1681 = vunpack.c.l.b16 %v1567
      %v1682 = vunpack.c.l.b16 %v1568
      %v1683 = vunpack.c.l.b16 %v1569
      %v1684 = vunpack.c.l.b16 %v1570
      %v1685 = vunpack.c.l.b16 %v1571
      %v1686 = vunpack.c.l.b16 %v1572
      %v1687 = vunpack.c.l.b16 %v1573
      %v1688 = vunpack.c.l.b16 %v1574
      %v1689 = vunpack.c.l.b16 %v1575
      %v1690 = vunpack.c.l.b16 %v1576
      %v1691 = vunpack.c.l.b16 %v1577
      %v1692 = vunpack.c.l.b16 %v1578
      %v1693 = vunpack.c.l.b16 %v1579
      %v1694 = vunpack.c.l.b16 %v1580
      %v1695 = vunpack.c.l.b16 %v1581
      %v1696 = vunpack.c.l.b16 %v1582
      %v1697 = vunpack.c.l.b16 %v1583
      %v1698 = vunpack.c.l.b16 %v1584
      %v1699 = vunpack.c.l.b16 %v1585
      %v1700 = vunpack.c.l.b16 %v1586
      %v1701 = vunpack.c.l.b16 %v1587
      %v1702 = vunpack.c.l.b16 %v1588
      %v1703 = vunpack.c.l.b16 %v1589
      %v1704 = vunpack.c.l.b16 %v1590
      %v1705 = vunpack.c.l.b16 %v1591
      %v1706 = vunpack.c.l.b16 %v1592
      %v1707 = vunpack.c.l.b16 %v1593
      %v1708 = vunpack.c.l.b16 %v1594
      %v1709 = vunpack.c.l.b16 %v1595
      %v1710 = vunpack.c.l.b16 %v1596
      %v1711 = vunpack.c.l.b16 %v1597
      %v1712 = vunpack.c.l.b16 %v1598
      %v1713 = vunpack.c.l.b16 %v1599
      %v1714 = vpack.c.b16 %v1667, %v1666
      %v1715 = vpack.c.b16 %v1669, %v1668
      %v1716 = vpack.c.b16 %v1671, %v1670
      %v1717 = vpack.c.b16 %v1673, %v1672
      %v1718 = vpack.c.b16 %v1675, %v1674
      %v1719 = vpack.c.b16 %v1677, %v1676
      %v1720 = vpack.c.b16 %v1679, %v1678
      %v1721 = vpack.c.b16 %v1681, %v1680
      %v1722 = vpack.c.b16 %v1683, %v1682
      %v1723 = vpack.c.b16 %v1685, %v1684
      %v1724 = vpack.c.b16 %v1687, %v1686
      %v1725 = vpack.c.b16 %v1689, %v1688
      %v1726 = vpack.c.b16 %v1691, %v1690
      %v1727 = vpack.c.b16 %v1693, %v1692
      %v1728 = vpack.c.b16 %v1695, %v1694
      %v1729 = vpack.c.b16 %v1697, %v1696
      %v1730 = vpack.c.b16 %v1699, %v1698
      %v1731 = vpack.c.b16 %v1701, %v1700
      %v1732 = vpack.c.b16 %v1703, %v1702
      %v1733 = vpack.c.b16 %v1705, %v1704
      %v1734 = vpack.c.b16 %v1707, %v1706
      %v1735 = vpack.c.b16 %v1709, %v1708
      %v1736 = vpack.c.b16 %v1711, %v1710
      %v1737 = vpack.c.b16 %v1713, %v1712
      %1762 = vmatprep.subr.bf16.mxu0 0
      %1763 = vmatpush1.bf16.msra.mxu0 %v1721
      %1764 = vmatprep.subr.bf16.mxu0 0
      %1765 = vmatpush1.bf16.msra.mxu0 %v1720
      %1766 = vmatprep.subr.bf16.mxu0 0
      %1767 = vmatpush1.bf16.msra.mxu0 %v1719
      %1768 = vmatprep.subr.bf16.mxu0 0
      %1769 = vmatpush1.bf16.msra.mxu0 %v1718
      %1770 = vmatprep.subr.bf16.mxu0 0
      %1771 = vmatpush1.bf16.msra.mxu0 %v1717
      %1772 = vmatprep.subr.bf16.mxu0 0
      %1773 = vmatpush1.bf16.msra.mxu0 %v1716
      %1774 = vmatprep.subr.bf16.mxu0 0
      %1775 = vmatpush1.bf16.msra.mxu0 %v1715
      %1776 = vmatprep.subr.bf16.mxu0 0
      %1777 = vmatpush1.bf16.msra.mxu0 %v1714
      %1778 = vmatprep.subr.bf16.mxu0 0
      %1779 = vmatpush2.bf16.msra.mxu0 %v1729
      %1780 = vmatprep.subr.bf16.mxu0 0
      %1781 = vmatpush2.bf16.msra.mxu0 %v1728
      %1782 = vmatprep.subr.bf16.mxu0 0
      %1783 = vmatpush2.bf16.msra.mxu0 %v1727
      %1784 = vmatprep.subr.bf16.mxu0 0
      %1785 = vmatpush2.bf16.msra.mxu0 %v1726
      %1786 = vmatprep.subr.bf16.mxu0 0
      %1787 = vmatpush2.bf16.msra.mxu0 %v1725
      %1788 = vmatprep.subr.bf16.mxu0 0
      %1789 = vmatpush2.bf16.msra.mxu0 %v1724
      %1790 = vmatprep.subr.bf16.mxu0 0
      %1791 = vmatpush2.bf16.msra.mxu0 %v1723
      %1792 = vmatprep.subr.bf16.mxu0 0
      %1793 = vmatpush2.bf16.msra.mxu0 %v1722
      %1794 = vmatprep.mubr.bf16.mxu0 %v1601
      %1795 = vmatmul.mubr.bf16.gmra.mxu0 %v1600
      %v1796 = vpop.f32.mrf.mxu0
      %v1797 = vadd.f32 0.0, %v1796
      %v1798 = vpop.f32.mrf.mxu0
      %v1799 = vpop.f32.mrf.mxu0
      %v1800 = vadd.f32 0.0, %v1799
      %v1801 = vpop.f32.mrf.mxu0
      %1802 = vmatprep.mubr.bf16.mxu0 %v1603
      %1803 = vmatmul.mubr.bf16.gmra.mxu0 %v1602
      %v1804 = vpop.f32.mrf.mxu0
      %v1805 = vadd.f32 0.0, %v1804
      %v1806 = vpop.f32.mrf.mxu0
      %v1807 = vpop.f32.mrf.mxu0
      %v1808 = vadd.f32 0.0, %v1807
      %v1809 = vpop.f32.mrf.mxu0
      %1810 = vmatprep.mubr.bf16.mxu0 %v1605
      %1811 = vmatmul.mubr.bf16.gmra.mxu0 %v1604
      %v1812 = vpop.f32.mrf.mxu0
      %v1813 = vadd.f32 0.0, %v1812
      %v1814 = vpop.f32.mrf.mxu0
      %v1815 = vpop.f32.mrf.mxu0
      %v1816 = vadd.f32 0.0, %v1815
      %v1817 = vpop.f32.mrf.mxu0
      %1818 = vmatprep.mubr.bf16.mxu0 %v1607
      %1819 = vmatmul.mubr.bf16.gmra.mxu0 %v1606
      %v1820 = vpop.f32.mrf.mxu0
      %v1821 = vadd.f32 0.0, %v1820
      %v1822 = vpop.f32.mrf.mxu0
      %v1823 = vpop.f32.mrf.mxu0
      %v1824 = vadd.f32 0.0, %v1823
      %v1825 = vpop.f32.mrf.mxu0
      %1826 = vdwg.mxu0
      %1827 = vmatprep.subr.bf16.mxu0 0
      %1828 = vmatpush1.bf16.msra.mxu0 %v1737
      %1829 = vmatprep.subr.bf16.mxu0 0
      %1830 = vmatpush1.bf16.msra.mxu0 %v1736
      %1831 = vmatprep.subr.bf16.mxu0 0
      %1832 = vmatpush1.bf16.msra.mxu0 %v1735
      %1833 = vmatprep.subr.bf16.mxu0 0
      %1834 = vmatpush1.bf16.msra.mxu0 %v1734
      %1835 = vmatprep.subr.bf16.mxu0 0
      %1836 = vmatpush1.bf16.msra.mxu0 %v1733
      %1837 = vmatprep.subr.bf16.mxu0 0
      %1838 = vmatpush1.bf16.msra.mxu0 %v1732
      %1839 = vmatprep.subr.bf16.mxu0 0
      %1840 = vmatpush1.bf16.msra.mxu0 %v1731
      %1841 = vmatprep.subr.bf16.mxu0 0
      %1842 = vmatpush1.bf16.msra.mxu0 %v1730
      %1843 = vmatprep.subr.bf16.mxu0 0
      %1844 = vmatpush2.bf16.msra.mxu0 0
      %1845 = vmatprep.subr.bf16.mxu0 0
      %1846 = vmatpush2.bf16.msra.mxu0 0
      %1847 = vmatprep.subr.bf16.mxu0 0
      %1848 = vmatpush2.bf16.msra.mxu0 0
      %1849 = vmatprep.subr.bf16.mxu0 0
      %1850 = vmatpush2.bf16.msra.mxu0 0
      %1851 = vmatprep.subr.bf16.mxu0 0
      %1852 = vmatpush2.bf16.msra.mxu0 0
      %1853 = vmatprep.subr.bf16.mxu0 0
      %1854 = vmatpush2.bf16.msra.mxu0 0
      %1855 = vmatprep.subr.bf16.mxu0 0
      %1856 = vmatpush2.bf16.msra.mxu0 0
      %1857 = vmatprep.subr.bf16.mxu0 0
      %1858 = vmatpush2.bf16.msra.mxu0 0
      %1859 = vmatprep.mubr.bf16.mxu0 0
      %1860 = vmatmul.mubr.bf16.gmra.mxu0 %v1602
      %v1861 = vpop.f32.mrf.mxu0
      %v1862 = vadd.f32 %v1797, %v1861
      %v1863 = vpop.f32.mrf.mxu0
      %v1864 = vpop.f32.mrf.mxu0
      %v1865 = vadd.f32 %v1800, %v1864
      %v1866 = vpop.f32.mrf.mxu0
      %1867 = vmatprep.mubr.bf16.mxu0 0
      %1868 = vmatmul.mubr.bf16.gmra.mxu0 %v1604
      %v1869 = vpop.f32.mrf.mxu0
      %v1870 = vadd.f32 %v1805, %v1869
      %v1871 = vpop.f32.mrf.mxu0
      %v1872 = vpop.f32.mrf.mxu0
      %v1873 = vadd.f32 %v1808, %v1872
      %v1874 = vpop.f32.mrf.mxu0
      %1875 = vmatprep.mubr.bf16.mxu0 0
      %1876 = vmatmul.mubr.bf16.gmra.mxu0 %v1606
      %v1877 = vpop.f32.mrf.mxu0
      %v1878 = vadd.f32 %v1813, %v1877
      %v1879 = vpop.f32.mrf.mxu0
      %v1880 = vpop.f32.mrf.mxu0
      %v1881 = vadd.f32 %v1816, %v1880
      %v1882 = vpop.f32.mrf.mxu0
      %1883 = vmatprep.mubr.bf16.mxu0 0
      %1884 = vmatmul.mubr.bf16.gmra.mxu0 %v1608
      %v1885 = vpop.f32.mrf.mxu0
      %v1886 = vadd.f32 %v1821, %v1885
      %v1887 = vpop.f32.mrf.mxu0
      %v1888 = vpop.f32.mrf.mxu0
      %v1889 = vadd.f32 %v1824, %v1888
      %v1890 = vpop.f32.mrf.mxu0
      %1891 = vdwg.mxu0
      %v1892 = vadd.f32 %v1501, %v1862
      %v1893 = vadd.f32 %v1504, %v1865
      %v1894 = vadd.f32 %v1509, %v1870
      %v1895 = vadd.f32 %v1512, %v1873
      %v1896 = vadd.f32 %v1517, %v1878
      %v1897 = vadd.f32 %v1520, %v1881
      %v1898 = vadd.f32 %v1525, %v1886
      %v1899 = vadd.f32 %v1528, %v1889
      %v1900 = vpack.c.bf16 %v1892, %v1892
      %v1901 = vpack.c.bf16 %v1893, %v1893
      %v1902 = vpack.c.bf16 %v1894, %v1894
      %v1903 = vpack.c.bf16 %v1895, %v1895
      %v1904 = vpack.c.bf16 %v1896, %v1896
      %v1905 = vpack.c.bf16 %v1897, %v1897
      %v1906 = vpack.c.bf16 %v1898, %v1898
      %v1907 = vpack.c.bf16 %v1899, %v1899
      %1908 = vst [vmem:[%s223] sm:$0xf] %v1900
      %1909 = vst [vmem:[%s223 + $0x4] sm:$0xf] %v1901
      %1910 = vst [vmem:[%s223 + $0x8] sm:$0xf] %v1902
      %1911 = vst [vmem:[%s223 + $0xc] sm:$0xf] %v1903
      %1912 = vst [vmem:[%s223 + $0x10] sm:$0xf] %v1904
      %1913 = vst [vmem:[%s223 + $0x14] sm:$0xf] %v1905
      %1914 = vst [vmem:[%s223 + $0x18] sm:$0xf] %v1906
      %1915 = vst [vmem:[%s223 + $0x1c] sm:$0xf] %v1907
      // Predicated region
      $region229: #{downblock_forward.5} parent=31 // pred_check
        %p1916 = pneg %p248
      $region230: #{downblock_forward.5} parent=31 // pred_check_branch
        %1918 = sbr.rel (%p1916) target = $region232
      $region231: #{downblock_forward.5} parent=31 // pred_region
        %1919 = vst [vmem:[%s232] sm:$0x3] 0.0
      $region232: #{downblock_forward.5} parent=31 // pred_fallthru
        _
      %v1920 = vadd.f32 %v1892, %v1893
      %v1921 = vadd.f32 %v1920, %v1894
      %v1922 = vadd.f32 %v1921, %v1895
      %v1923 = vadd.f32 %v1922, %v1896
      %v1924 = vadd.f32 %v1923, %v1897
      %v1925 = vadd.f32 %v1924, %v1898
      %v1926 = vadd.f32 %v1925, %v1899
      %v1927 = vrot.slane %v1926, 4
      %v1928 = vadd.f32 %v1926, %v1927
      %v1929 = vrot.slane %v1928, 2
      %v1930 = vadd.f32 %v1928, %v1929
      %v1931 = vrot.slane %v1930, 1
      %v1932 = vadd.f32 %v1930, %v1931
      %v1933 = vmul.f32 %v1892, %v1892
      %v1934 = vmul.f32 %v1893, %v1893
      %v1935 = vmul.f32 %v1894, %v1894
      %v1936 = vmul.f32 %v1895, %v1895
      %v1937 = vmul.f32 %v1896, %v1896
      %v1938 = vmul.f32 %v1897, %v1897
      %v1939 = vmul.f32 %v1898, %v1898
      %v1940 = vmul.f32 %v1899, %v1899
      %v1941 = vadd.f32 %v1933, %v1934
      %v1942 = vadd.f32 %v1941, %v1935
      %v1943 = vadd.f32 %v1942, %v1936
      %v1944 = vadd.f32 %v1943, %v1937
      %v1945 = vadd.f32 %v1944, %v1938
      %v1946 = vadd.f32 %v1945, %v1939
      %v1947 = vadd.f32 %v1946, %v1940
      %v1948 = vrot.slane %v1947, 4
      %v1949 = vadd.f32 %v1947, %v1948
      %v1950 = vrot.slane %v1949, 2
      %v1951 = vadd.f32 %v1949, %v1950
      %v1952 = vrot.slane %v1951, 1
      %v1953 = vadd.f32 %v1951, %v1952
      %v1954 = vld [vmem:[%s232] sm:$0x3]
      %vm1955 = vcmask 1040384
      %v1956 = vsel %vm1955, %v1932, %v1953
      %v1957 = vadd.f32 %v1954, %v1956
      %1958 = vst [vmem:[%s232] sm:$0x3] %v1957
      %s1959 = sadd.s32 %s23, %s24
      %s1960 = smul.u32 8, %s1959
      %p1961 = scmp.lt.s32.totalorder %s22, 1
      %s1962 = scalar_select %p1961, %s22, 1
      %p1963 = scmp.lt.s32.totalorder %s1960, 7
      %s1964 = scalar_select %p1963, %s1960, 7
      %s1965 = smul.addr %s1962, 8
      %s1966 = sadd.s32 %s1964, %s1965
      %s1967 = smul.addr %s1966, 4
      %s1968 = scalar_lea.vmem %s4, %s1967
      %p1969 = scmp.lt.s32.totalorder %s22, 1
      %s1970 = scalar_select %p1969, %s22, 1
      %p1971 = scmp.lt.s32.totalorder %s23, 0
      %s1972 = scalar_select %p1971, %s23, 0
      %s1973 = sadd.s32 %s1972, %s1970
      %s1974 = smul.addr %s1973, 2
      %s1975 = scalar_lea.vmem %s5, %s1974
      // Predicated region
      $region233: #{downblock_forward.5} parent=31 // pred_check
        %p1976 = pneg %p121
      $region234: #{downblock_forward.5} parent=31 // pred_check_branch
        %1978 = sbr.rel (%p1976) target = $region236
      $region235: #{downblock_forward.5} parent=31 // pred_region
        %s1979 = sadd.s32 %s23, %s24
        %s1980 = smul.u32 8, %s1979
      $region236: #{downblock_forward.5} parent=31 // pred_fallthru
        _
      // Predicated region
      $region237: #{downblock_forward.5} parent=31 // pred_check
        %p1981 = pneg %p149
      $region238: #{downblock_forward.5} parent=31 // pred_check_branch
        %1983 = sbr.rel (%p1981) target = $region240
      $region239: #{downblock_forward.5} parent=31 // pred_region
        _
      $region240: #{downblock_forward.5} parent=31 // pred_fallthru
        _
    $region32: #{downblock_forward.5} parent=5 // pred_fallthru
      _
    %p1984 = scmp.le.s32.totalorder 2, %s12
    // Predicated region
    $region241: #{downblock_forward.5} parent=5 // pred_check
      %p1985 = pneg %p1984
    $region242: #{downblock_forward.5} parent=5 // pred_check_branch
      %1987 = sbr.rel (%p1985) target = $region244
    $region243: #{downblock_forward.5} parent=5 // pred_region
      %s1988 = ssub.s32 %s12, 2
      // Predicated region
      $region245: #{downblock_forward.5} parent=243 // pred_check
        %p1989 = pneg %p127
      $region246: #{downblock_forward.5} parent=243 // pred_check_branch
        %1991 = sbr.rel (%p1989) target = $region248
      $region247: #{downblock_forward.5} parent=243 // pred_region
        %s1992 = sadd.s32 %s26, %s27
        %s1993 = smul.u32 8, %s1992
        %p1994 = scmp.lt.s32.totalorder %s25, 1
        %s1995 = scalar_select %p1994, %s25, 1
        %p1996 = scmp.lt.s32.totalorder %s1993, 7
        %s1997 = scalar_select %p1996, %s1993, 7
        %s1998 = smul.addr %s1995, 8
        %s1999 = sadd.s32 %s1997, %s1998
        %s2000 = smul.addr %s1999, 4
        %s2001 = scalar_lea.vmem %s4, %s2000
      $region248: #{downblock_forward.5} parent=243 // pred_fallthru
        _
      // Predicated region
      $region249: #{downblock_forward.5} parent=243 // pred_check
        %p2002 = pneg %p155
      $region250: #{downblock_forward.5} parent=243 // pred_check_branch
        %2004 = sbr.rel (%p2002) target = $region252
      $region251: #{downblock_forward.5} parent=243 // pred_region
        %p2005 = scmp.lt.s32.totalorder %s25, 1
        %s2006 = scalar_select %p2005, %s25, 1
        %p2007 = scmp.lt.s32.totalorder %s26, 0
        %s2008 = scalar_select %p2007, %s26, 0
        %s2009 = sadd.s32 %s2008, %s2006
        %s2010 = smul.addr %s2009, 2
        %s2011 = scalar_lea.vmem %s5, %s2010
      $region252: #{downblock_forward.5} parent=243 // pred_fallthru
        _
    $region244: #{downblock_forward.5} parent=5 // pred_fallthru
      _
  $region6: #{downblock_forward.5} parent=0 // loop_footer
    %s16 = sadd.s32 1, %s12
  $region7: #{downblock_forward.5} parent=0 // loop_footer_branch
    %11 = sbr.rel target = $region3
  $region8: #{downblock_forward.5} parent=0 // loop_exit
    _
  %2012 = vsyncmov [#allocation3]
  %s2013 = vpop.sfrf %2012
  %p2014 = scmp.eq.s32.totalorder %s2013, 0
  %p2015 = pneg %p2014
  %2017 = shalt.err (%p2015)
  %s2018 = scalar_lea.sflag [#allocation3], 1
  %2019 = vsyncmov %s2018
  %s2020 = vpop.sfrf %2019
  %p2021 = scmp.eq.s32.totalorder %s2020, 0
  %p2022 = pneg %p2021
  %2024 = shalt.err (%p2022)
  %s2025 = scalar_lea.sflag [#allocation3], 2
  %2026 = vsyncmov %s2025
  %s2027 = vpop.sfrf %2026
  %p2028 = scmp.eq.s32.totalorder %s2027, 0
  %p2029 = pneg %p2028
  %2031 = shalt.err (%p2029)
  %s2032 = scalar_lea.sflag [#allocation3], 3
  %2033 = vsyncmov %s2032
  %s2034 = vpop.sfrf %2033
  %p2035 = scmp.eq.s32.totalorder %s2034, 0
  %p2036 = pneg %p2035
  %2038 = shalt.err (%p2036)
  %s2039 = scalar_lea.sflag [#allocation3], 4
  %2040 = vsyncmov %s2039
  %s2041 = vpop.sfrf %2040
  %p2042 = scmp.eq.s32.totalorder %s2041, 0
  %p2043 = pneg %p2042
  %2045 = shalt.err (%p2043)
  %s2046 = scalar_lea.sflag [#allocation3], 5
  %2047 = vsyncmov %s2046
  %s2048 = vpop.sfrf %2047
  %p2049 = scmp.eq.s32.totalorder %s2048, 0
  %p2050 = pneg %p2049
  %2052 = shalt.err (%p2050)

// kernel: downblock_forward.7
$region0: #{downblock_forward.7}
  #allocation0 [shape = 'u32[]', space=smem, size = 0x4, offset = 0x4, fixed_abs, tag = 'smem constant byte address 0x4 - core index']
  #allocation1 [shape = 'u32[144,128]{1,0:T(1,128)}', space=vmem, size = 0x12000, scoped, tag = 'internal scratch']
  %s0 = inlined_call_operand.vmem [shape: bf16[2,8,8,128], index: 0, kind: input, shape index: {}]
  %s1 = inlined_call_operand.vmem [shape: f32[1,128], index: 1, kind: input, shape index: {}]
  %s2 = inlined_call_operand.vmem [shape: f32[1,128], index: 2, kind: input, shape index: {}]
  %s3 = inlined_call_operand.vmem [shape: f32[2,8,8,128], index: 3, kind: output, shape index: {}]
  %s4 = sld [smem:[#allocation0]]
  $region45: #{downblock_forward.7} parent=0
    _
  %s6 = ssub.s32 1, %s4
  %s7 = scalar_select 0, %s6, %s4
  loop: start=0, step=1, limit=4
  $region2: #{downblock_forward.7} parent=0 // loop_pre_header
    _
  $region3: #{downblock_forward.7} parent=0 // loop_header
    %s9 = sphi 0, %s13
    %p10 = scmp.ge.s32.totalorder %s9, 4
    %s16 = sphi 0, %s28
    %s17 = sphi 0, %s24
    %s18 = sphi 0, %s16
    %s19 = sphi 0, %s17
    %s20 = sphi 0, %s18
    %s21 = sphi 0, %s19
    %s33 = sphi 0, %s35
    %s36 = sphi 0, %s33
    %s37 = sphi 0, %s36
    %s53 = sphi 0, %s37
    %s57 = sphi 0, %s57
    %s59 = sphi 0, %s57
    %s60 = sphi 0, %s59
    %s74 = sphi 0, %s60
    %s78 = sphi 0, %s78
    %s80 = sphi 0, %s78
    %s81 = sphi 0, %s80
    %s95 = sphi 0, %s81
    %s103 = sphi 0, %s105
    %s106 = sphi 0, %s103
    %s107 = sphi 0, %s106
    %s123 = sphi 0, %s107
  $region4: #{downblock_forward.7} parent=0 // loop_header_branch
    %12 = sbr.rel (%p10) target = $region8
  $region5: #{downblock_forward.7} parent=0 // loop_body
    %s14 = ssub.s32 %s9, 1
    %s15 = ssub.s32 %s9, 2
    %s22 = sadd.s32 1, %s17
    %p23 = scmp.ge.s32.totalorder %s22, 1
    %s24 = scalar_select %p23, 0, %s22
    %s25 = sadd.s32 1, %s16
    %s26 = scalar_select %p23, %s25, %s16
    %p27 = scmp.ge.s32.totalorder %s26, 2
    %s28 = scalar_select %p27, 0, %s26
    %s29 = ssub.s32 %s16, %s28
    %s30 = ssub.s32 %s17, %s24
    %s31 = sor.u32 %s29, %s30
    %p32 = scmp.eq.s32.totalorder %s31, 0
    %s34 = sadd.s32 %s33, 1
    %s35 = scalar_select %p32, %s33, %s34
    %p38 = pneg %p32
    %p39 = scmp.eq.s32.totalorder %s9, 1
    %p40 = por %p38, %p39
    %p41 = scmp.ne.s32.totalorder %s33, %s36
    %p42 = scmp.eq.s32.totalorder %s9, 0
    %p43 = por %p41, %p42
    %p44 = scmp.ne.s32.totalorder %s33, %s36
    %p45 = scmp.eq.s32.totalorder %s14, 1
    %p46 = por %p44, %p45
    %p47 = scmp.ne.s32.totalorder %s36, %s37
    %p48 = scmp.eq.s32.totalorder %s14, 0
    %p49 = por %p47, %p48
    %p50 = scmp.ne.s32.totalorder %s36, %s37
    %p51 = scmp.eq.s32.totalorder %s15, 1
    %p52 = por %p50, %p51
    %p54 = scmp.ne.s32.totalorder %s37, %s53
    %p55 = scmp.eq.s32.totalorder %s15, 0
    %p56 = por %p54, %p55
    %s58 = sadd.s32 %s57, 1
    %p61 = scmp.eq.s32.totalorder %s9, 1
    %p62 = scmp.ne.s32.totalorder %s57, %s59
    %p63 = scmp.eq.s32.totalorder %s9, 0
    %p64 = por %p62, %p63
    %p65 = scmp.ne.s32.totalorder %s57, %s59
    %p66 = scmp.eq.s32.totalorder %s14, 1
    %p67 = por %p65, %p66
    %p68 = scmp.ne.s32.totalorder %s59, %s60
    %p69 = scmp.eq.s32.totalorder %s14, 0
    %p70 = por %p68, %p69
    %p71 = scmp.ne.s32.totalorder %s59, %s60
    %p72 = scmp.eq.s32.totalorder %s15, 1
    %p73 = por %p71, %p72
    %p75 = scmp.ne.s32.totalorder %s60, %s74
    %p76 = scmp.eq.s32.totalorder %s15, 0
    %p77 = por %p75, %p76
    %s79 = sadd.s32 %s78, 1
    %p82 = scmp.eq.s32.totalorder %s9, 1
    %p83 = scmp.ne.s32.totalorder %s78, %s80
    %p84 = scmp.eq.s32.totalorder %s9, 0
    %p85 = por %p83, %p84
    %p86 = scmp.ne.s32.totalorder %s78, %s80
    %p87 = scmp.eq.s32.totalorder %s14, 1
    %p88 = por %p86, %p87
    %p89 = scmp.ne.s32.totalorder %s80, %s81
    %p90 = scmp.eq.s32.totalorder %s14, 0
    %p91 = por %p89, %p90
    %p92 = scmp.ne.s32.totalorder %s80, %s81
    %p93 = scmp.eq.s32.totalorder %s15, 1
    %p94 = por %p92, %p93
    %p96 = scmp.ne.s32.totalorder %s81, %s95
    %p97 = scmp.eq.s32.totalorder %s15, 0
    %p98 = por %p96, %p97
    %s99 = ssub.s32 %s16, %s28
    %s100 = ssub.s32 %s17, %s24
    %s101 = sor.u32 %s99, %s100
    %p102 = scmp.eq.s32.totalorder %s101, 0
    %s104 = sadd.s32 %s103, 1
    %s105 = scalar_select %p102, %s103, %s104
    %p108 = pneg %p102
    %p109 = scmp.eq.s32.totalorder %s9, 1
    %p110 = por %p108, %p109
    %p111 = scmp.ne.s32.totalorder %s103, %s106
    %p112 = scmp.eq.s32.totalorder %s9, 0
    %p113 = por %p111, %p112
    %p114 = scmp.ne.s32.totalorder %s103, %s106
    %p115 = scmp.eq.s32.totalorder %s14, 1
    %p116 = por %p114, %p115
    %p117 = scmp.ne.s32.totalorder %s106, %s107
    %p118 = scmp.eq.s32.totalorder %s14, 0
    %p119 = por %p117, %p118
    %p120 = scmp.ne.s32.totalorder %s106, %s107
    %p121 = scmp.eq.s32.totalorder %s15, 1
    %p122 = por %p120, %p121
    %p124 = scmp.ne.s32.totalorder %s107, %s123
    %p125 = scmp.eq.s32.totalorder %s15, 0
    %p126 = por %p124, %p125
    %p127 = scmp.le.s32.totalorder 1, %s9
    %p128 = scmp.lt.s32.totalorder %s9, 3
    %p129 = pnand %p127, %p128
    %p130 = pneg %p129
    // Predicated region
    $region9: #{downblock_forward.7} parent=5 // pred_check
      _
    $region10: #{downblock_forward.7} parent=5 // pred_check_branch
      %132 = sbr.rel (%p129) target = $region12
    $region11: #{downblock_forward.7} parent=5 // pred_region
      %s133 = ssub.s32 %s9, 1
      // Predicated region
      $region13: #{downblock_forward.7} parent=11 // pred_check
        %p134 = pneg %p70
      $region14: #{downblock_forward.7} parent=11 // pred_check_branch
        %136 = sbr.rel (%p134) target = $region16
      $region15: #{downblock_forward.7} parent=11 // pred_region
        _
      $region16: #{downblock_forward.7} parent=11 // pred_fallthru
        _
      // Predicated region
      $region17: #{downblock_forward.7} parent=11 // pred_check
        %p137 = pneg %p91
      $region18: #{downblock_forward.7} parent=11 // pred_check_branch
        %139 = sbr.rel (%p137) target = $region20
      $region19: #{downblock_forward.7} parent=11 // pred_region
        _
      $region20: #{downblock_forward.7} parent=11 // pred_fallthru
        _
    $region12: #{downblock_forward.7} parent=5 // pred_fallthru
      _
    %p140 = scmp.lt.s32.totalorder %s9, 2
    // Predicated region
    $region21: #{downblock_forward.7} parent=5 // pred_check
      %p141 = pneg %p140
    $region22: #{downblock_forward.7} parent=5 // pred_check_branch
      %143 = sbr.rel (%p141) target = $region24
    $region23: #{downblock_forward.7} parent=5 // pred_region
      // Predicated region
      $region25: #{downblock_forward.7} parent=23 // pred_check
        %p144 = pneg %p43
      $region26: #{downblock_forward.7} parent=23 // pred_check_branch
        %146 = sbr.rel (%p144) target = $region28
      $region27: #{downblock_forward.7} parent=23 // pred_region
        %s147 = smul.u32 8, %s17
        %p148 = scmp.lt.s32.totalorder %s16, 1
        %s149 = scalar_select %p148, %s16, 1
        %p150 = scmp.lt.s32.totalorder %s147, 7
        %s151 = scalar_select %p150, %s147, 7
        %s152 = smul.addr %s149, 8
        %s153 = sadd.s32 %s151, %s152
        %s154 = smul.addr %s153, 4
        %s155 = scalar_lea.vmem %s0, %s154
        %s156 = smul.u32 8, %s17
      $region28: #{downblock_forward.7} parent=23 // pred_fallthru
        _
    $region24: #{downblock_forward.7} parent=5 // pred_fallthru
      _
    %p157 = scmp.le.s32.totalorder 1, %s9
    %p158 = scmp.lt.s32.totalorder %s9, 3
    %p159 = pnand %p157, %p158
    %p160 = pneg %p159
    // Predicated region
    $region29: #{downblock_forward.7} parent=5 // pred_check
      _
    $region30: #{downblock_forward.7} parent=5 // pred_check_branch
      %162 = sbr.rel (%p159) target = $region32
    $region31: #{downblock_forward.7} parent=5 // pred_region
      %s163 = ssub.s32 %s9, 1
      %s164 = smul.u32 8, %s19
      %p165 = scmp.lt.s32.totalorder %s18, 1
      %s166 = scalar_select %p165, %s18, 1
      %p167 = scmp.lt.s32.totalorder %s164, 7
      %s168 = scalar_select %p167, %s164, 7
      %s169 = smul.addr %s166, 8
      %s170 = sadd.s32 %s168, %s169
      %s171 = smul.addr %s170, 4
      %s172 = scalar_lea.vmem %s0, %s171
      %p173 = pneg %p49
      %p174 = pneg %p46
      %p175 = pneg %p70
      %p176 = pneg %p67
      %p177 = pneg %p91
      %p178 = pneg %p88
      %p179 = pneg %p119
      %p180 = pneg %p116
      %s181 = smul.u32 8, %s19
      %p182 = scmp.lt.s32.totalorder %s18, 1
      %s183 = scalar_select %p182, %s18, 1
      %p184 = scmp.lt.s32.totalorder %s181, 7
      %s185 = scalar_select %p184, %s181, 7
      %s186 = smul.addr %s183, 8
      %s187 = sadd.s32 %s185, %s186
      %s188 = smul.addr %s187, 8
      %s189 = scalar_lea.vmem %s3, %s188
      %s190 = smul.u32 8, %s19
      %p191 = scmp.lt.s32.totalorder %s18, 1
      %s192 = scalar_select %p191, %s18, 1
      %p193 = scmp.lt.s32.totalorder %s190, 7
      %s194 = scalar_select %p193, %s190, 7
      %s195 = smul.addr %s192, 8
      %s196 = sadd.s32 %s194, %s195
      %s197 = smul.addr %s196, 4
      %s198 = scalar_lea.vmem %s0, %s197
      %s199 = smul.u32 8, %s19
      %s200 = smul.u32 8, %s19
      %p201 = scmp.lt.s32.totalorder %s18, 1
      %s202 = scalar_select %p201, %s18, 1
      %p203 = scmp.lt.s32.totalorder %s200, 7
      %s204 = scalar_select %p203, %s200, 7
      %s205 = smul.addr %s202, 8
      %s206 = sadd.s32 %s204, %s205
      %s207 = smul.addr %s206, 8
      %s208 = scalar_lea.vmem %s3, %s207
      %s209 = smul.u32 8, %s19
      %v210 = vld [vmem:[%s198] sm:$0xf]
      %v211 = vld [vmem:[%s198 + $0x4] sm:$0xf]
      %v212 = vld [vmem:[%s198 + $0x8] sm:$0xf]
      %v213 = vld [vmem:[%s198 + $0xc] sm:$0xf]
      %v214 = vld [vmem:[%s198 + $0x10] sm:$0xf]
      %v215 = vld [vmem:[%s198 + $0x14] sm:$0xf]
      %v216 = vld [vmem:[%s198 + $0x18] sm:$0xf]
      %v217 = vld [vmem:[%s198 + $0x1c] sm:$0xf]
      %v218 = vunpack.c.l.bf16 %v210
      %v219 = vunpack.c.l.bf16 %v211
      %v220 = vunpack.c.l.bf16 %v212
      %v221 = vunpack.c.l.bf16 %v213
      %v222 = vunpack.c.l.bf16 %v214
      %v223 = vunpack.c.l.bf16 %v215
      %v224 = vunpack.c.l.bf16 %v216
      %v225 = vunpack.c.l.bf16 %v217
      %v226 = vld [vmem:[%s1] sm:$0x1]
      %v228 = vlaneseq
      %v229 = vshrl.u32 %v228, 7
      %v230 = vsub.s32 0, %v229
      %v231 = vrot.slane %v226, %v230
      %v233 = vmul.f32 %v218, %v231
      %v234 = vmul.f32 %v219, %v231
      %v235 = vmul.f32 %v220, %v231
      %v236 = vmul.f32 %v221, %v231
      %v237 = vmul.f32 %v222, %v231
      %v238 = vmul.f32 %v223, %v231
      %v239 = vmul.f32 %v224, %v231
      %v240 = vmul.f32 %v225, %v231
      %v241 = vld [vmem:[%s2] sm:$0x1]
      %v243 = vlaneseq
      %v244 = vshrl.u32 %v243, 7
      %v245 = vsub.s32 0, %v244
      %v246 = vrot.slane %v241, %v245
      %v248 = vadd.f32 %v233, %v246
      %v249 = vadd.f32 %v234, %v246
      %v250 = vadd.f32 %v235, %v246
      %v251 = vadd.f32 %v236, %v246
      %v252 = vadd.f32 %v237, %v246
      %v253 = vadd.f32 %v238, %v246
      %v254 = vadd.f32 %v239, %v246
      %v255 = vadd.f32 %v240, %v246
      %v256 = vmax.f32 %v248, 0.0
      %v257 = vmax.f32 %v249, 0.0
      %v258 = vmax.f32 %v250, 0.0
      %v259 = vmax.f32 %v251, 0.0
      %v260 = vmax.f32 %v252, 0.0
      %v261 = vmax.f32 %v253, 0.0
      %v262 = vmax.f32 %v254, 0.0
      %v263 = vmax.f32 %v255, 0.0
      %264 = vst [vmem:[%s208] sm:$0xff] %v256
      %265 = vst [vmem:[%s208 + $0x8] sm:$0xff] %v257
      %266 = vst [vmem:[%s208 + $0x10] sm:$0xff] %v258
      %267 = vst [vmem:[%s208 + $0x18] sm:$0xff] %v259
      %268 = vst [vmem:[%s208 + $0x20] sm:$0xff] %v260
      %269 = vst [vmem:[%s208 + $0x28] sm:$0xff] %v261
      %270 = vst [vmem:[%s208 + $0x30] sm:$0xff] %v262
      %271 = vst [vmem:[%s208 + $0x38] sm:$0xff] %v263
      %s272 = smul.u32 8, %s19
      %p273 = scmp.lt.s32.totalorder %s18, 1
      %s274 = scalar_select %p273, %s18, 1
      %p275 = scmp.lt.s32.totalorder %s272, 7
      %s276 = scalar_select %p275, %s272, 7
      %s277 = smul.addr %s274, 8
      %s278 = sadd.s32 %s276, %s277
      %s279 = smul.addr %s278, 8
      %s280 = scalar_lea.vmem %s3, %s279
      // Predicated region
      $region33: #{downblock_forward.7} parent=31 // pred_check
        %p281 = pneg %p116
      $region34: #{downblock_forward.7} parent=31 // pred_check_branch
        %283 = sbr.rel (%p281) target = $region36
      $region35: #{downblock_forward.7} parent=31 // pred_region
        %s284 = smul.u32 8, %s19
      $region36: #{downblock_forward.7} parent=31 // pred_fallthru
        _
    $region32: #{downblock_forward.7} parent=5 // pred_fallthru
      _
    %p285 = scmp.le.s32.totalorder 2, %s9
    // Predicated region
    $region37: #{downblock_forward.7} parent=5 // pred_check
      %p286 = pneg %p285
    $region38: #{downblock_forward.7} parent=5 // pred_check_branch
      %288 = sbr.rel (%p286) target = $region40
    $region39: #{downblock_forward.7} parent=5 // pred_region
      %s289 = ssub.s32 %s9, 2
      // Predicated region
      $region41: #{downblock_forward.7} parent=39 // pred_check
        %p290 = pneg %p122
      $region42: #{downblock_forward.7} parent=39 // pred_check_branch
        %292 = sbr.rel (%p290) target = $region44
      $region43: #{downblock_forward.7} parent=39 // pred_region
        %s293 = smul.u32 8, %s21
        %p294 = scmp.lt.s32.totalorder %s20, 1
        %s295 = scalar_select %p294, %s20, 1
        %p296 = scmp.lt.s32.totalorder %s293, 7
        %s297 = scalar_select %p296, %s293, 7
        %s298 = smul.addr %s295, 8
        %s299 = sadd.s32 %s297, %s298
        %s300 = smul.addr %s299, 8
        %s301 = scalar_lea.vmem %s3, %s300
      $region44: #{downblock_forward.7} parent=39 // pred_fallthru
        _
    $region40: #{downblock_forward.7} parent=5 // pred_fallthru
      _
  $region6: #{downblock_forward.7} parent=0 // loop_footer
    %s13 = sadd.s32 1, %s9
  $region7: #{downblock_forward.7} parent=0 // loop_footer_branch
    %8 = sbr.rel target = $region3
  $region8: #{downblock_forward.7} parent=0 // loop_exit
    _

// kernel: downblock_forward.6
$region0: #{downblock_forward.6}
  #allocation0 [shape = 'u32[]', space=smem, size = 0x4, offset = 0x4, fixed_abs, tag = 'smem constant byte address 0x4 - core index']
  #allocation1 [shape = 'u32[144,128]{1,0:T(1,128)}', space=vmem, size = 0x12000, scoped, tag = 'internal scratch']
  #allocation2 [shape = 'bf16[2,10,8,128]{3,2,1,0:T(8,128)(2,1)}', space=vmem, size = 0xa000, scoped, tag = 'scratch operand']
  #allocation3 [shape = 's32[6]{0}', space=sflag, size = 0x18, scoped, tag = 'scratch operand']
  #allocation4 [shape = 's32[]', space=sflag, size = 0x4, offset = 0, fixed_abs, tag = 'sflag constant byte address 0x0 - dummy sync flag']
  #allocation5 [shape = 's32[]', space=sflag, size = 0x4, offset = 0, fixed_abs, tag = 'sflag constant byte address 0x0 - dummy sync flag']
  #allocation6 [shape = 's32[]', space=sflag, size = 0x4, offset = 0, fixed_abs, tag = 'sflag constant byte address 0x0 - dummy sync flag']
  #allocation7 [shape = 's32[]', space=sflag, size = 0x4, offset = 0, fixed_abs, tag = 'sflag constant byte address 0x0 - dummy sync flag']
  #allocation8 [shape = 's32[]', space=sflag, size = 0x4, offset = 0, fixed_abs, tag = 'sflag constant byte address 0x0 - dummy sync flag']
  #allocation9 [shape = 's32[]', space=sflag, size = 0x4, offset = 0, fixed_abs, tag = 'sflag constant byte address 0x0 - dummy sync flag']
  %s0 = inlined_call_operand.vmem [shape: bf16[2,8,8,128], index: 0, kind: input, shape index: {}]
  %s1 = inlined_call_operand.vmem [shape: bf16[3,384,128], index: 1, kind: input, shape index: {}]
  %s2 = inlined_call_operand.vmem [shape: f32[1,128], index: 2, kind: input, shape index: {}]
  %s3 = inlined_call_operand.vmem [shape: f32[1,128], index: 3, kind: input, shape index: {}]
  %s4 = inlined_call_operand.vmem [shape: bf16[2,8,8,128], index: 4, kind: output, shape index: {0}]
  %s5 = inlined_call_operand.vmem [shape: f32[2,1,2,128], index: 5, kind: output, shape index: {1}]
  %6 = xla_tuple %s4, %s5
  %s7 = sld [smem:[#allocation0]]
  $region253: #{downblock_forward.6} parent=0
    _
  %s9 = ssub.s32 1, %s7
  %s10 = scalar_select 0, %s9, %s7
  loop: start=0, step=1, limit=4
  $region2: #{downblock_forward.6} parent=0 // loop_pre_header
    _
  $region3: #{downblock_forward.6} parent=0 // loop_header
    %s12 = sphi 0, %s16
    %p13 = scmp.ge.s32.totalorder %s12, 4
    %s19 = sphi 0, %s38
    %s20 = sphi 0, %s34
    %s21 = sphi 0, %s30
    %s22 = sphi 0, %s19
    %s23 = sphi 0, %s20
    %s24 = sphi 0, %s21
    %s25 = sphi 0, %s22
    %s26 = sphi 0, %s23
    %s27 = sphi 0, %s24
    %s39 = sphi 0, %s39
    %s41 = sphi 0, %s39
    %s42 = sphi 0, %s41
    %s56 = sphi 0, %s42
    %s60 = sphi 0, %s60
    %s62 = sphi 0, %s60
    %s63 = sphi 0, %s62
    %s77 = sphi 0, %s63
    %s81 = sphi 0, %s81
    %s83 = sphi 0, %s81
    %s84 = sphi 0, %s83
    %s98 = sphi 0, %s84
    %s108 = sphi 0, %s110
    %s111 = sphi 0, %s108
    %s112 = sphi 0, %s111
    %s128 = sphi 0, %s112
    %s136 = sphi 0, %s138
    %s139 = sphi 0, %s136
    %s140 = sphi 0, %s139
    %s156 = sphi 0, %s140
  $region4: #{downblock_forward.6} parent=0 // loop_header_branch
    %15 = sbr.rel (%p13) target = $region8
  $region5: #{downblock_forward.6} parent=0 // loop_body
    %s17 = ssub.s32 %s12, 1
    %s18 = ssub.s32 %s12, 2
    %s28 = sadd.s32 1, %s21
    %p29 = scmp.ge.s32.totalorder %s28, 1
    %s30 = scalar_select %p29, 0, %s28
    %s31 = sadd.s32 1, %s20
    %s32 = scalar_select %p29, %s31, %s20
    %p33 = scmp.ge.s32.totalorder %s32, 1
    %s34 = scalar_select %p33, 0, %s32
    %s35 = sadd.s32 1, %s19
    %s36 = scalar_select %p33, %s35, %s19
    %p37 = scmp.ge.s32.totalorder %s36, 2
    %s38 = scalar_select %p37, 0, %s36
    %s40 = sadd.s32 %s39, 1
    %p43 = scmp.eq.s32.totalorder %s12, 1
    %p44 = scmp.ne.s32.totalorder %s39, %s41
    %p45 = scmp.eq.s32.totalorder %s12, 0
    %p46 = por %p44, %p45
    %p47 = scmp.ne.s32.totalorder %s39, %s41
    %p48 = scmp.eq.s32.totalorder %s17, 1
    %p49 = por %p47, %p48
    %p50 = scmp.ne.s32.totalorder %s41, %s42
    %p51 = scmp.eq.s32.totalorder %s17, 0
    %p52 = por %p50, %p51
    %p53 = scmp.ne.s32.totalorder %s41, %s42
    %p54 = scmp.eq.s32.totalorder %s18, 1
    %p55 = por %p53, %p54
    %p57 = scmp.ne.s32.totalorder %s42, %s56
    %p58 = scmp.eq.s32.totalorder %s18, 0
    %p59 = por %p57, %p58
    %s61 = sadd.s32 %s60, 1
    %p64 = scmp.eq.s32.totalorder %s12, 1
    %p65 = scmp.ne.s32.totalorder %s60, %s62
    %p66 = scmp.eq.s32.totalorder %s12, 0
    %p67 = por %p65, %p66
    %p68 = scmp.ne.s32.totalorder %s60, %s62
    %p69 = scmp.eq.s32.totalorder %s17, 1
    %p70 = por %p68, %p69
    %p71 = scmp.ne.s32.totalorder %s62, %s63
    %p72 = scmp.eq.s32.totalorder %s17, 0
    %p73 = por %p71, %p72
    %p74 = scmp.ne.s32.totalorder %s62, %s63
    %p75 = scmp.eq.s32.totalorder %s18, 1
    %p76 = por %p74, %p75
    %p78 = scmp.ne.s32.totalorder %s63, %s77
    %p79 = scmp.eq.s32.totalorder %s18, 0
    %p80 = por %p78, %p79
    %s82 = sadd.s32 %s81, 1
    %p85 = scmp.eq.s32.totalorder %s12, 1
    %p86 = scmp.ne.s32.totalorder %s81, %s83
    %p87 = scmp.eq.s32.totalorder %s12, 0
    %p88 = por %p86, %p87
    %p89 = scmp.ne.s32.totalorder %s81, %s83
    %p90 = scmp.eq.s32.totalorder %s17, 1
    %p91 = por %p89, %p90
    %p92 = scmp.ne.s32.totalorder %s83, %s84
    %p93 = scmp.eq.s32.totalorder %s17, 0
    %p94 = por %p92, %p93
    %p95 = scmp.ne.s32.totalorder %s83, %s84
    %p96 = scmp.eq.s32.totalorder %s18, 1
    %p97 = por %p95, %p96
    %p99 = scmp.ne.s32.totalorder %s84, %s98
    %p100 = scmp.eq.s32.totalorder %s18, 0
    %p101 = por %p99, %p100
    %s102 = sadd.s32 %s20, %s21
    %s103 = sadd.s32 %s34, %s30
    %s104 = ssub.s32 %s19, %s38
    %s105 = ssub.s32 %s102, %s103
    %s106 = sor.u32 %s104, %s105
    %p107 = scmp.eq.s32.totalorder %s106, 0
    %s109 = sadd.s32 %s108, 1
    %s110 = scalar_select %p107, %s108, %s109
    %p113 = pneg %p107
    %p114 = scmp.eq.s32.totalorder %s12, 1
    %p115 = por %p113, %p114
    %p116 = scmp.ne.s32.totalorder %s108, %s111
    %p117 = scmp.eq.s32.totalorder %s12, 0
    %p118 = por %p116, %p117
    %p119 = scmp.ne.s32.totalorder %s108, %s111
    %p120 = scmp.eq.s32.totalorder %s17, 1
    %p121 = por %p119, %p120
    %p122 = scmp.ne.s32.totalorder %s111, %s112
    %p123 = scmp.eq.s32.totalorder %s17, 0
    %p124 = por %p122, %p123
    %p125 = scmp.ne.s32.totalorder %s111, %s112
    %p126 = scmp.eq.s32.totalorder %s18, 1
    %p127 = por %p125, %p126
    %p129 = scmp.ne.s32.totalorder %s112, %s128
    %p130 = scmp.eq.s32.totalorder %s18, 0
    %p131 = por %p129, %p130
    %s132 = ssub.s32 %s19, %s38
    %s133 = ssub.s32 %s20, %s34
    %s134 = sor.u32 %s132, %s133
    %p135 = scmp.eq.s32.totalorder %s134, 0
    %s137 = sadd.s32 %s136, 1
    %s138 = scalar_select %p135, %s136, %s137
    %p141 = pneg %p135
    %p142 = scmp.eq.s32.totalorder %s12, 1
    %p143 = por %p141, %p142
    %p144 = scmp.ne.s32.totalorder %s136, %s139
    %p145 = scmp.eq.s32.totalorder %s12, 0
    %p146 = por %p144, %p145
    %p147 = scmp.ne.s32.totalorder %s136, %s139
    %p148 = scmp.eq.s32.totalorder %s17, 1
    %p149 = por %p147, %p148
    %p150 = scmp.ne.s32.totalorder %s139, %s140
    %p151 = scmp.eq.s32.totalorder %s17, 0
    %p152 = por %p150, %p151
    %p153 = scmp.ne.s32.totalorder %s139, %s140
    %p154 = scmp.eq.s32.totalorder %s18, 1
    %p155 = por %p153, %p154
    %p157 = scmp.ne.s32.totalorder %s140, %s156
    %p158 = scmp.eq.s32.totalorder %s18, 0
    %p159 = por %p157, %p158
    %p160 = scmp.le.s32.totalorder 1, %s12
    %p161 = scmp.lt.s32.totalorder %s12, 3
    %p162 = pnand %p160, %p161
    %p163 = pneg %p162
    // Predicated region
    $region9: #{downblock_forward.6} parent=5 // pred_check
      _
    $region10: #{downblock_forward.6} parent=5 // pred_check_branch
      %165 = sbr.rel (%p162) target = $region12
    $region11: #{downblock_forward.6} parent=5 // pred_region
      %s166 = ssub.s32 %s12, 1
      // Predicated region
      $region13: #{downblock_forward.6} parent=11 // pred_check
        %p167 = pneg %p52
      $region14: #{downblock_forward.6} parent=11 // pred_check_branch
        %169 = sbr.rel (%p167) target = $region16
      $region15: #{downblock_forward.6} parent=11 // pred_region
        _
      $region16: #{downblock_forward.6} parent=11 // pred_fallthru
        _
      // Predicated region
      $region17: #{downblock_forward.6} parent=11 // pred_check
        %p170 = pneg %p73
      $region18: #{downblock_forward.6} parent=11 // pred_check_branch
        %172 = sbr.rel (%p170) target = $region20
      $region19: #{downblock_forward.6} parent=11 // pred_region
        _
      $region20: #{downblock_forward.6} parent=11 // pred_fallthru
        _
      // Predicated region
      $region21: #{downblock_forward.6} parent=11 // pred_check
        %p173 = pneg %p94
      $region22: #{downblock_forward.6} parent=11 // pred_check_branch
        %175 = sbr.rel (%p173) target = $region24
      $region23: #{downblock_forward.6} parent=11 // pred_region
        _
      $region24: #{downblock_forward.6} parent=11 // pred_fallthru
        _
    $region12: #{downblock_forward.6} parent=5 // pred_fallthru
      _
    %p176 = scmp.lt.s32.totalorder %s12, 2
    // Predicated region
    $region25: #{downblock_forward.6} parent=5 // pred_check
      %p177 = pneg %p176
    $region26: #{downblock_forward.6} parent=5 // pred_check_branch
      %179 = sbr.rel (%p177) target = $region28
    $region27: #{downblock_forward.6} parent=5 // pred_region
      _
    $region28: #{downblock_forward.6} parent=5 // pred_fallthru
      _
    %p180 = scmp.le.s32.totalorder 1, %s12
    %p181 = scmp.lt.s32.totalorder %s12, 3
    %p182 = pnand %p180, %p181
    %p183 = pneg %p182
    // Predicated region
    $region29: #{downblock_forward.6} parent=5 // pred_check
      _
    $region30: #{downblock_forward.6} parent=5 // pred_check_branch
      %185 = sbr.rel (%p182) target = $region32
    $region31: #{downblock_forward.6} parent=5 // pred_region
      %s186 = ssub.s32 %s12, 1
      %p187 = pneg %p52
      %p188 = pneg %p49
      %p189 = pneg %p73
      %p190 = pneg %p70
      %p191 = pneg %p94
      %p192 = pneg %p91
      %p193 = pneg %p124
      %p194 = pneg %p121
      %s195 = sadd.s32 %s23, %s24
      %s196 = smul.u32 8, %s195
      %p197 = scmp.lt.s32.totalorder %s22, 1
      %s198 = scalar_select %p197, %s22, 1
      %p199 = scmp.lt.s32.totalorder %s196, 7
      %s200 = scalar_select %p199, %s196, 7
      %s201 = smul.addr %s198, 8
      %s202 = sadd.s32 %s200, %s201
      %s203 = smul.addr %s202, 4
      %s204 = scalar_lea.vmem %s4, %s203
      %p205 = pneg %p152
      %p206 = pneg %p149
      %p207 = scmp.lt.s32.totalorder %s22, 1
      %s208 = scalar_select %p207, %s22, 1
      %p209 = scmp.lt.s32.totalorder %s23, 0
      %s210 = scalar_select %p209, %s23, 0
      %s211 = sadd.s32 %s210, %s208
      %s212 = smul.addr %s211, 2
      %s213 = scalar_lea.vmem %s5, %s212
      %s214 = sadd.s32 %s23, %s24
      %s215 = smul.u32 8, %s214
      %p216 = scmp.lt.s32.totalorder %s22, 1
      %s217 = scalar_select %p216, %s22, 1
      %p218 = scmp.lt.s32.totalorder %s215, 7
      %s219 = scalar_select %p218, %s215, 7
      %s220 = smul.addr %s217, 8
      %s221 = sadd.s32 %s219, %s220
      %s222 = smul.addr %s221, 4
      %s223 = scalar_lea.vmem %s4, %s222
      %s224 = sadd.s32 %s23, %s24
      %s225 = smul.u32 8, %s224
      %p226 = scmp.lt.s32.totalorder %s22, 1
      %s227 = scalar_select %p226, %s22, 1
      %p228 = scmp.lt.s32.totalorder %s23, 0
      %s229 = scalar_select %p228, %s23, 0
      %s230 = sadd.s32 %s229, %s227
      %s231 = smul.addr %s230, 2
      %s232 = scalar_lea.vmem %s5, %s231
      %s234 = sadd.s32 %s23, %s24
      %s235 = smul.u32 %s234, 8
      %p236 = scmp.lt.s32.totalorder %s24, 0
      %s237 = ssub.s32 0, %s24
      %s238 = scalar_select %p236, %s237, %s24
      %s239 = sand.u32 %s238, 1
      %s240 = ssub.s32 0, %s239
      %s241 = scalar_select %p236, %s240, %s239
      %p242 = scmp.ne.s32.totalorder %s241, 0
      %p243 = scmp.lt.s32.totalorder %s241, 0
      %p244 = pnand %p243, %p242
      %p245 = pneg %p244
      %s246 = sadd.s32 %s241, 2
      %s247 = scalar_select %p245, %s246, %s241
      %p248 = scmp.eq.s32.totalorder %s24, 0
      // Predicated region
      $region33: #{downblock_forward.6} parent=31 // pred_check
        %p249 = pneg %p248
      $region34: #{downblock_forward.6} parent=31 // pred_check_branch
        %251 = sbr.rel (%p249) target = $region36
      $region35: #{downblock_forward.6} parent=31 // pred_region
        %p252 = scmp.lt.s32.totalorder %s235, 0
        %s253 = scalar_select %p252, %s235, 0
        %s254 = ssub.s32 %s253, 1
        %p255 = scmp.gt.s32.totalorder %s254, 0
        %s256 = scalar_select %p255, %s254, 0
        %s257 = sadd.s32 %s253, 8
        %p258 = scmp.lt.s32.totalorder %s257, 7
        %s259 = scalar_select %p258, %s257, 7
        %s260 = smul.u32 %s22, 8
        %s261 = sadd.s32 %s253, %s260
        %s262 = smul.addr %s261, 4
        %s263 = scalar_lea.vmem %s0, %s262
        %s264 = smul.u32 %s247, 10
        %s265 = sadd.s32 1, %s264
        %s266 = smul.addr %s265, 4
        %s267 = scalar_lea.vmem [#allocation2], %s266
        %s268 = smul.u32 %s247, 3
        %s269 = scalar_lea.sflag [#allocation3], %s268
        %p271 = scmp.lt.u32.totalorder 32, 8
        %p272 = pneg %p271
        // Predicated region
        $region37: #{downblock_forward.6} parent=35 // pred_check
          _
        $region38: #{downblock_forward.6} parent=35 // pred_check_branch
          %274 = sbr.rel (%p271) target = $region40
        $region39: #{downblock_forward.6} parent=35 // pred_region
          %s290 = sand.u32 32, 7
          %p291 = scmp.eq.s32.totalorder %s290, 0
          // Predicated region
          $region52: #{downblock_forward.6} parent=39 // pred_check
            %p292 = pneg %p291
          $region53: #{downblock_forward.6} parent=39 // pred_check_branch
            %294 = sbr.rel (%p292) target = $region55
          $region54: #{downblock_forward.6} parent=39 // pred_region
            loop: start=0, step=1, limit=1
            $region56: #{downblock_forward.6} parent=54 // loop_pre_header
              _
            $region57: #{downblock_forward.6} parent=54 // loop_header
              %s296 = sphi 0, %s300
              %p297 = scmp.ge.s32.totalorder %s296, 1
              %s301 = sphi %s263, %s263
              %s302 = sphi %s267, %s267
            $region58: #{downblock_forward.6} parent=54 // loop_header_branch
              %299 = sbr.rel (%p297) target = $region62
            $region59: #{downblock_forward.6} parent=54 // loop_body
              %v303 = vld [vmem:[%s301] sm:$0xff]
              %304 = vst [vmem:[%s302] sm:$0xff] %v303
              %v305 = vld [vmem:[%s301 + $0x8] sm:$0xff]
              %306 = vst [vmem:[%s302 + $0x8] sm:$0xff] %v305
              %v307 = vld [vmem:[%s301 + $0x10] sm:$0xff]
              %308 = vst [vmem:[%s302 + $0x10] sm:$0xff] %v307
              %v309 = vld [vmem:[%s301 + $0x18] sm:$0xff]
              %310 = vst [vmem:[%s302 + $0x18] sm:$0xff] %v309
            $region60: #{downblock_forward.6} parent=54 // loop_footer
              %s300 = sadd.s32 1, %s296
            $region61: #{downblock_forward.6} parent=54 // loop_footer_branch
              %295 = sbr.rel target = $region57
            $region62: #{downblock_forward.6} parent=54 // loop_exit
              _
          $region55: #{downblock_forward.6} parent=39 // pred_fallthru
            _
          %p311 = pneg %p291
          // Predicated region
          $region63: #{downblock_forward.6} parent=39 // pred_check
            _
          $region64: #{downblock_forward.6} parent=39 // pred_check_branch
            %313 = sbr.rel (%p291) target = $region66
          $region65: #{downblock_forward.6} parent=39 // pred_region
            %s314 = sand.u32 32, 7
          $region66: #{downblock_forward.6} parent=39 // pred_fallthru
            _
        $region40: #{downblock_forward.6} parent=35 // pred_fallthru
          _
        // Predicated region
        $region41: #{downblock_forward.6} parent=35 // pred_check
          %p275 = pneg %p271
        $region42: #{downblock_forward.6} parent=35 // pred_check_branch
          %277 = sbr.rel (%p275) target = $region44
        $region43: #{downblock_forward.6} parent=35 // pred_region
          %s278 = sshll.u32 1, 32
          %s279 = ssub.s32 %s278, 1
          loop: start=0, step=1, limit=1
          $region45: #{downblock_forward.6} parent=43 // loop_pre_header
            _
          $region46: #{downblock_forward.6} parent=43 // loop_header
            %s281 = sphi 0, %s285
            %p282 = scmp.ge.s32.totalorder %s281, 1
            %s286 = sphi %s263, %s263
            %s287 = sphi %s267, %s267
          $region47: #{downblock_forward.6} parent=43 // loop_header_branch
            %284 = sbr.rel (%p282) target = $region51
          $region48: #{downblock_forward.6} parent=43 // loop_body
            %v288 = vld [vmem:[%s286] sm:%s279]
            %289 = vst [vmem:[%s287] sm:%s279] %v288
          $region49: #{downblock_forward.6} parent=43 // loop_footer
            %s285 = sadd.s32 1, %s281
          $region50: #{downblock_forward.6} parent=43 // loop_footer_branch
            %280 = sbr.rel target = $region46
          $region51: #{downblock_forward.6} parent=43 // loop_exit
            _
        $region44: #{downblock_forward.6} parent=35 // pred_fallthru
          _
        // Predicated region
        $region67: #{downblock_forward.6} parent=35 // pred_check
          _
        $region68: #{downblock_forward.6} parent=35 // pred_check_branch
          %317 = sbr.rel (0) target = $region70
        $region69: #{downblock_forward.6} parent=35 // pred_region
          %318 = vsyncadd %s269, 512
        $region70: #{downblock_forward.6} parent=35 // pred_fallthru
          _
        %s319 = sadd.s32 %s256, %s260
        %s320 = smul.addr %s319, 4
        %s321 = scalar_lea.vmem %s0, %s320
        %s322 = smul.addr %s264, 4
        %s323 = scalar_lea.vmem [#allocation2], %s322
        %s324 = sadd.s32 1, %s268
        %s325 = scalar_lea.sflag [#allocation3], %s324
        %p327 = scmp.lt.u32.totalorder 4, 8
        %p328 = pneg %p327
        // Predicated region
        $region71: #{downblock_forward.6} parent=35 // pred_check
          _
        $region72: #{downblock_forward.6} parent=35 // pred_check_branch
          %330 = sbr.rel (%p327) target = $region74
        $region73: #{downblock_forward.6} parent=35 // pred_region
          %s346 = sand.u32 4, 7
          %p347 = scmp.eq.s32.totalorder %s346, 0
          %p348 = pneg %p347
          // Predicated region
          $region86: #{downblock_forward.6} parent=73 // pred_check
            _
          $region87: #{downblock_forward.6} parent=73 // pred_check_branch
            %350 = sbr.rel (%p347) target = $region89
          $region88: #{downblock_forward.6} parent=73 // pred_region
            %s351 = sand.u32 4, 7
            %s352 = ssub.s32 4, %s351
            %s353 = scalar_lea.vmem %s321, %s352
            %s354 = ssub.s32 4, %s351
            %s355 = scalar_lea.vmem %s323, %s354 [#allocation2]
            %s356 = sshll.u32 1, %s351
            %s357 = ssub.s32 %s356, 1
            loop: start=0, step=1, limit=1
            $region90: #{downblock_forward.6} parent=88 // loop_pre_header
              _
            $region91: #{downblock_forward.6} parent=88 // loop_header
              %s359 = sphi 0, %s363
              %p360 = scmp.ge.s32.totalorder %s359, 1
              %s364 = sphi %s353, %s353
              %s365 = sphi %s355, %s355
            $region92: #{downblock_forward.6} parent=88 // loop_header_branch
              %362 = sbr.rel (%p360) target = $region96
            $region93: #{downblock_forward.6} parent=88 // loop_body
              %v366 = vld [vmem:[%s364] sm:%s357]
              %367 = vst [vmem:[%s365] sm:%s357] %v366
            $region94: #{downblock_forward.6} parent=88 // loop_footer
              %s363 = sadd.s32 1, %s359
            $region95: #{downblock_forward.6} parent=88 // loop_footer_branch
              %358 = sbr.rel target = $region91
            $region96: #{downblock_forward.6} parent=88 // loop_exit
              _
          $region89: #{downblock_forward.6} parent=73 // pred_fallthru
            _
        $region74: #{downblock_forward.6} parent=35 // pred_fallthru
          _
        // Predicated region
        $region75: #{downblock_forward.6} parent=35 // pred_check
          %p331 = pneg %p327
        $region76: #{downblock_forward.6} parent=35 // pred_check_branch
          %333 = sbr.rel (%p331) target = $region78
        $region77: #{downblock_forward.6} parent=35 // pred_region
          %s334 = sshll.u32 1, 4
          %s335 = ssub.s32 %s334, 1
          loop: start=0, step=1, limit=1
          $region79: #{downblock_forward.6} parent=77 // loop_pre_header
            _
          $region80: #{downblock_forward.6} parent=77 // loop_header
            %s337 = sphi 0, %s341
            %p338 = scmp.ge.s32.totalorder %s337, 1
            %s342 = sphi %s321, %s321
            %s343 = sphi %s323, %s323
          $region81: #{downblock_forward.6} parent=77 // loop_header_branch
            %340 = sbr.rel (%p338) target = $region85
          $region82: #{downblock_forward.6} parent=77 // loop_body
            %v344 = vld [vmem:[%s342] sm:%s335]
            %345 = vst [vmem:[%s343] sm:%s335] %v344
          $region83: #{downblock_forward.6} parent=77 // loop_footer
            %s341 = sadd.s32 1, %s337
          $region84: #{downblock_forward.6} parent=77 // loop_footer_branch
            %336 = sbr.rel target = $region80
          $region85: #{downblock_forward.6} parent=77 // loop_exit
            _
        $region78: #{downblock_forward.6} parent=35 // pred_fallthru
          _
        // Predicated region
        $region97: #{downblock_forward.6} parent=35 // pred_check
          _
        $region98: #{downblock_forward.6} parent=35 // pred_check_branch
          %370 = sbr.rel (0) target = $region100
        $region99: #{downblock_forward.6} parent=35 // pred_region
          %371 = vsyncadd %s325, 64
        $region100: #{downblock_forward.6} parent=35 // pred_fallthru
          _
        %s372 = sadd.s32 %s259, %s260
        %s373 = smul.addr %s372, 4
        %s374 = scalar_lea.vmem %s0, %s373
        %s375 = sadd.s32 9, %s264
        %s376 = smul.addr %s375, 4
        %s377 = scalar_lea.vmem [#allocation2], %s376
        %s378 = sadd.s32 2, %s268
        %s379 = scalar_lea.sflag [#allocation3], %s378
        %p381 = scmp.lt.u32.totalorder 4, 8
        %p382 = pneg %p381
        // Predicated region
        $region101: #{downblock_forward.6} parent=35 // pred_check
          _
        $region102: #{downblock_forward.6} parent=35 // pred_check_branch
          %384 = sbr.rel (%p381) target = $region104
        $region103: #{downblock_forward.6} parent=35 // pred_region
          %s400 = sand.u32 4, 7
          %p401 = scmp.eq.s32.totalorder %s400, 0
          %p402 = pneg %p401
          // Predicated region
          $region116: #{downblock_forward.6} parent=103 // pred_check
            _
          $region117: #{downblock_forward.6} parent=103 // pred_check_branch
            %404 = sbr.rel (%p401) target = $region119
          $region118: #{downblock_forward.6} parent=103 // pred_region
            %s405 = sand.u32 4, 7
            %s406 = ssub.s32 4, %s405
            %s407 = scalar_lea.vmem %s374, %s406
            %s408 = ssub.s32 4, %s405
            %s409 = scalar_lea.vmem %s377, %s408 [#allocation2]
            %s410 = sshll.u32 1, %s405
            %s411 = ssub.s32 %s410, 1
            loop: start=0, step=1, limit=1
            $region120: #{downblock_forward.6} parent=118 // loop_pre_header
              _
            $region121: #{downblock_forward.6} parent=118 // loop_header
              %s413 = sphi 0, %s417
              %p414 = scmp.ge.s32.totalorder %s413, 1
              %s418 = sphi %s407, %s407
              %s419 = sphi %s409, %s409
            $region122: #{downblock_forward.6} parent=118 // loop_header_branch
              %416 = sbr.rel (%p414) target = $region126
            $region123: #{downblock_forward.6} parent=118 // loop_body
              %v420 = vld [vmem:[%s418] sm:%s411]
              %421 = vst [vmem:[%s419] sm:%s411] %v420
            $region124: #{downblock_forward.6} parent=118 // loop_footer
              %s417 = sadd.s32 1, %s413
            $region125: #{downblock_forward.6} parent=118 // loop_footer_branch
              %412 = sbr.rel target = $region121
            $region126: #{downblock_forward.6} parent=118 // loop_exit
              _
          $region119: #{downblock_forward.6} parent=103 // pred_fallthru
            _
        $region104: #{downblock_forward.6} parent=35 // pred_fallthru
          _
        // Predicated region
        $region105: #{downblock_forward.6} parent=35 // pred_check
          %p385 = pneg %p381
        $region106: #{downblock_forward.6} parent=35 // pred_check_branch
          %387 = sbr.rel (%p385) target = $region108
        $region107: #{downblock_forward.6} parent=35 // pred_region
          %s388 = sshll.u32 1, 4
          %s389 = ssub.s32 %s388, 1
          loop: start=0, step=1, limit=1
          $region109: #{downblock_forward.6} parent=107 // loop_pre_header
            _
          $region110: #{downblock_forward.6} parent=107 // loop_header
            %s391 = sphi 0, %s395
            %p392 = scmp.ge.s32.totalorder %s391, 1
            %s396 = sphi %s374, %s374
            %s397 = sphi %s377, %s377
          $region111: #{downblock_forward.6} parent=107 // loop_header_branch
            %394 = sbr.rel (%p392) target = $region115
          $region112: #{downblock_forward.6} parent=107 // loop_body
            %v398 = vld [vmem:[%s396] sm:%s389]
            %399 = vst [vmem:[%s397] sm:%s389] %v398
          $region113: #{downblock_forward.6} parent=107 // loop_footer
            %s395 = sadd.s32 1, %s391
          $region114: #{downblock_forward.6} parent=107 // loop_footer_branch
            %390 = sbr.rel target = $region110
          $region115: #{downblock_forward.6} parent=107 // loop_exit
            _
        $region108: #{downblock_forward.6} parent=35 // pred_fallthru
          _
        // Predicated region
        $region127: #{downblock_forward.6} parent=35 // pred_check
          _
        $region128: #{downblock_forward.6} parent=35 // pred_check_branch
          %424 = sbr.rel (0) target = $region130
        $region129: #{downblock_forward.6} parent=35 // pred_region
          %425 = vsyncadd %s379, 64
        $region130: #{downblock_forward.6} parent=35 // pred_fallthru
          _
      $region36: #{downblock_forward.6} parent=31 // pred_fallthru
        _
      %s426 = sadd.s32 %s24, 1
      %p427 = scmp.lt.s32.totalorder %s426, 1
      // Predicated region
      $region131: #{downblock_forward.6} parent=31 // pred_check
        %p428 = pneg %p427
      $region132: #{downblock_forward.6} parent=31 // pred_check_branch
        %430 = sbr.rel (%p428) target = $region134
      $region133: #{downblock_forward.6} parent=31 // pred_region
        %s431 = sadd.s32 %s235, 8
        %s432 = ssub.s32 1, %s247
        %p433 = scmp.lt.s32.totalorder %s431, 0
        %s434 = scalar_select %p433, %s431, 0
        %s435 = ssub.s32 %s434, 1
        %p436 = scmp.gt.s32.totalorder %s435, 0
        %s437 = scalar_select %p436, %s435, 0
        %s438 = sadd.s32 %s434, 8
        %p439 = scmp.lt.s32.totalorder %s438, 7
        %s440 = scalar_select %p439, %s438, 7
        %s441 = smul.u32 %s22, 8
        %s442 = sadd.s32 %s434, %s441
        %s443 = smul.addr %s442, 4
        %s444 = scalar_lea.vmem %s0, %s443
        %s445 = smul.u32 %s432, 10
        %s446 = sadd.s32 1, %s445
        %s447 = smul.addr %s446, 4
        %s448 = scalar_lea.vmem [#allocation2], %s447
        %s449 = smul.u32 %s432, 3
        %s450 = scalar_lea.sflag [#allocation3], %s449
        %p452 = scmp.lt.u32.totalorder 32, 8
        %p453 = pneg %p452
        // Predicated region
        $region135: #{downblock_forward.6} parent=133 // pred_check
          _
        $region136: #{downblock_forward.6} parent=133 // pred_check_branch
          %455 = sbr.rel (%p452) target = $region138
        $region137: #{downblock_forward.6} parent=133 // pred_region
          %s471 = sand.u32 32, 7
          %p472 = scmp.eq.s32.totalorder %s471, 0
          // Predicated region
          $region150: #{downblock_forward.6} parent=137 // pred_check
            %p473 = pneg %p472
          $region151: #{downblock_forward.6} parent=137 // pred_check_branch
            %475 = sbr.rel (%p473) target = $region153
          $region152: #{downblock_forward.6} parent=137 // pred_region
            loop: start=0, step=1, limit=1
            $region154: #{downblock_forward.6} parent=152 // loop_pre_header
              _
            $region155: #{downblock_forward.6} parent=152 // loop_header
              %s477 = sphi 0, %s481
              %p478 = scmp.ge.s32.totalorder %s477, 1
              %s482 = sphi %s444, %s444
              %s483 = sphi %s448, %s448
            $region156: #{downblock_forward.6} parent=152 // loop_header_branch
              %480 = sbr.rel (%p478) target = $region160
            $region157: #{downblock_forward.6} parent=152 // loop_body
              %v484 = vld [vmem:[%s482] sm:$0xff]
              %485 = vst [vmem:[%s483] sm:$0xff] %v484
              %v486 = vld [vmem:[%s482 + $0x8] sm:$0xff]
              %487 = vst [vmem:[%s483 + $0x8] sm:$0xff] %v486
              %v488 = vld [vmem:[%s482 + $0x10] sm:$0xff]
              %489 = vst [vmem:[%s483 + $0x10] sm:$0xff] %v488
              %v490 = vld [vmem:[%s482 + $0x18] sm:$0xff]
              %491 = vst [vmem:[%s483 + $0x18] sm:$0xff] %v490
            $region158: #{downblock_forward.6} parent=152 // loop_footer
              %s481 = sadd.s32 1, %s477
            $region159: #{downblock_forward.6} parent=152 // loop_footer_branch
              %476 = sbr.rel target = $region155
            $region160: #{downblock_forward.6} parent=152 // loop_exit
              _
          $region153: #{downblock_forward.6} parent=137 // pred_fallthru
            _
          %p492 = pneg %p472
          // Predicated region
          $region161: #{downblock_forward.6} parent=137 // pred_check
            _
          $region162: #{downblock_forward.6} parent=137 // pred_check_branch
            %494 = sbr.rel (%p472) target = $region164
          $region163: #{downblock_forward.6} parent=137 // pred_region
            %s495 = sand.u32 32, 7
          $region164: #{downblock_forward.6} parent=137 // pred_fallthru
            _
        $region138: #{downblock_forward.6} parent=133 // pred_fallthru
          _
        // Predicated region
        $region139: #{downblock_forward.6} parent=133 // pred_check
          %p456 = pneg %p452
        $region140: #{downblock_forward.6} parent=133 // pred_check_branch
          %458 = sbr.rel (%p456) target = $region142
        $region141: #{downblock_forward.6} parent=133 // pred_region
          %s459 = sshll.u32 1, 32
          %s460 = ssub.s32 %s459, 1
          loop: start=0, step=1, limit=1
          $region143: #{downblock_forward.6} parent=141 // loop_pre_header
            _
          $region144: #{downblock_forward.6} parent=141 // loop_header
            %s462 = sphi 0, %s466
            %p463 = scmp.ge.s32.totalorder %s462, 1
            %s467 = sphi %s444, %s444
            %s468 = sphi %s448, %s448
          $region145: #{downblock_forward.6} parent=141 // loop_header_branch
            %465 = sbr.rel (%p463) target = $region149
          $region146: #{downblock_forward.6} parent=141 // loop_body
            %v469 = vld [vmem:[%s467] sm:%s460]
            %470 = vst [vmem:[%s468] sm:%s460] %v469
          $region147: #{downblock_forward.6} parent=141 // loop_footer
            %s466 = sadd.s32 1, %s462
          $region148: #{downblock_forward.6} parent=141 // loop_footer_branch
            %461 = sbr.rel target = $region144
          $region149: #{downblock_forward.6} parent=141 // loop_exit
            _
        $region142: #{downblock_forward.6} parent=133 // pred_fallthru
          _
        // Predicated region
        $region165: #{downblock_forward.6} parent=133 // pred_check
          _
        $region166: #{downblock_forward.6} parent=133 // pred_check_branch
          %498 = sbr.rel (0) target = $region168
        $region167: #{downblock_forward.6} parent=133 // pred_region
          %499 = vsyncadd %s450, 512
        $region168: #{downblock_forward.6} parent=133 // pred_fallthru
          _
        %s500 = sadd.s32 %s437, %s441
        %s501 = smul.addr %s500, 4
        %s502 = scalar_lea.vmem %s0, %s501
        %s503 = smul.addr %s445, 4
        %s504 = scalar_lea.vmem [#allocation2], %s503
        %s505 = sadd.s32 1, %s449
        %s506 = scalar_lea.sflag [#allocation3], %s505
        %p508 = scmp.lt.u32.totalorder 4, 8
        %p509 = pneg %p508
        // Predicated region
        $region169: #{downblock_forward.6} parent=133 // pred_check
          _
        $region170: #{downblock_forward.6} parent=133 // pred_check_branch
          %511 = sbr.rel (%p508) target = $region172
        $region171: #{downblock_forward.6} parent=133 // pred_region
          %s527 = sand.u32 4, 7
          %p528 = scmp.eq.s32.totalorder %s527, 0
          %p529 = pneg %p528
          // Predicated region
          $region184: #{downblock_forward.6} parent=171 // pred_check
            _
          $region185: #{downblock_forward.6} parent=171 // pred_check_branch
            %531 = sbr.rel (%p528) target = $region187
          $region186: #{downblock_forward.6} parent=171 // pred_region
            %s532 = sand.u32 4, 7
            %s533 = ssub.s32 4, %s532
            %s534 = scalar_lea.vmem %s502, %s533
            %s535 = ssub.s32 4, %s532
            %s536 = scalar_lea.vmem %s504, %s535 [#allocation2]
            %s537 = sshll.u32 1, %s532
            %s538 = ssub.s32 %s537, 1
            loop: start=0, step=1, limit=1
            $region188: #{downblock_forward.6} parent=186 // loop_pre_header
              _
            $region189: #{downblock_forward.6} parent=186 // loop_header
              %s540 = sphi 0, %s544
              %p541 = scmp.ge.s32.totalorder %s540, 1
              %s545 = sphi %s534, %s534
              %s546 = sphi %s536, %s536
            $region190: #{downblock_forward.6} parent=186 // loop_header_branch
              %543 = sbr.rel (%p541) target = $region194
            $region191: #{downblock_forward.6} parent=186 // loop_body
              %v547 = vld [vmem:[%s545] sm:%s538]
              %548 = vst [vmem:[%s546] sm:%s538] %v547
            $region192: #{downblock_forward.6} parent=186 // loop_footer
              %s544 = sadd.s32 1, %s540
            $region193: #{downblock_forward.6} parent=186 // loop_footer_branch
              %539 = sbr.rel target = $region189
            $region194: #{downblock_forward.6} parent=186 // loop_exit
              _
          $region187: #{downblock_forward.6} parent=171 // pred_fallthru
            _
        $region172: #{downblock_forward.6} parent=133 // pred_fallthru
          _
        // Predicated region
        $region173: #{downblock_forward.6} parent=133 // pred_check
          %p512 = pneg %p508
        $region174: #{downblock_forward.6} parent=133 // pred_check_branch
          %514 = sbr.rel (%p512) target = $region176
        $region175: #{downblock_forward.6} parent=133 // pred_region
          %s515 = sshll.u32 1, 4
          %s516 = ssub.s32 %s515, 1
          loop: start=0, step=1, limit=1
          $region177: #{downblock_forward.6} parent=175 // loop_pre_header
            _
          $region178: #{downblock_forward.6} parent=175 // loop_header
            %s518 = sphi 0, %s522
            %p519 = scmp.ge.s32.totalorder %s518, 1
            %s523 = sphi %s502, %s502
            %s524 = sphi %s504, %s504
          $region179: #{downblock_forward.6} parent=175 // loop_header_branch
            %521 = sbr.rel (%p519) target = $region183
          $region180: #{downblock_forward.6} parent=175 // loop_body
            %v525 = vld [vmem:[%s523] sm:%s516]
            %526 = vst [vmem:[%s524] sm:%s516] %v525
          $region181: #{downblock_forward.6} parent=175 // loop_footer
            %s522 = sadd.s32 1, %s518
          $region182: #{downblock_forward.6} parent=175 // loop_footer_branch
            %517 = sbr.rel target = $region178
          $region183: #{downblock_forward.6} parent=175 // loop_exit
            _
        $region176: #{downblock_forward.6} parent=133 // pred_fallthru
          _
        // Predicated region
        $region195: #{downblock_forward.6} parent=133 // pred_check
          _
        $region196: #{downblock_forward.6} parent=133 // pred_check_branch
          %551 = sbr.rel (0) target = $region198
        $region197: #{downblock_forward.6} parent=133 // pred_region
          %552 = vsyncadd %s506, 64
        $region198: #{downblock_forward.6} parent=133 // pred_fallthru
          _
        %s553 = sadd.s32 %s440, %s441
        %s554 = smul.addr %s553, 4
        %s555 = scalar_lea.vmem %s0, %s554
        %s556 = sadd.s32 9, %s445
        %s557 = smul.addr %s556, 4
        %s558 = scalar_lea.vmem [#allocation2], %s557
        %s559 = sadd.s32 2, %s449
        %s560 = scalar_lea.sflag [#allocation3], %s559
        %p562 = scmp.lt.u32.totalorder 4, 8
        %p563 = pneg %p562
        // Predicated region
        $region199: #{downblock_forward.6} parent=133 // pred_check
          _
        $region200: #{downblock_forward.6} parent=133 // pred_check_branch
          %565 = sbr.rel (%p562) target = $region202
        $region201: #{downblock_forward.6} parent=133 // pred_region
          %s581 = sand.u32 4, 7
          %p582 = scmp.eq.s32.totalorder %s581, 0
          %p583 = pneg %p582
          // Predicated region
          $region214: #{downblock_forward.6} parent=201 // pred_check
            _
          $region215: #{downblock_forward.6} parent=201 // pred_check_branch
            %585 = sbr.rel (%p582) target = $region217
          $region216: #{downblock_forward.6} parent=201 // pred_region
            %s586 = sand.u32 4, 7
            %s587 = ssub.s32 4, %s586
            %s588 = scalar_lea.vmem %s555, %s587
            %s589 = ssub.s32 4, %s586
            %s590 = scalar_lea.vmem %s558, %s589 [#allocation2]
            %s591 = sshll.u32 1, %s586
            %s592 = ssub.s32 %s591, 1
            loop: start=0, step=1, limit=1
            $region218: #{downblock_forward.6} parent=216 // loop_pre_header
              _
            $region219: #{downblock_forward.6} parent=216 // loop_header
              %s594 = sphi 0, %s598
              %p595 = scmp.ge.s32.totalorder %s594, 1
              %s599 = sphi %s588, %s588
              %s600 = sphi %s590, %s590
            $region220: #{downblock_forward.6} parent=216 // loop_header_branch
              %597 = sbr.rel (%p595) target = $region224
            $region221: #{downblock_forward.6} parent=216 // loop_body
              %v601 = vld [vmem:[%s599] sm:%s592]
              %602 = vst [vmem:[%s600] sm:%s592] %v601
            $region222: #{downblock_forward.6} parent=216 // loop_footer
              %s598 = sadd.s32 1, %s594
            $region223: #{downblock_forward.6} parent=216 // loop_footer_branch
              %593 = sbr.rel target = $region219
            $region224: #{downblock_forward.6} parent=216 // loop_exit
              _
          $region217: #{downblock_forward.6} parent=201 // pred_fallthru
            _
        $region202: #{downblock_forward.6} parent=133 // pred_fallthru
          _
        // Predicated region
        $region203: #{downblock_forward.6} parent=133 // pred_check
          %p566 = pneg %p562
        $region204: #{downblock_forward.6} parent=133 // pred_check_branch
          %568 = sbr.rel (%p566) target = $region206
        $region205: #{downblock_forward.6} parent=133 // pred_region
          %s569 = sshll.u32 1, 4
          %s570 = ssub.s32 %s569, 1
          loop: start=0, step=1, limit=1
          $region207: #{downblock_forward.6} parent=205 // loop_pre_header
            _
          $region208: #{downblock_forward.6} parent=205 // loop_header
            %s572 = sphi 0, %s576
            %p573 = scmp.ge.s32.totalorder %s572, 1
            %s577 = sphi %s555, %s555
            %s578 = sphi %s558, %s558
          $region209: #{downblock_forward.6} parent=205 // loop_header_branch
            %575 = sbr.rel (%p573) target = $region213
          $region210: #{downblock_forward.6} parent=205 // loop_body
            %v579 = vld [vmem:[%s577] sm:%s570]
            %580 = vst [vmem:[%s578] sm:%s570] %v579
          $region211: #{downblock_forward.6} parent=205 // loop_footer
            %s576 = sadd.s32 1, %s572
          $region212: #{downblock_forward.6} parent=205 // loop_footer_branch
            %571 = sbr.rel target = $region208
          $region213: #{downblock_forward.6} parent=205 // loop_exit
            _
        $region206: #{downblock_forward.6} parent=133 // pred_fallthru
          _
        // Predicated region
        $region225: #{downblock_forward.6} parent=133 // pred_check
          _
        $region226: #{downblock_forward.6} parent=133 // pred_check_branch
          %605 = sbr.rel (0) target = $region228
        $region227: #{downblock_forward.6} parent=133 // pred_region
          %606 = vsyncadd %s560, 64
        $region228: #{downblock_forward.6} parent=133 // pred_fallthru
          _
      $region134: #{downblock_forward.6} parent=31 // pred_fallthru
        _
      %s607 = smul.u32 %s247, 3
      %s608 = scalar_lea.sflag [#allocation3], %s607
      %s609 = smul.u32 4, 8
      %s610 = smul.u32 %s609, 1
      %s611 = smul.u32 %s610, 1
      %s612 = sshll.u32 %s611, 4
      %613 = dma.done %s608, %s612
      %s614 = sadd.s32 1, %s607
      %s615 = scalar_lea.sflag [#allocation3], %s614
      %s616 = smul.u32 4, 1
      %s617 = smul.u32 %s616, 1
      %s618 = smul.u32 %s617, 1
      %s619 = sshll.u32 %s618, 4
      %620 = dma.done %s615, %s619
      %s621 = sadd.s32 2, %s607
      %s622 = scalar_lea.sflag [#allocation3], %s621
      %s623 = sshll.u32 %s618, 4
      %624 = dma.done %s622, %s623
      %s625 = smul.u32 %s247, 10
      %s626 = smul.addr %s625, 4
      %s627 = scalar_lea.vmem [#allocation2], %s626
      %v628 = vld [vmem:[%s627] sm:$0xf]
      %v629 = vld [vmem:[%s627 + $0x4] sm:$0xf]
      %v630 = vld [vmem:[%s627 + $0x8] sm:$0xf]
      %v631 = vld [vmem:[%s627 + $0xc] sm:$0xf]
      %v632 = vld [vmem:[%s627 + $0x10] sm:$0xf]
      %v633 = vld [vmem:[%s627 + $0x14] sm:$0xf]
      %v634 = vld [vmem:[%s627 + $0x18] sm:$0xf]
      %v635 = vld [vmem:[%s627 + $0x1c] sm:$0xf]
      %v636 = vld [vmem:[%s627 + $0x20] sm:$0xf]
      %v637 = vld [vmem:[%s627 + $0x24] sm:$0xf]
      %v638 = vunpack.c.l.bf16 %v628
      %v639 = vunpack.c.l.bf16 %v629
      %v640 = vunpack.c.l.bf16 %v630
      %v641 = vunpack.c.l.bf16 %v631
      %v642 = vunpack.c.l.bf16 %v632
      %v643 = vunpack.c.l.bf16 %v633
      %v644 = vunpack.c.l.bf16 %v634
      %v645 = vunpack.c.l.bf16 %v635
      %v646 = vunpack.c.l.bf16 %v636
      %v647 = vunpack.c.l.bf16 %v637
      %v648 = vld [vmem:[%s2] sm:$0x1]
      %v650 = vlaneseq
      %v651 = vshrl.u32 %v650, 7
      %v652 = vsub.s32 0, %v651
      %v653 = vrot.slane %v648, %v652
      %v655 = vmul.f32 %v638, %v653
      %v656 = vmul.f32 %v639, %v653
      %v657 = vmul.f32 %v640, %v653
      %v658 = vmul.f32 %v641, %v653
      %v659 = vmul.f32 %v642, %v653
      %v660 = vmul.f32 %v643, %v653
      %v661 = vmul.f32 %v644, %v653
      %v662 = vmul.f32 %v645, %v653
      %v663 = vmul.f32 %v646, %v653
      %v664 = vmul.f32 %v647, %v653
      %v665 = vld [vmem:[%s3] sm:$0x1]
      %v667 = vlaneseq
      %v668 = vshrl.u32 %v667, 7
      %v669 = vsub.s32 0, %v668
      %v670 = vrot.slane %v665, %v669
      %v672 = vadd.f32 %v655, %v670
      %v673 = vadd.f32 %v656, %v670
      %v674 = vadd.f32 %v657, %v670
      %v675 = vadd.f32 %v658, %v670
      %v676 = vadd.f32 %v659, %v670
      %v677 = vadd.f32 %v660, %v670
      %v678 = vadd.f32 %v661, %v670
      %v679 = vadd.f32 %v662, %v670
      %v680 = vadd.f32 %v663, %v670
      %v681 = vadd.f32 %v664, %v670
      %v682 = vmax.f32 %v672, 0.0
      %v683 = vmax.f32 %v673, 0.0
      %v684 = vmax.f32 %v674, 0.0
      %v685 = vmax.f32 %v675, 0.0
      %v686 = vmax.f32 %v676, 0.0
      %v687 = vmax.f32 %v677, 0.0
      %v688 = vmax.f32 %v678, 0.0
      %v689 = vmax.f32 %v679, 0.0
      %v690 = vmax.f32 %v680, 0.0
      %v691 = vmax.f32 %v681, 0.0
      %p692 = scmp.eq.s32.totalorder %s234, 0
      %s693 = scalar_select %p692, 1, 0
      %v694 = vstv %s693
      %vm695 = vcmp.eq.s32.totalorder %v694, 1
      %v696 = vsel %vm695, 1, 0
      %vm697 = vcmp.eq.s32.totalorder %v696, 1
      %v698 = vsel %vm697, 0.0, %v682
      %v699 = vsel 0, 0.0, %v683
      %v700 = vsel 0, 0.0, %v684
      %v701 = vsel 0, 0.0, %v685
      %v702 = vsel 0, 0.0, %v686
      %v703 = vsel 0, 0.0, %v687
      %v704 = vsel 0, 0.0, %v688
      %v705 = vsel 0, 0.0, %v689
      %v706 = vsel 0, 0.0, %v690
      %v707 = vsel %vm697, 0.0, %v691
      %v708 = vpack.c.bf16 %v698, %v698
      %v709 = vpack.c.bf16 %v699, %v699
      %v710 = vpack.c.bf16 %v700, %v700
      %v711 = vpack.c.bf16 %v701, %v701
      %v712 = vpack.c.bf16 %v702, %v702
      %v713 = vpack.c.bf16 %v703, %v703
      %v714 = vpack.c.bf16 %v704, %v704
      %v715 = vpack.c.bf16 %v705, %v705
      %v716 = vpack.c.bf16 %v706, %v706
      %v717 = vpack.c.bf16 %v707, %v707
      %v719 = vshrl.u32 %v708, 16
      %v721 = vrot.slane %v719, 7
      %v722 = vshll.u32 %v708, 16
      %v724 = vor.u32 %v721, %v722
      %v726 = vshrl.u32 %v709, 16
      %v728 = vrot.slane %v726, 7
      %v729 = vshll.u32 %v709, 16
      %v731 = vor.u32 %v728, %v729
      %v733 = vshrl.u32 %v710, 16
      %v735 = vrot.slane %v733, 7
      %v736 = vshll.u32 %v710, 16
      %v738 = vor.u32 %v735, %v736
      %v740 = vshrl.u32 %v711, 16
      %v742 = vrot.slane %v740, 7
      %v743 = vshll.u32 %v711, 16
      %v745 = vor.u32 %v742, %v743
      %v747 = vshrl.u32 %v712, 16
      %v749 = vrot.slane %v747, 7
      %v750 = vshll.u32 %v712, 16
      %v752 = vor.u32 %v749, %v750
      %v754 = vshrl.u32 %v713, 16
      %v756 = vrot.slane %v754, 7
      %v757 = vshll.u32 %v713, 16
      %v759 = vor.u32 %v756, %v757
      %v761 = vshrl.u32 %v714, 16
      %v763 = vrot.slane %v761, 7
      %v764 = vshll.u32 %v714, 16
      %v766 = vor.u32 %v763, %v764
      %v768 = vshrl.u32 %v715, 16
      %v770 = vrot.slane %v768, 7
      %v771 = vshll.u32 %v715, 16
      %v773 = vor.u32 %v770, %v771
      %v775 = vshrl.u32 %v716, 16
      %v777 = vrot.slane %v775, 7
      %v778 = vshll.u32 %v716, 16
      %v780 = vor.u32 %v777, %v778
      %v782 = vshrl.u32 %v717, 16
      %v784 = vrot.slane %v782, 7
      %v785 = vshll.u32 %v717, 16
      %v787 = vor.u32 %v784, %v785
      %vm798 = vcmask 1040384
      %vm799 = vsmask.f32 256
      %vm800 = vmand %vm798, %vm799
      %v801 = vsel %vm800, 0, %v724
      %v802 = vsel %vm800, 0, %v731
      %v803 = vsel %vm800, 0, %v738
      %v804 = vsel %vm800, 0, %v745
      %v805 = vsel %vm800, 0, %v752
      %v806 = vsel %vm800, 0, %v759
      %v807 = vsel %vm800, 0, %v766
      %v808 = vsel %vm800, 0, %v773
      %v809 = vsel %vm800, 0, %v780
      %v810 = vsel %vm800, 0, %v787
      %v811 = vrot.slane %v722, 1
      %v812 = vor.u32 %v719, %v811
      %v813 = vrot.slane %v729, 1
      %v814 = vor.u32 %v726, %v813
      %v815 = vrot.slane %v736, 1
      %v816 = vor.u32 %v733, %v815
      %v817 = vrot.slane %v743, 1
      %v818 = vor.u32 %v740, %v817
      %v819 = vrot.slane %v750, 1
      %v820 = vor.u32 %v747, %v819
      %v821 = vrot.slane %v757, 1
      %v822 = vor.u32 %v754, %v821
      %v823 = vrot.slane %v764, 1
      %v824 = vor.u32 %v761, %v823
      %v825 = vrot.slane %v771, 1
      %v826 = vor.u32 %v768, %v825
      %v827 = vrot.slane %v778, 1
      %v828 = vor.u32 %v775, %v827
      %v829 = vrot.slane %v785, 1
      %v830 = vor.u32 %v782, %v829
      %vm841 = vcmask 1043456
      %vm842 = vsmask.f32 3328
      %vm843 = vmand %vm841, %vm842
      %v844 = vsel %vm843, %v812, 0
      %v845 = vsel %vm843, %v814, 0
      %v846 = vsel %vm843, %v816, 0
      %v847 = vsel %vm843, %v818, 0
      %v848 = vsel %vm843, %v820, 0
      %v849 = vsel %vm843, %v822, 0
      %v850 = vsel %vm843, %v824, 0
      %v851 = vsel %vm843, %v826, 0
      %v852 = vsel %vm843, %v828, 0
      %v853 = vsel %vm843, %v830, 0
      %v864 = vunpack.c.l.b16 %v801
      %v865 = vunpack.c.l.b16 %v802
      %v866 = vunpack.c.l.b16 %v803
      %v867 = vunpack.c.l.b16 %v804
      %v868 = vunpack.c.l.b16 %v805
      %v869 = vunpack.c.l.b16 %v806
      %v870 = vunpack.c.l.b16 %v807
      %v871 = vunpack.c.l.b16 %v808
      %v872 = vunpack.c.l.b16 %v809
      %v873 = vunpack.c.l.b16 %v810
      %v874 = vld [vmem:[%s1] sm:$0xf]
      %v875 = vld [vmem:[%s1 + $0x4] sm:$0xf]
      %v876 = vld [vmem:[%s1 + $0x8] sm:$0xf]
      %v877 = vld [vmem:[%s1 + $0xc] sm:$0xf]
      %v878 = vld [vmem:[%s1 + $0x10] sm:$0xf]
      %v879 = vld [vmem:[%s1 + $0x14] sm:$0xf]
      %v880 = vld [vmem:[%s1 + $0x18] sm:$0xf]
      %v881 = vld [vmem:[%s1 + $0x1c] sm:$0xf]
      %v882 = vld [vmem:[%s1 + $0x20] sm:$0xf]
      %v883 = vld [vmem:[%s1 + $0x24] sm:$0xf]
      %v884 = vld [vmem:[%s1 + $0x28] sm:$0xf]
      %v885 = vld [vmem:[%s1 + $0x2c] sm:$0xf]
      %v886 = vld [vmem:[%s1 + $0x30] sm:$0xf]
      %v887 = vld [vmem:[%s1 + $0x34] sm:$0xf]
      %v888 = vld [vmem:[%s1 + $0x38] sm:$0xf]
      %v889 = vld [vmem:[%s1 + $0x3c] sm:$0xf]
      %v890 = vld [vmem:[%s1 + $0x40] sm:$0xf]
      %v891 = vld [vmem:[%s1 + $0x44] sm:$0xf]
      %v892 = vld [vmem:[%s1 + $0x48] sm:$0xf]
      %v893 = vld [vmem:[%s1 + $0x4c] sm:$0xf]
      %v894 = vld [vmem:[%s1 + $0x50] sm:$0xf]
      %v895 = vld [vmem:[%s1 + $0x54] sm:$0xf]
      %v896 = vld [vmem:[%s1 + $0x58] sm:$0xf]
      %v897 = vld [vmem:[%s1 + $0x5c] sm:$0xf]
      %v898 = vld [vmem:[%s1 + $0x60] sm:$0xf]
      %v899 = vld [vmem:[%s1 + $0x64] sm:$0xf]
      %v900 = vld [vmem:[%s1 + $0x68] sm:$0xf]
      %v901 = vld [vmem:[%s1 + $0x6c] sm:$0xf]
      %v902 = vld [vmem:[%s1 + $0x70] sm:$0xf]
      %v903 = vld [vmem:[%s1 + $0x74] sm:$0xf]
      %v904 = vld [vmem:[%s1 + $0x78] sm:$0xf]
      %v905 = vld [vmem:[%s1 + $0x7c] sm:$0xf]
      %v906 = vld [vmem:[%s1 + $0x80] sm:$0xf]
      %v907 = vld [vmem:[%s1 + $0x84] sm:$0xf]
      %v908 = vld [vmem:[%s1 + $0x88] sm:$0xf]
      %v909 = vld [vmem:[%s1 + $0x8c] sm:$0xf]
      %v910 = vld [vmem:[%s1 + $0x90] sm:$0xf]
      %v911 = vld [vmem:[%s1 + $0x94] sm:$0xf]
      %v912 = vld [vmem:[%s1 + $0x98] sm:$0xf]
      %v913 = vld [vmem:[%s1 + $0x9c] sm:$0xf]
      %v914 = vld [vmem:[%s1 + $0xa0] sm:$0xf]
      %v915 = vld [vmem:[%s1 + $0xa4] sm:$0xf]
      %v916 = vld [vmem:[%s1 + $0xa8] sm:$0xf]
      %v917 = vld [vmem:[%s1 + $0xac] sm:$0xf]
      %v918 = vld [vmem:[%s1 + $0xb0] sm:$0xf]
      %v919 = vld [vmem:[%s1 + $0xb4] sm:$0xf]
      %v920 = vld [vmem:[%s1 + $0xb8] sm:$0xf]
      %v921 = vld [vmem:[%s1 + $0xbc] sm:$0xf]
      %v932 = vunpack.c.l.b16 %v708
      %v933 = vunpack.c.l.b16 %v709
      %v934 = vunpack.c.l.b16 %v710
      %v935 = vunpack.c.l.b16 %v711
      %v936 = vunpack.c.l.b16 %v712
      %v937 = vunpack.c.l.b16 %v713
      %v938 = vunpack.c.l.b16 %v714
      %v939 = vunpack.c.l.b16 %v715
      %v940 = vunpack.c.l.b16 %v716
      %v941 = vunpack.c.l.b16 %v717
      %s942 = scalar_lea.vmem %s1, 192
      %v943 = vld [vmem:[%s942] sm:$0xf]
      %v944 = vld [vmem:[%s942 + $0x4] sm:$0xf]
      %v945 = vld [vmem:[%s942 + $0x8] sm:$0xf]
      %v946 = vld [vmem:[%s942 + $0xc] sm:$0xf]
      %v947 = vld [vmem:[%s942 + $0x10] sm:$0xf]
      %v948 = vld [vmem:[%s942 + $0x14] sm:$0xf]
      %v949 = vld [vmem:[%s942 + $0x18] sm:$0xf]
      %v950 = vld [vmem:[%s942 + $0x1c] sm:$0xf]
      %v951 = vld [vmem:[%s942 + $0x20] sm:$0xf]
      %v952 = vld [vmem:[%s942 + $0x24] sm:$0xf]
      %v953 = vld [vmem:[%s942 + $0x28] sm:$0xf]
      %v954 = vld [vmem:[%s942 + $0x2c] sm:$0xf]
      %v955 = vld [vmem:[%s942 + $0x30] sm:$0xf]
      %v956 = vld [vmem:[%s942 + $0x34] sm:$0xf]
      %v957 = vld [vmem:[%s942 + $0x38] sm:$0xf]
      %v958 = vld [vmem:[%s942 + $0x3c] sm:$0xf]
      %v959 = vld [vmem:[%s942 + $0x40] sm:$0xf]
      %v960 = vld [vmem:[%s942 + $0x44] sm:$0xf]
      %v961 = vld [vmem:[%s942 + $0x48] sm:$0xf]
      %v962 = vld [vmem:[%s942 + $0x4c] sm:$0xf]
      %v963 = vld [vmem:[%s942 + $0x50] sm:$0xf]
      %v964 = vld [vmem:[%s942 + $0x54] sm:$0xf]
      %v965 = vld [vmem:[%s942 + $0x58] sm:$0xf]
      %v966 = vld [vmem:[%s942 + $0x5c] sm:$0xf]
      %v967 = vld [vmem:[%s942 + $0x60] sm:$0xf]
      %v968 = vld [vmem:[%s942 + $0x64] sm:$0xf]
      %v969 = vld [vmem:[%s942 + $0x68] sm:$0xf]
      %v970 = vld [vmem:[%s942 + $0x6c] sm:$0xf]
      %v971 = vld [vmem:[%s942 + $0x70] sm:$0xf]
      %v972 = vld [vmem:[%s942 + $0x74] sm:$0xf]
      %v973 = vld [vmem:[%s942 + $0x78] sm:$0xf]
      %v974 = vld [vmem:[%s942 + $0x7c] sm:$0xf]
      %v975 = vld [vmem:[%s942 + $0x80] sm:$0xf]
      %v976 = vld [vmem:[%s942 + $0x84] sm:$0xf]
      %v977 = vld [vmem:[%s942 + $0x88] sm:$0xf]
      %v978 = vld [vmem:[%s942 + $0x8c] sm:$0xf]
      %v979 = vld [vmem:[%s942 + $0x90] sm:$0xf]
      %v980 = vld [vmem:[%s942 + $0x94] sm:$0xf]
      %v981 = vld [vmem:[%s942 + $0x98] sm:$0xf]
      %v982 = vld [vmem:[%s942 + $0x9c] sm:$0xf]
      %v983 = vld [vmem:[%s942 + $0xa0] sm:$0xf]
      %v984 = vld [vmem:[%s942 + $0xa4] sm:$0xf]
      %v985 = vld [vmem:[%s942 + $0xa8] sm:$0xf]
      %v986 = vld [vmem:[%s942 + $0xac] sm:$0xf]
      %v987 = vld [vmem:[%s942 + $0xb0] sm:$0xf]
      %v988 = vld [vmem:[%s942 + $0xb4] sm:$0xf]
      %v989 = vld [vmem:[%s942 + $0xb8] sm:$0xf]
      %v990 = vld [vmem:[%s942 + $0xbc] sm:$0xf]
      %v991 = vpack.c.b16 %v933, %v932
      %v992 = vpack.c.b16 %v934, %v933
      %v993 = vpack.c.b16 %v935, %v934
      %v994 = vpack.c.b16 %v936, %v935
      %v995 = vpack.c.b16 %v937, %v936
      %v996 = vpack.c.b16 %v938, %v937
      %v997 = vpack.c.b16 %v939, %v938
      %v998 = vpack.c.b16 %v940, %v939
      %v999 = vpack.c.b16 %v941, %v940
      %v1057 = vunpack.c.l.b16 %v943
      %v1058 = vunpack.c.l.b16 %v944
      %v1059 = vunpack.c.l.b16 %v945
      %v1060 = vunpack.c.l.b16 %v946
      %v1061 = vunpack.c.l.b16 %v947
      %v1062 = vunpack.c.l.b16 %v948
      %v1063 = vunpack.c.l.b16 %v949
      %v1064 = vunpack.c.l.b16 %v950
      %v1065 = vunpack.c.l.b16 %v951
      %v1066 = vunpack.c.l.b16 %v952
      %v1067 = vunpack.c.l.b16 %v953
      %v1068 = vunpack.c.l.b16 %v954
      %v1069 = vunpack.c.l.b16 %v955
      %v1070 = vunpack.c.l.b16 %v956
      %v1071 = vunpack.c.l.b16 %v957
      %v1072 = vunpack.c.l.b16 %v958
      %v1073 = vunpack.c.l.b16 %v959
      %v1074 = vunpack.c.l.b16 %v960
      %v1075 = vunpack.c.l.b16 %v961
      %v1076 = vunpack.c.l.b16 %v962
      %v1077 = vunpack.c.l.b16 %v963
      %v1078 = vunpack.c.l.b16 %v964
      %v1079 = vunpack.c.l.b16 %v965
      %v1080 = vunpack.c.l.b16 %v966
      %v1081 = vunpack.c.l.b16 %v967
      %v1082 = vunpack.c.l.b16 %v968
      %v1083 = vunpack.c.l.b16 %v969
      %v1084 = vunpack.c.l.b16 %v970
      %v1085 = vunpack.c.l.b16 %v971
      %v1086 = vunpack.c.l.b16 %v972
      %v1087 = vunpack.c.l.b16 %v973
      %v1088 = vunpack.c.l.b16 %v974
      %v1089 = vunpack.c.l.b16 %v975
      %v1090 = vunpack.c.l.b16 %v976
      %v1091 = vunpack.c.l.b16 %v977
      %v1092 = vunpack.c.l.b16 %v978
      %v1093 = vunpack.c.l.b16 %v979
      %v1094 = vunpack.c.l.b16 %v980
      %v1095 = vunpack.c.l.b16 %v981
      %v1096 = vunpack.c.l.b16 %v982
      %v1097 = vunpack.c.l.b16 %v983
      %v1098 = vunpack.c.l.b16 %v984
      %v1099 = vunpack.c.l.b16 %v985
      %v1100 = vunpack.c.l.b16 %v986
      %v1101 = vunpack.c.l.b16 %v987
      %v1102 = vunpack.c.l.b16 %v988
      %v1103 = vunpack.c.l.b16 %v989
      %v1104 = vunpack.c.l.b16 %v990
      %v1105 = vpack.c.b16 %v1058, %v1057
      %v1106 = vpack.c.b16 %v1060, %v1059
      %v1107 = vpack.c.b16 %v1062, %v1061
      %v1108 = vpack.c.b16 %v1064, %v1063
      %v1109 = vpack.c.b16 %v1066, %v1065
      %v1110 = vpack.c.b16 %v1068, %v1067
      %v1111 = vpack.c.b16 %v1070, %v1069
      %v1112 = vpack.c.b16 %v1072, %v1071
      %v1113 = vpack.c.b16 %v1074, %v1073
      %v1114 = vpack.c.b16 %v1076, %v1075
      %v1115 = vpack.c.b16 %v1078, %v1077
      %v1116 = vpack.c.b16 %v1080, %v1079
      %v1117 = vpack.c.b16 %v1082, %v1081
      %v1118 = vpack.c.b16 %v1084, %v1083
      %v1119 = vpack.c.b16 %v1086, %v1085
      %v1120 = vpack.c.b16 %v1088, %v1087
      %v1121 = vpack.c.b16 %v1090, %v1089
      %v1122 = vpack.c.b16 %v1092, %v1091
      %v1123 = vpack.c.b16 %v1094, %v1093
      %v1124 = vpack.c.b16 %v1096, %v1095
      %v1125 = vpack.c.b16 %v1098, %v1097
      %v1126 = vpack.c.b16 %v1100, %v1099
      %v1127 = vpack.c.b16 %v1102, %v1101
      %v1128 = vpack.c.b16 %v1104, %v1103
      %1153 = vmatprep.subr.bf16.mxu0 0
      %1154 = vmatpush1.bf16.msra.mxu0 %v1112
      %1155 = vmatprep.subr.bf16.mxu0 0
      %1156 = vmatpush1.bf16.msra.mxu0 %v1111
      %1157 = vmatprep.subr.bf16.mxu0 0
      %1158 = vmatpush1.bf16.msra.mxu0 %v1110
      %1159 = vmatprep.subr.bf16.mxu0 0
      %1160 = vmatpush1.bf16.msra.mxu0 %v1109
      %1161 = vmatprep.subr.bf16.mxu0 0
      %1162 = vmatpush1.bf16.msra.mxu0 %v1108
      %1163 = vmatprep.subr.bf16.mxu0 0
      %1164 = vmatpush1.bf16.msra.mxu0 %v1107
      %1165 = vmatprep.subr.bf16.mxu0 0
      %1166 = vmatpush1.bf16.msra.mxu0 %v1106
      %1167 = vmatprep.subr.bf16.mxu0 0
      %1168 = vmatpush1.bf16.msra.mxu0 %v1105
      %1169 = vmatprep.subr.bf16.mxu0 0
      %1170 = vmatpush2.bf16.msra.mxu0 %v1120
      %1171 = vmatprep.subr.bf16.mxu0 0
      %1172 = vmatpush2.bf16.msra.mxu0 %v1119
      %1173 = vmatprep.subr.bf16.mxu0 0
      %1174 = vmatpush2.bf16.msra.mxu0 %v1118
      %1175 = vmatprep.subr.bf16.mxu0 0
      %1176 = vmatpush2.bf16.msra.mxu0 %v1117
      %1177 = vmatprep.subr.bf16.mxu0 0
      %1178 = vmatpush2.bf16.msra.mxu0 %v1116
      %1179 = vmatprep.subr.bf16.mxu0 0
      %1180 = vmatpush2.bf16.msra.mxu0 %v1115
      %1181 = vmatprep.subr.bf16.mxu0 0
      %1182 = vmatpush2.bf16.msra.mxu0 %v1114
      %1183 = vmatprep.subr.bf16.mxu0 0
      %1184 = vmatpush2.bf16.msra.mxu0 %v1113
      %1185 = vmatprep.mubr.bf16.mxu0 %v992
      %1186 = vmatmul.mubr.bf16.gmra.mxu0 %v991
      %v1187 = vpop.f32.mrf.mxu0
      %v1188 = vadd.f32 0.0, %v1187
      %v1189 = vpop.f32.mrf.mxu0
      %v1190 = vpop.f32.mrf.mxu0
      %v1191 = vadd.f32 0.0, %v1190
      %v1192 = vpop.f32.mrf.mxu0
      %1193 = vmatprep.mubr.bf16.mxu0 %v994
      %1194 = vmatmul.mubr.bf16.gmra.mxu0 %v993
      %v1195 = vpop.f32.mrf.mxu0
      %v1196 = vadd.f32 0.0, %v1195
      %v1197 = vpop.f32.mrf.mxu0
      %v1198 = vpop.f32.mrf.mxu0
      %v1199 = vadd.f32 0.0, %v1198
      %v1200 = vpop.f32.mrf.mxu0
      %1201 = vmatprep.mubr.bf16.mxu0 %v996
      %1202 = vmatmul.mubr.bf16.gmra.mxu0 %v995
      %v1203 = vpop.f32.mrf.mxu0
      %v1204 = vadd.f32 0.0, %v1203
      %v1205 = vpop.f32.mrf.mxu0
      %v1206 = vpop.f32.mrf.mxu0
      %v1207 = vadd.f32 0.0, %v1206
      %v1208 = vpop.f32.mrf.mxu0
      %1209 = vmatprep.mubr.bf16.mxu0 %v998
      %1210 = vmatmul.mubr.bf16.gmra.mxu0 %v997
      %v1211 = vpop.f32.mrf.mxu0
      %v1212 = vadd.f32 0.0, %v1211
      %v1213 = vpop.f32.mrf.mxu0
      %v1214 = vpop.f32.mrf.mxu0
      %v1215 = vadd.f32 0.0, %v1214
      %v1216 = vpop.f32.mrf.mxu0
      %1217 = vdwg.mxu0
      %1218 = vmatprep.subr.bf16.mxu0 0
      %1219 = vmatpush1.bf16.msra.mxu0 %v1128
      %1220 = vmatprep.subr.bf16.mxu0 0
      %1221 = vmatpush1.bf16.msra.mxu0 %v1127
      %1222 = vmatprep.subr.bf16.mxu0 0
      %1223 = vmatpush1.bf16.msra.mxu0 %v1126
      %1224 = vmatprep.subr.bf16.mxu0 0
      %1225 = vmatpush1.bf16.msra.mxu0 %v1125
      %1226 = vmatprep.subr.bf16.mxu0 0
      %1227 = vmatpush1.bf16.msra.mxu0 %v1124
      %1228 = vmatprep.subr.bf16.mxu0 0
      %1229 = vmatpush1.bf16.msra.mxu0 %v1123
      %1230 = vmatprep.subr.bf16.mxu0 0
      %1231 = vmatpush1.bf16.msra.mxu0 %v1122
      %1232 = vmatprep.subr.bf16.mxu0 0
      %1233 = vmatpush1.bf16.msra.mxu0 %v1121
      %1234 = vmatprep.subr.bf16.mxu0 0
      %1235 = vmatpush2.bf16.msra.mxu0 0
      %1236 = vmatprep.subr.bf16.mxu0 0
      %1237 = vmatpush2.bf16.msra.mxu0 0
      %1238 = vmatprep.subr.bf16.mxu0 0
      %1239 = vmatpush2.bf16.msra.mxu0 0
      %1240 = vmatprep.subr.bf16.mxu0 0
      %1241 = vmatpush2.bf16.msra.mxu0 0
      %1242 = vmatprep.subr.bf16.mxu0 0
      %1243 = vmatpush2.bf16.msra.mxu0 0
      %1244 = vmatprep.subr.bf16.mxu0 0
      %1245 = vmatpush2.bf16.msra.mxu0 0
      %1246 = vmatprep.subr.bf16.mxu0 0
      %1247 = vmatpush2.bf16.msra.mxu0 0
      %1248 = vmatprep.subr.bf16.mxu0 0
      %1249 = vmatpush2.bf16.msra.mxu0 0
      %1250 = vmatprep.mubr.bf16.mxu0 0
      %1251 = vmatmul.mubr.bf16.gmra.mxu0 %v993
      %v1252 = vpop.f32.mrf.mxu0
      %v1253 = vadd.f32 %v1188, %v1252
      %v1254 = vpop.f32.mrf.mxu0
      %v1255 = vpop.f32.mrf.mxu0
      %v1256 = vadd.f32 %v1191, %v1255
      %v1257 = vpop.f32.mrf.mxu0
      %1258 = vmatprep.mubr.bf16.mxu0 0
      %1259 = vmatmul.mubr.bf16.gmra.mxu0 %v995
      %v1260 = vpop.f32.mrf.mxu0
      %v1261 = vadd.f32 %v1196, %v1260
      %v1262 = vpop.f32.mrf.mxu0
      %v1263 = vpop.f32.mrf.mxu0
      %v1264 = vadd.f32 %v1199, %v1263
      %v1265 = vpop.f32.mrf.mxu0
      %1266 = vmatprep.mubr.bf16.mxu0 0
      %1267 = vmatmul.mubr.bf16.gmra.mxu0 %v997
      %v1268 = vpop.f32.mrf.mxu0
      %v1269 = vadd.f32 %v1204, %v1268
      %v1270 = vpop.f32.mrf.mxu0
      %v1271 = vpop.f32.mrf.mxu0
      %v1272 = vadd.f32 %v1207, %v1271
      %v1273 = vpop.f32.mrf.mxu0
      %1274 = vmatprep.mubr.bf16.mxu0 0
      %1275 = vmatmul.mubr.bf16.gmra.mxu0 %v999
      %v1276 = vpop.f32.mrf.mxu0
      %v1277 = vadd.f32 %v1212, %v1276
      %v1278 = vpop.f32.mrf.mxu0
      %v1279 = vpop.f32.mrf.mxu0
      %v1280 = vadd.f32 %v1215, %v1279
      %v1281 = vpop.f32.mrf.mxu0
      %1282 = vdwg.mxu0
      %v1283 = vpack.c.b16 %v865, %v864
      %v1284 = vpack.c.b16 %v866, %v865
      %v1285 = vpack.c.b16 %v867, %v866
      %v1286 = vpack.c.b16 %v868, %v867
      %v1287 = vpack.c.b16 %v869, %v868
      %v1288 = vpack.c.b16 %v870, %v869
      %v1289 = vpack.c.b16 %v871, %v870
      %v1290 = vpack.c.b16 %v872, %v871
      %v1291 = vpack.c.b16 %v873, %v872
      %v1349 = vunpack.c.l.b16 %v874
      %v1350 = vunpack.c.l.b16 %v875
      %v1351 = vunpack.c.l.b16 %v876
      %v1352 = vunpack.c.l.b16 %v877
      %v1353 = vunpack.c.l.b16 %v878
      %v1354 = vunpack.c.l.b16 %v879
      %v1355 = vunpack.c.l.b16 %v880
      %v1356 = vunpack.c.l.b16 %v881
      %v1357 = vunpack.c.l.b16 %v882
      %v1358 = vunpack.c.l.b16 %v883
      %v1359 = vunpack.c.l.b16 %v884
      %v1360 = vunpack.c.l.b16 %v885
      %v1361 = vunpack.c.l.b16 %v886
      %v1362 = vunpack.c.l.b16 %v887
      %v1363 = vunpack.c.l.b16 %v888
      %v1364 = vunpack.c.l.b16 %v889
      %v1365 = vunpack.c.l.b16 %v890
      %v1366 = vunpack.c.l.b16 %v891
      %v1367 = vunpack.c.l.b16 %v892
      %v1368 = vunpack.c.l.b16 %v893
      %v1369 = vunpack.c.l.b16 %v894
      %v1370 = vunpack.c.l.b16 %v895
      %v1371 = vunpack.c.l.b16 %v896
      %v1372 = vunpack.c.l.b16 %v897
      %v1373 = vunpack.c.l.b16 %v898
      %v1374 = vunpack.c.l.b16 %v899
      %v1375 = vunpack.c.l.b16 %v900
      %v1376 = vunpack.c.l.b16 %v901
      %v1377 = vunpack.c.l.b16 %v902
      %v1378 = vunpack.c.l.b16 %v903
      %v1379 = vunpack.c.l.b16 %v904
      %v1380 = vunpack.c.l.b16 %v905
      %v1381 = vunpack.c.l.b16 %v906
      %v1382 = vunpack.c.l.b16 %v907
      %v1383 = vunpack.c.l.b16 %v908
      %v1384 = vunpack.c.l.b16 %v909
      %v1385 = vunpack.c.l.b16 %v910
      %v1386 = vunpack.c.l.b16 %v911
      %v1387 = vunpack.c.l.b16 %v912
      %v1388 = vunpack.c.l.b16 %v913
      %v1389 = vunpack.c.l.b16 %v914
      %v1390 = vunpack.c.l.b16 %v915
      %v1391 = vunpack.c.l.b16 %v916
      %v1392 = vunpack.c.l.b16 %v917
      %v1393 = vunpack.c.l.b16 %v918
      %v1394 = vunpack.c.l.b16 %v919
      %v1395 = vunpack.c.l.b16 %v920
      %v1396 = vunpack.c.l.b16 %v921
      %v1397 = vpack.c.b16 %v1350, %v1349
      %v1398 = vpack.c.b16 %v1352, %v1351
      %v1399 = vpack.c.b16 %v1354, %v1353
      %v1400 = vpack.c.b16 %v1356, %v1355
      %v1401 = vpack.c.b16 %v1358, %v1357
      %v1402 = vpack.c.b16 %v1360, %v1359
      %v1403 = vpack.c.b16 %v1362, %v1361
      %v1404 = vpack.c.b16 %v1364, %v1363
      %v1405 = vpack.c.b16 %v1366, %v1365
      %v1406 = vpack.c.b16 %v1368, %v1367
      %v1407 = vpack.c.b16 %v1370, %v1369
      %v1408 = vpack.c.b16 %v1372, %v1371
      %v1409 = vpack.c.b16 %v1374, %v1373
      %v1410 = vpack.c.b16 %v1376, %v1375
      %v1411 = vpack.c.b16 %v1378, %v1377
      %v1412 = vpack.c.b16 %v1380, %v1379
      %v1413 = vpack.c.b16 %v1382, %v1381
      %v1414 = vpack.c.b16 %v1384, %v1383
      %v1415 = vpack.c.b16 %v1386, %v1385
      %v1416 = vpack.c.b16 %v1388, %v1387
      %v1417 = vpack.c.b16 %v1390, %v1389
      %v1418 = vpack.c.b16 %v1392, %v1391
      %v1419 = vpack.c.b16 %v1394, %v1393
      %v1420 = vpack.c.b16 %v1396, %v1395
      %1445 = vmatprep.subr.bf16.mxu0 0
      %1446 = vmatpush1.bf16.msra.mxu0 %v1404
      %1447 = vmatprep.subr.bf16.mxu0 0
      %1448 = vmatpush1.bf16.msra.mxu0 %v1403
      %1449 = vmatprep.subr.bf16.mxu0 0
      %1450 = vmatpush1.bf16.msra.mxu0 %v1402
      %1451 = vmatprep.subr.bf16.mxu0 0
      %1452 = vmatpush1.bf16.msra.mxu0 %v1401
      %1453 = vmatprep.subr.bf16.mxu0 0
      %1454 = vmatpush1.bf16.msra.mxu0 %v1400
      %1455 = vmatprep.subr.bf16.mxu0 0
      %1456 = vmatpush1.bf16.msra.mxu0 %v1399
      %1457 = vmatprep.subr.bf16.mxu0 0
      %1458 = vmatpush1.bf16.msra.mxu0 %v1398
      %1459 = vmatprep.subr.bf16.mxu0 0
      %1460 = vmatpush1.bf16.msra.mxu0 %v1397
      %1461 = vmatprep.subr.bf16.mxu0 0
      %1462 = vmatpush2.bf16.msra.mxu0 %v1412
      %1463 = vmatprep.subr.bf16.mxu0 0
      %1464 = vmatpush2.bf16.msra.mxu0 %v1411
      %1465 = vmatprep.subr.bf16.mxu0 0
      %1466 = vmatpush2.bf16.msra.mxu0 %v1410
      %1467 = vmatprep.subr.bf16.mxu0 0
      %1468 = vmatpush2.bf16.msra.mxu0 %v1409
      %1469 = vmatprep.subr.bf16.mxu0 0
      %1470 = vmatpush2.bf16.msra.mxu0 %v1408
      %1471 = vmatprep.subr.bf16.mxu0 0
      %1472 = vmatpush2.bf16.msra.mxu0 %v1407
      %1473 = vmatprep.subr.bf16.mxu0 0
      %1474 = vmatpush2.bf16.msra.mxu0 %v1406
      %1475 = vmatprep.subr.bf16.mxu0 0
      %1476 = vmatpush2.bf16.msra.mxu0 %v1405
      %1477 = vmatprep.mubr.bf16.mxu0 %v1284
      %1478 = vmatmul.mubr.bf16.gmra.mxu0 %v1283
      %v1479 = vpop.f32.mrf.mxu0
      %v1480 = vadd.f32 %v1253, %v1479
      %v1481 = vpop.f32.mrf.mxu0
      %v1482 = vpop.f32.mrf.mxu0
      %v1483 = vadd.f32 %v1256, %v1482
      %v1484 = vpop.f32.mrf.mxu0
      %1485 = vmatprep.mubr.bf16.mxu0 %v1286
      %1486 = vmatmul.mubr.bf16.gmra.mxu0 %v1285
      %v1487 = vpop.f32.mrf.mxu0
      %v1488 = vadd.f32 %v1261, %v1487
      %v1489 = vpop.f32.mrf.mxu0
      %v1490 = vpop.f32.mrf.mxu0
      %v1491 = vadd.f32 %v1264, %v1490
      %v1492 = vpop.f32.mrf.mxu0
      %1493 = vmatprep.mubr.bf16.mxu0 %v1288
      %1494 = vmatmul.mubr.bf16.gmra.mxu0 %v1287
      %v1495 = vpop.f32.mrf.mxu0
      %v1496 = vadd.f32 %v1269, %v1495
      %v1497 = vpop.f32.mrf.mxu0
      %v1498 = vpop.f32.mrf.mxu0
      %v1499 = vadd.f32 %v1272, %v1498
      %v1500 = vpop.f32.mrf.mxu0
      %1501 = vmatprep.mubr.bf16.mxu0 %v1290
      %1502 = vmatmul.mubr.bf16.gmra.mxu0 %v1289
      %v1503 = vpop.f32.mrf.mxu0
      %v1504 = vadd.f32 %v1277, %v1503
      %v1505 = vpop.f32.mrf.mxu0
      %v1506 = vpop.f32.mrf.mxu0
      %v1507 = vadd.f32 %v1280, %v1506
      %v1508 = vpop.f32.mrf.mxu0
      %1509 = vdwg.mxu0
      %1510 = vmatprep.subr.bf16.mxu0 0
      %1511 = vmatpush1.bf16.msra.mxu0 %v1420
      %1512 = vmatprep.subr.bf16.mxu0 0
      %1513 = vmatpush1.bf16.msra.mxu0 %v1419
      %1514 = vmatprep.subr.bf16.mxu0 0
      %1515 = vmatpush1.bf16.msra.mxu0 %v1418
      %1516 = vmatprep.subr.bf16.mxu0 0
      %1517 = vmatpush1.bf16.msra.mxu0 %v1417
      %1518 = vmatprep.subr.bf16.mxu0 0
      %1519 = vmatpush1.bf16.msra.mxu0 %v1416
      %1520 = vmatprep.subr.bf16.mxu0 0
      %1521 = vmatpush1.bf16.msra.mxu0 %v1415
      %1522 = vmatprep.subr.bf16.mxu0 0
      %1523 = vmatpush1.bf16.msra.mxu0 %v1414
      %1524 = vmatprep.subr.bf16.mxu0 0
      %1525 = vmatpush1.bf16.msra.mxu0 %v1413
      %1526 = vmatprep.subr.bf16.mxu0 0
      %1527 = vmatpush2.bf16.msra.mxu0 0
      %1528 = vmatprep.subr.bf16.mxu0 0
      %1529 = vmatpush2.bf16.msra.mxu0 0
      %1530 = vmatprep.subr.bf16.mxu0 0
      %1531 = vmatpush2.bf16.msra.mxu0 0
      %1532 = vmatprep.subr.bf16.mxu0 0
      %1533 = vmatpush2.bf16.msra.mxu0 0
      %1534 = vmatprep.subr.bf16.mxu0 0
      %1535 = vmatpush2.bf16.msra.mxu0 0
      %1536 = vmatprep.subr.bf16.mxu0 0
      %1537 = vmatpush2.bf16.msra.mxu0 0
      %1538 = vmatprep.subr.bf16.mxu0 0
      %1539 = vmatpush2.bf16.msra.mxu0 0
      %1540 = vmatprep.subr.bf16.mxu0 0
      %1541 = vmatpush2.bf16.msra.mxu0 0
      %1542 = vmatprep.mubr.bf16.mxu0 0
      %1543 = vmatmul.mubr.bf16.gmra.mxu0 %v1285
      %v1544 = vpop.f32.mrf.mxu0
      %v1545 = vadd.f32 %v1480, %v1544
      %v1546 = vpop.f32.mrf.mxu0
      %v1547 = vpop.f32.mrf.mxu0
      %v1548 = vadd.f32 %v1483, %v1547
      %v1549 = vpop.f32.mrf.mxu0
      %1550 = vmatprep.mubr.bf16.mxu0 0
      %1551 = vmatmul.mubr.bf16.gmra.mxu0 %v1287
      %v1552 = vpop.f32.mrf.mxu0
      %v1553 = vadd.f32 %v1488, %v1552
      %v1554 = vpop.f32.mrf.mxu0
      %v1555 = vpop.f32.mrf.mxu0
      %v1556 = vadd.f32 %v1491, %v1555
      %v1557 = vpop.f32.mrf.mxu0
      %1558 = vmatprep.mubr.bf16.mxu0 0
      %1559 = vmatmul.mubr.bf16.gmra.mxu0 %v1289
      %v1560 = vpop.f32.mrf.mxu0
      %v1561 = vadd.f32 %v1496, %v1560
      %v1562 = vpop.f32.mrf.mxu0
      %v1563 = vpop.f32.mrf.mxu0
      %v1564 = vadd.f32 %v1499, %v1563
      %v1565 = vpop.f32.mrf.mxu0
      %1566 = vmatprep.mubr.bf16.mxu0 0
      %1567 = vmatmul.mubr.bf16.gmra.mxu0 %v1291
      %v1568 = vpop.f32.mrf.mxu0
      %v1569 = vadd.f32 %v1504, %v1568
      %v1570 = vpop.f32.mrf.mxu0
      %v1571 = vpop.f32.mrf.mxu0
      %v1572 = vadd.f32 %v1507, %v1571
      %v1573 = vpop.f32.mrf.mxu0
      %1574 = vdwg.mxu0
      %v1585 = vunpack.c.l.b16 %v844
      %v1586 = vunpack.c.l.b16 %v845
      %v1587 = vunpack.c.l.b16 %v846
      %v1588 = vunpack.c.l.b16 %v847
      %v1589 = vunpack.c.l.b16 %v848
      %v1590 = vunpack.c.l.b16 %v849
      %v1591 = vunpack.c.l.b16 %v850
      %v1592 = vunpack.c.l.b16 %v851
      %v1593 = vunpack.c.l.b16 %v852
      %v1594 = vunpack.c.l.b16 %v853
      %s1595 = scalar_lea.vmem %s1, 384
      %v1596 = vld [vmem:[%s1595] sm:$0xf]
      %v1597 = vld [vmem:[%s1595 + $0x4] sm:$0xf]
      %v1598 = vld [vmem:[%s1595 + $0x8] sm:$0xf]
      %v1599 = vld [vmem:[%s1595 + $0xc] sm:$0xf]
      %v1600 = vld [vmem:[%s1595 + $0x10] sm:$0xf]
      %v1601 = vld [vmem:[%s1595 + $0x14] sm:$0xf]
      %v1602 = vld [vmem:[%s1595 + $0x18] sm:$0xf]
      %v1603 = vld [vmem:[%s1595 + $0x1c] sm:$0xf]
      %v1604 = vld [vmem:[%s1595 + $0x20] sm:$0xf]
      %v1605 = vld [vmem:[%s1595 + $0x24] sm:$0xf]
      %v1606 = vld [vmem:[%s1595 + $0x28] sm:$0xf]
      %v1607 = vld [vmem:[%s1595 + $0x2c] sm:$0xf]
      %v1608 = vld [vmem:[%s1595 + $0x30] sm:$0xf]
      %v1609 = vld [vmem:[%s1595 + $0x34] sm:$0xf]
      %v1610 = vld [vmem:[%s1595 + $0x38] sm:$0xf]
      %v1611 = vld [vmem:[%s1595 + $0x3c] sm:$0xf]
      %v1612 = vld [vmem:[%s1595 + $0x40] sm:$0xf]
      %v1613 = vld [vmem:[%s1595 + $0x44] sm:$0xf]
      %v1614 = vld [vmem:[%s1595 + $0x48] sm:$0xf]
      %v1615 = vld [vmem:[%s1595 + $0x4c] sm:$0xf]
      %v1616 = vld [vmem:[%s1595 + $0x50] sm:$0xf]
      %v1617 = vld [vmem:[%s1595 + $0x54] sm:$0xf]
      %v1618 = vld [vmem:[%s1595 + $0x58] sm:$0xf]
      %v1619 = vld [vmem:[%s1595 + $0x5c] sm:$0xf]
      %v1620 = vld [vmem:[%s1595 + $0x60] sm:$0xf]
      %v1621 = vld [vmem:[%s1595 + $0x64] sm:$0xf]
      %v1622 = vld [vmem:[%s1595 + $0x68] sm:$0xf]
      %v1623 = vld [vmem:[%s1595 + $0x6c] sm:$0xf]
      %v1624 = vld [vmem:[%s1595 + $0x70] sm:$0xf]
      %v1625 = vld [vmem:[%s1595 + $0x74] sm:$0xf]
      %v1626 = vld [vmem:[%s1595 + $0x78] sm:$0xf]
      %v1627 = vld [vmem:[%s1595 + $0x7c] sm:$0xf]
      %v1628 = vld [vmem:[%s1595 + $0x80] sm:$0xf]
      %v1629 = vld [vmem:[%s1595 + $0x84] sm:$0xf]
      %v1630 = vld [vmem:[%s1595 + $0x88] sm:$0xf]
      %v1631 = vld [vmem:[%s1595 + $0x8c] sm:$0xf]
      %v1632 = vld [vmem:[%s1595 + $0x90] sm:$0xf]
      %v1633 = vld [vmem:[%s1595 + $0x94] sm:$0xf]
      %v1634 = vld [vmem:[%s1595 + $0x98] sm:$0xf]
      %v1635 = vld [vmem:[%s1595 + $0x9c] sm:$0xf]
      %v1636 = vld [vmem:[%s1595 + $0xa0] sm:$0xf]
      %v1637 = vld [vmem:[%s1595 + $0xa4] sm:$0xf]
      %v1638 = vld [vmem:[%s1595 + $0xa8] sm:$0xf]
      %v1639 = vld [vmem:[%s1595 + $0xac] sm:$0xf]
      %v1640 = vld [vmem:[%s1595 + $0xb0] sm:$0xf]
      %v1641 = vld [vmem:[%s1595 + $0xb4] sm:$0xf]
      %v1642 = vld [vmem:[%s1595 + $0xb8] sm:$0xf]
      %v1643 = vld [vmem:[%s1595 + $0xbc] sm:$0xf]
      %v1644 = vpack.c.b16 %v1586, %v1585
      %v1645 = vpack.c.b16 %v1587, %v1586
      %v1646 = vpack.c.b16 %v1588, %v1587
      %v1647 = vpack.c.b16 %v1589, %v1588
      %v1648 = vpack.c.b16 %v1590, %v1589
      %v1649 = vpack.c.b16 %v1591, %v1590
      %v1650 = vpack.c.b16 %v1592, %v1591
      %v1651 = vpack.c.b16 %v1593, %v1592
      %v1652 = vpack.c.b16 %v1594, %v1593
      %v1710 = vunpack.c.l.b16 %v1596
      %v1711 = vunpack.c.l.b16 %v1597
      %v1712 = vunpack.c.l.b16 %v1598
      %v1713 = vunpack.c.l.b16 %v1599
      %v1714 = vunpack.c.l.b16 %v1600
      %v1715 = vunpack.c.l.b16 %v1601
      %v1716 = vunpack.c.l.b16 %v1602
      %v1717 = vunpack.c.l.b16 %v1603
      %v1718 = vunpack.c.l.b16 %v1604
      %v1719 = vunpack.c.l.b16 %v1605
      %v1720 = vunpack.c.l.b16 %v1606
      %v1721 = vunpack.c.l.b16 %v1607
      %v1722 = vunpack.c.l.b16 %v1608
      %v1723 = vunpack.c.l.b16 %v1609
      %v1724 = vunpack.c.l.b16 %v1610
      %v1725 = vunpack.c.l.b16 %v1611
      %v1726 = vunpack.c.l.b16 %v1612
      %v1727 = vunpack.c.l.b16 %v1613
      %v1728 = vunpack.c.l.b16 %v1614
      %v1729 = vunpack.c.l.b16 %v1615
      %v1730 = vunpack.c.l.b16 %v1616
      %v1731 = vunpack.c.l.b16 %v1617
      %v1732 = vunpack.c.l.b16 %v1618
      %v1733 = vunpack.c.l.b16 %v1619
      %v1734 = vunpack.c.l.b16 %v1620
      %v1735 = vunpack.c.l.b16 %v1621
      %v1736 = vunpack.c.l.b16 %v1622
      %v1737 = vunpack.c.l.b16 %v1623
      %v1738 = vunpack.c.l.b16 %v1624
      %v1739 = vunpack.c.l.b16 %v1625
      %v1740 = vunpack.c.l.b16 %v1626
      %v1741 = vunpack.c.l.b16 %v1627
      %v1742 = vunpack.c.l.b16 %v1628
      %v1743 = vunpack.c.l.b16 %v1629
      %v1744 = vunpack.c.l.b16 %v1630
      %v1745 = vunpack.c.l.b16 %v1631
      %v1746 = vunpack.c.l.b16 %v1632
      %v1747 = vunpack.c.l.b16 %v1633
      %v1748 = vunpack.c.l.b16 %v1634
      %v1749 = vunpack.c.l.b16 %v1635
      %v1750 = vunpack.c.l.b16 %v1636
      %v1751 = vunpack.c.l.b16 %v1637
      %v1752 = vunpack.c.l.b16 %v1638
      %v1753 = vunpack.c.l.b16 %v1639
      %v1754 = vunpack.c.l.b16 %v1640
      %v1755 = vunpack.c.l.b16 %v1641
      %v1756 = vunpack.c.l.b16 %v1642
      %v1757 = vunpack.c.l.b16 %v1643
      %v1758 = vpack.c.b16 %v1711, %v1710
      %v1759 = vpack.c.b16 %v1713, %v1712
      %v1760 = vpack.c.b16 %v1715, %v1714
      %v1761 = vpack.c.b16 %v1717, %v1716
      %v1762 = vpack.c.b16 %v1719, %v1718
      %v1763 = vpack.c.b16 %v1721, %v1720
      %v1764 = vpack.c.b16 %v1723, %v1722
      %v1765 = vpack.c.b16 %v1725, %v1724
      %v1766 = vpack.c.b16 %v1727, %v1726
      %v1767 = vpack.c.b16 %v1729, %v1728
      %v1768 = vpack.c.b16 %v1731, %v1730
      %v1769 = vpack.c.b16 %v1733, %v1732
      %v1770 = vpack.c.b16 %v1735, %v1734
      %v1771 = vpack.c.b16 %v1737, %v1736
      %v1772 = vpack.c.b16 %v1739, %v1738
      %v1773 = vpack.c.b16 %v1741, %v1740
      %v1774 = vpack.c.b16 %v1743, %v1742
      %v1775 = vpack.c.b16 %v1745, %v1744
      %v1776 = vpack.c.b16 %v1747, %v1746
      %v1777 = vpack.c.b16 %v1749, %v1748
      %v1778 = vpack.c.b16 %v1751, %v1750
      %v1779 = vpack.c.b16 %v1753, %v1752
      %v1780 = vpack.c.b16 %v1755, %v1754
      %v1781 = vpack.c.b16 %v1757, %v1756
      %1806 = vmatprep.subr.bf16.mxu0 0
      %1807 = vmatpush1.bf16.msra.mxu0 %v1765
      %1808 = vmatprep.subr.bf16.mxu0 0
      %1809 = vmatpush1.bf16.msra.mxu0 %v1764
      %1810 = vmatprep.subr.bf16.mxu0 0
      %1811 = vmatpush1.bf16.msra.mxu0 %v1763
      %1812 = vmatprep.subr.bf16.mxu0 0
      %1813 = vmatpush1.bf16.msra.mxu0 %v1762
      %1814 = vmatprep.subr.bf16.mxu0 0
      %1815 = vmatpush1.bf16.msra.mxu0 %v1761
      %1816 = vmatprep.subr.bf16.mxu0 0
      %1817 = vmatpush1.bf16.msra.mxu0 %v1760
      %1818 = vmatprep.subr.bf16.mxu0 0
      %1819 = vmatpush1.bf16.msra.mxu0 %v1759
      %1820 = vmatprep.subr.bf16.mxu0 0
      %1821 = vmatpush1.bf16.msra.mxu0 %v1758
      %1822 = vmatprep.subr.bf16.mxu0 0
      %1823 = vmatpush2.bf16.msra.mxu0 %v1773
      %1824 = vmatprep.subr.bf16.mxu0 0
      %1825 = vmatpush2.bf16.msra.mxu0 %v1772
      %1826 = vmatprep.subr.bf16.mxu0 0
      %1827 = vmatpush2.bf16.msra.mxu0 %v1771
      %1828 = vmatprep.subr.bf16.mxu0 0
      %1829 = vmatpush2.bf16.msra.mxu0 %v1770
      %1830 = vmatprep.subr.bf16.mxu0 0
      %1831 = vmatpush2.bf16.msra.mxu0 %v1769
      %1832 = vmatprep.subr.bf16.mxu0 0
      %1833 = vmatpush2.bf16.msra.mxu0 %v1768
      %1834 = vmatprep.subr.bf16.mxu0 0
      %1835 = vmatpush2.bf16.msra.mxu0 %v1767
      %1836 = vmatprep.subr.bf16.mxu0 0
      %1837 = vmatpush2.bf16.msra.mxu0 %v1766
      %1838 = vmatprep.mubr.bf16.mxu0 %v1645
      %1839 = vmatmul.mubr.bf16.gmra.mxu0 %v1644
      %v1840 = vpop.f32.mrf.mxu0
      %v1841 = vadd.f32 0.0, %v1840
      %v1842 = vpop.f32.mrf.mxu0
      %v1843 = vpop.f32.mrf.mxu0
      %v1844 = vadd.f32 0.0, %v1843
      %v1845 = vpop.f32.mrf.mxu0
      %1846 = vmatprep.mubr.bf16.mxu0 %v1647
      %1847 = vmatmul.mubr.bf16.gmra.mxu0 %v1646
      %v1848 = vpop.f32.mrf.mxu0
      %v1849 = vadd.f32 0.0, %v1848
      %v1850 = vpop.f32.mrf.mxu0
      %v1851 = vpop.f32.mrf.mxu0
      %v1852 = vadd.f32 0.0, %v1851
      %v1853 = vpop.f32.mrf.mxu0
      %1854 = vmatprep.mubr.bf16.mxu0 %v1649
      %1855 = vmatmul.mubr.bf16.gmra.mxu0 %v1648
      %v1856 = vpop.f32.mrf.mxu0
      %v1857 = vadd.f32 0.0, %v1856
      %v1858 = vpop.f32.mrf.mxu0
      %v1859 = vpop.f32.mrf.mxu0
      %v1860 = vadd.f32 0.0, %v1859
      %v1861 = vpop.f32.mrf.mxu0
      %1862 = vmatprep.mubr.bf16.mxu0 %v1651
      %1863 = vmatmul.mubr.bf16.gmra.mxu0 %v1650
      %v1864 = vpop.f32.mrf.mxu0
      %v1865 = vadd.f32 0.0, %v1864
      %v1866 = vpop.f32.mrf.mxu0
      %v1867 = vpop.f32.mrf.mxu0
      %v1868 = vadd.f32 0.0, %v1867
      %v1869 = vpop.f32.mrf.mxu0
      %1870 = vdwg.mxu0
      %1871 = vmatprep.subr.bf16.mxu0 0
      %1872 = vmatpush1.bf16.msra.mxu0 %v1781
      %1873 = vmatprep.subr.bf16.mxu0 0
      %1874 = vmatpush1.bf16.msra.mxu0 %v1780
      %1875 = vmatprep.subr.bf16.mxu0 0
      %1876 = vmatpush1.bf16.msra.mxu0 %v1779
      %1877 = vmatprep.subr.bf16.mxu0 0
      %1878 = vmatpush1.bf16.msra.mxu0 %v1778
      %1879 = vmatprep.subr.bf16.mxu0 0
      %1880 = vmatpush1.bf16.msra.mxu0 %v1777
      %1881 = vmatprep.subr.bf16.mxu0 0
      %1882 = vmatpush1.bf16.msra.mxu0 %v1776
      %1883 = vmatprep.subr.bf16.mxu0 0
      %1884 = vmatpush1.bf16.msra.mxu0 %v1775
      %1885 = vmatprep.subr.bf16.mxu0 0
      %1886 = vmatpush1.bf16.msra.mxu0 %v1774
      %1887 = vmatprep.subr.bf16.mxu0 0
      %1888 = vmatpush2.bf16.msra.mxu0 0
      %1889 = vmatprep.subr.bf16.mxu0 0
      %1890 = vmatpush2.bf16.msra.mxu0 0
      %1891 = vmatprep.subr.bf16.mxu0 0
      %1892 = vmatpush2.bf16.msra.mxu0 0
      %1893 = vmatprep.subr.bf16.mxu0 0
      %1894 = vmatpush2.bf16.msra.mxu0 0
      %1895 = vmatprep.subr.bf16.mxu0 0
      %1896 = vmatpush2.bf16.msra.mxu0 0
      %1897 = vmatprep.subr.bf16.mxu0 0
      %1898 = vmatpush2.bf16.msra.mxu0 0
      %1899 = vmatprep.subr.bf16.mxu0 0
      %1900 = vmatpush2.bf16.msra.mxu0 0
      %1901 = vmatprep.subr.bf16.mxu0 0
      %1902 = vmatpush2.bf16.msra.mxu0 0
      %1903 = vmatprep.mubr.bf16.mxu0 0
      %1904 = vmatmul.mubr.bf16.gmra.mxu0 %v1646
      %v1905 = vpop.f32.mrf.mxu0
      %v1906 = vadd.f32 %v1841, %v1905
      %v1907 = vpop.f32.mrf.mxu0
      %v1908 = vpop.f32.mrf.mxu0
      %v1909 = vadd.f32 %v1844, %v1908
      %v1910 = vpop.f32.mrf.mxu0
      %1911 = vmatprep.mubr.bf16.mxu0 0
      %1912 = vmatmul.mubr.bf16.gmra.mxu0 %v1648
      %v1913 = vpop.f32.mrf.mxu0
      %v1914 = vadd.f32 %v1849, %v1913
      %v1915 = vpop.f32.mrf.mxu0
      %v1916 = vpop.f32.mrf.mxu0
      %v1917 = vadd.f32 %v1852, %v1916
      %v1918 = vpop.f32.mrf.mxu0
      %1919 = vmatprep.mubr.bf16.mxu0 0
      %1920 = vmatmul.mubr.bf16.gmra.mxu0 %v1650
      %v1921 = vpop.f32.mrf.mxu0
      %v1922 = vadd.f32 %v1857, %v1921
      %v1923 = vpop.f32.mrf.mxu0
      %v1924 = vpop.f32.mrf.mxu0
      %v1925 = vadd.f32 %v1860, %v1924
      %v1926 = vpop.f32.mrf.mxu0
      %1927 = vmatprep.mubr.bf16.mxu0 0
      %1928 = vmatmul.mubr.bf16.gmra.mxu0 %v1652
      %v1929 = vpop.f32.mrf.mxu0
      %v1930 = vadd.f32 %v1865, %v1929
      %v1931 = vpop.f32.mrf.mxu0
      %v1932 = vpop.f32.mrf.mxu0
      %v1933 = vadd.f32 %v1868, %v1932
      %v1934 = vpop.f32.mrf.mxu0
      %1935 = vdwg.mxu0
      %v1936 = vadd.f32 %v1545, %v1906
      %v1937 = vadd.f32 %v1548, %v1909
      %v1938 = vadd.f32 %v1553, %v1914
      %v1939 = vadd.f32 %v1556, %v1917
      %v1940 = vadd.f32 %v1561, %v1922
      %v1941 = vadd.f32 %v1564, %v1925
      %v1942 = vadd.f32 %v1569, %v1930
      %v1943 = vadd.f32 %v1572, %v1933
      %v1944 = vpack.c.bf16 %v1936, %v1936
      %v1945 = vpack.c.bf16 %v1937, %v1937
      %v1946 = vpack.c.bf16 %v1938, %v1938
      %v1947 = vpack.c.bf16 %v1939, %v1939
      %v1948 = vpack.c.bf16 %v1940, %v1940
      %v1949 = vpack.c.bf16 %v1941, %v1941
      %v1950 = vpack.c.bf16 %v1942, %v1942
      %v1951 = vpack.c.bf16 %v1943, %v1943
      %1952 = vst [vmem:[%s223] sm:$0xf] %v1944
      %1953 = vst [vmem:[%s223 + $0x4] sm:$0xf] %v1945
      %1954 = vst [vmem:[%s223 + $0x8] sm:$0xf] %v1946
      %1955 = vst [vmem:[%s223 + $0xc] sm:$0xf] %v1947
      %1956 = vst [vmem:[%s223 + $0x10] sm:$0xf] %v1948
      %1957 = vst [vmem:[%s223 + $0x14] sm:$0xf] %v1949
      %1958 = vst [vmem:[%s223 + $0x18] sm:$0xf] %v1950
      %1959 = vst [vmem:[%s223 + $0x1c] sm:$0xf] %v1951
      // Predicated region
      $region229: #{downblock_forward.6} parent=31 // pred_check
        %p1960 = pneg %p248
      $region230: #{downblock_forward.6} parent=31 // pred_check_branch
        %1962 = sbr.rel (%p1960) target = $region232
      $region231: #{downblock_forward.6} parent=31 // pred_region
        %1963 = vst [vmem:[%s232] sm:$0x3] 0.0
      $region232: #{downblock_forward.6} parent=31 // pred_fallthru
        _
      %v1964 = vadd.f32 %v1936, %v1937
      %v1965 = vadd.f32 %v1964, %v1938
      %v1966 = vadd.f32 %v1965, %v1939
      %v1967 = vadd.f32 %v1966, %v1940
      %v1968 = vadd.f32 %v1967, %v1941
      %v1969 = vadd.f32 %v1968, %v1942
      %v1970 = vadd.f32 %v1969, %v1943
      %v1971 = vrot.slane %v1970, 4
      %v1972 = vadd.f32 %v1970, %v1971
      %v1973 = vrot.slane %v1972, 2
      %v1974 = vadd.f32 %v1972, %v1973
      %v1975 = vrot.slane %v1974, 1
      %v1976 = vadd.f32 %v1974, %v1975
      %v1977 = vmul.f32 %v1936, %v1936
      %v1978 = vmul.f32 %v1937, %v1937
      %v1979 = vmul.f32 %v1938, %v1938
      %v1980 = vmul.f32 %v1939, %v1939
      %v1981 = vmul.f32 %v1940, %v1940
      %v1982 = vmul.f32 %v1941, %v1941
      %v1983 = vmul.f32 %v1942, %v1942
      %v1984 = vmul.f32 %v1943, %v1943
      %v1985 = vadd.f32 %v1977, %v1978
      %v1986 = vadd.f32 %v1985, %v1979
      %v1987 = vadd.f32 %v1986, %v1980
      %v1988 = vadd.f32 %v1987, %v1981
      %v1989 = vadd.f32 %v1988, %v1982
      %v1990 = vadd.f32 %v1989, %v1983
      %v1991 = vadd.f32 %v1990, %v1984
      %v1992 = vrot.slane %v1991, 4
      %v1993 = vadd.f32 %v1991, %v1992
      %v1994 = vrot.slane %v1993, 2
      %v1995 = vadd.f32 %v1993, %v1994
      %v1996 = vrot.slane %v1995, 1
      %v1997 = vadd.f32 %v1995, %v1996
      %v1998 = vld [vmem:[%s232] sm:$0x3]
      %vm1999 = vcmask 1040384
      %v2000 = vsel %vm1999, %v1976, %v1997
      %v2001 = vadd.f32 %v1998, %v2000
      %2002 = vst [vmem:[%s232] sm:$0x3] %v2001
      %s2003 = sadd.s32 %s23, %s24
      %s2004 = smul.u32 8, %s2003
      %p2005 = scmp.lt.s32.totalorder %s22, 1
      %s2006 = scalar_select %p2005, %s22, 1
      %p2007 = scmp.lt.s32.totalorder %s2004, 7
      %s2008 = scalar_select %p2007, %s2004, 7
      %s2009 = smul.addr %s2006, 8
      %s2010 = sadd.s32 %s2008, %s2009
      %s2011 = smul.addr %s2010, 4
      %s2012 = scalar_lea.vmem %s4, %s2011
      %p2013 = scmp.lt.s32.totalorder %s22, 1
      %s2014 = scalar_select %p2013, %s22, 1
      %p2015 = scmp.lt.s32.totalorder %s23, 0
      %s2016 = scalar_select %p2015, %s23, 0
      %s2017 = sadd.s32 %s2016, %s2014
      %s2018 = smul.addr %s2017, 2
      %s2019 = scalar_lea.vmem %s5, %s2018
      // Predicated region
      $region233: #{downblock_forward.6} parent=31 // pred_check
        %p2020 = pneg %p121
      $region234: #{downblock_forward.6} parent=31 // pred_check_branch
        %2022 = sbr.rel (%p2020) target = $region236
      $region235: #{downblock_forward.6} parent=31 // pred_region
        %s2023 = sadd.s32 %s23, %s24
        %s2024 = smul.u32 8, %s2023
      $region236: #{downblock_forward.6} parent=31 // pred_fallthru
        _
      // Predicated region
      $region237: #{downblock_forward.6} parent=31 // pred_check
        %p2025 = pneg %p149
      $region238: #{downblock_forward.6} parent=31 // pred_check_branch
        %2027 = sbr.rel (%p2025) target = $region240
      $region239: #{downblock_forward.6} parent=31 // pred_region
        _
      $region240: #{downblock_forward.6} parent=31 // pred_fallthru
        _
    $region32: #{downblock_forward.6} parent=5 // pred_fallthru
      _
    %p2028 = scmp.le.s32.totalorder 2, %s12
    // Predicated region
    $region241: #{downblock_forward.6} parent=5 // pred_check
      %p2029 = pneg %p2028
    $region242: #{downblock_forward.6} parent=5 // pred_check_branch
      %2031 = sbr.rel (%p2029) target = $region244
    $region243: #{downblock_forward.6} parent=5 // pred_region
      %s2032 = ssub.s32 %s12, 2
      // Predicated region
      $region245: #{downblock_forward.6} parent=243 // pred_check
        %p2033 = pneg %p127
      $region246: #{downblock_forward.6} parent=243 // pred_check_branch
        %2035 = sbr.rel (%p2033) target = $region248
      $region247: #{downblock_forward.6} parent=243 // pred_region
        %s2036 = sadd.s32 %s26, %s27
        %s2037 = smul.u32 8, %s2036
        %p2038 = scmp.lt.s32.totalorder %s25, 1
        %s2039 = scalar_select %p2038, %s25, 1
        %p2040 = scmp.lt.s32.totalorder %s2037, 7
        %s2041 = scalar_select %p2040, %s2037, 7
        %s2042 = smul.addr %s2039, 8
        %s2043 = sadd.s32 %s2041, %s2042
        %s2044 = smul.addr %s2043, 4
        %s2045 = scalar_lea.vmem %s4, %s2044
      $region248: #{downblock_forward.6} parent=243 // pred_fallthru
        _
      // Predicated region
      $region249: #{downblock_forward.6} parent=243 // pred_check
        %p2046 = pneg %p155
      $region250: #{downblock_forward.6} parent=243 // pred_check_branch
        %2048 = sbr.rel (%p2046) target = $region252
      $region251: #{downblock_forward.6} parent=243 // pred_region
        %p2049 = scmp.lt.s32.totalorder %s25, 1
        %s2050 = scalar_select %p2049, %s25, 1
        %p2051 = scmp.lt.s32.totalorder %s26, 0
        %s2052 = scalar_select %p2051, %s26, 0
        %s2053 = sadd.s32 %s2052, %s2050
        %s2054 = smul.addr %s2053, 2
        %s2055 = scalar_lea.vmem %s5, %s2054
      $region252: #{downblock_forward.6} parent=243 // pred_fallthru
        _
    $region244: #{downblock_forward.6} parent=5 // pred_fallthru
      _
  $region6: #{downblock_forward.6} parent=0 // loop_footer
    %s16 = sadd.s32 1, %s12
  $region7: #{downblock_forward.6} parent=0 // loop_footer_branch
    %11 = sbr.rel target = $region3
  $region8: #{downblock_forward.6} parent=0 // loop_exit
    _
  %2056 = vsyncmov [#allocation3]
  %s2057 = vpop.sfrf %2056
  %p2058 = scmp.eq.s32.totalorder %s2057, 0
  %p2059 = pneg %p2058
  %2061 = shalt.err (%p2059)
  %s2062 = scalar_lea.sflag [#allocation3], 1
  %2063 = vsyncmov %s2062
  %s2064 = vpop.sfrf %2063
  %p2065 = scmp.eq.s32.totalorder %s2064, 0
  %p2066 = pneg %p2065
  %2068 = shalt.err (%p2066)
  %s2069 = scalar_lea.sflag [#allocation3], 2
  %2070 = vsyncmov %s2069
  %s2071 = vpop.sfrf %2070
  %p2072 = scmp.eq.s32.totalorder %s2071, 0
  %p2073 = pneg %p2072
  %2075 = shalt.err (%p2073)
  %s2076 = scalar_lea.sflag [#allocation3], 3
  %2077 = vsyncmov %s2076
  %s2078 = vpop.sfrf %2077
  %p2079 = scmp.eq.s32.totalorder %s2078, 0
  %p2080 = pneg %p2079
  %2082 = shalt.err (%p2080)
  %s2083 = scalar_lea.sflag [#allocation3], 4
  %2084 = vsyncmov %s2083
  %s2085 = vpop.sfrf %2084
  %p2086 = scmp.eq.s32.totalorder %s2085, 0
  %p2087 = pneg %p2086
  %2089 = shalt.err (%p2087)
  %s2090 = scalar_lea.sflag [#allocation3], 5
  %2091 = vsyncmov %s2090
  %s2092 = vpop.sfrf %2091
  %p2093 = scmp.eq.s32.totalorder %s2092, 0
  %p2094 = pneg %p2093
  %2096 = shalt.err (%p2094)

</llo_original>
